<compile_context>
chip_gen: v7x
topology: tpu7x:2x2x1
jax: 0.10.0
libtpu: 0.0.40
codegen_flags: <defaults>
</compile_context>

<pallas_src>
import numpy as np
import jax
import jax.numpy as jnp
from jax.experimental import pallas as pl
from jax.experimental.pallas import tpu as pltpu


_VMEM_LIMIT = 48 * 1024 * 1024          # headroom on v7x (64 MiB phys), fine on v5e/v6e
_COMPUTE_DTYPE = jnp.bfloat16           # MXU input dtype; accumulation stays f32


def _silu_f32(y):
    return y * jax.nn.sigmoid(y)


# ---------------------------------------------------------------------------
# In-kernel value helpers (operate on VMEM values, never touch HBM)
# ---------------------------------------------------------------------------
def _zero_pad_hw1(x):
    """Zero-pad an (H, W, C) value by 1 on each spatial side, in VMEM."""
    H, W, C = x.shape
    zr = jnp.zeros((1, W, C), x.dtype)
    x = jnp.concatenate([zr, x, zr], axis=0)              # (H+2, W, C)
    zc = jnp.zeros((H + 2, 1, C), x.dtype)
    return jnp.concatenate([zc, x, zc], axis=1)           # (H+2, W+2, C)


def _conv3x3_acc_f32(xpad, w9_ref, H, W):
    """9-tap 3x3 conv: xpad (H+2, W+2, Cin) value, w9_ref (9, Cin, Cout) ref
    -> (H*W, Cout) f32 accumulator (no bias / activation)."""
    Cin = xpad.shape[-1]
    acc = None
    for dy in range(3):
        for dx in range(3):
            tap = xpad[dy:dy + H, dx:dx + W, :].reshape(H * W, Cin)
            t = jnp.dot(tap, w9_ref[dy * 3 + dx],
                        preferred_element_type=jnp.float32)
            acc = t if acc is None else acc + t
    return acc


def _maxpool_same_value(x, k):
    """k x k max pool, stride 1, 'same' (-inf) padding, on an (H, W, C) value."""
    H, W, C = x.shape
    r = (k - 1) // 2
    if r == 0:
        return x
    pad_h = jnp.full((r, W, C), -jnp.inf, x.dtype)
    xh = jnp.concatenate([pad_h, x, pad_h], axis=0)        # (H + 2r, W, C)
    out = xh[0:H]
    for d in range(1, k):
        out = jnp.maximum(out, xh[d:d + H])
    pad_w = jnp.full((H, r, C), -jnp.inf, x.dtype)
    xw = jnp.concatenate([pad_w, out, pad_w], axis=1)      # (H, W + 2r, C)
    out = xw[:, 0:W, :]
    for d in range(1, k):
        out = jnp.maximum(out, xw[:, d:d + W, :])
    return out


# ---------------------------------------------------------------------------
# Kernels
# ---------------------------------------------------------------------------
def _cv1_cv2_kernel(x_ref, w1_ref, b1_ref, w2_ref, b2_ref, o1_ref, o2_ref):
    """Fused cv1/cv2: one activation read, two 1x1 conv + SiLU outputs."""
    x = x_ref[0]                                           # (TP, Cin) bf16
    y1 = jnp.dot(x, w1_ref[...], preferred_element_type=jnp.float32) + b1_ref[...]
    o1_ref[0] = _silu_f32(y1).astype(o1_ref.dtype)
    y2 = jnp.dot(x, w2_ref[...], preferred_element_type=jnp.float32) + b2_ref[...]
    o2_ref[0] = _silu_f32(y2).astype(o2_ref.dtype)


def _make_cv3_cv4_kernel(H, W):
    """Fused cv3 (3x3) + cv4 (1x1); cv3 intermediate stays in VMEM."""
    def kernel(x_ref, w3_ref, b3_ref, w4_ref, b4_ref, o_ref):
        xpad = _zero_pad_hw1(x_ref[0])                     # (H+2, W+2, c_) bf16
        t = _conv3x3_acc_f32(xpad, w3_ref, H, W) + b3_ref[...]
        t = _silu_f32(t).astype(x_ref.dtype)               # bf16 layer boundary
        y = jnp.dot(t, w4_ref[...], preferred_element_type=jnp.float32) + b4_ref[...]
        o_ref[0] = _silu_f32(y).astype(o_ref.dtype)
    return kernel


def _make_spp_cv5_kernel(H, W, cascade_widths):
    """Fused SPP cascade + concat-free cv5 (row-split weights)."""
    n_feat = len(cascade_widths) + 1
    def kernel(*refs):
        x_ref = refs[0]
        w_refs = refs[1:1 + n_feat]
        b_ref = refs[1 + n_feat]
        o_ref = refs[2 + n_feat]
        x = x_ref[0]                                       # (H, W, c_)
        feats = [x]
        cur = x
        for kk in cascade_widths:                          # 5,5,5 -> k = 5, 9, 13
            cur = _maxpool_same_value(cur, kk)
            feats.append(cur)
        acc = None
        for f, w_ref in zip(feats, w_refs):
            t = jnp.dot(f.reshape(H * W, f.shape[-1]), w_ref[...],
                        preferred_element_type=jnp.float32)
            acc = t if acc is None else acc + t
        y = acc + b_ref[...]
        o_ref[0] = _silu_f32(y).astype(o_ref.dtype)
    return kernel


def _make_cv6_cv7_kernel(H, W):
    """Fused cv6 (3x3) + concat-free cv7 on [y1, y2]; y1 stays in VMEM."""
    def kernel(y1_ref, y2_ref, w6_ref, b6_ref, w7a_ref, w7b_ref, b7_ref, o_ref):
        ypad = _zero_pad_hw1(y1_ref[0])
        t = _conv3x3_acc_f32(ypad, w6_ref, H, W) + b6_ref[...]
        t = _silu_f32(t).astype(y1_ref.dtype)              # bf16 layer boundary
        acc = jnp.dot(t, w7a_ref[...], preferred_element_type=jnp.float32)
        acc = acc + jnp.dot(y2_ref[0], w7b_ref[...],
                            preferred_element_type=jnp.float32)
        y = acc + b7_ref[...]
        o_ref[0] = _silu_f32(y).astype(o_ref.dtype)
    return kernel


# ---------------------------------------------------------------------------
# pallas_call wrappers
# ---------------------------------------------------------------------------
def _pick_row_tile(P, max_tile=512):
    """Largest divisor of P <= max_tile, multiple of 16, with >= 2 tiles."""
    for cand in range(min(P, max_tile), 15, -1):
        if P % cand == 0 and cand % 16 == 0 and P // cand >= 2:
            return cand
    return P


def _cv1_cv2(xf, w1, b1, w2, b2, out_dtype):
    N, P, Cin = xf.shape
    Cm = w1.shape[1]
    TP = _pick_row_tile(P)
    return pl.pallas_call(
        _cv1_cv2_kernel,
        out_shape=(jax.ShapeDtypeStruct((N, P, Cm), out_dtype),
                   jax.ShapeDtypeStruct((N, P, Cm), out_dtype)),
        grid=(N, P // TP),
        in_specs=[
            pl.BlockSpec((1, TP, Cin), lambda n, p: (n, p, 0)),
            pl.BlockSpec(w1.shape, lambda n, p: (0, 0)),       # resident weights
            pl.BlockSpec((1, Cm), lambda n, p: (0, 0)),
            pl.BlockSpec(w2.shape, lambda n, p: (0, 0)),
            pl.BlockSpec((1, Cm), lambda n, p: (0, 0)),
        ],
        out_specs=(pl.BlockSpec((1, TP, Cm), lambda n, p: (n, p, 0)),
                   pl.BlockSpec((1, TP, Cm), lambda n, p: (n, p, 0))),
        compiler_params=pltpu.CompilerParams(
            dimension_semantics=("parallel", "parallel"),
            vmem_limit_bytes=_VMEM_LIMIT),
    )(xf, w1, b1.reshape(1, Cm), w2, b2.reshape(1, Cm))


def _cv3_cv4(x_nhwc, w3, b3, w4, b4, out_dtype):
    N, H, W, Cin = x_nhwc.shape
    Cm = w4.shape[1]
    P = H * W
    return pl.pallas_call(
        _make_cv3_cv4_kernel(H, W),
        out_shape=jax.ShapeDtypeStruct((N, P, Cm), out_dtype),
        grid=(N,),
        in_specs=[
            pl.BlockSpec((1, H, W, Cin), lambda n: (n, 0, 0, 0)),
            pl.BlockSpec(w3.shape, lambda n: (0, 0, 0)),
            pl.BlockSpec((1, w3.shape[-1]), lambda n: (0, 0)),
            pl.BlockSpec(w4.shape, lambda n: (0, 0)),
            pl.BlockSpec((1, Cm), lambda n: (0, 0)),
        ],
        out_specs=pl.BlockSpec((1, P, Cm), lambda n: (n, 0, 0)),
        compiler_params=pltpu.CompilerParams(
            dimension_semantics=("parallel",),
            vmem_limit_bytes=_VMEM_LIMIT),
    )(x_nhwc, w3, b3.reshape(1, -1), w4, b4.reshape(1, Cm))


def _spp_cv5(x1_nhwc, w_chunks, b, cascade_widths, out_dtype):
    N, H, W, C = x1_nhwc.shape
    Cout = w_chunks[0].shape[1]
    P = H * W
    in_specs = (
        [pl.BlockSpec((1, H, W, C), lambda n: (n, 0, 0, 0))]
        + [pl.BlockSpec((C, Cout), lambda n: (0, 0)) for _ in w_chunks]
        + [pl.BlockSpec((1, Cout), lambda n: (0, 0))])
    return pl.pallas_call(
        _make_spp_cv5_kernel(H, W, cascade_widths),
        out_shape=jax.ShapeDtypeStruct((N, P, Cout), out_dtype),
        grid=(N,),
        in_specs=in_specs,
        out_specs=pl.BlockSpec((1, P, Cout), lambda n: (n, 0, 0)),
        compiler_params=pltpu.CompilerParams(
            dimension_semantics=("parallel",),
            vmem_limit_bytes=_VMEM_LIMIT),
    )(x1_nhwc, *w_chunks, b.reshape(1, Cout))


def _cv6_cv7(y1_nhwc, y2_flat, w6, b6, w7a, w7b, b7, out_dtype):
    N, H, W, Cm = y1_nhwc.shape
    P = H * W
    C2 = w7a.shape[1]
    return pl.pallas_call(
        _make_cv6_cv7_kernel(H, W),
        out_shape=jax.ShapeDtypeStruct((N, P, C2), out_dtype),
        grid=(N,),
        in_specs=[
            pl.BlockSpec((1, H, W, Cm), lambda n: (n, 0, 0, 0)),
            pl.BlockSpec((1, P, Cm), lambda n: (n, 0, 0)),
            pl.BlockSpec(w6.shape, lambda n: (0, 0, 0)),
            pl.BlockSpec((1, Cm), lambda n: (0, 0)),
            pl.BlockSpec(w7a.shape, lambda n: (0, 0)),
            pl.BlockSpec(w7b.shape, lambda n: (0, 0)),
            pl.BlockSpec((1, C2), lambda n: (0, 0)),
        ],
        out_specs=pl.BlockSpec((1, P, C2), lambda n: (n, 0, 0)),
        compiler_params=pltpu.CompilerParams(
            dimension_semantics=("parallel",),
            vmem_limit_bytes=_VMEM_LIMIT),
    )(y1_nhwc, y2_flat, w6, b6.reshape(1, Cm), w7a, w7b, b7.reshape(1, C2))


# ---------------------------------------------------------------------------
# Deterministic parameter initialization (Conv + folded BatchNorm, f32 master)
# ---------------------------------------------------------------------------
def _fold_bn(w, gamma, beta, mean, var, eps=1e-5):
    scale = gamma / jnp.sqrt(var + eps)
    return w * scale, beta - mean * scale


def _init_conv(key, cin, cout, k):
    kw, kg, kb, km, kv = jax.random.split(key, 5)
    fan_in = k * k * cin
    w = jax.random.normal(kw, (k, k, cin, cout), jnp.float32) / np.sqrt(fan_in)
    gamma = jax.random.uniform(kg, (cout,), jnp.float32, 0.8, 1.2)
    beta = jax.random.normal(kb, (cout,), jnp.float32) * 0.05
    mean = jax.random.normal(km, (cout,), jnp.float32) * 0.05
    var = jax.random.uniform(kv, (cout,), jnp.float32, 0.8, 1.2)
    return _fold_bn(w, gamma, beta, mean, var)


def init_sppcspc_params(key, c1, c2, e=0.5):
    c_ = int(2 * c2 * e)
    keys = jax.random.split(key, 7)
    return {
        "cv1": _init_conv(keys[0], c1, c_, 1),
        "cv2": _init_conv(keys[1], c1, c_, 1),
        "cv3": _init_conv(keys[2], c_, c_, 3),
        "cv4": _init_conv(keys[3], c_, c_, 1),
        "cv5": _init_conv(keys[4], 4 * c_, c_, 1),
        "cv6": _init_conv(keys[5], c_, c_, 3),
        "cv7": _init_conv(keys[6], 2 * c_, c2, 1),
    }


# ---------------------------------------------------------------------------
# SPPCSPC forward (Pallas path)
# ---------------------------------------------------------------------------
def sppcspc_forward(x_nchw, params, k=(5, 9, 13), compute_dtype=_COMPUTE_DTYPE):
    assert all(kk % 2 == 1 for kk in k), "pool sizes must be odd"
    radii = [(kk - 1) // 2 for kk in k]
    assert radii == sorted(radii), "pool sizes must be non-decreasing"
    cascade_widths, prev = [], 0
    for r in radii:                                   # SPPF decomposition
        cascade_widths.append(2 * (r - prev) + 1)
        prev = r

    N, _, H, W = x_nchw.shape
    P = H * W
    x = jnp.transpose(x_nchw, (0, 2, 3, 1)).astype(compute_dtype)   # NHWC bf16
    xf = x.reshape(N, P, -1)

    def wb(name):
        w, b = params[name]
        return w.astype(compute_dtype), b.astype(jnp.float32)

    def w1x1(name):
        w, b = wb(name)
        return w.reshape(w.shape[2], w.shape[3]), b           # (Cin, Cout)

    def w3x3(name):
        w, b = wb(name)
        return w.reshape(9, w.shape[2], w.shape[3]), b        # (9, Cin, Cout)

    c_ = params["cv1"][0].shape[-1]

    # K1: cv1 + cv2 (x is read from HBM once)
    w1, b1 = w1x1("cv1")
    w2, b2 = w1x1("cv2")
    x1a, y2 = _cv1_cv2(xf, w1, b1, w2, b2, compute_dtype)     # (N, P, c_) each

    # K2: cv3 (3x3) + cv4 (1x1)
    w3, b3 = w3x3("cv3")
    w4, b4 = w1x1("cv4")
    x1 = _cv3_cv4(x1a.reshape(N, H, W, c_), w3, b3, w4, b4, compute_dtype)

    # K3: SPP cascade + cv5 (row-split weight, concat never materialized)
    w5, b5 = w1x1("cv5")
    n_feat = len(k) + 1
    w5_chunks = [w5[i * c_:(i + 1) * c_] for i in range(n_feat)]
    y1pre = _spp_cv5(x1.reshape(N, H, W, c_), w5_chunks, b5,
                     cascade_widths, compute_dtype)

    # K4: cv6 (3x3) + cv7 (1x1 on [y1, y2], concat-free)
    w6, b6 = w3x3("cv6")
    w7, b7 = w1x1("cv7")
    w7a, w7b = w7[:c_], w7[c_:]
    out = _cv6_cv7(y1pre.reshape(N, H, W, c_), y2, w6, b6, w7a, w7b, b7,
                   jnp.float32)                               # (N, P, c2) f32

    c2 = out.shape[-1]
    return jnp.transpose(out.reshape(N, H, W, c2), (0, 3, 1, 2))    # NCHW


# ---------------------------------------------------------------------------
# Pure-JAX reference (same bf16-at-layer-boundary / f32-accumulate strategy)
# ---------------------------------------------------------------------------
def _ref_conv_silu(x, w, b, pad, compute_dtype, out_dtype=None):
    y = jax.lax.conv_general_dilated(
        x.astype(compute_dtype), w.astype(compute_dtype),
        window_strides=(1, 1), padding=[(pad, pad), (pad, pad)],
        dimension_numbers=("NHWC", "HWIO", "NHWC"),
        preferred_element_type=jnp.float32)
    y = y + b.astype(jnp.float32)
    y = y * jax.nn.sigmoid(y)
    return y.astype(out_dtype or compute_dtype)


def _ref_maxpool(x, k):
    p = k // 2
    return jax.lax.reduce_window(
        x, jnp.array(-jnp.inf, x.dtype), jax.lax.max,
        (1, k, k, 1), (1, 1, 1, 1),
        [(0, 0), (p, p), (p, p), (0, 0)])


def sppcspc_reference(x_nchw, params, k=(5, 9, 13), compute_dtype=_COMPUTE_DTYPE):
    x = jnp.transpose(x_nchw, (0, 2, 3, 1)).astype(compute_dtype)

    def c(t, name, pad, out_dtype=None):
        w, b = params[name]
        return _ref_conv_silu(t, w, b, pad, compute_dtype, out_dtype)

    x1 = c(x, "cv1", 0)
    x1 = c(x1, "cv3", 1)
    x1 = c(x1, "cv4", 0)
    pools = [_ref_maxpool(x1, kk) for kk in k]
    y1 = c(jnp.concatenate([x1] + pools, axis=-1), "cv5", 0)
    y1 = c(y1, "cv6", 1)
    y2 = c(x, "cv2", 0)
    out = c(jnp.concatenate([y1, y2], axis=-1), "cv7", 0, out_dtype=jnp.float32)
    return jnp.transpose(out, (0, 3, 1, 2))


if __name__ == "__main__":
    c1, c2 = 4, 8          # -> c_ = int(2 * c2 * 0.5) = 8
    N, H, W = 2, 16, 16
    key = jax.random.PRNGKey(0)
    kx, kp = jax.random.split(key)
    x = jax.random.normal(kx, (N, c1, H, W), jnp.float32)   # NCHW (PyTorch convention)
    params = init_sppcspc_params(kp, c1, c2)

    out = jax.jit(sppcspc_forward)(x, params)
    out = jax.block_until_ready(out)
    assert out.shape == (N, c2, H, W), out.shape

    ref = jax.block_until_ready(sppcspc_reference(x, params))
    np.testing.assert_allclose(np.asarray(out, np.float32),
                               np.asarray(ref, np.float32),
                               rtol=2e-2, atol=2e-2)

    print("KERNEL_OK")
</pallas_src>

<mosaic_0001>
module attributes {stable_mosaic.version = 11 : i64} {
  func.func @kernel(%arg0: i32, %arg1: memref<1x16x16x8xbf16, #tpu.memory_space<vmem>>, %arg2: memref<8x8xbf16, #tpu.memory_space<vmem>>, %arg3: memref<8x8xbf16, #tpu.memory_space<vmem>>, %arg4: memref<8x8xbf16, #tpu.memory_space<vmem>>, %arg5: memref<8x8xbf16, #tpu.memory_space<vmem>>, %arg6: memref<1x8xf32, #tpu.memory_space<vmem>>, %arg7: memref<1x256x8xbf16, #tpu.memory_space<vmem>>) attributes {dimension_semantics = [#tpu.dimension_semantics<parallel>], iteration_bounds = array<i64: 2>, scalar_prefetch = 0 : i64, scratch_operands = 0 : i64, tpu.core_type = #tpu.core_type<tc>, window_params = [{transform_indices = @transform_0, window_bounds = array<i64: 1, 16, 16, 8>}, {pipeline_mode = #tpu.pipeline_mode<synchronous>, transform_indices = @transform_1, window_bounds = array<i64: 8, 8>}, {pipeline_mode = #tpu.pipeline_mode<synchronous>, transform_indices = @transform_2, window_bounds = array<i64: 8, 8>}, {pipeline_mode = #tpu.pipeline_mode<synchronous>, transform_indices = @transform_3, window_bounds = array<i64: 8, 8>}, {pipeline_mode = #tpu.pipeline_mode<synchronous>, transform_indices = @transform_4, window_bounds = array<i64: 8, 8>}, {pipeline_mode = #tpu.pipeline_mode<synchronous>, transform_indices = @transform_5, window_bounds = array<i64: 1, 8>}, {transform_indices = @transform_6, window_bounds = array<i64: 1, 256, 8>}]} {
    %c0 = arith.constant 0 : index
    %c0_0 = arith.constant 0 : index
    %c0_1 = arith.constant 0 : index
    %c0_2 = arith.constant 0 : index
    %0 = vector.load %arg1[%c0, %c0_0, %c0_1, %c0_2] : memref<1x16x16x8xbf16, #tpu.memory_space<vmem>>, vector<1x16x16x8xbf16>
    %1 = vector.shape_cast %0 : vector<1x16x16x8xbf16> to vector<16x16x8xbf16>
    %cst = arith.constant 0xFF80 : bf16
    %2 = vector.broadcast %cst : bf16 to vector<2x16x8xbf16>
    %3 = tpu.concatenate %2, %1, %2 in 0 : vector<2x16x8xbf16>, vector<16x16x8xbf16>, vector<2x16x8xbf16> -> vector<20x16x8xbf16>
    %4 = vector.extract_strided_slice %3 {offsets = [0, 0, 0], sizes = [16, 16, 8], strides = [1, 1, 1]} : vector<20x16x8xbf16> to vector<16x16x8xbf16>
    %5 = vector.extract_strided_slice %3 {offsets = [1, 0, 0], sizes = [16, 16, 8], strides = [1, 1, 1]} : vector<20x16x8xbf16> to vector<16x16x8xbf16>
    %6 = arith.maximumf %4, %5 : vector<16x16x8xbf16>
    %7 = vector.extract_strided_slice %3 {offsets = [2, 0, 0], sizes = [16, 16, 8], strides = [1, 1, 1]} : vector<20x16x8xbf16> to vector<16x16x8xbf16>
    %8 = arith.maximumf %6, %7 : vector<16x16x8xbf16>
    %9 = vector.extract_strided_slice %3 {offsets = [3, 0, 0], sizes = [16, 16, 8], strides = [1, 1, 1]} : vector<20x16x8xbf16> to vector<16x16x8xbf16>
    %10 = arith.maximumf %8, %9 : vector<16x16x8xbf16>
    %11 = vector.extract_strided_slice %3 {offsets = [4, 0, 0], sizes = [16, 16, 8], strides = [1, 1, 1]} : vector<20x16x8xbf16> to vector<16x16x8xbf16>
    %12 = arith.maximumf %10, %11 : vector<16x16x8xbf16>
    %cst_3 = arith.constant 0xFF80 : bf16
    %13 = vector.broadcast %cst_3 : bf16 to vector<16x2x8xbf16>
    %14 = tpu.concatenate %13, %12, %13 in 1 : vector<16x2x8xbf16>, vector<16x16x8xbf16>, vector<16x2x8xbf16> -> vector<16x20x8xbf16>
    %15 = vector.extract_strided_slice %14 {offsets = [0, 0, 0], sizes = [16, 16, 8], strides = [1, 1, 1]} : vector<16x20x8xbf16> to vector<16x16x8xbf16>
    %16 = vector.extract_strided_slice %14 {offsets = [0, 1, 0], sizes = [16, 16, 8], strides = [1, 1, 1]} : vector<16x20x8xbf16> to vector<16x16x8xbf16>
    %17 = arith.maximumf %15, %16 : vector<16x16x8xbf16>
    %18 = vector.extract_strided_slice %14 {offsets = [0, 2, 0], sizes = [16, 16, 8], strides = [1, 1, 1]} : vector<16x20x8xbf16> to vector<16x16x8xbf16>
    %19 = arith.maximumf %17, %18 : vector<16x16x8xbf16>
    %20 = vector.extract_strided_slice %14 {offsets = [0, 3, 0], sizes = [16, 16, 8], strides = [1, 1, 1]} : vector<16x20x8xbf16> to vector<16x16x8xbf16>
    %21 = arith.maximumf %19, %20 : vector<16x16x8xbf16>
    %22 = vector.extract_strided_slice %14 {offsets = [0, 4, 0], sizes = [16, 16, 8], strides = [1, 1, 1]} : vector<16x20x8xbf16> to vector<16x16x8xbf16>
    %23 = arith.maximumf %21, %22 : vector<16x16x8xbf16>
    %cst_4 = arith.constant 0xFF80 : bf16
    %24 = vector.broadcast %cst_4 : bf16 to vector<2x16x8xbf16>
    %25 = tpu.concatenate %24, %23, %24 in 0 : vector<2x16x8xbf16>, vector<16x16x8xbf16>, vector<2x16x8xbf16> -> vector<20x16x8xbf16>
    %26 = vector.extract_strided_slice %25 {offsets = [0, 0, 0], sizes = [16, 16, 8], strides = [1, 1, 1]} : vector<20x16x8xbf16> to vector<16x16x8xbf16>
    %27 = vector.extract_strided_slice %25 {offsets = [1, 0, 0], sizes = [16, 16, 8], strides = [1, 1, 1]} : vector<20x16x8xbf16> to vector<16x16x8xbf16>
    %28 = arith.maximumf %26, %27 : vector<16x16x8xbf16>
    %29 = vector.extract_strided_slice %25 {offsets = [2, 0, 0], sizes = [16, 16, 8], strides = [1, 1, 1]} : vector<20x16x8xbf16> to vector<16x16x8xbf16>
    %30 = arith.maximumf %28, %29 : vector<16x16x8xbf16>
    %31 = vector.extract_strided_slice %25 {offsets = [3, 0, 0], sizes = [16, 16, 8], strides = [1, 1, 1]} : vector<20x16x8xbf16> to vector<16x16x8xbf16>
    %32 = arith.maximumf %30, %31 : vector<16x16x8xbf16>
    %33 = vector.extract_strided_slice %25 {offsets = [4, 0, 0], sizes = [16, 16, 8], strides = [1, 1, 1]} : vector<20x16x8xbf16> to vector<16x16x8xbf16>
    %34 = arith.maximumf %32, %33 : vector<16x16x8xbf16>
    %cst_5 = arith.constant 0xFF80 : bf16
    %35 = vector.broadcast %cst_5 : bf16 to vector<16x2x8xbf16>
    %36 = tpu.concatenate %35, %34, %35 in 1 : vector<16x2x8xbf16>, vector<16x16x8xbf16>, vector<16x2x8xbf16> -> vector<16x20x8xbf16>
    %37 = vector.extract_strided_slice %36 {offsets = [0, 0, 0], sizes = [16, 16, 8], strides = [1, 1, 1]} : vector<16x20x8xbf16> to vector<16x16x8xbf16>
    %38 = vector.extract_strided_slice %36 {offsets = [0, 1, 0], sizes = [16, 16, 8], strides = [1, 1, 1]} : vector<16x20x8xbf16> to vector<16x16x8xbf16>
    %39 = arith.maximumf %37, %38 : vector<16x16x8xbf16>
    %40 = vector.extract_strided_slice %36 {offsets = [0, 2, 0], sizes = [16, 16, 8], strides = [1, 1, 1]} : vector<16x20x8xbf16> to vector<16x16x8xbf16>
    %41 = arith.maximumf %39, %40 : vector<16x16x8xbf16>
    %42 = vector.extract_strided_slice %36 {offsets = [0, 3, 0], sizes = [16, 16, 8], strides = [1, 1, 1]} : vector<16x20x8xbf16> to vector<16x16x8xbf16>
    %43 = arith.maximumf %41, %42 : vector<16x16x8xbf16>
    %44 = vector.extract_strided_slice %36 {offsets = [0, 4, 0], sizes = [16, 16, 8], strides = [1, 1, 1]} : vector<16x20x8xbf16> to vector<16x16x8xbf16>
    %45 = arith.maximumf %43, %44 : vector<16x16x8xbf16>
    %cst_6 = arith.constant 0xFF80 : bf16
    %46 = vector.broadcast %cst_6 : bf16 to vector<2x16x8xbf16>
    %47 = tpu.concatenate %46, %45, %46 in 0 : vector<2x16x8xbf16>, vector<16x16x8xbf16>, vector<2x16x8xbf16> -> vector<20x16x8xbf16>
    %48 = vector.extract_strided_slice %47 {offsets = [0, 0, 0], sizes = [16, 16, 8], strides = [1, 1, 1]} : vector<20x16x8xbf16> to vector<16x16x8xbf16>
    %49 = vector.extract_strided_slice %47 {offsets = [1, 0, 0], sizes = [16, 16, 8], strides = [1, 1, 1]} : vector<20x16x8xbf16> to vector<16x16x8xbf16>
    %50 = arith.maximumf %48, %49 : vector<16x16x8xbf16>
    %51 = vector.extract_strided_slice %47 {offsets = [2, 0, 0], sizes = [16, 16, 8], strides = [1, 1, 1]} : vector<20x16x8xbf16> to vector<16x16x8xbf16>
    %52 = arith.maximumf %50, %51 : vector<16x16x8xbf16>
    %53 = vector.extract_strided_slice %47 {offsets = [3, 0, 0], sizes = [16, 16, 8], strides = [1, 1, 1]} : vector<20x16x8xbf16> to vector<16x16x8xbf16>
    %54 = arith.maximumf %52, %53 : vector<16x16x8xbf16>
    %55 = vector.extract_strided_slice %47 {offsets = [4, 0, 0], sizes = [16, 16, 8], strides = [1, 1, 1]} : vector<20x16x8xbf16> to vector<16x16x8xbf16>
    %56 = arith.maximumf %54, %55 : vector<16x16x8xbf16>
    %cst_7 = arith.constant 0xFF80 : bf16
    %57 = vector.broadcast %cst_7 : bf16 to vector<16x2x8xbf16>
    %58 = tpu.concatenate %57, %56, %57 in 1 : vector<16x2x8xbf16>, vector<16x16x8xbf16>, vector<16x2x8xbf16> -> vector<16x20x8xbf16>
    %59 = vector.extract_strided_slice %58 {offsets = [0, 0, 0], sizes = [16, 16, 8], strides = [1, 1, 1]} : vector<16x20x8xbf16> to vector<16x16x8xbf16>
    %60 = vector.extract_strided_slice %58 {offsets = [0, 1, 0], sizes = [16, 16, 8], strides = [1, 1, 1]} : vector<16x20x8xbf16> to vector<16x16x8xbf16>
    %61 = arith.maximumf %59, %60 : vector<16x16x8xbf16>
    %62 = vector.extract_strided_slice %58 {offsets = [0, 2, 0], sizes = [16, 16, 8], strides = [1, 1, 1]} : vector<16x20x8xbf16> to vector<16x16x8xbf16>
    %63 = arith.maximumf %61, %62 : vector<16x16x8xbf16>
    %64 = vector.extract_strided_slice %58 {offsets = [0, 3, 0], sizes = [16, 16, 8], strides = [1, 1, 1]} : vector<16x20x8xbf16> to vector<16x16x8xbf16>
    %65 = arith.maximumf %63, %64 : vector<16x16x8xbf16>
    %66 = vector.extract_strided_slice %58 {offsets = [0, 4, 0], sizes = [16, 16, 8], strides = [1, 1, 1]} : vector<16x20x8xbf16> to vector<16x16x8xbf16>
    %67 = arith.maximumf %65, %66 : vector<16x16x8xbf16>
    %68 = vector.shape_cast %1 : vector<16x16x8xbf16> to vector<256x8xbf16>
    %c0_8 = arith.constant 0 : index
    %c0_9 = arith.constant 0 : index
    %69 = vector.load %arg2[%c0_8, %c0_9] : memref<8x8xbf16, #tpu.memory_space<vmem>>, vector<8x8xbf16>
    %cst_10 = arith.constant dense<0.000000e+00> : vector<256x8xf32>
    %70 = tpu.matmul %68, %69, %cst_10 {dimension_numbers = #tpu.dot_dimension_numbers<[1], [0], [0], [1], [0, 0, 1, 1], [], []>} : vector<256x8xbf16>, vector<8x8xbf16>, vector<256x8xf32> -> vector<256x8xf32>
    %71 = vector.shape_cast %23 : vector<16x16x8xbf16> to vector<256x8xbf16>
    %c0_11 = arith.constant 0 : index
    %c0_12 = arith.constant 0 : index
    %72 = vector.load %arg3[%c0_11, %c0_12] : memref<8x8xbf16, #tpu.memory_space<vmem>>, vector<8x8xbf16>
    %cst_13 = arith.constant dense<0.000000e+00> : vector<256x8xf32>
    %73 = tpu.matmul %71, %72, %cst_13 {dimension_numbers = #tpu.dot_dimension_numbers<[1], [0], [0], [1], [0, 0, 1, 1], [], []>} : vector<256x8xbf16>, vector<8x8xbf16>, vector<256x8xf32> -> vector<256x8xf32>
    %74 = arith.addf %70, %73 : vector<256x8xf32>
    %75 = vector.shape_cast %45 : vector<16x16x8xbf16> to vector<256x8xbf16>
    %c0_14 = arith.constant 0 : index
    %c0_15 = arith.constant 0 : index
    %76 = vector.load %arg4[%c0_14, %c0_15] : memref<8x8xbf16, #tpu.memory_space<vmem>>, vector<8x8xbf16>
    %cst_16 = arith.constant dense<0.000000e+00> : vector<256x8xf32>
    %77 = tpu.matmul %75, %76, %cst_16 {dimension_numbers = #tpu.dot_dimension_numbers<[1], [0], [0], [1], [0, 0, 1, 1], [], []>} : vector<256x8xbf16>, vector<8x8xbf16>, vector<256x8xf32> -> vector<256x8xf32>
    %78 = arith.addf %74, %77 : vector<256x8xf32>
    %79 = vector.shape_cast %67 : vector<16x16x8xbf16> to vector<256x8xbf16>
    %c0_17 = arith.constant 0 : index
    %c0_18 = arith.constant 0 : index
    %80 = vector.load %arg5[%c0_17, %c0_18] : memref<8x8xbf16, #tpu.memory_space<vmem>>, vector<8x8xbf16>
    %cst_19 = arith.constant dense<0.000000e+00> : vector<256x8xf32>
    %81 = tpu.matmul %79, %80, %cst_19 {dimension_numbers = #tpu.dot_dimension_numbers<[1], [0], [0], [1], [0, 0, 1, 1], [], []>} : vector<256x8xbf16>, vector<8x8xbf16>, vector<256x8xf32> -> vector<256x8xf32>
    %82 = arith.addf %78, %81 : vector<256x8xf32>
    %c0_20 = arith.constant 0 : index
    %c0_21 = arith.constant 0 : index
    %83 = vector.load %arg6[%c0_20, %c0_21] : memref<1x8xf32, #tpu.memory_space<vmem>>, vector<1x8xf32>
    %84 = vector.broadcast %83 : vector<1x8xf32> to vector<256x8xf32>
    %85 = arith.addf %82, %84 : vector<256x8xf32>
    %86 = arith.negf %85 : vector<256x8xf32>
    %87 = math.exp %86 : vector<256x8xf32>
    %cst_22 = arith.constant 1.000000e+00 : f32
    %88 = vector.broadcast %cst_22 : f32 to vector<256x8xf32>
    %89 = arith.addf %88, %87 : vector<256x8xf32>
    %90 = arith.divf %88, %89 : vector<256x8xf32>
    %91 = arith.mulf %85, %90 : vector<256x8xf32>
    %92 = arith.truncf %91 : vector<256x8xf32> to vector<256x8xbf16>
    %c0_23 = arith.constant 0 : index
    %c0_24 = arith.constant 0 : index
    %c0_25 = arith.constant 0 : index
    %93 = vector.load %arg7[%c0_23, %c0_24, %c0_25] : memref<1x256x8xbf16, #tpu.memory_space<vmem>>, vector<1x256x8xbf16>
    %94 = vector.shape_cast %93 : vector<1x256x8xbf16> to vector<256x8xbf16>
    %95 = vector.shape_cast %92 : vector<256x8xbf16> to vector<1x256x8xbf16>
    tpu.vector_store %arg7[%c0_23, %c0_24, %c0_25], %95 {strides = array<i32>} : memref<1x256x8xbf16, #tpu.memory_space<vmem>>, vector<1x256x8xbf16>,
    return
  }
  func.func @transform_0(%arg0: i32) -> (i32, i32, i32, i32) {
    %c0_i32 = arith.constant 0 : i32
    %c0_i32_0 = arith.constant 0 : i32
    %c0_i32_1 = arith.constant 0 : i32
    %c0_i32_2 = arith.constant 0 : i32
    return %arg0, %c0_i32, %c0_i32_0, %c0_i32_1 : i32, i32, i32, i32
  }
  func.func @transform_1(%arg0: i32) -> (i32, i32) {
    %c0_i32 = arith.constant 0 : i32
    %c0_i32_0 = arith.constant 0 : i32
    %c0_i32_1 = arith.constant 0 : i32
    return %c0_i32, %c0_i32_0 : i32, i32
  }
  func.func @transform_2(%arg0: i32) -> (i32, i32) {
    %c0_i32 = arith.constant 0 : i32
    %c0_i32_0 = arith.constant 0 : i32
    %c0_i32_1 = arith.constant 0 : i32
    return %c0_i32, %c0_i32_0 : i32, i32
  }
  func.func @transform_3(%arg0: i32) -> (i32, i32) {
    %c0_i32 = arith.constant 0 : i32
    %c0_i32_0 = arith.constant 0 : i32
    %c0_i32_1 = arith.constant 0 : i32
    return %c0_i32, %c0_i32_0 : i32, i32
  }
  func.func @transform_4(%arg0: i32) -> (i32, i32) {
    %c0_i32 = arith.constant 0 : i32
    %c0_i32_0 = arith.constant 0 : i32
    %c0_i32_1 = arith.constant 0 : i32
    return %c0_i32, %c0_i32_0 : i32, i32
  }
  func.func @transform_5(%arg0: i32) -> (i32, i32) {
    %c0_i32 = arith.constant 0 : i32
    %c0_i32_0 = arith.constant 0 : i32
    %c0_i32_1 = arith.constant 0 : i32
    return %c0_i32, %c0_i32_0 : i32, i32
  }
  func.func @transform_6(%arg0: i32) -> (i32, i32, i32) {
    %c0_i32 = arith.constant 0 : i32
    %c0_i32_0 = arith.constant 0 : i32
    %c0_i32_1 = arith.constant 0 : i32
    return %arg0, %c0_i32, %c0_i32_0 : i32, i32, i32
  }
}

module attributes {stable_mosaic.version = 11 : i64} {
  func.func @_cv1_cv2_kernel(%arg0: i32, %arg1: i32, %arg2: memref<1x128x4xbf16, #tpu.memory_space<vmem>>, %arg3: memref<4x8xbf16, #tpu.memory_space<vmem>>, %arg4: memref<1x8xf32, #tpu.memory_space<vmem>>, %arg5: memref<4x8xbf16, #tpu.memory_space<vmem>>, %arg6: memref<1x8xf32, #tpu.memory_space<vmem>>, %arg7: memref<1x128x8xbf16, #tpu.memory_space<vmem>>, %arg8: memref<1x128x8xbf16, #tpu.memory_space<vmem>>) attributes {dimension_semantics = [#tpu.dimension_semantics<parallel>, #tpu.dimension_semantics<parallel>], iteration_bounds = array<i64: 2, 2>, scalar_prefetch = 0 : i64, scratch_operands = 0 : i64, tpu.core_type = #tpu.core_type<tc>, window_params = [{transform_indices = @transform_0, window_bounds = array<i64: 1, 128, 4>}, {pipeline_mode = #tpu.pipeline_mode<synchronous>, transform_indices = @transform_1, window_bounds = array<i64: 4, 8>}, {pipeline_mode = #tpu.pipeline_mode<synchronous>, transform_indices = @transform_2, window_bounds = array<i64: 1, 8>}, {pipeline_mode = #tpu.pipeline_mode<synchronous>, transform_indices = @transform_3, window_bounds = array<i64: 4, 8>}, {pipeline_mode = #tpu.pipeline_mode<synchronous>, transform_indices = @transform_4, window_bounds = array<i64: 1, 8>}, {transform_indices = @transform_5, window_bounds = array<i64: 1, 128, 8>}, {transform_indices = @transform_6, window_bounds = array<i64: 1, 128, 8>}]} {
    %c0 = arith.constant 0 : index
    %c0_0 = arith.constant 0 : index
    %c0_1 = arith.constant 0 : index
    %0 = vector.load %arg2[%c0, %c0_0, %c0_1] : memref<1x128x4xbf16, #tpu.memory_space<vmem>>, vector<1x128x4xbf16>
    %1 = vector.shape_cast %0 : vector<1x128x4xbf16> to vector<128x4xbf16>
    %c0_2 = arith.constant 0 : index
    %c0_3 = arith.constant 0 : index
    %2 = vector.load %arg3[%c0_2, %c0_3] : memref<4x8xbf16, #tpu.memory_space<vmem>>, vector<4x8xbf16>
    %cst = arith.constant dense<0.000000e+00> : vector<128x8xf32>
    %3 = tpu.matmul %1, %2, %cst {dimension_numbers = #tpu.dot_dimension_numbers<[1], [0], [0], [1], [0, 0, 1, 1], [], []>} : vector<128x4xbf16>, vector<4x8xbf16>, vector<128x8xf32> -> vector<128x8xf32>
    %c0_4 = arith.constant 0 : index
    %c0_5 = arith.constant 0 : index
    %4 = vector.load %arg4[%c0_4, %c0_5] : memref<1x8xf32, #tpu.memory_space<vmem>>, vector<1x8xf32>
    %5 = vector.broadcast %4 : vector<1x8xf32> to vector<128x8xf32>
    %6 = arith.addf %3, %5 : vector<128x8xf32>
    %7 = arith.negf %6 : vector<128x8xf32>
    %8 = math.exp %7 : vector<128x8xf32>
    %cst_6 = arith.constant 1.000000e+00 : f32
    %9 = vector.broadcast %cst_6 : f32 to vector<128x8xf32>
    %10 = arith.addf %9, %8 : vector<128x8xf32>
    %11 = arith.divf %9, %10 : vector<128x8xf32>
    %12 = arith.mulf %6, %11 : vector<128x8xf32>
    %13 = arith.truncf %12 : vector<128x8xf32> to vector<128x8xbf16>
    %c0_7 = arith.constant 0 : index
    %c0_8 = arith.constant 0 : index
    %c0_9 = arith.constant 0 : index
    %14 = vector.load %arg7[%c0_7, %c0_8, %c0_9] : memref<1x128x8xbf16, #tpu.memory_space<vmem>>, vector<1x128x8xbf16>
    %15 = vector.shape_cast %14 : vector<1x128x8xbf16> to vector<128x8xbf16>
    %16 = vector.shape_cast %13 : vector<128x8xbf16> to vector<1x128x8xbf16>
    tpu.vector_store %arg7[%c0_7, %c0_8, %c0_9], %16 {strides = array<i32>} : memref<1x128x8xbf16, #tpu.memory_space<vmem>>, vector<1x128x8xbf16>,
    %c0_10 = arith.constant 0 : index
    %c0_11 = arith.constant 0 : index
    %17 = vector.load %arg5[%c0_10, %c0_11] : memref<4x8xbf16, #tpu.memory_space<vmem>>, vector<4x8xbf16>
    %cst_12 = arith.constant dense<0.000000e+00> : vector<128x8xf32>
    %18 = tpu.matmul %1, %17, %cst_12 {dimension_numbers = #tpu.dot_dimension_numbers<[1], [0], [0], [1], [0, 0, 1, 1], [], []>} : vector<128x4xbf16>, vector<4x8xbf16>, vector<128x8xf32> -> vector<128x8xf32>
    %c0_13 = arith.constant 0 : index
    %c0_14 = arith.constant 0 : index
    %19 = vector.load %arg6[%c0_13, %c0_14] : memref<1x8xf32, #tpu.memory_space<vmem>>, vector<1x8xf32>
    %20 = vector.broadcast %19 : vector<1x8xf32> to vector<128x8xf32>
    %21 = arith.addf %18, %20 : vector<128x8xf32>
    %22 = arith.negf %21 : vector<128x8xf32>
    %23 = math.exp %22 : vector<128x8xf32>
    %cst_15 = arith.constant 1.000000e+00 : f32
    %24 = vector.broadcast %cst_15 : f32 to vector<128x8xf32>
    %25 = arith.addf %24, %23 : vector<128x8xf32>
    %26 = arith.divf %24, %25 : vector<128x8xf32>
    %27 = arith.mulf %21, %26 : vector<128x8xf32>
    %28 = arith.truncf %27 : vector<128x8xf32> to vector<128x8xbf16>
    %c0_16 = arith.constant 0 : index
    %c0_17 = arith.constant 0 : index
    %c0_18 = arith.constant 0 : index
    %29 = vector.load %arg8[%c0_16, %c0_17, %c0_18] : memref<1x128x8xbf16, #tpu.memory_space<vmem>>, vector<1x128x8xbf16>
    %30 = vector.shape_cast %29 : vector<1x128x8xbf16> to vector<128x8xbf16>
    %31 = vector.shape_cast %28 : vector<128x8xbf16> to vector<1x128x8xbf16>
    tpu.vector_store %arg8[%c0_16, %c0_17, %c0_18], %31 {strides = array<i32>} : memref<1x128x8xbf16, #tpu.memory_space<vmem>>, vector<1x128x8xbf16>,
    return
  }
  func.func @transform_0(%arg0: i32, %arg1: i32) -> (i32, i32, i32) {
    %c0_i32 = arith.constant 0 : i32
    %c0_i32_0 = arith.constant 0 : i32
    return %arg0, %arg1, %c0_i32 : i32, i32, i32
  }
  func.func @transform_1(%arg0: i32, %arg1: i32) -> (i32, i32) {
    %c0_i32 = arith.constant 0 : i32
    %c0_i32_0 = arith.constant 0 : i32
    %c0_i32_1 = arith.constant 0 : i32
    return %c0_i32, %c0_i32_0 : i32, i32
  }
  func.func @transform_2(%arg0: i32, %arg1: i32) -> (i32, i32) {
    %c0_i32 = arith.constant 0 : i32
    %c0_i32_0 = arith.constant 0 : i32
    %c0_i32_1 = arith.constant 0 : i32
    return %c0_i32, %c0_i32_0 : i32, i32
  }
  func.func @transform_3(%arg0: i32, %arg1: i32) -> (i32, i32) {
    %c0_i32 = arith.constant 0 : i32
    %c0_i32_0 = arith.constant 0 : i32
    %c0_i32_1 = arith.constant 0 : i32
    return %c0_i32, %c0_i32_0 : i32, i32
  }
  func.func @transform_4(%arg0: i32, %arg1: i32) -> (i32, i32) {
    %c0_i32 = arith.constant 0 : i32
    %c0_i32_0 = arith.constant 0 : i32
    %c0_i32_1 = arith.constant 0 : i32
    return %c0_i32, %c0_i32_0 : i32, i32
  }
  func.func @transform_5(%arg0: i32, %arg1: i32) -> (i32, i32, i32) {
    %c0_i32 = arith.constant 0 : i32
    %c0_i32_0 = arith.constant 0 : i32
    return %arg0, %arg1, %c0_i32 : i32, i32, i32
  }
  func.func @transform_6(%arg0: i32, %arg1: i32) -> (i32, i32, i32) {
    %c0_i32 = arith.constant 0 : i32
    %c0_i32_0 = arith.constant 0 : i32
    return %arg0, %arg1, %c0_i32 : i32, i32, i32
  }
}

module attributes {stable_mosaic.version = 11 : i64} {
  func.func @kernel(%arg0: i32, %arg1: memref<1x16x16x8xbf16, #tpu.memory_space<vmem>>, %arg2: memref<9x8x8xbf16, #tpu.memory_space<vmem>>, %arg3: memref<1x8xf32, #tpu.memory_space<vmem>>, %arg4: memref<8x8xbf16, #tpu.memory_space<vmem>>, %arg5: memref<1x8xf32, #tpu.memory_space<vmem>>, %arg6: memref<1x256x8xbf16, #tpu.memory_space<vmem>>) attributes {dimension_semantics = [#tpu.dimension_semantics<parallel>], iteration_bounds = array<i64: 2>, scalar_prefetch = 0 : i64, scratch_operands = 0 : i64, tpu.core_type = #tpu.core_type<tc>, window_params = [{transform_indices = @transform_0, window_bounds = array<i64: 1, 16, 16, 8>}, {pipeline_mode = #tpu.pipeline_mode<synchronous>, transform_indices = @transform_1, window_bounds = array<i64: 9, 8, 8>}, {pipeline_mode = #tpu.pipeline_mode<synchronous>, transform_indices = @transform_2, window_bounds = array<i64: 1, 8>}, {pipeline_mode = #tpu.pipeline_mode<synchronous>, transform_indices = @transform_3, window_bounds = array<i64: 8, 8>}, {pipeline_mode = #tpu.pipeline_mode<synchronous>, transform_indices = @transform_4, window_bounds = array<i64: 1, 8>}, {transform_indices = @transform_5, window_bounds = array<i64: 1, 256, 8>}]} {
    %c0 = arith.constant 0 : index
    %c0_0 = arith.constant 0 : index
    %c0_1 = arith.constant 0 : index
    %c0_2 = arith.constant 0 : index
    %0 = vector.load %arg1[%c0, %c0_0, %c0_1, %c0_2] : memref<1x16x16x8xbf16, #tpu.memory_space<vmem>>, vector<1x16x16x8xbf16>
    %1 = vector.shape_cast %0 : vector<1x16x16x8xbf16> to vector<16x16x8xbf16>
    %cst = arith.constant 0.000000e+00 : bf16
    %2 = vector.broadcast %cst : bf16 to vector<1x16x8xbf16>
    %3 = tpu.concatenate %2, %1, %2 in 0 : vector<1x16x8xbf16>, vector<16x16x8xbf16>, vector<1x16x8xbf16> -> vector<18x16x8xbf16>
    %cst_3 = arith.constant 0.000000e+00 : bf16
    %4 = vector.broadcast %cst_3 : bf16 to vector<18x1x8xbf16>
    %5 = tpu.concatenate %4, %3, %4 in 1 : vector<18x1x8xbf16>, vector<18x16x8xbf16>, vector<18x1x8xbf16> -> vector<18x18x8xbf16>
    %6 = vector.extract_strided_slice %5 {offsets = [0, 0, 0], sizes = [16, 16, 8], strides = [1, 1, 1]} : vector<18x18x8xbf16> to vector<16x16x8xbf16>
    %7 = vector.shape_cast %6 : vector<16x16x8xbf16> to vector<256x8xbf16>
    %c0_4 = arith.constant 0 : index
    %c0_5 = arith.constant 0 : index
    %c0_6 = arith.constant 0 : index
    %8 = vector.load %arg2[%c0_4, %c0_5, %c0_6] : memref<9x8x8xbf16, #tpu.memory_space<vmem>>, vector<1x8x8xbf16>
    %9 = vector.shape_cast %8 : vector<1x8x8xbf16> to vector<8x8xbf16>
    %cst_7 = arith.constant dense<0.000000e+00> : vector<256x8xf32>
    %10 = tpu.matmul %7, %9, %cst_7 {dimension_numbers = #tpu.dot_dimension_numbers<[1], [0], [0], [1], [0, 0, 1, 1], [], []>} : vector<256x8xbf16>, vector<8x8xbf16>, vector<256x8xf32> -> vector<256x8xf32>
    %11 = vector.extract_strided_slice %5 {offsets = [0, 1, 0], sizes = [16, 16, 8], strides = [1, 1, 1]} : vector<18x18x8xbf16> to vector<16x16x8xbf16>
    %12 = vector.shape_cast %11 : vector<16x16x8xbf16> to vector<256x8xbf16>
    %c1 = arith.constant 1 : index
    %c0_8 = arith.constant 0 : index
    %c0_9 = arith.constant 0 : index
    %13 = vector.load %arg2[%c1, %c0_8, %c0_9] : memref<9x8x8xbf16, #tpu.memory_space<vmem>>, vector<1x8x8xbf16>
    %14 = vector.shape_cast %13 : vector<1x8x8xbf16> to vector<8x8xbf16>
    %cst_10 = arith.constant dense<0.000000e+00> : vector<256x8xf32>
    %15 = tpu.matmul %12, %14, %cst_10 {dimension_numbers = #tpu.dot_dimension_numbers<[1], [0], [0], [1], [0, 0, 1, 1], [], []>} : vector<256x8xbf16>, vector<8x8xbf16>, vector<256x8xf32> -> vector<256x8xf32>
    %16 = arith.addf %10, %15 : vector<256x8xf32>
    %17 = vector.extract_strided_slice %5 {offsets = [0, 2, 0], sizes = [16, 16, 8], strides = [1, 1, 1]} : vector<18x18x8xbf16> to vector<16x16x8xbf16>
    %18 = vector.shape_cast %17 : vector<16x16x8xbf16> to vector<256x8xbf16>
    %c2 = arith.constant 2 : index
    %c0_11 = arith.constant 0 : index
    %c0_12 = arith.constant 0 : index
    %19 = vector.load %arg2[%c2, %c0_11, %c0_12] : memref<9x8x8xbf16, #tpu.memory_space<vmem>>, vector<1x8x8xbf16>
    %20 = vector.shape_cast %19 : vector<1x8x8xbf16> to vector<8x8xbf16>
    %cst_13 = arith.constant dense<0.000000e+00> : vector<256x8xf32>
    %21 = tpu.matmul %18, %20, %cst_13 {dimension_numbers = #tpu.dot_dimension_numbers<[1], [0], [0], [1], [0, 0, 1, 1], [], []>} : vector<256x8xbf16>, vector<8x8xbf16>, vector<256x8xf32> -> vector<256x8xf32>
    %22 = arith.addf %16, %21 : vector<256x8xf32>
    %23 = vector.extract_strided_slice %5 {offsets = [1, 0, 0], sizes = [16, 16, 8], strides = [1, 1, 1]} : vector<18x18x8xbf16> to vector<16x16x8xbf16>
    %24 = vector.shape_cast %23 : vector<16x16x8xbf16> to vector<256x8xbf16>
    %c3 = arith.constant 3 : index
    %c0_14 = arith.constant 0 : index
    %c0_15 = arith.constant 0 : index
    %25 = vector.load %arg2[%c3, %c0_14, %c0_15] : memref<9x8x8xbf16, #tpu.memory_space<vmem>>, vector<1x8x8xbf16>
    %26 = vector.shape_cast %25 : vector<1x8x8xbf16> to vector<8x8xbf16>
    %cst_16 = arith.constant dense<0.000000e+00> : vector<256x8xf32>
    %27 = tpu.matmul %24, %26, %cst_16 {dimension_numbers = #tpu.dot_dimension_numbers<[1], [0], [0], [1], [0, 0, 1, 1], [], []>} : vector<256x8xbf16>, vector<8x8xbf16>, vector<256x8xf32> -> vector<256x8xf32>
    %28 = arith.addf %22, %27 : vector<256x8xf32>
    %29 = vector.extract_strided_slice %5 {offsets = [1, 1, 0], sizes = [16, 16, 8], strides = [1, 1, 1]} : vector<18x18x8xbf16> to vector<16x16x8xbf16>
    %30 = vector.shape_cast %29 : vector<16x16x8xbf16> to vector<256x8xbf16>
    %c4 = arith.constant 4 : index
    %c0_17 = arith.constant 0 : index
    %c0_18 = arith.constant 0 : index
    %31 = vector.load %arg2[%c4, %c0_17, %c0_18] : memref<9x8x8xbf16, #tpu.memory_space<vmem>>, vector<1x8x8xbf16>
    %32 = vector.shape_cast %31 : vector<1x8x8xbf16> to vector<8x8xbf16>
    %cst_19 = arith.constant dense<0.000000e+00> : vector<256x8xf32>
    %33 = tpu.matmul %30, %32, %cst_19 {dimension_numbers = #tpu.dot_dimension_numbers<[1], [0], [0], [1], [0, 0, 1, 1], [], []>} : vector<256x8xbf16>, vector<8x8xbf16>, vector<256x8xf32> -> vector<256x8xf32>
    %34 = arith.addf %28, %33 : vector<256x8xf32>
    %35 = vector.extract_strided_slice %5 {offsets = [1, 2, 0], sizes = [16, 16, 8], strides = [1, 1, 1]} : vector<18x18x8xbf16> to vector<16x16x8xbf16>
    %36 = vector.shape_cast %35 : vector<16x16x8xbf16> to vector<256x8xbf16>
    %c5 = arith.constant 5 : index
    %c0_20 = arith.constant 0 : index
    %c0_21 = arith.constant 0 : index
    %37 = vector.load %arg2[%c5, %c0_20, %c0_21] : memref<9x8x8xbf16, #tpu.memory_space<vmem>>, vector<1x8x8xbf16>
    %38 = vector.shape_cast %37 : vector<1x8x8xbf16> to vector<8x8xbf16>
    %cst_22 = arith.constant dense<0.000000e+00> : vector<256x8xf32>
    %39 = tpu.matmul %36, %38, %cst_22 {dimension_numbers = #tpu.dot_dimension_numbers<[1], [0], [0], [1], [0, 0, 1, 1], [], []>} : vector<256x8xbf16>, vector<8x8xbf16>, vector<256x8xf32> -> vector<256x8xf32>
    %40 = arith.addf %34, %39 : vector<256x8xf32>
    %41 = vector.extract_strided_slice %5 {offsets = [2, 0, 0], sizes = [16, 16, 8], strides = [1, 1, 1]} : vector<18x18x8xbf16> to vector<16x16x8xbf16>
    %42 = vector.shape_cast %41 : vector<16x16x8xbf16> to vector<256x8xbf16>
    %c6 = arith.constant 6 : index
    %c0_23 = arith.constant 0 : index
    %c0_24 = arith.constant 0 : index
    %43 = vector.load %arg2[%c6, %c0_23, %c0_24] : memref<9x8x8xbf16, #tpu.memory_space<vmem>>, vector<1x8x8xbf16>
    %44 = vector.shape_cast %43 : vector<1x8x8xbf16> to vector<8x8xbf16>
    %cst_25 = arith.constant dense<0.000000e+00> : vector<256x8xf32>
    %45 = tpu.matmul %42, %44, %cst_25 {dimension_numbers = #tpu.dot_dimension_numbers<[1], [0], [0], [1], [0, 0, 1, 1], [], []>} : vector<256x8xbf16>, vector<8x8xbf16>, vector<256x8xf32> -> vector<256x8xf32>
    %46 = arith.addf %40, %45 : vector<256x8xf32>
    %47 = vector.extract_strided_slice %5 {offsets = [2, 1, 0], sizes = [16, 16, 8], strides = [1, 1, 1]} : vector<18x18x8xbf16> to vector<16x16x8xbf16>
    %48 = vector.shape_cast %47 : vector<16x16x8xbf16> to vector<256x8xbf16>
    %c7 = arith.constant 7 : index
    %c0_26 = arith.constant 0 : index
    %c0_27 = arith.constant 0 : index
    %49 = vector.load %arg2[%c7, %c0_26, %c0_27] : memref<9x8x8xbf16, #tpu.memory_space<vmem>>, vector<1x8x8xbf16>
    %50 = vector.shape_cast %49 : vector<1x8x8xbf16> to vector<8x8xbf16>
    %cst_28 = arith.constant dense<0.000000e+00> : vector<256x8xf32>
    %51 = tpu.matmul %48, %50, %cst_28 {dimension_numbers = #tpu.dot_dimension_numbers<[1], [0], [0], [1], [0, 0, 1, 1], [], []>} : vector<256x8xbf16>, vector<8x8xbf16>, vector<256x8xf32> -> vector<256x8xf32>
    %52 = arith.addf %46, %51 : vector<256x8xf32>
    %53 = vector.extract_strided_slice %5 {offsets = [2, 2, 0], sizes = [16, 16, 8], strides = [1, 1, 1]} : vector<18x18x8xbf16> to vector<16x16x8xbf16>
    %54 = vector.shape_cast %53 : vector<16x16x8xbf16> to vector<256x8xbf16>
    %c8 = arith.constant 8 : index
    %c0_29 = arith.constant 0 : index
    %c0_30 = arith.constant 0 : index
    %55 = vector.load %arg2[%c8, %c0_29, %c0_30] : memref<9x8x8xbf16, #tpu.memory_space<vmem>>, vector<1x8x8xbf16>
    %56 = vector.shape_cast %55 : vector<1x8x8xbf16> to vector<8x8xbf16>
    %cst_31 = arith.constant dense<0.000000e+00> : vector<256x8xf32>
    %57 = tpu.matmul %54, %56, %cst_31 {dimension_numbers = #tpu.dot_dimension_numbers<[1], [0], [0], [1], [0, 0, 1, 1], [], []>} : vector<256x8xbf16>, vector<8x8xbf16>, vector<256x8xf32> -> vector<256x8xf32>
    %58 = arith.addf %52, %57 : vector<256x8xf32>
    %c0_32 = arith.constant 0 : index
    %c0_33 = arith.constant 0 : index
    %59 = vector.load %arg3[%c0_32, %c0_33] : memref<1x8xf32, #tpu.memory_space<vmem>>, vector<1x8xf32>
    %60 = vector.broadcast %59 : vector<1x8xf32> to vector<256x8xf32>
    %61 = arith.addf %58, %60 : vector<256x8xf32>
    %62 = arith.negf %61 : vector<256x8xf32>
    %63 = math.exp %62 : vector<256x8xf32>
    %cst_34 = arith.constant 1.000000e+00 : f32
    %64 = vector.broadcast %cst_34 : f32 to vector<256x8xf32>
    %65 = arith.addf %64, %63 : vector<256x8xf32>
    %66 = arith.divf %64, %65 : vector<256x8xf32>
    %67 = arith.mulf %61, %66 : vector<256x8xf32>
    %68 = arith.truncf %67 : vector<256x8xf32> to vector<256x8xbf16>
    %c0_35 = arith.constant 0 : index
    %c0_36 = arith.constant 0 : index
    %69 = vector.load %arg4[%c0_35, %c0_36] : memref<8x8xbf16, #tpu.memory_space<vmem>>, vector<8x8xbf16>
    %cst_37 = arith.constant dense<0.000000e+00> : vector<256x8xf32>
    %70 = tpu.matmul %68, %69, %cst_37 {dimension_numbers = #tpu.dot_dimension_numbers<[1], [0], [0], [1], [0, 0, 1, 1], [], []>} : vector<256x8xbf16>, vector<8x8xbf16>, vector<256x8xf32> -> vector<256x8xf32>
    %c0_38 = arith.constant 0 : index
    %c0_39 = arith.constant 0 : index
    %71 = vector.load %arg5[%c0_38, %c0_39] : memref<1x8xf32, #tpu.memory_space<vmem>>, vector<1x8xf32>
    %72 = vector.broadcast %71 : vector<1x8xf32> to vector<256x8xf32>
    %73 = arith.addf %70, %72 : vector<256x8xf32>
    %74 = arith.negf %73 : vector<256x8xf32>
    %75 = math.exp %74 : vector<256x8xf32>
    %cst_40 = arith.constant 1.000000e+00 : f32
    %76 = vector.broadcast %cst_40 : f32 to vector<256x8xf32>
    %77 = arith.addf %76, %75 : vector<256x8xf32>
    %78 = arith.divf %76, %77 : vector<256x8xf32>
    %79 = arith.mulf %73, %78 : vector<256x8xf32>
    %80 = arith.truncf %79 : vector<256x8xf32> to vector<256x8xbf16>
    %c0_41 = arith.constant 0 : index
    %c0_42 = arith.constant 0 : index
    %c0_43 = arith.constant 0 : index
    %81 = vector.load %arg6[%c0_41, %c0_42, %c0_43] : memref<1x256x8xbf16, #tpu.memory_space<vmem>>, vector<1x256x8xbf16>
    %82 = vector.shape_cast %81 : vector<1x256x8xbf16> to vector<256x8xbf16>
    %83 = vector.shape_cast %80 : vector<256x8xbf16> to vector<1x256x8xbf16>
    tpu.vector_store %arg6[%c0_41, %c0_42, %c0_43], %83 {strides = array<i32>} : memref<1x256x8xbf16, #tpu.memory_space<vmem>>, vector<1x256x8xbf16>,
    return
  }
  func.func @transform_0(%arg0: i32) -> (i32, i32, i32, i32) {
    %c0_i32 = arith.constant 0 : i32
    %c0_i32_0 = arith.constant 0 : i32
    %c0_i32_1 = arith.constant 0 : i32
    %c0_i32_2 = arith.constant 0 : i32
    return %arg0, %c0_i32, %c0_i32_0, %c0_i32_1 : i32, i32, i32, i32
  }
  func.func @transform_1(%arg0: i32) -> (i32, i32, i32) {
    %c0_i32 = arith.constant 0 : i32
    %c0_i32_0 = arith.constant 0 : i32
    %c0_i32_1 = arith.constant 0 : i32
    %c0_i32_2 = arith.constant 0 : i32
    return %c0_i32, %c0_i32_0, %c0_i32_1 : i32, i32, i32
  }
  func.func @transform_2(%arg0: i32) -> (i32, i32) {
    %c0_i32 = arith.constant 0 : i32
    %c0_i32_0 = arith.constant 0 : i32
    %c0_i32_1 = arith.constant 0 : i32
    return %c0_i32, %c0_i32_0 : i32, i32
  }
  func.func @transform_3(%arg0: i32) -> (i32, i32) {
    %c0_i32 = arith.constant 0 : i32
    %c0_i32_0 = arith.constant 0 : i32
    %c0_i32_1 = arith.constant 0 : i32
    return %c0_i32, %c0_i32_0 : i32, i32
  }
  func.func @transform_4(%arg0: i32) -> (i32, i32) {
    %c0_i32 = arith.constant 0 : i32
    %c0_i32_0 = arith.constant 0 : i32
    %c0_i32_1 = arith.constant 0 : i32
    return %c0_i32, %c0_i32_0 : i32, i32
  }
  func.func @transform_5(%arg0: i32) -> (i32, i32, i32) {
    %c0_i32 = arith.constant 0 : i32
    %c0_i32_0 = arith.constant 0 : i32
    %c0_i32_1 = arith.constant 0 : i32
    return %arg0, %c0_i32, %c0_i32_0 : i32, i32, i32
  }
}

module attributes {stable_mosaic.version = 11 : i64} {
  func.func @kernel(%arg0: i32, %arg1: memref<1x16x16x8xbf16, #tpu.memory_space<vmem>>, %arg2: memref<1x256x8xbf16, #tpu.memory_space<vmem>>, %arg3: memref<9x8x8xbf16, #tpu.memory_space<vmem>>, %arg4: memref<1x8xf32, #tpu.memory_space<vmem>>, %arg5: memref<8x8xbf16, #tpu.memory_space<vmem>>, %arg6: memref<8x8xbf16, #tpu.memory_space<vmem>>, %arg7: memref<1x8xf32, #tpu.memory_space<vmem>>, %arg8: memref<1x256x8xf32, #tpu.memory_space<vmem>>) attributes {dimension_semantics = [#tpu.dimension_semantics<parallel>], iteration_bounds = array<i64: 2>, scalar_prefetch = 0 : i64, scratch_operands = 0 : i64, tpu.core_type = #tpu.core_type<tc>, window_params = [{transform_indices = @transform_0, window_bounds = array<i64: 1, 16, 16, 8>}, {transform_indices = @transform_1, window_bounds = array<i64: 1, 256, 8>}, {pipeline_mode = #tpu.pipeline_mode<synchronous>, transform_indices = @transform_2, window_bounds = array<i64: 9, 8, 8>}, {pipeline_mode = #tpu.pipeline_mode<synchronous>, transform_indices = @transform_3, window_bounds = array<i64: 1, 8>}, {pipeline_mode = #tpu.pipeline_mode<synchronous>, transform_indices = @transform_4, window_bounds = array<i64: 8, 8>}, {pipeline_mode = #tpu.pipeline_mode<synchronous>, transform_indices = @transform_5, window_bounds = array<i64: 8, 8>}, {pipeline_mode = #tpu.pipeline_mode<synchronous>, transform_indices = @transform_6, window_bounds = array<i64: 1, 8>}, {transform_indices = @transform_7, window_bounds = array<i64: 1, 256, 8>}]} {
    %c0 = arith.constant 0 : index
    %c0_0 = arith.constant 0 : index
    %c0_1 = arith.constant 0 : index
    %c0_2 = arith.constant 0 : index
    %0 = vector.load %arg1[%c0, %c0_0, %c0_1, %c0_2] : memref<1x16x16x8xbf16, #tpu.memory_space<vmem>>, vector<1x16x16x8xbf16>
    %1 = vector.shape_cast %0 : vector<1x16x16x8xbf16> to vector<16x16x8xbf16>
    %cst = arith.constant 0.000000e+00 : bf16
    %2 = vector.broadcast %cst : bf16 to vector<1x16x8xbf16>
    %3 = tpu.concatenate %2, %1, %2 in 0 : vector<1x16x8xbf16>, vector<16x16x8xbf16>, vector<1x16x8xbf16> -> vector<18x16x8xbf16>
    %cst_3 = arith.constant 0.000000e+00 : bf16
    %4 = vector.broadcast %cst_3 : bf16 to vector<18x1x8xbf16>
    %5 = tpu.concatenate %4, %3, %4 in 1 : vector<18x1x8xbf16>, vector<18x16x8xbf16>, vector<18x1x8xbf16> -> vector<18x18x8xbf16>
    %6 = vector.extract_strided_slice %5 {offsets = [0, 0, 0], sizes = [16, 16, 8], strides = [1, 1, 1]} : vector<18x18x8xbf16> to vector<16x16x8xbf16>
    %7 = vector.shape_cast %6 : vector<16x16x8xbf16> to vector<256x8xbf16>
    %c0_4 = arith.constant 0 : index
    %c0_5 = arith.constant 0 : index
    %c0_6 = arith.constant 0 : index
    %8 = vector.load %arg3[%c0_4, %c0_5, %c0_6] : memref<9x8x8xbf16, #tpu.memory_space<vmem>>, vector<1x8x8xbf16>
    %9 = vector.shape_cast %8 : vector<1x8x8xbf16> to vector<8x8xbf16>
    %cst_7 = arith.constant dense<0.000000e+00> : vector<256x8xf32>
    %10 = tpu.matmul %7, %9, %cst_7 {dimension_numbers = #tpu.dot_dimension_numbers<[1], [0], [0], [1], [0, 0, 1, 1], [], []>} : vector<256x8xbf16>, vector<8x8xbf16>, vector<256x8xf32> -> vector<256x8xf32>
    %11 = vector.extract_strided_slice %5 {offsets = [0, 1, 0], sizes = [16, 16, 8], strides = [1, 1, 1]} : vector<18x18x8xbf16> to vector<16x16x8xbf16>
    %12 = vector.shape_cast %11 : vector<16x16x8xbf16> to vector<256x8xbf16>
    %c1 = arith.constant 1 : index
    %c0_8 = arith.constant 0 : index
    %c0_9 = arith.constant 0 : index
    %13 = vector.load %arg3[%c1, %c0_8, %c0_9] : memref<9x8x8xbf16, #tpu.memory_space<vmem>>, vector<1x8x8xbf16>
    %14 = vector.shape_cast %13 : vector<1x8x8xbf16> to vector<8x8xbf16>
    %cst_10 = arith.constant dense<0.000000e+00> : vector<256x8xf32>
    %15 = tpu.matmul %12, %14, %cst_10 {dimension_numbers = #tpu.dot_dimension_numbers<[1], [0], [0], [1], [0, 0, 1, 1], [], []>} : vector<256x8xbf16>, vector<8x8xbf16>, vector<256x8xf32> -> vector<256x8xf32>
    %16 = arith.addf %10, %15 : vector<256x8xf32>
    %17 = vector.extract_strided_slice %5 {offsets = [0, 2, 0], sizes = [16, 16, 8], strides = [1, 1, 1]} : vector<18x18x8xbf16> to vector<16x16x8xbf16>
    %18 = vector.shape_cast %17 : vector<16x16x8xbf16> to vector<256x8xbf16>
    %c2 = arith.constant 2 : index
    %c0_11 = arith.constant 0 : index
    %c0_12 = arith.constant 0 : index
    %19 = vector.load %arg3[%c2, %c0_11, %c0_12] : memref<9x8x8xbf16, #tpu.memory_space<vmem>>, vector<1x8x8xbf16>
    %20 = vector.shape_cast %19 : vector<1x8x8xbf16> to vector<8x8xbf16>
    %cst_13 = arith.constant dense<0.000000e+00> : vector<256x8xf32>
    %21 = tpu.matmul %18, %20, %cst_13 {dimension_numbers = #tpu.dot_dimension_numbers<[1], [0], [0], [1], [0, 0, 1, 1], [], []>} : vector<256x8xbf16>, vector<8x8xbf16>, vector<256x8xf32> -> vector<256x8xf32>
    %22 = arith.addf %16, %21 : vector<256x8xf32>
    %23 = vector.extract_strided_slice %5 {offsets = [1, 0, 0], sizes = [16, 16, 8], strides = [1, 1, 1]} : vector<18x18x8xbf16> to vector<16x16x8xbf16>
    %24 = vector.shape_cast %23 : vector<16x16x8xbf16> to vector<256x8xbf16>
    %c3 = arith.constant 3 : index
    %c0_14 = arith.constant 0 : index
    %c0_15 = arith.constant 0 : index
    %25 = vector.load %arg3[%c3, %c0_14, %c0_15] : memref<9x8x8xbf16, #tpu.memory_space<vmem>>, vector<1x8x8xbf16>
    %26 = vector.shape_cast %25 : vector<1x8x8xbf16> to vector<8x8xbf16>
    %cst_16 = arith.constant dense<0.000000e+00> : vector<256x8xf32>
    %27 = tpu.matmul %24, %26, %cst_16 {dimension_numbers = #tpu.dot_dimension_numbers<[1], [0], [0], [1], [0, 0, 1, 1], [], []>} : vector<256x8xbf16>, vector<8x8xbf16>, vector<256x8xf32> -> vector<256x8xf32>
    %28 = arith.addf %22, %27 : vector<256x8xf32>
    %29 = vector.extract_strided_slice %5 {offsets = [1, 1, 0], sizes = [16, 16, 8], strides = [1, 1, 1]} : vector<18x18x8xbf16> to vector<16x16x8xbf16>
    %30 = vector.shape_cast %29 : vector<16x16x8xbf16> to vector<256x8xbf16>
    %c4 = arith.constant 4 : index
    %c0_17 = arith.constant 0 : index
    %c0_18 = arith.constant 0 : index
    %31 = vector.load %arg3[%c4, %c0_17, %c0_18] : memref<9x8x8xbf16, #tpu.memory_space<vmem>>, vector<1x8x8xbf16>
    %32 = vector.shape_cast %31 : vector<1x8x8xbf16> to vector<8x8xbf16>
    %cst_19 = arith.constant dense<0.000000e+00> : vector<256x8xf32>
    %33 = tpu.matmul %30, %32, %cst_19 {dimension_numbers = #tpu.dot_dimension_numbers<[1], [0], [0], [1], [0, 0, 1, 1], [], []>} : vector<256x8xbf16>, vector<8x8xbf16>, vector<256x8xf32> -> vector<256x8xf32>
    %34 = arith.addf %28, %33 : vector<256x8xf32>
    %35 = vector.extract_strided_slice %5 {offsets = [1, 2, 0], sizes = [16, 16, 8], strides = [1, 1, 1]} : vector<18x18x8xbf16> to vector<16x16x8xbf16>
    %36 = vector.shape_cast %35 : vector<16x16x8xbf16> to vector<256x8xbf16>
    %c5 = arith.constant 5 : index
    %c0_20 = arith.constant 0 : index
    %c0_21 = arith.constant 0 : index
    %37 = vector.load %arg3[%c5, %c0_20, %c0_21] : memref<9x8x8xbf16, #tpu.memory_space<vmem>>, vector<1x8x8xbf16>
    %38 = vector.shape_cast %37 : vector<1x8x8xbf16> to vector<8x8xbf16>
    %cst_22 = arith.constant dense<0.000000e+00> : vector<256x8xf32>
    %39 = tpu.matmul %36, %38, %cst_22 {dimension_numbers = #tpu.dot_dimension_numbers<[1], [0], [0], [1], [0, 0, 1, 1], [], []>} : vector<256x8xbf16>, vector<8x8xbf16>, vector<256x8xf32> -> vector<256x8xf32>
    %40 = arith.addf %34, %39 : vector<256x8xf32>
    %41 = vector.extract_strided_slice %5 {offsets = [2, 0, 0], sizes = [16, 16, 8], strides = [1, 1, 1]} : vector<18x18x8xbf16> to vector<16x16x8xbf16>
    %42 = vector.shape_cast %41 : vector<16x16x8xbf16> to vector<256x8xbf16>
    %c6 = arith.constant 6 : index
    %c0_23 = arith.constant 0 : index
    %c0_24 = arith.constant 0 : index
    %43 = vector.load %arg3[%c6, %c0_23, %c0_24] : memref<9x8x8xbf16, #tpu.memory_space<vmem>>, vector<1x8x8xbf16>
    %44 = vector.shape_cast %43 : vector<1x8x8xbf16> to vector<8x8xbf16>
    %cst_25 = arith.constant dense<0.000000e+00> : vector<256x8xf32>
    %45 = tpu.matmul %42, %44, %cst_25 {dimension_numbers = #tpu.dot_dimension_numbers<[1], [0], [0], [1], [0, 0, 1, 1], [], []>} : vector<256x8xbf16>, vector<8x8xbf16>, vector<256x8xf32> -> vector<256x8xf32>
    %46 = arith.addf %40, %45 : vector<256x8xf32>
    %47 = vector.extract_strided_slice %5 {offsets = [2, 1, 0], sizes = [16, 16, 8], strides = [1, 1, 1]} : vector<18x18x8xbf16> to vector<16x16x8xbf16>
    %48 = vector.shape_cast %47 : vector<16x16x8xbf16> to vector<256x8xbf16>
    %c7 = arith.constant 7 : index
    %c0_26 = arith.constant 0 : index
    %c0_27 = arith.constant 0 : index
    %49 = vector.load %arg3[%c7, %c0_26, %c0_27] : memref<9x8x8xbf16, #tpu.memory_space<vmem>>, vector<1x8x8xbf16>
    %50 = vector.shape_cast %49 : vector<1x8x8xbf16> to vector<8x8xbf16>
    %cst_28 = arith.constant dense<0.000000e+00> : vector<256x8xf32>
    %51 = tpu.matmul %48, %50, %cst_28 {dimension_numbers = #tpu.dot_dimension_numbers<[1], [0], [0], [1], [0, 0, 1, 1], [], []>} : vector<256x8xbf16>, vector<8x8xbf16>, vector<256x8xf32> -> vector<256x8xf32>
    %52 = arith.addf %46, %51 : vector<256x8xf32>
    %53 = vector.extract_strided_slice %5 {offsets = [2, 2, 0], sizes = [16, 16, 8], strides = [1, 1, 1]} : vector<18x18x8xbf16> to vector<16x16x8xbf16>
    %54 = vector.shape_cast %53 : vector<16x16x8xbf16> to vector<256x8xbf16>
    %c8 = arith.constant 8 : index
    %c0_29 = arith.constant 0 : index
    %c0_30 = arith.constant 0 : index
    %55 = vector.load %arg3[%c8, %c0_29, %c0_30] : memref<9x8x8xbf16, #tpu.memory_space<vmem>>, vector<1x8x8xbf16>
    %56 = vector.shape_cast %55 : vector<1x8x8xbf16> to vector<8x8xbf16>
    %cst_31 = arith.constant dense<0.000000e+00> : vector<256x8xf32>
    %57 = tpu.matmul %54, %56, %cst_31 {dimension_numbers = #tpu.dot_dimension_numbers<[1], [0], [0], [1], [0, 0, 1, 1], [], []>} : vector<256x8xbf16>, vector<8x8xbf16>, vector<256x8xf32> -> vector<256x8xf32>
    %58 = arith.addf %52, %57 : vector<256x8xf32>
    %c0_32 = arith.constant 0 : index
    %c0_33 = arith.constant 0 : index
    %59 = vector.load %arg4[%c0_32, %c0_33] : memref<1x8xf32, #tpu.memory_space<vmem>>, vector<1x8xf32>
    %60 = vector.broadcast %59 : vector<1x8xf32> to vector<256x8xf32>
    %61 = arith.addf %58, %60 : vector<256x8xf32>
    %62 = arith.negf %61 : vector<256x8xf32>
    %63 = math.exp %62 : vector<256x8xf32>
    %cst_34 = arith.constant 1.000000e+00 : f32
    %64 = vector.broadcast %cst_34 : f32 to vector<256x8xf32>
    %65 = arith.addf %64, %63 : vector<256x8xf32>
    %66 = arith.divf %64, %65 : vector<256x8xf32>
    %67 = arith.mulf %61, %66 : vector<256x8xf32>
    %68 = arith.truncf %67 : vector<256x8xf32> to vector<256x8xbf16>
    %c0_35 = arith.constant 0 : index
    %c0_36 = arith.constant 0 : index
    %69 = vector.load %arg5[%c0_35, %c0_36] : memref<8x8xbf16, #tpu.memory_space<vmem>>, vector<8x8xbf16>
    %cst_37 = arith.constant dense<0.000000e+00> : vector<256x8xf32>
    %70 = tpu.matmul %68, %69, %cst_37 {dimension_numbers = #tpu.dot_dimension_numbers<[1], [0], [0], [1], [0, 0, 1, 1], [], []>} : vector<256x8xbf16>, vector<8x8xbf16>, vector<256x8xf32> -> vector<256x8xf32>
    %c0_38 = arith.constant 0 : index
    %c0_39 = arith.constant 0 : index
    %c0_40 = arith.constant 0 : index
    %71 = vector.load %arg2[%c0_38, %c0_39, %c0_40] : memref<1x256x8xbf16, #tpu.memory_space<vmem>>, vector<1x256x8xbf16>
    %72 = vector.shape_cast %71 : vector<1x256x8xbf16> to vector<256x8xbf16>
    %c0_41 = arith.constant 0 : index
    %c0_42 = arith.constant 0 : index
    %73 = vector.load %arg6[%c0_41, %c0_42] : memref<8x8xbf16, #tpu.memory_space<vmem>>, vector<8x8xbf16>
    %cst_43 = arith.constant dense<0.000000e+00> : vector<256x8xf32>
    %74 = tpu.matmul %72, %73, %cst_43 {dimension_numbers = #tpu.dot_dimension_numbers<[1], [0], [0], [1], [0, 0, 1, 1], [], []>} : vector<256x8xbf16>, vector<8x8xbf16>, vector<256x8xf32> -> vector<256x8xf32>
    %75 = arith.addf %70, %74 : vector<256x8xf32>
    %c0_44 = arith.constant 0 : index
    %c0_45 = arith.constant 0 : index
    %76 = vector.load %arg7[%c0_44, %c0_45] : memref<1x8xf32, #tpu.memory_space<vmem>>, vector<1x8xf32>
    %77 = vector.broadcast %76 : vector<1x8xf32> to vector<256x8xf32>
    %78 = arith.addf %75, %77 : vector<256x8xf32>
    %79 = arith.negf %78 : vector<256x8xf32>
    %80 = math.exp %79 : vector<256x8xf32>
    %cst_46 = arith.constant 1.000000e+00 : f32
    %81 = vector.broadcast %cst_46 : f32 to vector<256x8xf32>
    %82 = arith.addf %81, %80 : vector<256x8xf32>
    %83 = arith.divf %81, %82 : vector<256x8xf32>
    %84 = arith.mulf %78, %83 : vector<256x8xf32>
    %c0_47 = arith.constant 0 : index
    %c0_48 = arith.constant 0 : index
    %c0_49 = arith.constant 0 : index
    %85 = vector.load %arg8[%c0_47, %c0_48, %c0_49] : memref<1x256x8xf32, #tpu.memory_space<vmem>>, vector<1x256x8xf32>
    %86 = vector.shape_cast %85 : vector<1x256x8xf32> to vector<256x8xf32>
    %87 = vector.shape_cast %84 : vector<256x8xf32> to vector<1x256x8xf32>
    tpu.vector_store %arg8[%c0_47, %c0_48, %c0_49], %87 {strides = array<i32>} : memref<1x256x8xf32, #tpu.memory_space<vmem>>, vector<1x256x8xf32>,
    return
  }
  func.func @transform_0(%arg0: i32) -> (i32, i32, i32, i32) {
    %c0_i32 = arith.constant 0 : i32
    %c0_i32_0 = arith.constant 0 : i32
    %c0_i32_1 = arith.constant 0 : i32
    %c0_i32_2 = arith.constant 0 : i32
    return %arg0, %c0_i32, %c0_i32_0, %c0_i32_1 : i32, i32, i32, i32
  }
  func.func @transform_1(%arg0: i32) -> (i32, i32, i32) {
    %c0_i32 = arith.constant 0 : i32
    %c0_i32_0 = arith.constant 0 : i32
    %c0_i32_1 = arith.constant 0 : i32
    return %arg0, %c0_i32, %c0_i32_0 : i32, i32, i32
  }
  func.func @transform_2(%arg0: i32) -> (i32, i32, i32) {
    %c0_i32 = arith.constant 0 : i32
    %c0_i32_0 = arith.constant 0 : i32
    %c0_i32_1 = arith.constant 0 : i32
    %c0_i32_2 = arith.constant 0 : i32
    return %c0_i32, %c0_i32_0, %c0_i32_1 : i32, i32, i32
  }
  func.func @transform_3(%arg0: i32) -> (i32, i32) {
    %c0_i32 = arith.constant 0 : i32
    %c0_i32_0 = arith.constant 0 : i32
    %c0_i32_1 = arith.constant 0 : i32
    return %c0_i32, %c0_i32_0 : i32, i32
  }
  func.func @transform_4(%arg0: i32) -> (i32, i32) {
    %c0_i32 = arith.constant 0 : i32
    %c0_i32_0 = arith.constant 0 : i32
    %c0_i32_1 = arith.constant 0 : i32
    return %c0_i32, %c0_i32_0 : i32, i32
  }
  func.func @transform_5(%arg0: i32) -> (i32, i32) {
    %c0_i32 = arith.constant 0 : i32
    %c0_i32_0 = arith.constant 0 : i32
    %c0_i32_1 = arith.constant 0 : i32
    return %c0_i32, %c0_i32_0 : i32, i32
  }
  func.func @transform_6(%arg0: i32) -> (i32, i32) {
    %c0_i32 = arith.constant 0 : i32
    %c0_i32_0 = arith.constant 0 : i32
    %c0_i32_1 = arith.constant 0 : i32
    return %c0_i32, %c0_i32_0 : i32, i32
  }
  func.func @transform_7(%arg0: i32) -> (i32, i32, i32) {
    %c0_i32 = arith.constant 0 : i32
    %c0_i32_0 = arith.constant 0 : i32
    %c0_i32_1 = arith.constant 0 : i32
    return %arg0, %c0_i32, %c0_i32_0 : i32, i32, i32
  }
}

</mosaic_0001>

<llo_original>
// kernel: sppcspc_forward.4
$region0: #{sppcspc_forward.4}
  #allocation0 [shape = 'u32[]', space=smem, size = 0x4, offset = 0x4, fixed_abs, tag = 'smem constant byte address 0x4 - core index']
  #allocation1 [shape = 'u32[144,128]{1,0:T(1,128)}', space=vmem, size = 0x12000, scoped, tag = 'internal scratch']
  %s0 = inlined_call_operand.vmem [shape: bf16[2,256,4], index: 0, kind: input, shape index: {}]
  %s1 = inlined_call_operand.vmem [shape: bf16[4,8], index: 1, kind: input, shape index: {}]
  %s2 = inlined_call_operand.vmem [shape: f32[1,8], index: 2, kind: input, shape index: {}]
  %s3 = inlined_call_operand.vmem [shape: bf16[4,8], index: 3, kind: input, shape index: {}]
  %s4 = inlined_call_operand.vmem [shape: f32[1,8], index: 4, kind: input, shape index: {}]
  %s5 = inlined_call_operand.vmem [shape: bf16[2,256,8], index: 5, kind: output, shape index: {0}]
  %s6 = inlined_call_operand.vmem [shape: bf16[2,256,8], index: 6, kind: output, shape index: {1}]
  %7 = xla_tuple %s5, %s6
  %s8 = sld [smem:[#allocation0]]
  $region61: #{sppcspc_forward.4} parent=0
    _
  %s10 = ssub.s32 1, %s8
  %s11 = scalar_select 0, %s10, %s8
  loop: start=0, step=1, limit=6
  $region2: #{sppcspc_forward.4} parent=0 // loop_pre_header
    _
  $region3: #{sppcspc_forward.4} parent=0 // loop_header
    %s13 = sphi 0, %s17
    %p14 = scmp.ge.s32.totalorder %s13, 6
    %s20 = sphi 0, %s32
    %s21 = sphi 0, %s28
    %s22 = sphi 0, %s20
    %s23 = sphi 0, %s21
    %s24 = sphi 0, %s22
    %s25 = sphi 0, %s23
    %s37 = sphi 0, %s39
    %s40 = sphi 0, %s37
    %s41 = sphi 0, %s40
    %s57 = sphi 0, %s41
    %s61 = sphi 0, %s61
    %s63 = sphi 0, %s61
    %s64 = sphi 0, %s63
    %s78 = sphi 0, %s64
    %s82 = sphi 0, %s82
    %s84 = sphi 0, %s82
    %s85 = sphi 0, %s84
    %s99 = sphi 0, %s85
    %s103 = sphi 0, %s103
    %s105 = sphi 0, %s103
    %s106 = sphi 0, %s105
    %s120 = sphi 0, %s106
    %s124 = sphi 0, %s124
    %s126 = sphi 0, %s124
    %s127 = sphi 0, %s126
    %s141 = sphi 0, %s127
    %s149 = sphi 0, %s151
    %s152 = sphi 0, %s149
    %s153 = sphi 0, %s152
    %s169 = sphi 0, %s153
    %s177 = sphi 0, %s179
    %s180 = sphi 0, %s177
    %s181 = sphi 0, %s180
    %s197 = sphi 0, %s181
  $region4: #{sppcspc_forward.4} parent=0 // loop_header_branch
    %16 = sbr.rel (%p14) target = $region8
  $region5: #{sppcspc_forward.4} parent=0 // loop_body
    %s18 = ssub.s32 %s13, 1
    %s19 = ssub.s32 %s13, 2
    %s26 = sadd.s32 1, %s21
    %p27 = scmp.ge.s32.totalorder %s26, 2
    %s28 = scalar_select %p27, 0, %s26
    %s29 = sadd.s32 1, %s20
    %s30 = scalar_select %p27, %s29, %s20
    %p31 = scmp.ge.s32.totalorder %s30, 2
    %s32 = scalar_select %p31, 0, %s30
    %s33 = ssub.s32 %s20, %s32
    %s34 = ssub.s32 %s21, %s28
    %s35 = sor.u32 %s33, %s34
    %p36 = scmp.eq.s32.totalorder %s35, 0
    %s38 = sadd.s32 %s37, 1
    %s39 = scalar_select %p36, %s37, %s38
    %p42 = pneg %p36
    %p43 = scmp.eq.s32.totalorder %s13, 3
    %p44 = por %p42, %p43
    %p45 = scmp.ne.s32.totalorder %s37, %s40
    %p46 = scmp.eq.s32.totalorder %s13, 0
    %p47 = por %p45, %p46
    %p48 = scmp.ne.s32.totalorder %s37, %s40
    %p49 = scmp.eq.s32.totalorder %s18, 3
    %p50 = por %p48, %p49
    %p51 = scmp.ne.s32.totalorder %s40, %s41
    %p52 = scmp.eq.s32.totalorder %s18, 0
    %p53 = por %p51, %p52
    %p54 = scmp.ne.s32.totalorder %s40, %s41
    %p55 = scmp.eq.s32.totalorder %s19, 3
    %p56 = por %p54, %p55
    %p58 = scmp.ne.s32.totalorder %s41, %s57
    %p59 = scmp.eq.s32.totalorder %s19, 0
    %p60 = por %p58, %p59
    %s62 = sadd.s32 %s61, 1
    %p65 = scmp.eq.s32.totalorder %s13, 3
    %p66 = scmp.ne.s32.totalorder %s61, %s63
    %p67 = scmp.eq.s32.totalorder %s13, 0
    %p68 = por %p66, %p67
    %p69 = scmp.ne.s32.totalorder %s61, %s63
    %p70 = scmp.eq.s32.totalorder %s18, 3
    %p71 = por %p69, %p70
    %p72 = scmp.ne.s32.totalorder %s63, %s64
    %p73 = scmp.eq.s32.totalorder %s18, 0
    %p74 = por %p72, %p73
    %p75 = scmp.ne.s32.totalorder %s63, %s64
    %p76 = scmp.eq.s32.totalorder %s19, 3
    %p77 = por %p75, %p76
    %p79 = scmp.ne.s32.totalorder %s64, %s78
    %p80 = scmp.eq.s32.totalorder %s19, 0
    %p81 = por %p79, %p80
    %s83 = sadd.s32 %s82, 1
    %p86 = scmp.eq.s32.totalorder %s13, 3
    %p87 = scmp.ne.s32.totalorder %s82, %s84
    %p88 = scmp.eq.s32.totalorder %s13, 0
    %p89 = por %p87, %p88
    %p90 = scmp.ne.s32.totalorder %s82, %s84
    %p91 = scmp.eq.s32.totalorder %s18, 3
    %p92 = por %p90, %p91
    %p93 = scmp.ne.s32.totalorder %s84, %s85
    %p94 = scmp.eq.s32.totalorder %s18, 0
    %p95 = por %p93, %p94
    %p96 = scmp.ne.s32.totalorder %s84, %s85
    %p97 = scmp.eq.s32.totalorder %s19, 3
    %p98 = por %p96, %p97
    %p100 = scmp.ne.s32.totalorder %s85, %s99
    %p101 = scmp.eq.s32.totalorder %s19, 0
    %p102 = por %p100, %p101
    %s104 = sadd.s32 %s103, 1
    %p107 = scmp.eq.s32.totalorder %s13, 3
    %p108 = scmp.ne.s32.totalorder %s103, %s105
    %p109 = scmp.eq.s32.totalorder %s13, 0
    %p110 = por %p108, %p109
    %p111 = scmp.ne.s32.totalorder %s103, %s105
    %p112 = scmp.eq.s32.totalorder %s18, 3
    %p113 = por %p111, %p112
    %p114 = scmp.ne.s32.totalorder %s105, %s106
    %p115 = scmp.eq.s32.totalorder %s18, 0
    %p116 = por %p114, %p115
    %p117 = scmp.ne.s32.totalorder %s105, %s106
    %p118 = scmp.eq.s32.totalorder %s19, 3
    %p119 = por %p117, %p118
    %p121 = scmp.ne.s32.totalorder %s106, %s120
    %p122 = scmp.eq.s32.totalorder %s19, 0
    %p123 = por %p121, %p122
    %s125 = sadd.s32 %s124, 1
    %p128 = scmp.eq.s32.totalorder %s13, 3
    %p129 = scmp.ne.s32.totalorder %s124, %s126
    %p130 = scmp.eq.s32.totalorder %s13, 0
    %p131 = por %p129, %p130
    %p132 = scmp.ne.s32.totalorder %s124, %s126
    %p133 = scmp.eq.s32.totalorder %s18, 3
    %p134 = por %p132, %p133
    %p135 = scmp.ne.s32.totalorder %s126, %s127
    %p136 = scmp.eq.s32.totalorder %s18, 0
    %p137 = por %p135, %p136
    %p138 = scmp.ne.s32.totalorder %s126, %s127
    %p139 = scmp.eq.s32.totalorder %s19, 3
    %p140 = por %p138, %p139
    %p142 = scmp.ne.s32.totalorder %s127, %s141
    %p143 = scmp.eq.s32.totalorder %s19, 0
    %p144 = por %p142, %p143
    %s145 = ssub.s32 %s20, %s32
    %s146 = ssub.s32 %s21, %s28
    %s147 = sor.u32 %s145, %s146
    %p148 = scmp.eq.s32.totalorder %s147, 0
    %s150 = sadd.s32 %s149, 1
    %s151 = scalar_select %p148, %s149, %s150
    %p154 = pneg %p148
    %p155 = scmp.eq.s32.totalorder %s13, 3
    %p156 = por %p154, %p155
    %p157 = scmp.ne.s32.totalorder %s149, %s152
    %p158 = scmp.eq.s32.totalorder %s13, 0
    %p159 = por %p157, %p158
    %p160 = scmp.ne.s32.totalorder %s149, %s152
    %p161 = scmp.eq.s32.totalorder %s18, 3
    %p162 = por %p160, %p161
    %p163 = scmp.ne.s32.totalorder %s152, %s153
    %p164 = scmp.eq.s32.totalorder %s18, 0
    %p165 = por %p163, %p164
    %p166 = scmp.ne.s32.totalorder %s152, %s153
    %p167 = scmp.eq.s32.totalorder %s19, 3
    %p168 = por %p166, %p167
    %p170 = scmp.ne.s32.totalorder %s153, %s169
    %p171 = scmp.eq.s32.totalorder %s19, 0
    %p172 = por %p170, %p171
    %s173 = ssub.s32 %s20, %s32
    %s174 = ssub.s32 %s21, %s28
    %s175 = sor.u32 %s173, %s174
    %p176 = scmp.eq.s32.totalorder %s175, 0
    %s178 = sadd.s32 %s177, 1
    %s179 = scalar_select %p176, %s177, %s178
    %p182 = pneg %p176
    %p183 = scmp.eq.s32.totalorder %s13, 3
    %p184 = por %p182, %p183
    %p185 = scmp.ne.s32.totalorder %s177, %s180
    %p186 = scmp.eq.s32.totalorder %s13, 0
    %p187 = por %p185, %p186
    %p188 = scmp.ne.s32.totalorder %s177, %s180
    %p189 = scmp.eq.s32.totalorder %s18, 3
    %p190 = por %p188, %p189
    %p191 = scmp.ne.s32.totalorder %s180, %s181
    %p192 = scmp.eq.s32.totalorder %s18, 0
    %p193 = por %p191, %p192
    %p194 = scmp.ne.s32.totalorder %s180, %s181
    %p195 = scmp.eq.s32.totalorder %s19, 3
    %p196 = por %p194, %p195
    %p198 = scmp.ne.s32.totalorder %s181, %s197
    %p199 = scmp.eq.s32.totalorder %s19, 0
    %p200 = por %p198, %p199
    %p201 = scmp.le.s32.totalorder 1, %s13
    %p202 = scmp.lt.s32.totalorder %s13, 5
    %p203 = pnand %p201, %p202
    %p204 = pneg %p203
    // Predicated region
    $region9: #{sppcspc_forward.4} parent=5 // pred_check
      _
    $region10: #{sppcspc_forward.4} parent=5 // pred_check_branch
      %206 = sbr.rel (%p203) target = $region12
    $region11: #{sppcspc_forward.4} parent=5 // pred_region
      %s207 = ssub.s32 %s13, 1
      // Predicated region
      $region13: #{sppcspc_forward.4} parent=11 // pred_check
        %p208 = pneg %p74
      $region14: #{sppcspc_forward.4} parent=11 // pred_check_branch
        %210 = sbr.rel (%p208) target = $region16
      $region15: #{sppcspc_forward.4} parent=11 // pred_region
        _
      $region16: #{sppcspc_forward.4} parent=11 // pred_fallthru
        _
      // Predicated region
      $region17: #{sppcspc_forward.4} parent=11 // pred_check
        %p211 = pneg %p95
      $region18: #{sppcspc_forward.4} parent=11 // pred_check_branch
        %213 = sbr.rel (%p211) target = $region20
      $region19: #{sppcspc_forward.4} parent=11 // pred_region
        _
      $region20: #{sppcspc_forward.4} parent=11 // pred_fallthru
        _
      // Predicated region
      $region21: #{sppcspc_forward.4} parent=11 // pred_check
        %p214 = pneg %p116
      $region22: #{sppcspc_forward.4} parent=11 // pred_check_branch
        %216 = sbr.rel (%p214) target = $region24
      $region23: #{sppcspc_forward.4} parent=11 // pred_region
        _
      $region24: #{sppcspc_forward.4} parent=11 // pred_fallthru
        _
      // Predicated region
      $region25: #{sppcspc_forward.4} parent=11 // pred_check
        %p217 = pneg %p137
      $region26: #{sppcspc_forward.4} parent=11 // pred_check_branch
        %219 = sbr.rel (%p217) target = $region28
      $region27: #{sppcspc_forward.4} parent=11 // pred_region
        _
      $region28: #{sppcspc_forward.4} parent=11 // pred_fallthru
        _
    $region12: #{sppcspc_forward.4} parent=5 // pred_fallthru
      _
    %p220 = scmp.lt.s32.totalorder %s13, 4
    // Predicated region
    $region29: #{sppcspc_forward.4} parent=5 // pred_check
      %p221 = pneg %p220
    $region30: #{sppcspc_forward.4} parent=5 // pred_check_branch
      %223 = sbr.rel (%p221) target = $region32
    $region31: #{sppcspc_forward.4} parent=5 // pred_region
      // Predicated region
      $region33: #{sppcspc_forward.4} parent=31 // pred_check
        %p224 = pneg %p47
      $region34: #{sppcspc_forward.4} parent=31 // pred_check_branch
        %226 = sbr.rel (%p224) target = $region36
      $region35: #{sppcspc_forward.4} parent=31 // pred_region
        %s227 = smul.u32 16, %s21
        %p228 = scmp.lt.s32.totalorder %s20, 1
        %s229 = scalar_select %p228, %s20, 1
        %p230 = scmp.lt.s32.totalorder %s227, 31
        %s231 = scalar_select %p230, %s227, 31
        %s232 = smul.addr %s229, 32
        %s233 = sadd.s32 %s231, %s232
        %s234 = smul.addr %s233, 4
        %s235 = scalar_lea.vmem %s0, %s234
        %s236 = smul.u32 16, %s21
      $region36: #{sppcspc_forward.4} parent=31 // pred_fallthru
        _
    $region32: #{sppcspc_forward.4} parent=5 // pred_fallthru
      _
    %p237 = scmp.le.s32.totalorder 1, %s13
    %p238 = scmp.lt.s32.totalorder %s13, 5
    %p239 = pnand %p237, %p238
    %p240 = pneg %p239
    // Predicated region
    $region37: #{sppcspc_forward.4} parent=5 // pred_check
      _
    $region38: #{sppcspc_forward.4} parent=5 // pred_check_branch
      %242 = sbr.rel (%p239) target = $region40
    $region39: #{sppcspc_forward.4} parent=5 // pred_region
      %s243 = ssub.s32 %s13, 1
      %s244 = smul.u32 16, %s23
      %p245 = scmp.lt.s32.totalorder %s22, 1
      %s246 = scalar_select %p245, %s22, 1
      %p247 = scmp.lt.s32.totalorder %s244, 31
      %s248 = scalar_select %p247, %s244, 31
      %s249 = smul.addr %s246, 32
      %s250 = sadd.s32 %s248, %s249
      %s251 = smul.addr %s250, 4
      %s252 = scalar_lea.vmem %s0, %s251
      %p253 = pneg %p53
      %p254 = pneg %p50
      %p255 = pneg %p74
      %p256 = pneg %p71
      %p257 = pneg %p95
      %p258 = pneg %p92
      %p259 = pneg %p116
      %p260 = pneg %p113
      %p261 = pneg %p137
      %p262 = pneg %p134
      %p263 = pneg %p165
      %p264 = pneg %p162
      %s265 = smul.u32 16, %s23
      %p266 = scmp.lt.s32.totalorder %s22, 1
      %s267 = scalar_select %p266, %s22, 1
      %p268 = scmp.lt.s32.totalorder %s265, 31
      %s269 = scalar_select %p268, %s265, 31
      %s270 = smul.addr %s267, 32
      %s271 = sadd.s32 %s269, %s270
      %s272 = smul.addr %s271, 4
      %s273 = scalar_lea.vmem %s5, %s272
      %p274 = pneg %p193
      %p275 = pneg %p190
      %s276 = smul.u32 16, %s23
      %p277 = scmp.lt.s32.totalorder %s22, 1
      %s278 = scalar_select %p277, %s22, 1
      %p279 = scmp.lt.s32.totalorder %s276, 31
      %s280 = scalar_select %p279, %s276, 31
      %s281 = smul.addr %s278, 32
      %s282 = sadd.s32 %s280, %s281
      %s283 = smul.addr %s282, 4
      %s284 = scalar_lea.vmem %s6, %s283
      %s285 = smul.u32 16, %s23
      %p286 = scmp.lt.s32.totalorder %s22, 1
      %s287 = scalar_select %p286, %s22, 1
      %p288 = scmp.lt.s32.totalorder %s285, 31
      %s289 = scalar_select %p288, %s285, 31
      %s290 = smul.addr %s287, 32
      %s291 = sadd.s32 %s289, %s290
      %s292 = smul.addr %s291, 4
      %s293 = scalar_lea.vmem %s0, %s292
      %s294 = smul.u32 16, %s23
      %s295 = smul.u32 16, %s23
      %p296 = scmp.lt.s32.totalorder %s22, 1
      %s297 = scalar_select %p296, %s22, 1
      %p298 = scmp.lt.s32.totalorder %s295, 31
      %s299 = scalar_select %p298, %s295, 31
      %s300 = smul.addr %s297, 32
      %s301 = sadd.s32 %s299, %s300
      %s302 = smul.addr %s301, 4
      %s303 = scalar_lea.vmem %s5, %s302
      %s304 = smul.u32 16, %s23
      %s305 = smul.u32 16, %s23
      %p306 = scmp.lt.s32.totalorder %s22, 1
      %s307 = scalar_select %p306, %s22, 1
      %p308 = scmp.lt.s32.totalorder %s305, 31
      %s309 = scalar_select %p308, %s305, 31
      %s310 = smul.addr %s307, 32
      %s311 = sadd.s32 %s309, %s310
      %s312 = smul.addr %s311, 4
      %s313 = scalar_lea.vmem %s6, %s312
      %s314 = smul.u32 16, %s23
      %v316 = vld [vmem:[%s293] sm:$0xf]
      %v317 = vld [vmem:[%s293 + $0x4] sm:$0xf]
      %v318 = vld [vmem:[%s293 + $0x8] sm:$0xf]
      %v319 = vld [vmem:[%s293 + $0xc] sm:$0xf]
      %v320 = vld [vmem:[%s293 + $0x10] sm:$0xf]
      %v321 = vld [vmem:[%s293 + $0x14] sm:$0xf]
      %v322 = vld [vmem:[%s293 + $0x18] sm:$0xf]
      %v323 = vld [vmem:[%s293 + $0x1c] sm:$0xf]
      %v324 = vld [vmem:[%s293 + $0x20] sm:$0xf]
      %v325 = vld [vmem:[%s293 + $0x24] sm:$0xf]
      %v326 = vld [vmem:[%s293 + $0x28] sm:$0xf]
      %v327 = vld [vmem:[%s293 + $0x2c] sm:$0xf]
      %v328 = vld [vmem:[%s293 + $0x30] sm:$0xf]
      %v329 = vld [vmem:[%s293 + $0x34] sm:$0xf]
      %v330 = vld [vmem:[%s293 + $0x38] sm:$0xf]
      %v331 = vld [vmem:[%s293 + $0x3c] sm:$0xf]
      %v332 = vld [vmem:[%s1] sm:$0x3]
      %v333 = vld [vmem:[%s2] sm:$0x1]
      %v335 = vlaneseq
      %v336 = vshrl.u32 %v335, 7
      %v337 = vsub.s32 0, %v336
      %v338 = vrot.slane %v333, %v337
      %v356 = vunpack.c.l.b16 %v316
      %v357 = vunpack.c.l.b16 %v317
      %v358 = vunpack.c.l.b16 %v318
      %v359 = vunpack.c.l.b16 %v319
      %v360 = vunpack.c.l.b16 %v320
      %v361 = vunpack.c.l.b16 %v321
      %v362 = vunpack.c.l.b16 %v322
      %v363 = vunpack.c.l.b16 %v323
      %v364 = vunpack.c.l.b16 %v324
      %v365 = vunpack.c.l.b16 %v325
      %v366 = vunpack.c.l.b16 %v326
      %v367 = vunpack.c.l.b16 %v327
      %v368 = vunpack.c.l.b16 %v328
      %v369 = vunpack.c.l.b16 %v329
      %v370 = vunpack.c.l.b16 %v330
      %v371 = vunpack.c.l.b16 %v331
      %v372 = vpack.c.b16 %v357, %v356
      %v373 = vpack.c.b16 %v359, %v358
      %v374 = vpack.c.b16 %v361, %v360
      %v375 = vpack.c.b16 %v363, %v362
      %v376 = vpack.c.b16 %v365, %v364
      %v377 = vpack.c.b16 %v367, %v366
      %v378 = vpack.c.b16 %v369, %v368
      %v379 = vpack.c.b16 %v371, %v370
      %vm380 = vcmask 31744
      %v382 = vsel %vm380, %v372, 0
      %v385 = vsel %vm380, %v373, 0
      %v388 = vsel %vm380, %v374, 0
      %v391 = vsel %vm380, %v375, 0
      %v394 = vsel %vm380, %v376, 0
      %v397 = vsel %vm380, %v377, 0
      %v400 = vsel %vm380, %v378, 0
      %v403 = vsel %vm380, %v379, 0
      %vm405 = vcmask 1041408
      %v407 = vsel %vm405, %v332, 0
      %409 = vmatprep.subr.bf16.mxu0 0
      %410 = vmatpush1.bf16.msra.mxu0 %v407
      %411 = vmatprep.subr.bf16.mxu0 0
      %412 = vmatpush1.bf16.msra.mxu0 0
      %413 = vmatprep.subr.bf16.mxu0 0
      %414 = vmatpush1.bf16.msra.mxu0 0
      %415 = vmatprep.subr.bf16.mxu0 0
      %416 = vmatpush1.bf16.msra.mxu0 0
      %417 = vmatprep.subr.bf16.mxu0 0
      %418 = vmatpush1.bf16.msra.mxu0 0
      %419 = vmatprep.subr.bf16.mxu0 0
      %420 = vmatpush1.bf16.msra.mxu0 0
      %421 = vmatprep.subr.bf16.mxu0 0
      %422 = vmatpush1.bf16.msra.mxu0 0
      %423 = vmatprep.subr.bf16.mxu0 0
      %424 = vmatpush1.bf16.msra.mxu0 0
      %425 = vmatprep.subr.bf16.mxu0 0
      %426 = vmatpush1.bf16.msra.mxu0 0
      %427 = vmatprep.subr.bf16.mxu0 0
      %428 = vmatpush1.bf16.msra.mxu0 0
      %429 = vmatprep.subr.bf16.mxu0 0
      %430 = vmatpush1.bf16.msra.mxu0 0
      %431 = vmatprep.subr.bf16.mxu0 0
      %432 = vmatpush1.bf16.msra.mxu0 0
      %433 = vmatprep.subr.bf16.mxu0 0
      %434 = vmatpush1.bf16.msra.mxu0 0
      %435 = vmatprep.subr.bf16.mxu0 0
      %436 = vmatpush1.bf16.msra.mxu0 0
      %437 = vmatprep.subr.bf16.mxu0 0
      %438 = vmatpush1.bf16.msra.mxu0 0
      %439 = vmatprep.subr.bf16.mxu0 0
      %440 = vmatpush1.bf16.msra.mxu0 0
      %441 = vmatprep.mubr.bf16.mxu0 0
      %442 = vmatmul.mubr.bf16.gmra.mrb[0].mxu0 %v382
      %v443 = vpop.f32.mrb[0].mxu0
      %v444 = vadd.f32 %v338, %v443
      %v445 = vpop.f32.mrb[0].mxu0
      %v446 = vpop.f32.mrb[0].mxu0
      %v447 = vadd.f32 %v338, %v446
      %v448 = vpop.f32.mrb[0].mxu0
      %449 = vmatprep.mubr.bf16.mxu0 0
      %450 = vmatmul.mubr.bf16.gmra.mrb[0].mxu0 %v385
      %v451 = vpop.f32.mrb[0].mxu0
      %v452 = vadd.f32 %v338, %v451
      %v453 = vpop.f32.mrb[0].mxu0
      %v454 = vpop.f32.mrb[0].mxu0
      %v455 = vadd.f32 %v338, %v454
      %v456 = vpop.f32.mrb[0].mxu0
      %457 = vmatprep.mubr.bf16.mxu0 0
      %458 = vmatmul.mubr.bf16.gmra.mrb[0].mxu0 %v388
      %v459 = vpop.f32.mrb[0].mxu0
      %v460 = vadd.f32 %v338, %v459
      %v461 = vpop.f32.mrb[0].mxu0
      %v462 = vpop.f32.mrb[0].mxu0
      %v463 = vadd.f32 %v338, %v462
      %v464 = vpop.f32.mrb[0].mxu0
      %465 = vmatprep.mubr.bf16.mxu0 0
      %466 = vmatmul.mubr.bf16.gmra.mrb[0].mxu0 %v391
      %v467 = vpop.f32.mrb[0].mxu0
      %v468 = vadd.f32 %v338, %v467
      %v469 = vpop.f32.mrb[0].mxu0
      %v470 = vpop.f32.mrb[0].mxu0
      %v471 = vadd.f32 %v338, %v470
      %v472 = vpop.f32.mrb[0].mxu0
      %473 = vmatprep.mubr.bf16.mxu0 0
      %474 = vmatmul.mubr.bf16.gmra.mrb[0].mxu0 %v394
      %v475 = vpop.f32.mrb[0].mxu0
      %v476 = vadd.f32 %v338, %v475
      %v477 = vpop.f32.mrb[0].mxu0
      %v478 = vpop.f32.mrb[0].mxu0
      %v479 = vadd.f32 %v338, %v478
      %v480 = vpop.f32.mrb[0].mxu0
      %481 = vmatprep.mubr.bf16.mxu0 0
      %482 = vmatmul.mubr.bf16.gmra.mrb[0].mxu0 %v397
      %v483 = vpop.f32.mrb[0].mxu0
      %v484 = vadd.f32 %v338, %v483
      %v485 = vpop.f32.mrb[0].mxu0
      %v486 = vpop.f32.mrb[0].mxu0
      %v487 = vadd.f32 %v338, %v486
      %v488 = vpop.f32.mrb[0].mxu0
      %489 = vmatprep.mubr.bf16.mxu0 0
      %490 = vmatmul.mubr.bf16.gmra.mrb[0].mxu0 %v400
      %v491 = vpop.f32.mrb[0].mxu0
      %v492 = vadd.f32 %v338, %v491
      %v493 = vpop.f32.mrb[0].mxu0
      %v494 = vpop.f32.mrb[0].mxu0
      %v495 = vadd.f32 %v338, %v494
      %v496 = vpop.f32.mrb[0].mxu0
      %497 = vmatprep.mubr.bf16.mxu0 0
      %498 = vmatmul.mubr.bf16.gmra.mrb[0].mxu0 %v403
      %v499 = vpop.f32.mrb[0].mxu0
      %v500 = vadd.f32 %v338, %v499
      %v501 = vpop.f32.mrb[0].mxu0
      %v502 = vpop.f32.mrb[0].mxu0
      %v503 = vadd.f32 %v338, %v502
      %v504 = vpop.f32.mrb[0].mxu0
      %505 = vdwg.mxu0
      %v506 = vxor.u32 %v444, 2147483648
      %v507 = vxor.u32 %v447, 2147483648
      %v508 = vxor.u32 %v452, 2147483648
      %v509 = vxor.u32 %v455, 2147483648
      %v510 = vxor.u32 %v460, 2147483648
      %v511 = vxor.u32 %v463, 2147483648
      %v512 = vxor.u32 %v468, 2147483648
      %v513 = vxor.u32 %v471, 2147483648
      %v514 = vxor.u32 %v476, 2147483648
      %v515 = vxor.u32 %v479, 2147483648
      %v516 = vxor.u32 %v484, 2147483648
      %v517 = vxor.u32 %v487, 2147483648
      %v518 = vxor.u32 %v492, 2147483648
      %v519 = vxor.u32 %v495, 2147483648
      %v520 = vxor.u32 %v500, 2147483648
      %v521 = vxor.u32 %v503, 2147483648
      %v522 = vmul.f32 %v506, 1.442695
      %v523 = vpow.pop %v522
      %v524 = vmul.f32 %v507, 1.442695
      %v525 = vpow.pop %v524
      %v526 = vmul.f32 %v508, 1.442695
      %v527 = vpow.pop %v526
      %v528 = vmul.f32 %v509, 1.442695
      %v529 = vpow.pop %v528
      %v530 = vmul.f32 %v510, 1.442695
      %v531 = vpow.pop %v530
      %v532 = vmul.f32 %v511, 1.442695
      %v533 = vpow.pop %v532
      %v534 = vmul.f32 %v512, 1.442695
      %v535 = vpow.pop %v534
      %v536 = vmul.f32 %v513, 1.442695
      %v537 = vpow.pop %v536
      %v538 = vmul.f32 %v514, 1.442695
      %v539 = vpow.pop %v538
      %v540 = vmul.f32 %v515, 1.442695
      %v541 = vpow.pop %v540
      %v542 = vmul.f32 %v516, 1.442695
      %v543 = vpow.pop %v542
      %v544 = vmul.f32 %v517, 1.442695
      %v545 = vpow.pop %v544
      %v546 = vmul.f32 %v518, 1.442695
      %v547 = vpow.pop %v546
      %v548 = vmul.f32 %v519, 1.442695
      %v549 = vpow.pop %v548
      %v550 = vmul.f32 %v520, 1.442695
      %v551 = vpow.pop %v550
      %v552 = vmul.f32 %v521, 1.442695
      %v553 = vpow.pop %v552
      %v554 = vadd.f32 %v523, 1.0
      %v555 = vadd.f32 %v525, 1.0
      %v556 = vadd.f32 %v527, 1.0
      %v557 = vadd.f32 %v529, 1.0
      %v558 = vadd.f32 %v531, 1.0
      %v559 = vadd.f32 %v533, 1.0
      %v560 = vadd.f32 %v535, 1.0
      %v561 = vadd.f32 %v537, 1.0
      %v562 = vadd.f32 %v539, 1.0
      %v563 = vadd.f32 %v541, 1.0
      %v564 = vadd.f32 %v543, 1.0
      %v565 = vadd.f32 %v545, 1.0
      %v566 = vadd.f32 %v547, 1.0
      %v567 = vadd.f32 %v549, 1.0
      %v568 = vadd.f32 %v551, 1.0
      %v569 = vadd.f32 %v553, 1.0
      %v570 = vrcp.pop %v554
      %v571 = vmul.f32 1.0, %v570
      %v572 = vrcp.pop %v555
      %v573 = vmul.f32 1.0, %v572
      %v574 = vrcp.pop %v556
      %v575 = vmul.f32 1.0, %v574
      %v576 = vrcp.pop %v557
      %v577 = vmul.f32 1.0, %v576
      %v578 = vrcp.pop %v558
      %v579 = vmul.f32 1.0, %v578
      %v580 = vrcp.pop %v559
      %v581 = vmul.f32 1.0, %v580
      %v582 = vrcp.pop %v560
      %v583 = vmul.f32 1.0, %v582
      %v584 = vrcp.pop %v561
      %v585 = vmul.f32 1.0, %v584
      %v586 = vrcp.pop %v562
      %v587 = vmul.f32 1.0, %v586
      %v588 = vrcp.pop %v563
      %v589 = vmul.f32 1.0, %v588
      %v590 = vrcp.pop %v564
      %v591 = vmul.f32 1.0, %v590
      %v592 = vrcp.pop %v565
      %v593 = vmul.f32 1.0, %v592
      %v594 = vrcp.pop %v566
      %v595 = vmul.f32 1.0, %v594
      %v596 = vrcp.pop %v567
      %v597 = vmul.f32 1.0, %v596
      %v598 = vrcp.pop %v568
      %v599 = vmul.f32 1.0, %v598
      %v600 = vrcp.pop %v569
      %v601 = vmul.f32 1.0, %v600
      %v602 = vmul.f32 %v444, %v571
      %v603 = vmul.f32 %v447, %v573
      %v604 = vmul.f32 %v452, %v575
      %v605 = vmul.f32 %v455, %v577
      %v606 = vmul.f32 %v460, %v579
      %v607 = vmul.f32 %v463, %v581
      %v608 = vmul.f32 %v468, %v583
      %v609 = vmul.f32 %v471, %v585
      %v610 = vmul.f32 %v476, %v587
      %v611 = vmul.f32 %v479, %v589
      %v612 = vmul.f32 %v484, %v591
      %v613 = vmul.f32 %v487, %v593
      %v614 = vmul.f32 %v492, %v595
      %v615 = vmul.f32 %v495, %v597
      %v616 = vmul.f32 %v500, %v599
      %v617 = vmul.f32 %v503, %v601
      %v618 = vpack.c.bf16 %v603, %v602
      %v619 = vpack.c.bf16 %v605, %v604
      %v620 = vpack.c.bf16 %v607, %v606
      %v621 = vpack.c.bf16 %v609, %v608
      %v622 = vpack.c.bf16 %v611, %v610
      %v623 = vpack.c.bf16 %v613, %v612
      %v624 = vpack.c.bf16 %v615, %v614
      %v625 = vpack.c.bf16 %v617, %v616
      %v634 = vunpack.c.l.b16 %v618
      %v635 = vunpack.c.h.b16 %v618
      %v636 = vunpack.c.l.b16 %v619
      %v637 = vunpack.c.h.b16 %v619
      %v638 = vunpack.c.l.b16 %v620
      %v639 = vunpack.c.h.b16 %v620
      %v640 = vunpack.c.l.b16 %v621
      %v641 = vunpack.c.h.b16 %v621
      %v642 = vunpack.c.l.b16 %v622
      %v643 = vunpack.c.h.b16 %v622
      %v644 = vunpack.c.l.b16 %v623
      %v645 = vunpack.c.h.b16 %v623
      %v646 = vunpack.c.l.b16 %v624
      %v647 = vunpack.c.h.b16 %v624
      %v648 = vunpack.c.l.b16 %v625
      %v649 = vunpack.c.h.b16 %v625
      %v650 = vpack.c.b16 %v634, %v634
      %v651 = vpack.c.b16 %v635, %v635
      %v652 = vpack.c.b16 %v636, %v636
      %v653 = vpack.c.b16 %v637, %v637
      %v654 = vpack.c.b16 %v638, %v638
      %v655 = vpack.c.b16 %v639, %v639
      %v656 = vpack.c.b16 %v640, %v640
      %v657 = vpack.c.b16 %v641, %v641
      %v658 = vpack.c.b16 %v642, %v642
      %v659 = vpack.c.b16 %v643, %v643
      %v660 = vpack.c.b16 %v644, %v644
      %v661 = vpack.c.b16 %v645, %v645
      %v662 = vpack.c.b16 %v646, %v646
      %v663 = vpack.c.b16 %v647, %v647
      %v664 = vpack.c.b16 %v648, %v648
      %v665 = vpack.c.b16 %v649, %v649
      %vm682 = vcmask 60416
      %683 = vst.msk [vmem:[%s303] sm:$0xf] %vm682, %v650
      %684 = vst.msk [vmem:[%s303 + $0x4] sm:$0xf] %vm682, %v651
      %685 = vst.msk [vmem:[%s303 + $0x8] sm:$0xf] %vm682, %v652
      %686 = vst.msk [vmem:[%s303 + $0xc] sm:$0xf] %vm682, %v653
      %687 = vst.msk [vmem:[%s303 + $0x10] sm:$0xf] %vm682, %v654
      %688 = vst.msk [vmem:[%s303 + $0x14] sm:$0xf] %vm682, %v655
      %689 = vst.msk [vmem:[%s303 + $0x18] sm:$0xf] %vm682, %v656
      %690 = vst.msk [vmem:[%s303 + $0x1c] sm:$0xf] %vm682, %v657
      %691 = vst.msk [vmem:[%s303 + $0x20] sm:$0xf] %vm682, %v658
      %692 = vst.msk [vmem:[%s303 + $0x24] sm:$0xf] %vm682, %v659
      %693 = vst.msk [vmem:[%s303 + $0x28] sm:$0xf] %vm682, %v660
      %694 = vst.msk [vmem:[%s303 + $0x2c] sm:$0xf] %vm682, %v661
      %695 = vst.msk [vmem:[%s303 + $0x30] sm:$0xf] %vm682, %v662
      %696 = vst.msk [vmem:[%s303 + $0x34] sm:$0xf] %vm682, %v663
      %697 = vst.msk [vmem:[%s303 + $0x38] sm:$0xf] %vm682, %v664
      %698 = vst.msk [vmem:[%s303 + $0x3c] sm:$0xf] %vm682, %v665
      %v699 = vld [vmem:[%s3] sm:$0x3]
      %v700 = vld [vmem:[%s4] sm:$0x1]
      %v702 = vlaneseq
      %v703 = vshrl.u32 %v702, 7
      %v704 = vsub.s32 0, %v703
      %v705 = vrot.slane %v700, %v704
      %v708 = vsel %vm405, %v699, 0
      %710 = vmatprep.subr.bf16.mxu0 0
      %711 = vmatpush1.bf16.msra.mxu0 %v708
      %712 = vmatprep.subr.bf16.mxu0 0
      %713 = vmatpush1.bf16.msra.mxu0 0
      %714 = vmatprep.subr.bf16.mxu0 0
      %715 = vmatpush1.bf16.msra.mxu0 0
      %716 = vmatprep.subr.bf16.mxu0 0
      %717 = vmatpush1.bf16.msra.mxu0 0
      %718 = vmatprep.subr.bf16.mxu0 0
      %719 = vmatpush1.bf16.msra.mxu0 0
      %720 = vmatprep.subr.bf16.mxu0 0
      %721 = vmatpush1.bf16.msra.mxu0 0
      %722 = vmatprep.subr.bf16.mxu0 0
      %723 = vmatpush1.bf16.msra.mxu0 0
      %724 = vmatprep.subr.bf16.mxu0 0
      %725 = vmatpush1.bf16.msra.mxu0 0
      %726 = vmatprep.subr.bf16.mxu0 0
      %727 = vmatpush1.bf16.msra.mxu0 0
      %728 = vmatprep.subr.bf16.mxu0 0
      %729 = vmatpush1.bf16.msra.mxu0 0
      %730 = vmatprep.subr.bf16.mxu0 0
      %731 = vmatpush1.bf16.msra.mxu0 0
      %732 = vmatprep.subr.bf16.mxu0 0
      %733 = vmatpush1.bf16.msra.mxu0 0
      %734 = vmatprep.subr.bf16.mxu0 0
      %735 = vmatpush1.bf16.msra.mxu0 0
      %736 = vmatprep.subr.bf16.mxu0 0
      %737 = vmatpush1.bf16.msra.mxu0 0
      %738 = vmatprep.subr.bf16.mxu0 0
      %739 = vmatpush1.bf16.msra.mxu0 0
      %740 = vmatprep.subr.bf16.mxu0 0
      %741 = vmatpush1.bf16.msra.mxu0 0
      %742 = vmatprep.mubr.bf16.mxu0 0
      %743 = vmatmul.mubr.bf16.gmra.mrb[0].mxu0 %v382
      %v744 = vpop.f32.mrb[0].mxu0
      %v745 = vadd.f32 %v705, %v744
      %v746 = vpop.f32.mrb[0].mxu0
      %v747 = vpop.f32.mrb[0].mxu0
      %v748 = vadd.f32 %v705, %v747
      %v749 = vpop.f32.mrb[0].mxu0
      %750 = vmatprep.mubr.bf16.mxu0 0
      %751 = vmatmul.mubr.bf16.gmra.mrb[0].mxu0 %v385
      %v752 = vpop.f32.mrb[0].mxu0
      %v753 = vadd.f32 %v705, %v752
      %v754 = vpop.f32.mrb[0].mxu0
      %v755 = vpop.f32.mrb[0].mxu0
      %v756 = vadd.f32 %v705, %v755
      %v757 = vpop.f32.mrb[0].mxu0
      %758 = vmatprep.mubr.bf16.mxu0 0
      %759 = vmatmul.mubr.bf16.gmra.mrb[0].mxu0 %v388
      %v760 = vpop.f32.mrb[0].mxu0
      %v761 = vadd.f32 %v705, %v760
      %v762 = vpop.f32.mrb[0].mxu0
      %v763 = vpop.f32.mrb[0].mxu0
      %v764 = vadd.f32 %v705, %v763
      %v765 = vpop.f32.mrb[0].mxu0
      %766 = vmatprep.mubr.bf16.mxu0 0
      %767 = vmatmul.mubr.bf16.gmra.mrb[0].mxu0 %v391
      %v768 = vpop.f32.mrb[0].mxu0
      %v769 = vadd.f32 %v705, %v768
      %v770 = vpop.f32.mrb[0].mxu0
      %v771 = vpop.f32.mrb[0].mxu0
      %v772 = vadd.f32 %v705, %v771
      %v773 = vpop.f32.mrb[0].mxu0
      %774 = vmatprep.mubr.bf16.mxu0 0
      %775 = vmatmul.mubr.bf16.gmra.mrb[0].mxu0 %v394
      %v776 = vpop.f32.mrb[0].mxu0
      %v777 = vadd.f32 %v705, %v776
      %v778 = vpop.f32.mrb[0].mxu0
      %v779 = vpop.f32.mrb[0].mxu0
      %v780 = vadd.f32 %v705, %v779
      %v781 = vpop.f32.mrb[0].mxu0
      %782 = vmatprep.mubr.bf16.mxu0 0
      %783 = vmatmul.mubr.bf16.gmra.mrb[0].mxu0 %v397
      %v784 = vpop.f32.mrb[0].mxu0
      %v785 = vadd.f32 %v705, %v784
      %v786 = vpop.f32.mrb[0].mxu0
      %v787 = vpop.f32.mrb[0].mxu0
      %v788 = vadd.f32 %v705, %v787
      %v789 = vpop.f32.mrb[0].mxu0
      %790 = vmatprep.mubr.bf16.mxu0 0
      %791 = vmatmul.mubr.bf16.gmra.mrb[0].mxu0 %v400
      %v792 = vpop.f32.mrb[0].mxu0
      %v793 = vadd.f32 %v705, %v792
      %v794 = vpop.f32.mrb[0].mxu0
      %v795 = vpop.f32.mrb[0].mxu0
      %v796 = vadd.f32 %v705, %v795
      %v797 = vpop.f32.mrb[0].mxu0
      %798 = vmatprep.mubr.bf16.mxu0 0
      %799 = vmatmul.mubr.bf16.gmra.mrb[0].mxu0 %v403
      %v800 = vpop.f32.mrb[0].mxu0
      %v801 = vadd.f32 %v705, %v800
      %v802 = vpop.f32.mrb[0].mxu0
      %v803 = vpop.f32.mrb[0].mxu0
      %v804 = vadd.f32 %v705, %v803
      %v805 = vpop.f32.mrb[0].mxu0
      %806 = vdwg.mxu0
      %v807 = vxor.u32 %v745, 2147483648
      %v808 = vxor.u32 %v748, 2147483648
      %v809 = vxor.u32 %v753, 2147483648
      %v810 = vxor.u32 %v756, 2147483648
      %v811 = vxor.u32 %v761, 2147483648
      %v812 = vxor.u32 %v764, 2147483648
      %v813 = vxor.u32 %v769, 2147483648
      %v814 = vxor.u32 %v772, 2147483648
      %v815 = vxor.u32 %v777, 2147483648
      %v816 = vxor.u32 %v780, 2147483648
      %v817 = vxor.u32 %v785, 2147483648
      %v818 = vxor.u32 %v788, 2147483648
      %v819 = vxor.u32 %v793, 2147483648
      %v820 = vxor.u32 %v796, 2147483648
      %v821 = vxor.u32 %v801, 2147483648
      %v822 = vxor.u32 %v804, 2147483648
      %v823 = vmul.f32 %v807, 1.442695
      %v824 = vpow.pop %v823
      %v825 = vmul.f32 %v808, 1.442695
      %v826 = vpow.pop %v825
      %v827 = vmul.f32 %v809, 1.442695
      %v828 = vpow.pop %v827
      %v829 = vmul.f32 %v810, 1.442695
      %v830 = vpow.pop %v829
      %v831 = vmul.f32 %v811, 1.442695
      %v832 = vpow.pop %v831
      %v833 = vmul.f32 %v812, 1.442695
      %v834 = vpow.pop %v833
      %v835 = vmul.f32 %v813, 1.442695
      %v836 = vpow.pop %v835
      %v837 = vmul.f32 %v814, 1.442695
      %v838 = vpow.pop %v837
      %v839 = vmul.f32 %v815, 1.442695
      %v840 = vpow.pop %v839
      %v841 = vmul.f32 %v816, 1.442695
      %v842 = vpow.pop %v841
      %v843 = vmul.f32 %v817, 1.442695
      %v844 = vpow.pop %v843
      %v845 = vmul.f32 %v818, 1.442695
      %v846 = vpow.pop %v845
      %v847 = vmul.f32 %v819, 1.442695
      %v848 = vpow.pop %v847
      %v849 = vmul.f32 %v820, 1.442695
      %v850 = vpow.pop %v849
      %v851 = vmul.f32 %v821, 1.442695
      %v852 = vpow.pop %v851
      %v853 = vmul.f32 %v822, 1.442695
      %v854 = vpow.pop %v853
      %v855 = vadd.f32 %v824, 1.0
      %v856 = vadd.f32 %v826, 1.0
      %v857 = vadd.f32 %v828, 1.0
      %v858 = vadd.f32 %v830, 1.0
      %v859 = vadd.f32 %v832, 1.0
      %v860 = vadd.f32 %v834, 1.0
      %v861 = vadd.f32 %v836, 1.0
      %v862 = vadd.f32 %v838, 1.0
      %v863 = vadd.f32 %v840, 1.0
      %v864 = vadd.f32 %v842, 1.0
      %v865 = vadd.f32 %v844, 1.0
      %v866 = vadd.f32 %v846, 1.0
      %v867 = vadd.f32 %v848, 1.0
      %v868 = vadd.f32 %v850, 1.0
      %v869 = vadd.f32 %v852, 1.0
      %v870 = vadd.f32 %v854, 1.0
      %v871 = vrcp.pop %v855
      %v872 = vmul.f32 1.0, %v871
      %v873 = vrcp.pop %v856
      %v874 = vmul.f32 1.0, %v873
      %v875 = vrcp.pop %v857
      %v876 = vmul.f32 1.0, %v875
      %v877 = vrcp.pop %v858
      %v878 = vmul.f32 1.0, %v877
      %v879 = vrcp.pop %v859
      %v880 = vmul.f32 1.0, %v879
      %v881 = vrcp.pop %v860
      %v882 = vmul.f32 1.0, %v881
      %v883 = vrcp.pop %v861
      %v884 = vmul.f32 1.0, %v883
      %v885 = vrcp.pop %v862
      %v886 = vmul.f32 1.0, %v885
      %v887 = vrcp.pop %v863
      %v888 = vmul.f32 1.0, %v887
      %v889 = vrcp.pop %v864
      %v890 = vmul.f32 1.0, %v889
      %v891 = vrcp.pop %v865
      %v892 = vmul.f32 1.0, %v891
      %v893 = vrcp.pop %v866
      %v894 = vmul.f32 1.0, %v893
      %v895 = vrcp.pop %v867
      %v896 = vmul.f32 1.0, %v895
      %v897 = vrcp.pop %v868
      %v898 = vmul.f32 1.0, %v897
      %v899 = vrcp.pop %v869
      %v900 = vmul.f32 1.0, %v899
      %v901 = vrcp.pop %v870
      %v902 = vmul.f32 1.0, %v901
      %v903 = vmul.f32 %v745, %v872
      %v904 = vmul.f32 %v748, %v874
      %v905 = vmul.f32 %v753, %v876
      %v906 = vmul.f32 %v756, %v878
      %v907 = vmul.f32 %v761, %v880
      %v908 = vmul.f32 %v764, %v882
      %v909 = vmul.f32 %v769, %v884
      %v910 = vmul.f32 %v772, %v886
      %v911 = vmul.f32 %v777, %v888
      %v912 = vmul.f32 %v780, %v890
      %v913 = vmul.f32 %v785, %v892
      %v914 = vmul.f32 %v788, %v894
      %v915 = vmul.f32 %v793, %v896
      %v916 = vmul.f32 %v796, %v898
      %v917 = vmul.f32 %v801, %v900
      %v918 = vmul.f32 %v804, %v902
      %v919 = vpack.c.bf16 %v904, %v903
      %v920 = vpack.c.bf16 %v906, %v905
      %v921 = vpack.c.bf16 %v908, %v907
      %v922 = vpack.c.bf16 %v910, %v909
      %v923 = vpack.c.bf16 %v912, %v911
      %v924 = vpack.c.bf16 %v914, %v913
      %v925 = vpack.c.bf16 %v916, %v915
      %v926 = vpack.c.bf16 %v918, %v917
      %v935 = vunpack.c.l.b16 %v919
      %v936 = vunpack.c.h.b16 %v919
      %v937 = vunpack.c.l.b16 %v920
      %v938 = vunpack.c.h.b16 %v920
      %v939 = vunpack.c.l.b16 %v921
      %v940 = vunpack.c.h.b16 %v921
      %v941 = vunpack.c.l.b16 %v922
      %v942 = vunpack.c.h.b16 %v922
      %v943 = vunpack.c.l.b16 %v923
      %v944 = vunpack.c.h.b16 %v923
      %v945 = vunpack.c.l.b16 %v924
      %v946 = vunpack.c.h.b16 %v924
      %v947 = vunpack.c.l.b16 %v925
      %v948 = vunpack.c.h.b16 %v925
      %v949 = vunpack.c.l.b16 %v926
      %v950 = vunpack.c.h.b16 %v926
      %v951 = vpack.c.b16 %v935, %v935
      %v952 = vpack.c.b16 %v936, %v936
      %v953 = vpack.c.b16 %v937, %v937
      %v954 = vpack.c.b16 %v938, %v938
      %v955 = vpack.c.b16 %v939, %v939
      %v956 = vpack.c.b16 %v940, %v940
      %v957 = vpack.c.b16 %v941, %v941
      %v958 = vpack.c.b16 %v942, %v942
      %v959 = vpack.c.b16 %v943, %v943
      %v960 = vpack.c.b16 %v944, %v944
      %v961 = vpack.c.b16 %v945, %v945
      %v962 = vpack.c.b16 %v946, %v946
      %v963 = vpack.c.b16 %v947, %v947
      %v964 = vpack.c.b16 %v948, %v948
      %v965 = vpack.c.b16 %v949, %v949
      %v966 = vpack.c.b16 %v950, %v950
      %983 = vst.msk [vmem:[%s313] sm:$0xf] %vm682, %v951
      %984 = vst.msk [vmem:[%s313 + $0x4] sm:$0xf] %vm682, %v952
      %985 = vst.msk [vmem:[%s313 + $0x8] sm:$0xf] %vm682, %v953
      %986 = vst.msk [vmem:[%s313 + $0xc] sm:$0xf] %vm682, %v954
      %987 = vst.msk [vmem:[%s313 + $0x10] sm:$0xf] %vm682, %v955
      %988 = vst.msk [vmem:[%s313 + $0x14] sm:$0xf] %vm682, %v956
      %989 = vst.msk [vmem:[%s313 + $0x18] sm:$0xf] %vm682, %v957
      %990 = vst.msk [vmem:[%s313 + $0x1c] sm:$0xf] %vm682, %v958
      %991 = vst.msk [vmem:[%s313 + $0x20] sm:$0xf] %vm682, %v959
      %992 = vst.msk [vmem:[%s313 + $0x24] sm:$0xf] %vm682, %v960
      %993 = vst.msk [vmem:[%s313 + $0x28] sm:$0xf] %vm682, %v961
      %994 = vst.msk [vmem:[%s313 + $0x2c] sm:$0xf] %vm682, %v962
      %995 = vst.msk [vmem:[%s313 + $0x30] sm:$0xf] %vm682, %v963
      %996 = vst.msk [vmem:[%s313 + $0x34] sm:$0xf] %vm682, %v964
      %997 = vst.msk [vmem:[%s313 + $0x38] sm:$0xf] %vm682, %v965
      %998 = vst.msk [vmem:[%s313 + $0x3c] sm:$0xf] %vm682, %v966
      %s999 = smul.u32 16, %s23
      %p1000 = scmp.lt.s32.totalorder %s22, 1
      %s1001 = scalar_select %p1000, %s22, 1
      %p1002 = scmp.lt.s32.totalorder %s999, 31
      %s1003 = scalar_select %p1002, %s999, 31
      %s1004 = smul.addr %s1001, 32
      %s1005 = sadd.s32 %s1003, %s1004
      %s1006 = smul.addr %s1005, 4
      %s1007 = scalar_lea.vmem %s5, %s1006
      %s1008 = smul.u32 16, %s23
      %p1009 = scmp.lt.s32.totalorder %s22, 1
      %s1010 = scalar_select %p1009, %s22, 1
      %p1011 = scmp.lt.s32.totalorder %s1008, 31
      %s1012 = scalar_select %p1011, %s1008, 31
      %s1013 = smul.addr %s1010, 32
      %s1014 = sadd.s32 %s1012, %s1013
      %s1015 = smul.addr %s1014, 4
      %s1016 = scalar_lea.vmem %s6, %s1015
      // Predicated region
      $region41: #{sppcspc_forward.4} parent=39 // pred_check
        %p1017 = pneg %p162
      $region42: #{sppcspc_forward.4} parent=39 // pred_check_branch
        %1019 = sbr.rel (%p1017) target = $region44
      $region43: #{sppcspc_forward.4} parent=39 // pred_region
        %s1020 = smul.u32 16, %s23
      $region44: #{sppcspc_forward.4} parent=39 // pred_fallthru
        _
      // Predicated region
      $region45: #{sppcspc_forward.4} parent=39 // pred_check
        %p1021 = pneg %p190
      $region46: #{sppcspc_forward.4} parent=39 // pred_check_branch
        %1023 = sbr.rel (%p1021) target = $region48
      $region47: #{sppcspc_forward.4} parent=39 // pred_region
        %s1024 = smul.u32 16, %s23
      $region48: #{sppcspc_forward.4} parent=39 // pred_fallthru
        _
    $region40: #{sppcspc_forward.4} parent=5 // pred_fallthru
      _
    %p1025 = scmp.le.s32.totalorder 2, %s13
    // Predicated region
    $region49: #{sppcspc_forward.4} parent=5 // pred_check
      %p1026 = pneg %p1025
    $region50: #{sppcspc_forward.4} parent=5 // pred_check_branch
      %1028 = sbr.rel (%p1026) target = $region52
    $region51: #{sppcspc_forward.4} parent=5 // pred_region
      %s1029 = ssub.s32 %s13, 2
      // Predicated region
      $region53: #{sppcspc_forward.4} parent=51 // pred_check
        %p1030 = pneg %p168
      $region54: #{sppcspc_forward.4} parent=51 // pred_check_branch
        %1032 = sbr.rel (%p1030) target = $region56
      $region55: #{sppcspc_forward.4} parent=51 // pred_region
        %s1033 = smul.u32 16, %s25
        %p1034 = scmp.lt.s32.totalorder %s24, 1
        %s1035 = scalar_select %p1034, %s24, 1
        %p1036 = scmp.lt.s32.totalorder %s1033, 31
        %s1037 = scalar_select %p1036, %s1033, 31
        %s1038 = smul.addr %s1035, 32
        %s1039 = sadd.s32 %s1037, %s1038
        %s1040 = smul.addr %s1039, 4
        %s1041 = scalar_lea.vmem %s5, %s1040
      $region56: #{sppcspc_forward.4} parent=51 // pred_fallthru
        _
      // Predicated region
      $region57: #{sppcspc_forward.4} parent=51 // pred_check
        %p1042 = pneg %p196
      $region58: #{sppcspc_forward.4} parent=51 // pred_check_branch
        %1044 = sbr.rel (%p1042) target = $region60
      $region59: #{sppcspc_forward.4} parent=51 // pred_region
        %s1045 = smul.u32 16, %s25
        %p1046 = scmp.lt.s32.totalorder %s24, 1
        %s1047 = scalar_select %p1046, %s24, 1
        %p1048 = scmp.lt.s32.totalorder %s1045, 31
        %s1049 = scalar_select %p1048, %s1045, 31
        %s1050 = smul.addr %s1047, 32
        %s1051 = sadd.s32 %s1049, %s1050
        %s1052 = smul.addr %s1051, 4
        %s1053 = scalar_lea.vmem %s6, %s1052
      $region60: #{sppcspc_forward.4} parent=51 // pred_fallthru
        _
    $region52: #{sppcspc_forward.4} parent=5 // pred_fallthru
      _
  $region6: #{sppcspc_forward.4} parent=0 // loop_footer
    %s17 = sadd.s32 1, %s13
  $region7: #{sppcspc_forward.4} parent=0 // loop_footer_branch
    %12 = sbr.rel target = $region3
  $region8: #{sppcspc_forward.4} parent=0 // loop_exit
    _

// kernel: sppcspc_forward.5
$region0: #{sppcspc_forward.5}
  #allocation0 [shape = 'u32[]', space=smem, size = 0x4, offset = 0x4, fixed_abs, tag = 'smem constant byte address 0x4 - core index']
  #allocation1 [shape = 'u32[144,128]{1,0:T(1,128)}', space=vmem, size = 0x12000, scoped, tag = 'internal scratch']
  %s0 = inlined_call_operand.vmem [shape: bf16[2,16,16,8], index: 0, kind: input, shape index: {}]
  %s1 = inlined_call_operand.vmem [shape: bf16[9,8,8], index: 1, kind: input, shape index: {}]
  %s2 = inlined_call_operand.vmem [shape: f32[1,8], index: 2, kind: input, shape index: {}]
  %s3 = inlined_call_operand.vmem [shape: bf16[8,8], index: 3, kind: input, shape index: {}]
  %s4 = inlined_call_operand.vmem [shape: f32[1,8], index: 4, kind: input, shape index: {}]
  %s5 = inlined_call_operand.vmem [shape: bf16[2,256,8], index: 5, kind: output, shape index: {}]
  %s6 = sld [smem:[#allocation0]]
  $region53: #{sppcspc_forward.5} parent=0
    _
  %s8 = ssub.s32 1, %s6
  %s9 = scalar_select 0, %s8, %s6
  loop: start=0, step=1, limit=4
  $region2: #{sppcspc_forward.5} parent=0 // loop_pre_header
    _
  $region3: #{sppcspc_forward.5} parent=0 // loop_header
    %s11 = sphi 0, %s15
    %p12 = scmp.ge.s32.totalorder %s11, 4
    %s21 = sphi 0, %s23
    %s24 = sphi 0, %s21
    %s25 = sphi 0, %s24
    %s41 = sphi 0, %s25
    %s45 = sphi 0, %s45
    %s47 = sphi 0, %s45
    %s48 = sphi 0, %s47
    %s62 = sphi 0, %s48
    %s66 = sphi 0, %s66
    %s68 = sphi 0, %s66
    %s69 = sphi 0, %s68
    %s83 = sphi 0, %s69
    %s87 = sphi 0, %s87
    %s89 = sphi 0, %s87
    %s90 = sphi 0, %s89
    %s104 = sphi 0, %s90
    %s108 = sphi 0, %s108
    %s110 = sphi 0, %s108
    %s111 = sphi 0, %s110
    %s125 = sphi 0, %s111
    %s131 = sphi 0, %s133
    %s134 = sphi 0, %s131
    %s135 = sphi 0, %s134
    %s151 = sphi 0, %s135
  $region4: #{sppcspc_forward.5} parent=0 // loop_header_branch
    %14 = sbr.rel (%p12) target = $region8
  $region5: #{sppcspc_forward.5} parent=0 // loop_body
    %s16 = ssub.s32 %s11, 1
    %s17 = ssub.s32 %s11, 2
    %s18 = sadd.s32 %s11, 1
    %s19 = ssub.s32 %s11, %s18
    %p20 = scmp.eq.s32.totalorder %s19, 0
    %s22 = sadd.s32 %s21, 1
    %s23 = scalar_select %p20, %s21, %s22
    %p26 = pneg %p20
    %p27 = scmp.eq.s32.totalorder %s11, 1
    %p28 = por %p26, %p27
    %p29 = scmp.ne.s32.totalorder %s21, %s24
    %p30 = scmp.eq.s32.totalorder %s11, 0
    %p31 = por %p29, %p30
    %p32 = scmp.ne.s32.totalorder %s21, %s24
    %p33 = scmp.eq.s32.totalorder %s16, 1
    %p34 = por %p32, %p33
    %p35 = scmp.ne.s32.totalorder %s24, %s25
    %p36 = scmp.eq.s32.totalorder %s16, 0
    %p37 = por %p35, %p36
    %p38 = scmp.ne.s32.totalorder %s24, %s25
    %p39 = scmp.eq.s32.totalorder %s17, 1
    %p40 = por %p38, %p39
    %p42 = scmp.ne.s32.totalorder %s25, %s41
    %p43 = scmp.eq.s32.totalorder %s17, 0
    %p44 = por %p42, %p43
    %s46 = sadd.s32 %s45, 1
    %p49 = scmp.eq.s32.totalorder %s11, 1
    %p50 = scmp.ne.s32.totalorder %s45, %s47
    %p51 = scmp.eq.s32.totalorder %s11, 0
    %p52 = por %p50, %p51
    %p53 = scmp.ne.s32.totalorder %s45, %s47
    %p54 = scmp.eq.s32.totalorder %s16, 1
    %p55 = por %p53, %p54
    %p56 = scmp.ne.s32.totalorder %s47, %s48
    %p57 = scmp.eq.s32.totalorder %s16, 0
    %p58 = por %p56, %p57
    %p59 = scmp.ne.s32.totalorder %s47, %s48
    %p60 = scmp.eq.s32.totalorder %s17, 1
    %p61 = por %p59, %p60
    %p63 = scmp.ne.s32.totalorder %s48, %s62
    %p64 = scmp.eq.s32.totalorder %s17, 0
    %p65 = por %p63, %p64
    %s67 = sadd.s32 %s66, 1
    %p70 = scmp.eq.s32.totalorder %s11, 1
    %p71 = scmp.ne.s32.totalorder %s66, %s68
    %p72 = scmp.eq.s32.totalorder %s11, 0
    %p73 = por %p71, %p72
    %p74 = scmp.ne.s32.totalorder %s66, %s68
    %p75 = scmp.eq.s32.totalorder %s16, 1
    %p76 = por %p74, %p75
    %p77 = scmp.ne.s32.totalorder %s68, %s69
    %p78 = scmp.eq.s32.totalorder %s16, 0
    %p79 = por %p77, %p78
    %p80 = scmp.ne.s32.totalorder %s68, %s69
    %p81 = scmp.eq.s32.totalorder %s17, 1
    %p82 = por %p80, %p81
    %p84 = scmp.ne.s32.totalorder %s69, %s83
    %p85 = scmp.eq.s32.totalorder %s17, 0
    %p86 = por %p84, %p85
    %s88 = sadd.s32 %s87, 1
    %p91 = scmp.eq.s32.totalorder %s11, 1
    %p92 = scmp.ne.s32.totalorder %s87, %s89
    %p93 = scmp.eq.s32.totalorder %s11, 0
    %p94 = por %p92, %p93
    %p95 = scmp.ne.s32.totalorder %s87, %s89
    %p96 = scmp.eq.s32.totalorder %s16, 1
    %p97 = por %p95, %p96
    %p98 = scmp.ne.s32.totalorder %s89, %s90
    %p99 = scmp.eq.s32.totalorder %s16, 0
    %p100 = por %p98, %p99
    %p101 = scmp.ne.s32.totalorder %s89, %s90
    %p102 = scmp.eq.s32.totalorder %s17, 1
    %p103 = por %p101, %p102
    %p105 = scmp.ne.s32.totalorder %s90, %s104
    %p106 = scmp.eq.s32.totalorder %s17, 0
    %p107 = por %p105, %p106
    %s109 = sadd.s32 %s108, 1
    %p112 = scmp.eq.s32.totalorder %s11, 1
    %p113 = scmp.ne.s32.totalorder %s108, %s110
    %p114 = scmp.eq.s32.totalorder %s11, 0
    %p115 = por %p113, %p114
    %p116 = scmp.ne.s32.totalorder %s108, %s110
    %p117 = scmp.eq.s32.totalorder %s16, 1
    %p118 = por %p116, %p117
    %p119 = scmp.ne.s32.totalorder %s110, %s111
    %p120 = scmp.eq.s32.totalorder %s16, 0
    %p121 = por %p119, %p120
    %p122 = scmp.ne.s32.totalorder %s110, %s111
    %p123 = scmp.eq.s32.totalorder %s17, 1
    %p124 = por %p122, %p123
    %p126 = scmp.ne.s32.totalorder %s111, %s125
    %p127 = scmp.eq.s32.totalorder %s17, 0
    %p128 = por %p126, %p127
    %s129 = ssub.s32 %s11, %s18
    %p130 = scmp.eq.s32.totalorder %s129, 0
    %s132 = sadd.s32 %s131, 1
    %s133 = scalar_select %p130, %s131, %s132
    %p136 = pneg %p130
    %p137 = scmp.eq.s32.totalorder %s11, 1
    %p138 = por %p136, %p137
    %p139 = scmp.ne.s32.totalorder %s131, %s134
    %p140 = scmp.eq.s32.totalorder %s11, 0
    %p141 = por %p139, %p140
    %p142 = scmp.ne.s32.totalorder %s131, %s134
    %p143 = scmp.eq.s32.totalorder %s16, 1
    %p144 = por %p142, %p143
    %p145 = scmp.ne.s32.totalorder %s134, %s135
    %p146 = scmp.eq.s32.totalorder %s16, 0
    %p147 = por %p145, %p146
    %p148 = scmp.ne.s32.totalorder %s134, %s135
    %p149 = scmp.eq.s32.totalorder %s17, 1
    %p150 = por %p148, %p149
    %p152 = scmp.ne.s32.totalorder %s135, %s151
    %p153 = scmp.eq.s32.totalorder %s17, 0
    %p154 = por %p152, %p153
    %p155 = scmp.le.s32.totalorder 1, %s11
    %p156 = scmp.lt.s32.totalorder %s11, 3
    %p157 = pnand %p155, %p156
    %p158 = pneg %p157
    // Predicated region
    $region9: #{sppcspc_forward.5} parent=5 // pred_check
      _
    $region10: #{sppcspc_forward.5} parent=5 // pred_check_branch
      %160 = sbr.rel (%p157) target = $region12
    $region11: #{sppcspc_forward.5} parent=5 // pred_region
      %s161 = ssub.s32 %s11, 1
      // Predicated region
      $region13: #{sppcspc_forward.5} parent=11 // pred_check
        %p162 = pneg %p58
      $region14: #{sppcspc_forward.5} parent=11 // pred_check_branch
        %164 = sbr.rel (%p162) target = $region16
      $region15: #{sppcspc_forward.5} parent=11 // pred_region
        _
      $region16: #{sppcspc_forward.5} parent=11 // pred_fallthru
        _
      // Predicated region
      $region17: #{sppcspc_forward.5} parent=11 // pred_check
        %p165 = pneg %p79
      $region18: #{sppcspc_forward.5} parent=11 // pred_check_branch
        %167 = sbr.rel (%p165) target = $region20
      $region19: #{sppcspc_forward.5} parent=11 // pred_region
        _
      $region20: #{sppcspc_forward.5} parent=11 // pred_fallthru
        _
      // Predicated region
      $region21: #{sppcspc_forward.5} parent=11 // pred_check
        %p168 = pneg %p100
      $region22: #{sppcspc_forward.5} parent=11 // pred_check_branch
        %170 = sbr.rel (%p168) target = $region24
      $region23: #{sppcspc_forward.5} parent=11 // pred_region
        _
      $region24: #{sppcspc_forward.5} parent=11 // pred_fallthru
        _
      // Predicated region
      $region25: #{sppcspc_forward.5} parent=11 // pred_check
        %p171 = pneg %p121
      $region26: #{sppcspc_forward.5} parent=11 // pred_check_branch
        %173 = sbr.rel (%p171) target = $region28
      $region27: #{sppcspc_forward.5} parent=11 // pred_region
        _
      $region28: #{sppcspc_forward.5} parent=11 // pred_fallthru
        _
    $region12: #{sppcspc_forward.5} parent=5 // pred_fallthru
      _
    %p174 = scmp.lt.s32.totalorder %s11, 2
    // Predicated region
    $region29: #{sppcspc_forward.5} parent=5 // pred_check
      %p175 = pneg %p174
    $region30: #{sppcspc_forward.5} parent=5 // pred_check_branch
      %177 = sbr.rel (%p175) target = $region32
    $region31: #{sppcspc_forward.5} parent=5 // pred_region
      // Predicated region
      $region33: #{sppcspc_forward.5} parent=31 // pred_check
        %p178 = pneg %p31
      $region34: #{sppcspc_forward.5} parent=31 // pred_check_branch
        %180 = sbr.rel (%p178) target = $region36
      $region35: #{sppcspc_forward.5} parent=31 // pred_region
        %p181 = scmp.lt.s32.totalorder %s11, 1
        %s182 = scalar_select %p181, %s11, 1
        %s183 = smul.addr %s182, 32
        %s184 = smul.addr %s183, 4
        %s185 = scalar_lea.vmem %s0, %s184
      $region36: #{sppcspc_forward.5} parent=31 // pred_fallthru
        _
    $region32: #{sppcspc_forward.5} parent=5 // pred_fallthru
      _
    %p186 = scmp.le.s32.totalorder 1, %s11
    %p187 = scmp.lt.s32.totalorder %s11, 3
    %p188 = pnand %p186, %p187
    %p189 = pneg %p188
    // Predicated region
    $region37: #{sppcspc_forward.5} parent=5 // pred_check
      _
    $region38: #{sppcspc_forward.5} parent=5 // pred_check_branch
      %191 = sbr.rel (%p188) target = $region40
    $region39: #{sppcspc_forward.5} parent=5 // pred_region
      %s192 = ssub.s32 %s11, 1
      %p193 = scmp.lt.s32.totalorder %s16, 1
      %s194 = scalar_select %p193, %s16, 1
      %s195 = smul.addr %s194, 32
      %s196 = smul.addr %s195, 4
      %s197 = scalar_lea.vmem %s0, %s196
      %p198 = pneg %p37
      %p199 = pneg %p34
      %p200 = pneg %p58
      %p201 = pneg %p55
      %p202 = pneg %p79
      %p203 = pneg %p76
      %p204 = pneg %p100
      %p205 = pneg %p97
      %p206 = pneg %p121
      %p207 = pneg %p118
      %p208 = pneg %p147
      %p209 = pneg %p144
      %p210 = scmp.lt.s32.totalorder %s16, 1
      %s211 = scalar_select %p210, %s16, 1
      %s212 = smul.addr %s211, 32
      %s213 = smul.addr %s212, 4
      %s214 = scalar_lea.vmem %s5, %s213
      %p215 = scmp.lt.s32.totalorder %s16, 1
      %s216 = scalar_select %p215, %s16, 1
      %s217 = smul.addr %s216, 32
      %s218 = smul.addr %s217, 4
      %s219 = scalar_lea.vmem %s0, %s218
      %p220 = scmp.lt.s32.totalorder %s16, 1
      %s221 = scalar_select %p220, %s16, 1
      %s222 = smul.addr %s221, 32
      %s223 = smul.addr %s222, 4
      %s224 = scalar_lea.vmem %s5, %s223
      %v226 = vld [vmem:[%s219] sm:$0xf]
      %v227 = vld [vmem:[%s219 + $0x4] sm:$0xf]
      %v228 = vld [vmem:[%s219 + $0x8] sm:$0xf]
      %v229 = vld [vmem:[%s219 + $0xc] sm:$0xf]
      %v230 = vld [vmem:[%s219 + $0x10] sm:$0xf]
      %v231 = vld [vmem:[%s219 + $0x14] sm:$0xf]
      %v232 = vld [vmem:[%s219 + $0x18] sm:$0xf]
      %v233 = vld [vmem:[%s219 + $0x1c] sm:$0xf]
      %v234 = vld [vmem:[%s219 + $0x20] sm:$0xf]
      %v235 = vld [vmem:[%s219 + $0x24] sm:$0xf]
      %v236 = vld [vmem:[%s219 + $0x28] sm:$0xf]
      %v237 = vld [vmem:[%s219 + $0x2c] sm:$0xf]
      %v238 = vld [vmem:[%s219 + $0x30] sm:$0xf]
      %v239 = vld [vmem:[%s219 + $0x34] sm:$0xf]
      %v240 = vld [vmem:[%s219 + $0x38] sm:$0xf]
      %v241 = vld [vmem:[%s219 + $0x3c] sm:$0xf]
      %v242 = vld [vmem:[%s219 + $0x40] sm:$0xf]
      %v243 = vld [vmem:[%s219 + $0x44] sm:$0xf]
      %v244 = vld [vmem:[%s219 + $0x48] sm:$0xf]
      %v245 = vld [vmem:[%s219 + $0x4c] sm:$0xf]
      %v246 = vld [vmem:[%s219 + $0x50] sm:$0xf]
      %v247 = vld [vmem:[%s219 + $0x54] sm:$0xf]
      %v248 = vld [vmem:[%s219 + $0x58] sm:$0xf]
      %v249 = vld [vmem:[%s219 + $0x5c] sm:$0xf]
      %v250 = vld [vmem:[%s219 + $0x60] sm:$0xf]
      %v251 = vld [vmem:[%s219 + $0x64] sm:$0xf]
      %v252 = vld [vmem:[%s219 + $0x68] sm:$0xf]
      %v253 = vld [vmem:[%s219 + $0x6c] sm:$0xf]
      %v254 = vld [vmem:[%s219 + $0x70] sm:$0xf]
      %v255 = vld [vmem:[%s219 + $0x74] sm:$0xf]
      %v256 = vld [vmem:[%s219 + $0x78] sm:$0xf]
      %v257 = vld [vmem:[%s219 + $0x7c] sm:$0xf]
      %v290 = vunpack.c.l.b16 %v226
      %v291 = vunpack.c.l.b16 %v227
      %v292 = vunpack.c.l.b16 %v228
      %v293 = vunpack.c.l.b16 %v229
      %v294 = vunpack.c.l.b16 %v230
      %v295 = vunpack.c.l.b16 %v231
      %v296 = vunpack.c.l.b16 %v232
      %v297 = vunpack.c.l.b16 %v233
      %v298 = vunpack.c.l.b16 %v234
      %v299 = vunpack.c.l.b16 %v235
      %v300 = vunpack.c.l.b16 %v236
      %v301 = vunpack.c.l.b16 %v237
      %v302 = vunpack.c.l.b16 %v238
      %v303 = vunpack.c.l.b16 %v239
      %v304 = vunpack.c.l.b16 %v240
      %v305 = vunpack.c.l.b16 %v241
      %v306 = vunpack.c.l.b16 %v242
      %v307 = vunpack.c.l.b16 %v243
      %v308 = vunpack.c.l.b16 %v244
      %v309 = vunpack.c.l.b16 %v245
      %v310 = vunpack.c.l.b16 %v246
      %v311 = vunpack.c.l.b16 %v247
      %v312 = vunpack.c.l.b16 %v248
      %v313 = vunpack.c.l.b16 %v249
      %v314 = vunpack.c.l.b16 %v250
      %v315 = vunpack.c.l.b16 %v251
      %v316 = vunpack.c.l.b16 %v252
      %v317 = vunpack.c.l.b16 %v253
      %v318 = vunpack.c.l.b16 %v254
      %v319 = vunpack.c.l.b16 %v255
      %v320 = vunpack.c.l.b16 %v256
      %v321 = vunpack.c.l.b16 %v257
      %v322 = vpack.c.b16 %v291, %v290
      %v323 = vpack.c.b16 %v293, %v292
      %v324 = vpack.c.b16 %v295, %v294
      %v325 = vpack.c.b16 %v297, %v296
      %v326 = vpack.c.b16 %v299, %v298
      %v327 = vpack.c.b16 %v301, %v300
      %v328 = vpack.c.b16 %v303, %v302
      %v329 = vpack.c.b16 %v305, %v304
      %v330 = vpack.c.b16 %v307, %v306
      %v331 = vpack.c.b16 %v309, %v308
      %v332 = vpack.c.b16 %v311, %v310
      %v333 = vpack.c.b16 %v313, %v312
      %v334 = vpack.c.b16 %v315, %v314
      %v335 = vpack.c.b16 %v317, %v316
      %v336 = vpack.c.b16 %v319, %v318
      %v337 = vpack.c.b16 %v321, %v320
      %v339 = vshrl.u32 0, 16
      %v341 = vrot.slane %v339, 7
      %v342 = vshll.u32 0, 16
      %v344 = vor.u32 %v341, %v342
      %v346 = vshrl.u32 %v322, 16
      %v348 = vrot.slane %v346, 7
      %v349 = vshll.u32 %v322, 16
      %v351 = vor.u32 %v348, %v349
      %v353 = vshrl.u32 %v323, 16
      %v355 = vrot.slane %v353, 7
      %v356 = vshll.u32 %v323, 16
      %v358 = vor.u32 %v355, %v356
      %v360 = vshrl.u32 %v324, 16
      %v362 = vrot.slane %v360, 7
      %v363 = vshll.u32 %v324, 16
      %v365 = vor.u32 %v362, %v363
      %v367 = vshrl.u32 %v325, 16
      %v369 = vrot.slane %v367, 7
      %v370 = vshll.u32 %v325, 16
      %v372 = vor.u32 %v369, %v370
      %v374 = vshrl.u32 %v326, 16
      %v376 = vrot.slane %v374, 7
      %v377 = vshll.u32 %v326, 16
      %v379 = vor.u32 %v376, %v377
      %v381 = vshrl.u32 %v327, 16
      %v383 = vrot.slane %v381, 7
      %v384 = vshll.u32 %v327, 16
      %v386 = vor.u32 %v383, %v384
      %v388 = vshrl.u32 %v328, 16
      %v390 = vrot.slane %v388, 7
      %v391 = vshll.u32 %v328, 16
      %v393 = vor.u32 %v390, %v391
      %v395 = vshrl.u32 %v329, 16
      %v397 = vrot.slane %v395, 7
      %v398 = vshll.u32 %v329, 16
      %v400 = vor.u32 %v397, %v398
      %v402 = vshrl.u32 %v330, 16
      %v404 = vrot.slane %v402, 7
      %v405 = vshll.u32 %v330, 16
      %v407 = vor.u32 %v404, %v405
      %v409 = vshrl.u32 %v331, 16
      %v411 = vrot.slane %v409, 7
      %v412 = vshll.u32 %v331, 16
      %v414 = vor.u32 %v411, %v412
      %v416 = vshrl.u32 %v332, 16
      %v418 = vrot.slane %v416, 7
      %v419 = vshll.u32 %v332, 16
      %v421 = vor.u32 %v418, %v419
      %v423 = vshrl.u32 %v333, 16
      %v425 = vrot.slane %v423, 7
      %v426 = vshll.u32 %v333, 16
      %v428 = vor.u32 %v425, %v426
      %v430 = vshrl.u32 %v334, 16
      %v432 = vrot.slane %v430, 7
      %v433 = vshll.u32 %v334, 16
      %v435 = vor.u32 %v432, %v433
      %v437 = vshrl.u32 %v335, 16
      %v439 = vrot.slane %v437, 7
      %v440 = vshll.u32 %v335, 16
      %v442 = vor.u32 %v439, %v440
      %v444 = vshrl.u32 %v336, 16
      %v446 = vrot.slane %v444, 7
      %v447 = vshll.u32 %v336, 16
      %v449 = vor.u32 %v446, %v447
      %v451 = vshrl.u32 %v337, 16
      %v453 = vrot.slane %v451, 7
      %v454 = vshll.u32 %v337, 16
      %v456 = vor.u32 %v453, %v454
      %vm491 = vcmask 1040384
      %vm492 = vsmask.f32 256
      %vm493 = vmand %vm491, %vm492
      %v494 = vsel %vm493, 0, %v344
      %v495 = vsel %vm493, 0, %v351
      %v496 = vsel %vm493, 0, %v358
      %v497 = vsel %vm493, 0, %v365
      %v498 = vsel %vm493, 0, %v372
      %v499 = vsel %vm493, 0, %v379
      %v500 = vsel %vm493, 0, %v386
      %v501 = vsel %vm493, 0, %v393
      %v502 = vsel %vm493, 0, %v400
      %v503 = vsel %vm493, 0, %v407
      %v504 = vsel %vm493, 0, %v414
      %v505 = vsel %vm493, 0, %v421
      %v506 = vsel %vm493, 0, %v428
      %v507 = vsel %vm493, 0, %v435
      %v508 = vsel %vm493, 0, %v442
      %v509 = vsel %vm493, 0, %v449
      %v510 = vsel %vm493, 0, %v456
      %v511 = vsel %vm493, %v341, 0
      %v512 = vsel %vm493, %v348, 0
      %v513 = vsel %vm493, %v355, 0
      %v514 = vsel %vm493, %v362, 0
      %v515 = vsel %vm493, %v369, 0
      %v516 = vsel %vm493, %v376, 0
      %v517 = vsel %vm493, %v383, 0
      %v518 = vsel %vm493, %v390, 0
      %v519 = vsel %vm493, %v397, 0
      %v520 = vsel %vm493, %v404, 0
      %v521 = vsel %vm493, %v411, 0
      %v522 = vsel %vm493, %v418, 0
      %v523 = vsel %vm493, %v425, 0
      %v524 = vsel %vm493, %v432, 0
      %v525 = vsel %vm493, %v439, 0
      %v526 = vsel %vm493, %v446, 0
      %v527 = vsel %vm493, %v453, 0
      %v528 = vld [vmem:[%s1] sm:$0xf]
      %vm529 = vsmask.f32 7424
      %v531 = vshrl.u32 %v494, 16
      %v533 = vshll.u32 %v494, 16
      %v535 = vrot.slane %v533, 1
      %v536 = vor.u32 %v531, %v535
      %v538 = vshll.u32 %v511, 16
      %v540 = vrot.slane %v538, 1
      %v541 = vsel %vm529, %v536, %v540
      %v543 = vshrl.u32 %v495, 16
      %v545 = vshll.u32 %v495, 16
      %v547 = vrot.slane %v545, 1
      %v548 = vor.u32 %v543, %v547
      %v550 = vshll.u32 %v512, 16
      %v552 = vrot.slane %v550, 1
      %v553 = vsel %vm529, %v548, %v552
      %v555 = vshrl.u32 %v496, 16
      %v557 = vshll.u32 %v496, 16
      %v559 = vrot.slane %v557, 1
      %v560 = vor.u32 %v555, %v559
      %v562 = vshll.u32 %v513, 16
      %v564 = vrot.slane %v562, 1
      %v565 = vsel %vm529, %v560, %v564
      %v567 = vshrl.u32 %v497, 16
      %v569 = vshll.u32 %v497, 16
      %v571 = vrot.slane %v569, 1
      %v572 = vor.u32 %v567, %v571
      %v574 = vshll.u32 %v514, 16
      %v576 = vrot.slane %v574, 1
      %v577 = vsel %vm529, %v572, %v576
      %v579 = vshrl.u32 %v498, 16
      %v581 = vshll.u32 %v498, 16
      %v583 = vrot.slane %v581, 1
      %v584 = vor.u32 %v579, %v583
      %v586 = vshll.u32 %v515, 16
      %v588 = vrot.slane %v586, 1
      %v589 = vsel %vm529, %v584, %v588
      %v591 = vshrl.u32 %v499, 16
      %v593 = vshll.u32 %v499, 16
      %v595 = vrot.slane %v593, 1
      %v596 = vor.u32 %v591, %v595
      %v598 = vshll.u32 %v516, 16
      %v600 = vrot.slane %v598, 1
      %v601 = vsel %vm529, %v596, %v600
      %v603 = vshrl.u32 %v500, 16
      %v605 = vshll.u32 %v500, 16
      %v607 = vrot.slane %v605, 1
      %v608 = vor.u32 %v603, %v607
      %v610 = vshll.u32 %v517, 16
      %v612 = vrot.slane %v610, 1
      %v613 = vsel %vm529, %v608, %v612
      %v615 = vshrl.u32 %v501, 16
      %v617 = vshll.u32 %v501, 16
      %v619 = vrot.slane %v617, 1
      %v620 = vor.u32 %v615, %v619
      %v622 = vshll.u32 %v518, 16
      %v624 = vrot.slane %v622, 1
      %v625 = vsel %vm529, %v620, %v624
      %v627 = vshrl.u32 %v502, 16
      %v629 = vshll.u32 %v502, 16
      %v631 = vrot.slane %v629, 1
      %v632 = vor.u32 %v627, %v631
      %v634 = vshll.u32 %v519, 16
      %v636 = vrot.slane %v634, 1
      %v637 = vsel %vm529, %v632, %v636
      %v639 = vshrl.u32 %v503, 16
      %v641 = vshll.u32 %v503, 16
      %v643 = vrot.slane %v641, 1
      %v644 = vor.u32 %v639, %v643
      %v646 = vshll.u32 %v520, 16
      %v648 = vrot.slane %v646, 1
      %v649 = vsel %vm529, %v644, %v648
      %v651 = vshrl.u32 %v504, 16
      %v653 = vshll.u32 %v504, 16
      %v655 = vrot.slane %v653, 1
      %v656 = vor.u32 %v651, %v655
      %v658 = vshll.u32 %v521, 16
      %v660 = vrot.slane %v658, 1
      %v661 = vsel %vm529, %v656, %v660
      %v663 = vshrl.u32 %v505, 16
      %v665 = vshll.u32 %v505, 16
      %v667 = vrot.slane %v665, 1
      %v668 = vor.u32 %v663, %v667
      %v670 = vshll.u32 %v522, 16
      %v672 = vrot.slane %v670, 1
      %v673 = vsel %vm529, %v668, %v672
      %v675 = vshrl.u32 %v506, 16
      %v677 = vshll.u32 %v506, 16
      %v679 = vrot.slane %v677, 1
      %v680 = vor.u32 %v675, %v679
      %v682 = vshll.u32 %v523, 16
      %v684 = vrot.slane %v682, 1
      %v685 = vsel %vm529, %v680, %v684
      %v687 = vshrl.u32 %v507, 16
      %v689 = vshll.u32 %v507, 16
      %v691 = vrot.slane %v689, 1
      %v692 = vor.u32 %v687, %v691
      %v694 = vshll.u32 %v524, 16
      %v696 = vrot.slane %v694, 1
      %v697 = vsel %vm529, %v692, %v696
      %v699 = vshrl.u32 %v508, 16
      %v701 = vshll.u32 %v508, 16
      %v703 = vrot.slane %v701, 1
      %v704 = vor.u32 %v699, %v703
      %v706 = vshll.u32 %v525, 16
      %v708 = vrot.slane %v706, 1
      %v709 = vsel %vm529, %v704, %v708
      %v711 = vshrl.u32 %v509, 16
      %v713 = vshll.u32 %v509, 16
      %v715 = vrot.slane %v713, 1
      %v716 = vor.u32 %v711, %v715
      %v718 = vshll.u32 %v526, 16
      %v720 = vrot.slane %v718, 1
      %v721 = vsel %vm529, %v716, %v720
      %s722 = scalar_lea.vmem %s1, 4
      %v723 = vld [vmem:[%s722] sm:$0xf]
      %vm724 = vcmask 64512
      %v726 = vsel %vm724, %v541, 0
      %v729 = vsel %vm724, %v553, 0
      %v732 = vsel %vm724, %v565, 0
      %v735 = vsel %vm724, %v577, 0
      %v738 = vsel %vm724, %v589, 0
      %v741 = vsel %vm724, %v601, 0
      %v744 = vsel %vm724, %v613, 0
      %v747 = vsel %vm724, %v625, 0
      %v750 = vsel %vm724, %v637, 0
      %v753 = vsel %vm724, %v649, 0
      %v756 = vsel %vm724, %v661, 0
      %v759 = vsel %vm724, %v673, 0
      %v762 = vsel %vm724, %v685, 0
      %v765 = vsel %vm724, %v697, 0
      %v768 = vsel %vm724, %v709, 0
      %v771 = vsel %vm724, %v721, 0
      %vm773 = vcmask 1043456
      %v775 = vsel %vm773, %v723, 0
      %777 = vmatprep.subr.bf16.mxu0 0
      %778 = vmatpush1.bf16.msra.mxu0 %v775
      %779 = vmatprep.subr.bf16.mxu0 0
      %780 = vmatpush1.bf16.msra.mxu0 0
      %781 = vmatprep.subr.bf16.mxu0 0
      %782 = vmatpush1.bf16.msra.mxu0 0
      %783 = vmatprep.subr.bf16.mxu0 0
      %784 = vmatpush1.bf16.msra.mxu0 0
      %785 = vmatprep.subr.bf16.mxu0 0
      %786 = vmatpush1.bf16.msra.mxu0 0
      %787 = vmatprep.subr.bf16.mxu0 0
      %788 = vmatpush1.bf16.msra.mxu0 0
      %789 = vmatprep.subr.bf16.mxu0 0
      %790 = vmatpush1.bf16.msra.mxu0 0
      %791 = vmatprep.subr.bf16.mxu0 0
      %792 = vmatpush1.bf16.msra.mxu0 0
      %793 = vmatprep.subr.bf16.mxu0 0
      %794 = vmatpush1.bf16.msra.mxu0 0
      %795 = vmatprep.subr.bf16.mxu0 0
      %796 = vmatpush1.bf16.msra.mxu0 0
      %797 = vmatprep.subr.bf16.mxu0 0
      %798 = vmatpush1.bf16.msra.mxu0 0
      %799 = vmatprep.subr.bf16.mxu0 0
      %800 = vmatpush1.bf16.msra.mxu0 0
      %801 = vmatprep.subr.bf16.mxu0 0
      %802 = vmatpush1.bf16.msra.mxu0 0
      %803 = vmatprep.subr.bf16.mxu0 0
      %804 = vmatpush1.bf16.msra.mxu0 0
      %805 = vmatprep.subr.bf16.mxu0 0
      %806 = vmatpush1.bf16.msra.mxu0 0
      %807 = vmatprep.subr.bf16.mxu0 0
      %808 = vmatpush1.bf16.msra.mxu0 0
      %809 = vmatprep.mubr.bf16.mxu0 0
      %810 = vmatmul.mubr.bf16.gmra.mrb[0].mxu0 %v726
      %v811 = vpop.f32.mrb[0].mxu0
      %v812 = vadd.f32 0.0, %v811
      %v813 = vpop.f32.mrb[0].mxu0
      %v814 = vpop.f32.mrb[0].mxu0
      %v815 = vadd.f32 0.0, %v814
      %v816 = vpop.f32.mrb[0].mxu0
      %817 = vmatprep.mubr.bf16.mxu0 0
      %818 = vmatmul.mubr.bf16.gmra.mrb[0].mxu0 %v729
      %v819 = vpop.f32.mrb[0].mxu0
      %v820 = vadd.f32 0.0, %v819
      %v821 = vpop.f32.mrb[0].mxu0
      %v822 = vpop.f32.mrb[0].mxu0
      %v823 = vadd.f32 0.0, %v822
      %v824 = vpop.f32.mrb[0].mxu0
      %825 = vmatprep.mubr.bf16.mxu0 0
      %826 = vmatmul.mubr.bf16.gmra.mrb[0].mxu0 %v732
      %v827 = vpop.f32.mrb[0].mxu0
      %v828 = vadd.f32 0.0, %v827
      %v829 = vpop.f32.mrb[0].mxu0
      %v830 = vpop.f32.mrb[0].mxu0
      %v831 = vadd.f32 0.0, %v830
      %v832 = vpop.f32.mrb[0].mxu0
      %833 = vmatprep.mubr.bf16.mxu0 0
      %834 = vmatmul.mubr.bf16.gmra.mrb[0].mxu0 %v735
      %v835 = vpop.f32.mrb[0].mxu0
      %v836 = vadd.f32 0.0, %v835
      %v837 = vpop.f32.mrb[0].mxu0
      %v838 = vpop.f32.mrb[0].mxu0
      %v839 = vadd.f32 0.0, %v838
      %v840 = vpop.f32.mrb[0].mxu0
      %841 = vmatprep.mubr.bf16.mxu0 0
      %842 = vmatmul.mubr.bf16.gmra.mrb[0].mxu0 %v738
      %v843 = vpop.f32.mrb[0].mxu0
      %v844 = vadd.f32 0.0, %v843
      %v845 = vpop.f32.mrb[0].mxu0
      %v846 = vpop.f32.mrb[0].mxu0
      %v847 = vadd.f32 0.0, %v846
      %v848 = vpop.f32.mrb[0].mxu0
      %849 = vmatprep.mubr.bf16.mxu0 0
      %850 = vmatmul.mubr.bf16.gmra.mrb[0].mxu0 %v741
      %v851 = vpop.f32.mrb[0].mxu0
      %v852 = vadd.f32 0.0, %v851
      %v853 = vpop.f32.mrb[0].mxu0
      %v854 = vpop.f32.mrb[0].mxu0
      %v855 = vadd.f32 0.0, %v854
      %v856 = vpop.f32.mrb[0].mxu0
      %857 = vmatprep.mubr.bf16.mxu0 0
      %858 = vmatmul.mubr.bf16.gmra.mrb[0].mxu0 %v744
      %v859 = vpop.f32.mrb[0].mxu0
      %v860 = vadd.f32 0.0, %v859
      %v861 = vpop.f32.mrb[0].mxu0
      %v862 = vpop.f32.mrb[0].mxu0
      %v863 = vadd.f32 0.0, %v862
      %v864 = vpop.f32.mrb[0].mxu0
      %865 = vmatprep.mubr.bf16.mxu0 0
      %866 = vmatmul.mubr.bf16.gmra.mrb[0].mxu0 %v747
      %v867 = vpop.f32.mrb[0].mxu0
      %v868 = vadd.f32 0.0, %v867
      %v869 = vpop.f32.mrb[0].mxu0
      %v870 = vpop.f32.mrb[0].mxu0
      %v871 = vadd.f32 0.0, %v870
      %v872 = vpop.f32.mrb[0].mxu0
      %873 = vmatprep.mubr.bf16.mxu0 0
      %874 = vmatmul.mubr.bf16.gmra.mrb[0].mxu0 %v750
      %v875 = vpop.f32.mrb[0].mxu0
      %v876 = vadd.f32 0.0, %v875
      %v877 = vpop.f32.mrb[0].mxu0
      %v878 = vpop.f32.mrb[0].mxu0
      %v879 = vadd.f32 0.0, %v878
      %v880 = vpop.f32.mrb[0].mxu0
      %881 = vmatprep.mubr.bf16.mxu0 0
      %882 = vmatmul.mubr.bf16.gmra.mrb[0].mxu0 %v753
      %v883 = vpop.f32.mrb[0].mxu0
      %v884 = vadd.f32 0.0, %v883
      %v885 = vpop.f32.mrb[0].mxu0
      %v886 = vpop.f32.mrb[0].mxu0
      %v887 = vadd.f32 0.0, %v886
      %v888 = vpop.f32.mrb[0].mxu0
      %889 = vmatprep.mubr.bf16.mxu0 0
      %890 = vmatmul.mubr.bf16.gmra.mrb[0].mxu0 %v756
      %v891 = vpop.f32.mrb[0].mxu0
      %v892 = vadd.f32 0.0, %v891
      %v893 = vpop.f32.mrb[0].mxu0
      %v894 = vpop.f32.mrb[0].mxu0
      %v895 = vadd.f32 0.0, %v894
      %v896 = vpop.f32.mrb[0].mxu0
      %897 = vmatprep.mubr.bf16.mxu0 0
      %898 = vmatmul.mubr.bf16.gmra.mrb[0].mxu0 %v759
      %v899 = vpop.f32.mrb[0].mxu0
      %v900 = vadd.f32 0.0, %v899
      %v901 = vpop.f32.mrb[0].mxu0
      %v902 = vpop.f32.mrb[0].mxu0
      %v903 = vadd.f32 0.0, %v902
      %v904 = vpop.f32.mrb[0].mxu0
      %905 = vmatprep.mubr.bf16.mxu0 0
      %906 = vmatmul.mubr.bf16.gmra.mrb[0].mxu0 %v762
      %v907 = vpop.f32.mrb[0].mxu0
      %v908 = vadd.f32 0.0, %v907
      %v909 = vpop.f32.mrb[0].mxu0
      %v910 = vpop.f32.mrb[0].mxu0
      %v911 = vadd.f32 0.0, %v910
      %v912 = vpop.f32.mrb[0].mxu0
      %913 = vmatprep.mubr.bf16.mxu0 0
      %914 = vmatmul.mubr.bf16.gmra.mrb[0].mxu0 %v765
      %v915 = vpop.f32.mrb[0].mxu0
      %v916 = vadd.f32 0.0, %v915
      %v917 = vpop.f32.mrb[0].mxu0
      %v918 = vpop.f32.mrb[0].mxu0
      %v919 = vadd.f32 0.0, %v918
      %v920 = vpop.f32.mrb[0].mxu0
      %921 = vmatprep.mubr.bf16.mxu0 0
      %922 = vmatmul.mubr.bf16.gmra.mrb[0].mxu0 %v768
      %v923 = vpop.f32.mrb[0].mxu0
      %v924 = vadd.f32 0.0, %v923
      %v925 = vpop.f32.mrb[0].mxu0
      %v926 = vpop.f32.mrb[0].mxu0
      %v927 = vadd.f32 0.0, %v926
      %v928 = vpop.f32.mrb[0].mxu0
      %929 = vmatprep.mubr.bf16.mxu0 0
      %930 = vmatmul.mubr.bf16.gmra.mrb[0].mxu0 %v771
      %v931 = vpop.f32.mrb[0].mxu0
      %v932 = vadd.f32 0.0, %v931
      %v933 = vpop.f32.mrb[0].mxu0
      %v934 = vpop.f32.mrb[0].mxu0
      %v935 = vadd.f32 0.0, %v934
      %v936 = vpop.f32.mrb[0].mxu0
      %937 = vdwg.mxu0
      %v938 = vsel %vm724, %v494, 0
      %v940 = vsel %vm724, %v495, 0
      %v942 = vsel %vm724, %v496, 0
      %v944 = vsel %vm724, %v497, 0
      %v946 = vsel %vm724, %v498, 0
      %v948 = vsel %vm724, %v499, 0
      %v950 = vsel %vm724, %v500, 0
      %v952 = vsel %vm724, %v501, 0
      %v954 = vsel %vm724, %v502, 0
      %v956 = vsel %vm724, %v503, 0
      %v958 = vsel %vm724, %v504, 0
      %v960 = vsel %vm724, %v505, 0
      %v962 = vsel %vm724, %v506, 0
      %v964 = vsel %vm724, %v507, 0
      %v966 = vsel %vm724, %v508, 0
      %v968 = vsel %vm724, %v509, 0
      %v971 = vsel %vm773, %v528, 0
      %973 = vmatprep.subr.bf16.mxu0 0
      %974 = vmatpush1.bf16.msra.mxu0 %v971
      %975 = vmatprep.subr.bf16.mxu0 0
      %976 = vmatpush1.bf16.msra.mxu0 0
      %977 = vmatprep.subr.bf16.mxu0 0
      %978 = vmatpush1.bf16.msra.mxu0 0
      %979 = vmatprep.subr.bf16.mxu0 0
      %980 = vmatpush1.bf16.msra.mxu0 0
      %981 = vmatprep.subr.bf16.mxu0 0
      %982 = vmatpush1.bf16.msra.mxu0 0
      %983 = vmatprep.subr.bf16.mxu0 0
      %984 = vmatpush1.bf16.msra.mxu0 0
      %985 = vmatprep.subr.bf16.mxu0 0
      %986 = vmatpush1.bf16.msra.mxu0 0
      %987 = vmatprep.subr.bf16.mxu0 0
      %988 = vmatpush1.bf16.msra.mxu0 0
      %989 = vmatprep.subr.bf16.mxu0 0
      %990 = vmatpush1.bf16.msra.mxu0 0
      %991 = vmatprep.subr.bf16.mxu0 0
      %992 = vmatpush1.bf16.msra.mxu0 0
      %993 = vmatprep.subr.bf16.mxu0 0
      %994 = vmatpush1.bf16.msra.mxu0 0
      %995 = vmatprep.subr.bf16.mxu0 0
      %996 = vmatpush1.bf16.msra.mxu0 0
      %997 = vmatprep.subr.bf16.mxu0 0
      %998 = vmatpush1.bf16.msra.mxu0 0
      %999 = vmatprep.subr.bf16.mxu0 0
      %1000 = vmatpush1.bf16.msra.mxu0 0
      %1001 = vmatprep.subr.bf16.mxu0 0
      %1002 = vmatpush1.bf16.msra.mxu0 0
      %1003 = vmatprep.subr.bf16.mxu0 0
      %1004 = vmatpush1.bf16.msra.mxu0 0
      %1005 = vmatprep.mubr.bf16.mxu0 0
      %1006 = vmatmul.mubr.bf16.gmra.mrb[0].mxu0 %v938
      %v1007 = vpop.f32.mrb[0].mxu0
      %v1008 = vadd.f32 %v812, %v1007
      %v1009 = vpop.f32.mrb[0].mxu0
      %v1010 = vpop.f32.mrb[0].mxu0
      %v1011 = vadd.f32 %v815, %v1010
      %v1012 = vpop.f32.mrb[0].mxu0
      %1013 = vmatprep.mubr.bf16.mxu0 0
      %1014 = vmatmul.mubr.bf16.gmra.mrb[0].mxu0 %v940
      %v1015 = vpop.f32.mrb[0].mxu0
      %v1016 = vadd.f32 %v820, %v1015
      %v1017 = vpop.f32.mrb[0].mxu0
      %v1018 = vpop.f32.mrb[0].mxu0
      %v1019 = vadd.f32 %v823, %v1018
      %v1020 = vpop.f32.mrb[0].mxu0
      %1021 = vmatprep.mubr.bf16.mxu0 0
      %1022 = vmatmul.mubr.bf16.gmra.mrb[0].mxu0 %v942
      %v1023 = vpop.f32.mrb[0].mxu0
      %v1024 = vadd.f32 %v828, %v1023
      %v1025 = vpop.f32.mrb[0].mxu0
      %v1026 = vpop.f32.mrb[0].mxu0
      %v1027 = vadd.f32 %v831, %v1026
      %v1028 = vpop.f32.mrb[0].mxu0
      %1029 = vmatprep.mubr.bf16.mxu0 0
      %1030 = vmatmul.mubr.bf16.gmra.mrb[0].mxu0 %v944
      %v1031 = vpop.f32.mrb[0].mxu0
      %v1032 = vadd.f32 %v836, %v1031
      %v1033 = vpop.f32.mrb[0].mxu0
      %v1034 = vpop.f32.mrb[0].mxu0
      %v1035 = vadd.f32 %v839, %v1034
      %v1036 = vpop.f32.mrb[0].mxu0
      %1037 = vmatprep.mubr.bf16.mxu0 0
      %1038 = vmatmul.mubr.bf16.gmra.mrb[0].mxu0 %v946
      %v1039 = vpop.f32.mrb[0].mxu0
      %v1040 = vadd.f32 %v844, %v1039
      %v1041 = vpop.f32.mrb[0].mxu0
      %v1042 = vpop.f32.mrb[0].mxu0
      %v1043 = vadd.f32 %v847, %v1042
      %v1044 = vpop.f32.mrb[0].mxu0
      %1045 = vmatprep.mubr.bf16.mxu0 0
      %1046 = vmatmul.mubr.bf16.gmra.mrb[0].mxu0 %v948
      %v1047 = vpop.f32.mrb[0].mxu0
      %v1048 = vadd.f32 %v852, %v1047
      %v1049 = vpop.f32.mrb[0].mxu0
      %v1050 = vpop.f32.mrb[0].mxu0
      %v1051 = vadd.f32 %v855, %v1050
      %v1052 = vpop.f32.mrb[0].mxu0
      %1053 = vmatprep.mubr.bf16.mxu0 0
      %1054 = vmatmul.mubr.bf16.gmra.mrb[0].mxu0 %v950
      %v1055 = vpop.f32.mrb[0].mxu0
      %v1056 = vadd.f32 %v860, %v1055
      %v1057 = vpop.f32.mrb[0].mxu0
      %v1058 = vpop.f32.mrb[0].mxu0
      %v1059 = vadd.f32 %v863, %v1058
      %v1060 = vpop.f32.mrb[0].mxu0
      %1061 = vmatprep.mubr.bf16.mxu0 0
      %1062 = vmatmul.mubr.bf16.gmra.mrb[0].mxu0 %v952
      %v1063 = vpop.f32.mrb[0].mxu0
      %v1064 = vadd.f32 %v868, %v1063
      %v1065 = vpop.f32.mrb[0].mxu0
      %v1066 = vpop.f32.mrb[0].mxu0
      %v1067 = vadd.f32 %v871, %v1066
      %v1068 = vpop.f32.mrb[0].mxu0
      %1069 = vmatprep.mubr.bf16.mxu0 0
      %1070 = vmatmul.mubr.bf16.gmra.mrb[0].mxu0 %v954
      %v1071 = vpop.f32.mrb[0].mxu0
      %v1072 = vadd.f32 %v876, %v1071
      %v1073 = vpop.f32.mrb[0].mxu0
      %v1074 = vpop.f32.mrb[0].mxu0
      %v1075 = vadd.f32 %v879, %v1074
      %v1076 = vpop.f32.mrb[0].mxu0
      %1077 = vmatprep.mubr.bf16.mxu0 0
      %1078 = vmatmul.mubr.bf16.gmra.mrb[0].mxu0 %v956
      %v1079 = vpop.f32.mrb[0].mxu0
      %v1080 = vadd.f32 %v884, %v1079
      %v1081 = vpop.f32.mrb[0].mxu0
      %v1082 = vpop.f32.mrb[0].mxu0
      %v1083 = vadd.f32 %v887, %v1082
      %v1084 = vpop.f32.mrb[0].mxu0
      %1085 = vmatprep.mubr.bf16.mxu0 0
      %1086 = vmatmul.mubr.bf16.gmra.mrb[0].mxu0 %v958
      %v1087 = vpop.f32.mrb[0].mxu0
      %v1088 = vadd.f32 %v892, %v1087
      %v1089 = vpop.f32.mrb[0].mxu0
      %v1090 = vpop.f32.mrb[0].mxu0
      %v1091 = vadd.f32 %v895, %v1090
      %v1092 = vpop.f32.mrb[0].mxu0
      %1093 = vmatprep.mubr.bf16.mxu0 0
      %1094 = vmatmul.mubr.bf16.gmra.mrb[0].mxu0 %v960
      %v1095 = vpop.f32.mrb[0].mxu0
      %v1096 = vadd.f32 %v900, %v1095
      %v1097 = vpop.f32.mrb[0].mxu0
      %v1098 = vpop.f32.mrb[0].mxu0
      %v1099 = vadd.f32 %v903, %v1098
      %v1100 = vpop.f32.mrb[0].mxu0
      %1101 = vmatprep.mubr.bf16.mxu0 0
      %1102 = vmatmul.mubr.bf16.gmra.mrb[0].mxu0 %v962
      %v1103 = vpop.f32.mrb[0].mxu0
      %v1104 = vadd.f32 %v908, %v1103
      %v1105 = vpop.f32.mrb[0].mxu0
      %v1106 = vpop.f32.mrb[0].mxu0
      %v1107 = vadd.f32 %v911, %v1106
      %v1108 = vpop.f32.mrb[0].mxu0
      %1109 = vmatprep.mubr.bf16.mxu0 0
      %1110 = vmatmul.mubr.bf16.gmra.mrb[0].mxu0 %v964
      %v1111 = vpop.f32.mrb[0].mxu0
      %v1112 = vadd.f32 %v916, %v1111
      %v1113 = vpop.f32.mrb[0].mxu0
      %v1114 = vpop.f32.mrb[0].mxu0
      %v1115 = vadd.f32 %v919, %v1114
      %v1116 = vpop.f32.mrb[0].mxu0
      %1117 = vmatprep.mubr.bf16.mxu0 0
      %1118 = vmatmul.mubr.bf16.gmra.mrb[0].mxu0 %v966
      %v1119 = vpop.f32.mrb[0].mxu0
      %v1120 = vadd.f32 %v924, %v1119
      %v1121 = vpop.f32.mrb[0].mxu0
      %v1122 = vpop.f32.mrb[0].mxu0
      %v1123 = vadd.f32 %v927, %v1122
      %v1124 = vpop.f32.mrb[0].mxu0
      %1125 = vmatprep.mubr.bf16.mxu0 0
      %1126 = vmatmul.mubr.bf16.gmra.mrb[0].mxu0 %v968
      %v1127 = vpop.f32.mrb[0].mxu0
      %v1128 = vadd.f32 %v932, %v1127
      %v1129 = vpop.f32.mrb[0].mxu0
      %v1130 = vpop.f32.mrb[0].mxu0
      %v1131 = vadd.f32 %v935, %v1130
      %v1132 = vpop.f32.mrb[0].mxu0
      %1133 = vdwg.mxu0
      %vm1166 = vcmask 1046528
      %v1167 = vrot.slane %v494, 1
      %v1168 = vrot.slane %v511, 1
      %v1169 = vsel %vm1166, %v1167, %v1168
      %v1170 = vrot.slane %v495, 1
      %v1171 = vrot.slane %v512, 1
      %v1172 = vsel %vm1166, %v1170, %v1171
      %v1173 = vrot.slane %v496, 1
      %v1174 = vrot.slane %v513, 1
      %v1175 = vsel %vm1166, %v1173, %v1174
      %v1176 = vrot.slane %v497, 1
      %v1177 = vrot.slane %v514, 1
      %v1178 = vsel %vm1166, %v1176, %v1177
      %v1179 = vrot.slane %v498, 1
      %v1180 = vrot.slane %v515, 1
      %v1181 = vsel %vm1166, %v1179, %v1180
      %v1182 = vrot.slane %v499, 1
      %v1183 = vrot.slane %v516, 1
      %v1184 = vsel %vm1166, %v1182, %v1183
      %v1185 = vrot.slane %v500, 1
      %v1186 = vrot.slane %v517, 1
      %v1187 = vsel %vm1166, %v1185, %v1186
      %v1188 = vrot.slane %v501, 1
      %v1189 = vrot.slane %v518, 1
      %v1190 = vsel %vm1166, %v1188, %v1189
      %v1191 = vrot.slane %v502, 1
      %v1192 = vrot.slane %v519, 1
      %v1193 = vsel %vm1166, %v1191, %v1192
      %v1194 = vrot.slane %v503, 1
      %v1195 = vrot.slane %v520, 1
      %v1196 = vsel %vm1166, %v1194, %v1195
      %v1197 = vrot.slane %v504, 1
      %v1198 = vrot.slane %v521, 1
      %v1199 = vsel %vm1166, %v1197, %v1198
      %v1200 = vrot.slane %v505, 1
      %v1201 = vrot.slane %v522, 1
      %v1202 = vsel %vm1166, %v1200, %v1201
      %v1203 = vrot.slane %v506, 1
      %v1204 = vrot.slane %v523, 1
      %v1205 = vsel %vm1166, %v1203, %v1204
      %v1206 = vrot.slane %v507, 1
      %v1207 = vrot.slane %v524, 1
      %v1208 = vsel %vm1166, %v1206, %v1207
      %v1209 = vrot.slane %v508, 1
      %v1210 = vrot.slane %v525, 1
      %v1211 = vsel %vm1166, %v1209, %v1210
      %v1212 = vrot.slane %v509, 1
      %v1213 = vrot.slane %v526, 1
      %v1214 = vsel %vm1166, %v1212, %v1213
      %s1215 = scalar_lea.vmem %s1, 8
      %v1216 = vld [vmem:[%s1215] sm:$0xf]
      %v1218 = vsel %vm724, %v1169, 0
      %v1221 = vsel %vm724, %v1172, 0
      %v1224 = vsel %vm724, %v1175, 0
      %v1227 = vsel %vm724, %v1178, 0
      %v1230 = vsel %vm724, %v1181, 0
      %v1233 = vsel %vm724, %v1184, 0
      %v1236 = vsel %vm724, %v1187, 0
      %v1239 = vsel %vm724, %v1190, 0
      %v1242 = vsel %vm724, %v1193, 0
      %v1245 = vsel %vm724, %v1196, 0
      %v1248 = vsel %vm724, %v1199, 0
      %v1251 = vsel %vm724, %v1202, 0
      %v1254 = vsel %vm724, %v1205, 0
      %v1257 = vsel %vm724, %v1208, 0
      %v1260 = vsel %vm724, %v1211, 0
      %v1263 = vsel %vm724, %v1214, 0
      %v1266 = vsel %vm773, %v1216, 0
      %1268 = vmatprep.subr.bf16.mxu0 0
      %1269 = vmatpush1.bf16.msra.mxu0 %v1266
      %1270 = vmatprep.subr.bf16.mxu0 0
      %1271 = vmatpush1.bf16.msra.mxu0 0
      %1272 = vmatprep.subr.bf16.mxu0 0
      %1273 = vmatpush1.bf16.msra.mxu0 0
      %1274 = vmatprep.subr.bf16.mxu0 0
      %1275 = vmatpush1.bf16.msra.mxu0 0
      %1276 = vmatprep.subr.bf16.mxu0 0
      %1277 = vmatpush1.bf16.msra.mxu0 0
      %1278 = vmatprep.subr.bf16.mxu0 0
      %1279 = vmatpush1.bf16.msra.mxu0 0
      %1280 = vmatprep.subr.bf16.mxu0 0
      %1281 = vmatpush1.bf16.msra.mxu0 0
      %1282 = vmatprep.subr.bf16.mxu0 0
      %1283 = vmatpush1.bf16.msra.mxu0 0
      %1284 = vmatprep.subr.bf16.mxu0 0
      %1285 = vmatpush1.bf16.msra.mxu0 0
      %1286 = vmatprep.subr.bf16.mxu0 0
      %1287 = vmatpush1.bf16.msra.mxu0 0
      %1288 = vmatprep.subr.bf16.mxu0 0
      %1289 = vmatpush1.bf16.msra.mxu0 0
      %1290 = vmatprep.subr.bf16.mxu0 0
      %1291 = vmatpush1.bf16.msra.mxu0 0
      %1292 = vmatprep.subr.bf16.mxu0 0
      %1293 = vmatpush1.bf16.msra.mxu0 0
      %1294 = vmatprep.subr.bf16.mxu0 0
      %1295 = vmatpush1.bf16.msra.mxu0 0
      %1296 = vmatprep.subr.bf16.mxu0 0
      %1297 = vmatpush1.bf16.msra.mxu0 0
      %1298 = vmatprep.subr.bf16.mxu0 0
      %1299 = vmatpush1.bf16.msra.mxu0 0
      %1300 = vmatprep.mubr.bf16.mxu0 0
      %1301 = vmatmul.mubr.bf16.gmra.mrb[0].mxu0 %v1218
      %v1302 = vpop.f32.mrb[0].mxu0
      %v1303 = vadd.f32 0.0, %v1302
      %v1304 = vpop.f32.mrb[0].mxu0
      %v1305 = vpop.f32.mrb[0].mxu0
      %v1306 = vadd.f32 0.0, %v1305
      %v1307 = vpop.f32.mrb[0].mxu0
      %1308 = vmatprep.mubr.bf16.mxu0 0
      %1309 = vmatmul.mubr.bf16.gmra.mrb[0].mxu0 %v1221
      %v1310 = vpop.f32.mrb[0].mxu0
      %v1311 = vadd.f32 0.0, %v1310
      %v1312 = vpop.f32.mrb[0].mxu0
      %v1313 = vpop.f32.mrb[0].mxu0
      %v1314 = vadd.f32 0.0, %v1313
      %v1315 = vpop.f32.mrb[0].mxu0
      %1316 = vmatprep.mubr.bf16.mxu0 0
      %1317 = vmatmul.mubr.bf16.gmra.mrb[0].mxu0 %v1224
      %v1318 = vpop.f32.mrb[0].mxu0
      %v1319 = vadd.f32 0.0, %v1318
      %v1320 = vpop.f32.mrb[0].mxu0
      %v1321 = vpop.f32.mrb[0].mxu0
      %v1322 = vadd.f32 0.0, %v1321
      %v1323 = vpop.f32.mrb[0].mxu0
      %1324 = vmatprep.mubr.bf16.mxu0 0
      %1325 = vmatmul.mubr.bf16.gmra.mrb[0].mxu0 %v1227
      %v1326 = vpop.f32.mrb[0].mxu0
      %v1327 = vadd.f32 0.0, %v1326
      %v1328 = vpop.f32.mrb[0].mxu0
      %v1329 = vpop.f32.mrb[0].mxu0
      %v1330 = vadd.f32 0.0, %v1329
      %v1331 = vpop.f32.mrb[0].mxu0
      %1332 = vmatprep.mubr.bf16.mxu0 0
      %1333 = vmatmul.mubr.bf16.gmra.mrb[0].mxu0 %v1230
      %v1334 = vpop.f32.mrb[0].mxu0
      %v1335 = vadd.f32 0.0, %v1334
      %v1336 = vpop.f32.mrb[0].mxu0
      %v1337 = vpop.f32.mrb[0].mxu0
      %v1338 = vadd.f32 0.0, %v1337
      %v1339 = vpop.f32.mrb[0].mxu0
      %1340 = vmatprep.mubr.bf16.mxu0 0
      %1341 = vmatmul.mubr.bf16.gmra.mrb[0].mxu0 %v1233
      %v1342 = vpop.f32.mrb[0].mxu0
      %v1343 = vadd.f32 0.0, %v1342
      %v1344 = vpop.f32.mrb[0].mxu0
      %v1345 = vpop.f32.mrb[0].mxu0
      %v1346 = vadd.f32 0.0, %v1345
      %v1347 = vpop.f32.mrb[0].mxu0
      %1348 = vmatprep.mubr.bf16.mxu0 0
      %1349 = vmatmul.mubr.bf16.gmra.mrb[0].mxu0 %v1236
      %v1350 = vpop.f32.mrb[0].mxu0
      %v1351 = vadd.f32 0.0, %v1350
      %v1352 = vpop.f32.mrb[0].mxu0
      %v1353 = vpop.f32.mrb[0].mxu0
      %v1354 = vadd.f32 0.0, %v1353
      %v1355 = vpop.f32.mrb[0].mxu0
      %1356 = vmatprep.mubr.bf16.mxu0 0
      %1357 = vmatmul.mubr.bf16.gmra.mrb[0].mxu0 %v1239
      %v1358 = vpop.f32.mrb[0].mxu0
      %v1359 = vadd.f32 0.0, %v1358
      %v1360 = vpop.f32.mrb[0].mxu0
      %v1361 = vpop.f32.mrb[0].mxu0
      %v1362 = vadd.f32 0.0, %v1361
      %v1363 = vpop.f32.mrb[0].mxu0
      %1364 = vmatprep.mubr.bf16.mxu0 0
      %1365 = vmatmul.mubr.bf16.gmra.mrb[0].mxu0 %v1242
      %v1366 = vpop.f32.mrb[0].mxu0
      %v1367 = vadd.f32 0.0, %v1366
      %v1368 = vpop.f32.mrb[0].mxu0
      %v1369 = vpop.f32.mrb[0].mxu0
      %v1370 = vadd.f32 0.0, %v1369
      %v1371 = vpop.f32.mrb[0].mxu0
      %1372 = vmatprep.mubr.bf16.mxu0 0
      %1373 = vmatmul.mubr.bf16.gmra.mrb[0].mxu0 %v1245
      %v1374 = vpop.f32.mrb[0].mxu0
      %v1375 = vadd.f32 0.0, %v1374
      %v1376 = vpop.f32.mrb[0].mxu0
      %v1377 = vpop.f32.mrb[0].mxu0
      %v1378 = vadd.f32 0.0, %v1377
      %v1379 = vpop.f32.mrb[0].mxu0
      %1380 = vmatprep.mubr.bf16.mxu0 0
      %1381 = vmatmul.mubr.bf16.gmra.mrb[0].mxu0 %v1248
      %v1382 = vpop.f32.mrb[0].mxu0
      %v1383 = vadd.f32 0.0, %v1382
      %v1384 = vpop.f32.mrb[0].mxu0
      %v1385 = vpop.f32.mrb[0].mxu0
      %v1386 = vadd.f32 0.0, %v1385
      %v1387 = vpop.f32.mrb[0].mxu0
      %1388 = vmatprep.mubr.bf16.mxu0 0
      %1389 = vmatmul.mubr.bf16.gmra.mrb[0].mxu0 %v1251
      %v1390 = vpop.f32.mrb[0].mxu0
      %v1391 = vadd.f32 0.0, %v1390
      %v1392 = vpop.f32.mrb[0].mxu0
      %v1393 = vpop.f32.mrb[0].mxu0
      %v1394 = vadd.f32 0.0, %v1393
      %v1395 = vpop.f32.mrb[0].mxu0
      %1396 = vmatprep.mubr.bf16.mxu0 0
      %1397 = vmatmul.mubr.bf16.gmra.mrb[0].mxu0 %v1254
      %v1398 = vpop.f32.mrb[0].mxu0
      %v1399 = vadd.f32 0.0, %v1398
      %v1400 = vpop.f32.mrb[0].mxu0
      %v1401 = vpop.f32.mrb[0].mxu0
      %v1402 = vadd.f32 0.0, %v1401
      %v1403 = vpop.f32.mrb[0].mxu0
      %1404 = vmatprep.mubr.bf16.mxu0 0
      %1405 = vmatmul.mubr.bf16.gmra.mrb[0].mxu0 %v1257
      %v1406 = vpop.f32.mrb[0].mxu0
      %v1407 = vadd.f32 0.0, %v1406
      %v1408 = vpop.f32.mrb[0].mxu0
      %v1409 = vpop.f32.mrb[0].mxu0
      %v1410 = vadd.f32 0.0, %v1409
      %v1411 = vpop.f32.mrb[0].mxu0
      %1412 = vmatprep.mubr.bf16.mxu0 0
      %1413 = vmatmul.mubr.bf16.gmra.mrb[0].mxu0 %v1260
      %v1414 = vpop.f32.mrb[0].mxu0
      %v1415 = vadd.f32 0.0, %v1414
      %v1416 = vpop.f32.mrb[0].mxu0
      %v1417 = vpop.f32.mrb[0].mxu0
      %v1418 = vadd.f32 0.0, %v1417
      %v1419 = vpop.f32.mrb[0].mxu0
      %1420 = vmatprep.mubr.bf16.mxu0 0
      %1421 = vmatmul.mubr.bf16.gmra.mrb[0].mxu0 %v1263
      %v1422 = vpop.f32.mrb[0].mxu0
      %v1423 = vadd.f32 0.0, %v1422
      %v1424 = vpop.f32.mrb[0].mxu0
      %v1425 = vpop.f32.mrb[0].mxu0
      %v1426 = vadd.f32 0.0, %v1425
      %v1427 = vpop.f32.mrb[0].mxu0
      %1428 = vdwg.mxu0
      %v1429 = vadd.f32 %v1008, %v1303
      %v1430 = vadd.f32 %v1011, %v1306
      %v1431 = vadd.f32 %v1016, %v1311
      %v1432 = vadd.f32 %v1019, %v1314
      %v1433 = vadd.f32 %v1024, %v1319
      %v1434 = vadd.f32 %v1027, %v1322
      %v1435 = vadd.f32 %v1032, %v1327
      %v1436 = vadd.f32 %v1035, %v1330
      %v1437 = vadd.f32 %v1040, %v1335
      %v1438 = vadd.f32 %v1043, %v1338
      %v1439 = vadd.f32 %v1048, %v1343
      %v1440 = vadd.f32 %v1051, %v1346
      %v1441 = vadd.f32 %v1056, %v1351
      %v1442 = vadd.f32 %v1059, %v1354
      %v1443 = vadd.f32 %v1064, %v1359
      %v1444 = vadd.f32 %v1067, %v1362
      %v1445 = vadd.f32 %v1072, %v1367
      %v1446 = vadd.f32 %v1075, %v1370
      %v1447 = vadd.f32 %v1080, %v1375
      %v1448 = vadd.f32 %v1083, %v1378
      %v1449 = vadd.f32 %v1088, %v1383
      %v1450 = vadd.f32 %v1091, %v1386
      %v1451 = vadd.f32 %v1096, %v1391
      %v1452 = vadd.f32 %v1099, %v1394
      %v1453 = vadd.f32 %v1104, %v1399
      %v1454 = vadd.f32 %v1107, %v1402
      %v1455 = vadd.f32 %v1112, %v1407
      %v1456 = vadd.f32 %v1115, %v1410
      %v1457 = vadd.f32 %v1120, %v1415
      %v1458 = vadd.f32 %v1123, %v1418
      %v1459 = vadd.f32 %v1128, %v1423
      %v1460 = vadd.f32 %v1131, %v1426
      %s1461 = scalar_lea.vmem %s1, 12
      %v1462 = vld [vmem:[%s1461] sm:$0xf]
      %v1464 = vsel %vm724, %v510, 0
      %v1467 = vsel %vm773, %v1462, 0
      %1469 = vmatprep.subr.bf16.mxu0 0
      %1470 = vmatpush1.bf16.msra.mxu0 %v1467
      %1471 = vmatprep.subr.bf16.mxu0 0
      %1472 = vmatpush1.bf16.msra.mxu0 0
      %1473 = vmatprep.subr.bf16.mxu0 0
      %1474 = vmatpush1.bf16.msra.mxu0 0
      %1475 = vmatprep.subr.bf16.mxu0 0
      %1476 = vmatpush1.bf16.msra.mxu0 0
      %1477 = vmatprep.subr.bf16.mxu0 0
      %1478 = vmatpush1.bf16.msra.mxu0 0
      %1479 = vmatprep.subr.bf16.mxu0 0
      %1480 = vmatpush1.bf16.msra.mxu0 0
      %1481 = vmatprep.subr.bf16.mxu0 0
      %1482 = vmatpush1.bf16.msra.mxu0 0
      %1483 = vmatprep.subr.bf16.mxu0 0
      %1484 = vmatpush1.bf16.msra.mxu0 0
      %1485 = vmatprep.subr.bf16.mxu0 0
      %1486 = vmatpush1.bf16.msra.mxu0 0
      %1487 = vmatprep.subr.bf16.mxu0 0
      %1488 = vmatpush1.bf16.msra.mxu0 0
      %1489 = vmatprep.subr.bf16.mxu0 0
      %1490 = vmatpush1.bf16.msra.mxu0 0
      %1491 = vmatprep.subr.bf16.mxu0 0
      %1492 = vmatpush1.bf16.msra.mxu0 0
      %1493 = vmatprep.subr.bf16.mxu0 0
      %1494 = vmatpush1.bf16.msra.mxu0 0
      %1495 = vmatprep.subr.bf16.mxu0 0
      %1496 = vmatpush1.bf16.msra.mxu0 0
      %1497 = vmatprep.subr.bf16.mxu0 0
      %1498 = vmatpush1.bf16.msra.mxu0 0
      %1499 = vmatprep.subr.bf16.mxu0 0
      %1500 = vmatpush1.bf16.msra.mxu0 0
      %1501 = vmatprep.mubr.bf16.mxu0 0
      %1502 = vmatmul.mubr.bf16.gmra.mrb[0].mxu0 %v940
      %v1503 = vpop.f32.mrb[0].mxu0
      %v1504 = vadd.f32 0.0, %v1503
      %v1505 = vpop.f32.mrb[0].mxu0
      %v1506 = vpop.f32.mrb[0].mxu0
      %v1507 = vadd.f32 0.0, %v1506
      %v1508 = vpop.f32.mrb[0].mxu0
      %1509 = vmatprep.mubr.bf16.mxu0 0
      %1510 = vmatmul.mubr.bf16.gmra.mrb[0].mxu0 %v942
      %v1511 = vpop.f32.mrb[0].mxu0
      %v1512 = vadd.f32 0.0, %v1511
      %v1513 = vpop.f32.mrb[0].mxu0
      %v1514 = vpop.f32.mrb[0].mxu0
      %v1515 = vadd.f32 0.0, %v1514
      %v1516 = vpop.f32.mrb[0].mxu0
      %1517 = vmatprep.mubr.bf16.mxu0 0
      %1518 = vmatmul.mubr.bf16.gmra.mrb[0].mxu0 %v944
      %v1519 = vpop.f32.mrb[0].mxu0
      %v1520 = vadd.f32 0.0, %v1519
      %v1521 = vpop.f32.mrb[0].mxu0
      %v1522 = vpop.f32.mrb[0].mxu0
      %v1523 = vadd.f32 0.0, %v1522
      %v1524 = vpop.f32.mrb[0].mxu0
      %1525 = vmatprep.mubr.bf16.mxu0 0
      %1526 = vmatmul.mubr.bf16.gmra.mrb[0].mxu0 %v946
      %v1527 = vpop.f32.mrb[0].mxu0
      %v1528 = vadd.f32 0.0, %v1527
      %v1529 = vpop.f32.mrb[0].mxu0
      %v1530 = vpop.f32.mrb[0].mxu0
      %v1531 = vadd.f32 0.0, %v1530
      %v1532 = vpop.f32.mrb[0].mxu0
      %1533 = vmatprep.mubr.bf16.mxu0 0
      %1534 = vmatmul.mubr.bf16.gmra.mrb[0].mxu0 %v948
      %v1535 = vpop.f32.mrb[0].mxu0
      %v1536 = vadd.f32 0.0, %v1535
      %v1537 = vpop.f32.mrb[0].mxu0
      %v1538 = vpop.f32.mrb[0].mxu0
      %v1539 = vadd.f32 0.0, %v1538
      %v1540 = vpop.f32.mrb[0].mxu0
      %1541 = vmatprep.mubr.bf16.mxu0 0
      %1542 = vmatmul.mubr.bf16.gmra.mrb[0].mxu0 %v950
      %v1543 = vpop.f32.mrb[0].mxu0
      %v1544 = vadd.f32 0.0, %v1543
      %v1545 = vpop.f32.mrb[0].mxu0
      %v1546 = vpop.f32.mrb[0].mxu0
      %v1547 = vadd.f32 0.0, %v1546
      %v1548 = vpop.f32.mrb[0].mxu0
      %1549 = vmatprep.mubr.bf16.mxu0 0
      %1550 = vmatmul.mubr.bf16.gmra.mrb[0].mxu0 %v952
      %v1551 = vpop.f32.mrb[0].mxu0
      %v1552 = vadd.f32 0.0, %v1551
      %v1553 = vpop.f32.mrb[0].mxu0
      %v1554 = vpop.f32.mrb[0].mxu0
      %v1555 = vadd.f32 0.0, %v1554
      %v1556 = vpop.f32.mrb[0].mxu0
      %1557 = vmatprep.mubr.bf16.mxu0 0
      %1558 = vmatmul.mubr.bf16.gmra.mrb[0].mxu0 %v954
      %v1559 = vpop.f32.mrb[0].mxu0
      %v1560 = vadd.f32 0.0, %v1559
      %v1561 = vpop.f32.mrb[0].mxu0
      %v1562 = vpop.f32.mrb[0].mxu0
      %v1563 = vadd.f32 0.0, %v1562
      %v1564 = vpop.f32.mrb[0].mxu0
      %1565 = vmatprep.mubr.bf16.mxu0 0
      %1566 = vmatmul.mubr.bf16.gmra.mrb[0].mxu0 %v956
      %v1567 = vpop.f32.mrb[0].mxu0
      %v1568 = vadd.f32 0.0, %v1567
      %v1569 = vpop.f32.mrb[0].mxu0
      %v1570 = vpop.f32.mrb[0].mxu0
      %v1571 = vadd.f32 0.0, %v1570
      %v1572 = vpop.f32.mrb[0].mxu0
      %1573 = vmatprep.mubr.bf16.mxu0 0
      %1574 = vmatmul.mubr.bf16.gmra.mrb[0].mxu0 %v958
      %v1575 = vpop.f32.mrb[0].mxu0
      %v1576 = vadd.f32 0.0, %v1575
      %v1577 = vpop.f32.mrb[0].mxu0
      %v1578 = vpop.f32.mrb[0].mxu0
      %v1579 = vadd.f32 0.0, %v1578
      %v1580 = vpop.f32.mrb[0].mxu0
      %1581 = vmatprep.mubr.bf16.mxu0 0
      %1582 = vmatmul.mubr.bf16.gmra.mrb[0].mxu0 %v960
      %v1583 = vpop.f32.mrb[0].mxu0
      %v1584 = vadd.f32 0.0, %v1583
      %v1585 = vpop.f32.mrb[0].mxu0
      %v1586 = vpop.f32.mrb[0].mxu0
      %v1587 = vadd.f32 0.0, %v1586
      %v1588 = vpop.f32.mrb[0].mxu0
      %1589 = vmatprep.mubr.bf16.mxu0 0
      %1590 = vmatmul.mubr.bf16.gmra.mrb[0].mxu0 %v962
      %v1591 = vpop.f32.mrb[0].mxu0
      %v1592 = vadd.f32 0.0, %v1591
      %v1593 = vpop.f32.mrb[0].mxu0
      %v1594 = vpop.f32.mrb[0].mxu0
      %v1595 = vadd.f32 0.0, %v1594
      %v1596 = vpop.f32.mrb[0].mxu0
      %1597 = vmatprep.mubr.bf16.mxu0 0
      %1598 = vmatmul.mubr.bf16.gmra.mrb[0].mxu0 %v964
      %v1599 = vpop.f32.mrb[0].mxu0
      %v1600 = vadd.f32 0.0, %v1599
      %v1601 = vpop.f32.mrb[0].mxu0
      %v1602 = vpop.f32.mrb[0].mxu0
      %v1603 = vadd.f32 0.0, %v1602
      %v1604 = vpop.f32.mrb[0].mxu0
      %1605 = vmatprep.mubr.bf16.mxu0 0
      %1606 = vmatmul.mubr.bf16.gmra.mrb[0].mxu0 %v966
      %v1607 = vpop.f32.mrb[0].mxu0
      %v1608 = vadd.f32 0.0, %v1607
      %v1609 = vpop.f32.mrb[0].mxu0
      %v1610 = vpop.f32.mrb[0].mxu0
      %v1611 = vadd.f32 0.0, %v1610
      %v1612 = vpop.f32.mrb[0].mxu0
      %1613 = vmatprep.mubr.bf16.mxu0 0
      %1614 = vmatmul.mubr.bf16.gmra.mrb[0].mxu0 %v968
      %v1615 = vpop.f32.mrb[0].mxu0
      %v1616 = vadd.f32 0.0, %v1615
      %v1617 = vpop.f32.mrb[0].mxu0
      %v1618 = vpop.f32.mrb[0].mxu0
      %v1619 = vadd.f32 0.0, %v1618
      %v1620 = vpop.f32.mrb[0].mxu0
      %1621 = vmatprep.mubr.bf16.mxu0 0
      %1622 = vmatmul.mubr.bf16.gmra.mrb[0].mxu0 %v1464
      %v1623 = vpop.f32.mrb[0].mxu0
      %v1624 = vadd.f32 0.0, %v1623
      %v1625 = vpop.f32.mrb[0].mxu0
      %v1626 = vpop.f32.mrb[0].mxu0
      %v1627 = vadd.f32 0.0, %v1626
      %v1628 = vpop.f32.mrb[0].mxu0
      %1629 = vdwg.mxu0
      %v1630 = vadd.f32 %v1429, %v1504
      %v1631 = vadd.f32 %v1430, %v1507
      %v1632 = vadd.f32 %v1431, %v1512
      %v1633 = vadd.f32 %v1432, %v1515
      %v1634 = vadd.f32 %v1433, %v1520
      %v1635 = vadd.f32 %v1434, %v1523
      %v1636 = vadd.f32 %v1435, %v1528
      %v1637 = vadd.f32 %v1436, %v1531
      %v1638 = vadd.f32 %v1437, %v1536
      %v1639 = vadd.f32 %v1438, %v1539
      %v1640 = vadd.f32 %v1439, %v1544
      %v1641 = vadd.f32 %v1440, %v1547
      %v1642 = vadd.f32 %v1441, %v1552
      %v1643 = vadd.f32 %v1442, %v1555
      %v1644 = vadd.f32 %v1443, %v1560
      %v1645 = vadd.f32 %v1444, %v1563
      %v1646 = vadd.f32 %v1445, %v1568
      %v1647 = vadd.f32 %v1446, %v1571
      %v1648 = vadd.f32 %v1447, %v1576
      %v1649 = vadd.f32 %v1448, %v1579
      %v1650 = vadd.f32 %v1449, %v1584
      %v1651 = vadd.f32 %v1450, %v1587
      %v1652 = vadd.f32 %v1451, %v1592
      %v1653 = vadd.f32 %v1452, %v1595
      %v1654 = vadd.f32 %v1453, %v1600
      %v1655 = vadd.f32 %v1454, %v1603
      %v1656 = vadd.f32 %v1455, %v1608
      %v1657 = vadd.f32 %v1456, %v1611
      %v1658 = vadd.f32 %v1457, %v1616
      %v1659 = vadd.f32 %v1458, %v1619
      %v1660 = vadd.f32 %v1459, %v1624
      %v1661 = vadd.f32 %v1460, %v1627
      %v1662 = vshrl.u32 %v510, 16
      %v1664 = vshll.u32 %v510, 16
      %v1666 = vrot.slane %v1664, 1
      %v1667 = vor.u32 %v1662, %v1666
      %v1669 = vshll.u32 %v527, 16
      %v1671 = vrot.slane %v1669, 1
      %v1672 = vsel %vm529, %v1667, %v1671
      %s1673 = scalar_lea.vmem %s1, 16
      %v1674 = vld [vmem:[%s1673] sm:$0xf]
      %v1676 = vsel %vm724, %v1672, 0
      %v1679 = vsel %vm773, %v1674, 0
      %1681 = vmatprep.subr.bf16.mxu0 0
      %1682 = vmatpush1.bf16.msra.mxu0 %v1679
      %1683 = vmatprep.subr.bf16.mxu0 0
      %1684 = vmatpush1.bf16.msra.mxu0 0
      %1685 = vmatprep.subr.bf16.mxu0 0
      %1686 = vmatpush1.bf16.msra.mxu0 0
      %1687 = vmatprep.subr.bf16.mxu0 0
      %1688 = vmatpush1.bf16.msra.mxu0 0
      %1689 = vmatprep.subr.bf16.mxu0 0
      %1690 = vmatpush1.bf16.msra.mxu0 0
      %1691 = vmatprep.subr.bf16.mxu0 0
      %1692 = vmatpush1.bf16.msra.mxu0 0
      %1693 = vmatprep.subr.bf16.mxu0 0
      %1694 = vmatpush1.bf16.msra.mxu0 0
      %1695 = vmatprep.subr.bf16.mxu0 0
      %1696 = vmatpush1.bf16.msra.mxu0 0
      %1697 = vmatprep.subr.bf16.mxu0 0
      %1698 = vmatpush1.bf16.msra.mxu0 0
      %1699 = vmatprep.subr.bf16.mxu0 0
      %1700 = vmatpush1.bf16.msra.mxu0 0
      %1701 = vmatprep.subr.bf16.mxu0 0
      %1702 = vmatpush1.bf16.msra.mxu0 0
      %1703 = vmatprep.subr.bf16.mxu0 0
      %1704 = vmatpush1.bf16.msra.mxu0 0
      %1705 = vmatprep.subr.bf16.mxu0 0
      %1706 = vmatpush1.bf16.msra.mxu0 0
      %1707 = vmatprep.subr.bf16.mxu0 0
      %1708 = vmatpush1.bf16.msra.mxu0 0
      %1709 = vmatprep.subr.bf16.mxu0 0
      %1710 = vmatpush1.bf16.msra.mxu0 0
      %1711 = vmatprep.subr.bf16.mxu0 0
      %1712 = vmatpush1.bf16.msra.mxu0 0
      %1713 = vmatprep.mubr.bf16.mxu0 0
      %1714 = vmatmul.mubr.bf16.gmra.mrb[0].mxu0 %v729
      %v1715 = vpop.f32.mrb[0].mxu0
      %v1716 = vadd.f32 0.0, %v1715
      %v1717 = vpop.f32.mrb[0].mxu0
      %v1718 = vpop.f32.mrb[0].mxu0
      %v1719 = vadd.f32 0.0, %v1718
      %v1720 = vpop.f32.mrb[0].mxu0
      %1721 = vmatprep.mubr.bf16.mxu0 0
      %1722 = vmatmul.mubr.bf16.gmra.mrb[0].mxu0 %v732
      %v1723 = vpop.f32.mrb[0].mxu0
      %v1724 = vadd.f32 0.0, %v1723
      %v1725 = vpop.f32.mrb[0].mxu0
      %v1726 = vpop.f32.mrb[0].mxu0
      %v1727 = vadd.f32 0.0, %v1726
      %v1728 = vpop.f32.mrb[0].mxu0
      %1729 = vmatprep.mubr.bf16.mxu0 0
      %1730 = vmatmul.mubr.bf16.gmra.mrb[0].mxu0 %v735
      %v1731 = vpop.f32.mrb[0].mxu0
      %v1732 = vadd.f32 0.0, %v1731
      %v1733 = vpop.f32.mrb[0].mxu0
      %v1734 = vpop.f32.mrb[0].mxu0
      %v1735 = vadd.f32 0.0, %v1734
      %v1736 = vpop.f32.mrb[0].mxu0
      %1737 = vmatprep.mubr.bf16.mxu0 0
      %1738 = vmatmul.mubr.bf16.gmra.mrb[0].mxu0 %v738
      %v1739 = vpop.f32.mrb[0].mxu0
      %v1740 = vadd.f32 0.0, %v1739
      %v1741 = vpop.f32.mrb[0].mxu0
      %v1742 = vpop.f32.mrb[0].mxu0
      %v1743 = vadd.f32 0.0, %v1742
      %v1744 = vpop.f32.mrb[0].mxu0
      %1745 = vmatprep.mubr.bf16.mxu0 0
      %1746 = vmatmul.mubr.bf16.gmra.mrb[0].mxu0 %v741
      %v1747 = vpop.f32.mrb[0].mxu0
      %v1748 = vadd.f32 0.0, %v1747
      %v1749 = vpop.f32.mrb[0].mxu0
      %v1750 = vpop.f32.mrb[0].mxu0
      %v1751 = vadd.f32 0.0, %v1750
      %v1752 = vpop.f32.mrb[0].mxu0
      %1753 = vmatprep.mubr.bf16.mxu0 0
      %1754 = vmatmul.mubr.bf16.gmra.mrb[0].mxu0 %v744
      %v1755 = vpop.f32.mrb[0].mxu0
      %v1756 = vadd.f32 0.0, %v1755
      %v1757 = vpop.f32.mrb[0].mxu0
      %v1758 = vpop.f32.mrb[0].mxu0
      %v1759 = vadd.f32 0.0, %v1758
      %v1760 = vpop.f32.mrb[0].mxu0
      %1761 = vmatprep.mubr.bf16.mxu0 0
      %1762 = vmatmul.mubr.bf16.gmra.mrb[0].mxu0 %v747
      %v1763 = vpop.f32.mrb[0].mxu0
      %v1764 = vadd.f32 0.0, %v1763
      %v1765 = vpop.f32.mrb[0].mxu0
      %v1766 = vpop.f32.mrb[0].mxu0
      %v1767 = vadd.f32 0.0, %v1766
      %v1768 = vpop.f32.mrb[0].mxu0
      %1769 = vmatprep.mubr.bf16.mxu0 0
      %1770 = vmatmul.mubr.bf16.gmra.mrb[0].mxu0 %v750
      %v1771 = vpop.f32.mrb[0].mxu0
      %v1772 = vadd.f32 0.0, %v1771
      %v1773 = vpop.f32.mrb[0].mxu0
      %v1774 = vpop.f32.mrb[0].mxu0
      %v1775 = vadd.f32 0.0, %v1774
      %v1776 = vpop.f32.mrb[0].mxu0
      %1777 = vmatprep.mubr.bf16.mxu0 0
      %1778 = vmatmul.mubr.bf16.gmra.mrb[0].mxu0 %v753
      %v1779 = vpop.f32.mrb[0].mxu0
      %v1780 = vadd.f32 0.0, %v1779
      %v1781 = vpop.f32.mrb[0].mxu0
      %v1782 = vpop.f32.mrb[0].mxu0
      %v1783 = vadd.f32 0.0, %v1782
      %v1784 = vpop.f32.mrb[0].mxu0
      %1785 = vmatprep.mubr.bf16.mxu0 0
      %1786 = vmatmul.mubr.bf16.gmra.mrb[0].mxu0 %v756
      %v1787 = vpop.f32.mrb[0].mxu0
      %v1788 = vadd.f32 0.0, %v1787
      %v1789 = vpop.f32.mrb[0].mxu0
      %v1790 = vpop.f32.mrb[0].mxu0
      %v1791 = vadd.f32 0.0, %v1790
      %v1792 = vpop.f32.mrb[0].mxu0
      %1793 = vmatprep.mubr.bf16.mxu0 0
      %1794 = vmatmul.mubr.bf16.gmra.mrb[0].mxu0 %v759
      %v1795 = vpop.f32.mrb[0].mxu0
      %v1796 = vadd.f32 0.0, %v1795
      %v1797 = vpop.f32.mrb[0].mxu0
      %v1798 = vpop.f32.mrb[0].mxu0
      %v1799 = vadd.f32 0.0, %v1798
      %v1800 = vpop.f32.mrb[0].mxu0
      %1801 = vmatprep.mubr.bf16.mxu0 0
      %1802 = vmatmul.mubr.bf16.gmra.mrb[0].mxu0 %v762
      %v1803 = vpop.f32.mrb[0].mxu0
      %v1804 = vadd.f32 0.0, %v1803
      %v1805 = vpop.f32.mrb[0].mxu0
      %v1806 = vpop.f32.mrb[0].mxu0
      %v1807 = vadd.f32 0.0, %v1806
      %v1808 = vpop.f32.mrb[0].mxu0
      %1809 = vmatprep.mubr.bf16.mxu0 0
      %1810 = vmatmul.mubr.bf16.gmra.mrb[0].mxu0 %v765
      %v1811 = vpop.f32.mrb[0].mxu0
      %v1812 = vadd.f32 0.0, %v1811
      %v1813 = vpop.f32.mrb[0].mxu0
      %v1814 = vpop.f32.mrb[0].mxu0
      %v1815 = vadd.f32 0.0, %v1814
      %v1816 = vpop.f32.mrb[0].mxu0
      %1817 = vmatprep.mubr.bf16.mxu0 0
      %1818 = vmatmul.mubr.bf16.gmra.mrb[0].mxu0 %v768
      %v1819 = vpop.f32.mrb[0].mxu0
      %v1820 = vadd.f32 0.0, %v1819
      %v1821 = vpop.f32.mrb[0].mxu0
      %v1822 = vpop.f32.mrb[0].mxu0
      %v1823 = vadd.f32 0.0, %v1822
      %v1824 = vpop.f32.mrb[0].mxu0
      %1825 = vmatprep.mubr.bf16.mxu0 0
      %1826 = vmatmul.mubr.bf16.gmra.mrb[0].mxu0 %v771
      %v1827 = vpop.f32.mrb[0].mxu0
      %v1828 = vadd.f32 0.0, %v1827
      %v1829 = vpop.f32.mrb[0].mxu0
      %v1830 = vpop.f32.mrb[0].mxu0
      %v1831 = vadd.f32 0.0, %v1830
      %v1832 = vpop.f32.mrb[0].mxu0
      %1833 = vmatprep.mubr.bf16.mxu0 0
      %1834 = vmatmul.mubr.bf16.gmra.mrb[0].mxu0 %v1676
      %v1835 = vpop.f32.mrb[0].mxu0
      %v1836 = vadd.f32 0.0, %v1835
      %v1837 = vpop.f32.mrb[0].mxu0
      %v1838 = vpop.f32.mrb[0].mxu0
      %v1839 = vadd.f32 0.0, %v1838
      %v1840 = vpop.f32.mrb[0].mxu0
      %1841 = vdwg.mxu0
      %v1842 = vadd.f32 %v1630, %v1716
      %v1843 = vadd.f32 %v1631, %v1719
      %v1844 = vadd.f32 %v1632, %v1724
      %v1845 = vadd.f32 %v1633, %v1727
      %v1846 = vadd.f32 %v1634, %v1732
      %v1847 = vadd.f32 %v1635, %v1735
      %v1848 = vadd.f32 %v1636, %v1740
      %v1849 = vadd.f32 %v1637, %v1743
      %v1850 = vadd.f32 %v1638, %v1748
      %v1851 = vadd.f32 %v1639, %v1751
      %v1852 = vadd.f32 %v1640, %v1756
      %v1853 = vadd.f32 %v1641, %v1759
      %v1854 = vadd.f32 %v1642, %v1764
      %v1855 = vadd.f32 %v1643, %v1767
      %v1856 = vadd.f32 %v1644, %v1772
      %v1857 = vadd.f32 %v1645, %v1775
      %v1858 = vadd.f32 %v1646, %v1780
      %v1859 = vadd.f32 %v1647, %v1783
      %v1860 = vadd.f32 %v1648, %v1788
      %v1861 = vadd.f32 %v1649, %v1791
      %v1862 = vadd.f32 %v1650, %v1796
      %v1863 = vadd.f32 %v1651, %v1799
      %v1864 = vadd.f32 %v1652, %v1804
      %v1865 = vadd.f32 %v1653, %v1807
      %v1866 = vadd.f32 %v1654, %v1812
      %v1867 = vadd.f32 %v1655, %v1815
      %v1868 = vadd.f32 %v1656, %v1820
      %v1869 = vadd.f32 %v1657, %v1823
      %v1870 = vadd.f32 %v1658, %v1828
      %v1871 = vadd.f32 %v1659, %v1831
      %v1872 = vadd.f32 %v1660, %v1836
      %v1873 = vadd.f32 %v1661, %v1839
      %v1876 = vrot.slane %v510, 1
      %v1877 = vrot.slane %v527, 1
      %v1878 = vsel %vm1166, %v1876, %v1877
      %s1879 = scalar_lea.vmem %s1, 20
      %v1880 = vld [vmem:[%s1879] sm:$0xf]
      %v1882 = vsel %vm724, %v1878, 0
      %v1885 = vsel %vm773, %v1880, 0
      %1887 = vmatprep.subr.bf16.mxu0 0
      %1888 = vmatpush1.bf16.msra.mxu0 %v1885
      %1889 = vmatprep.subr.bf16.mxu0 0
      %1890 = vmatpush1.bf16.msra.mxu0 0
      %1891 = vmatprep.subr.bf16.mxu0 0
      %1892 = vmatpush1.bf16.msra.mxu0 0
      %1893 = vmatprep.subr.bf16.mxu0 0
      %1894 = vmatpush1.bf16.msra.mxu0 0
      %1895 = vmatprep.subr.bf16.mxu0 0
      %1896 = vmatpush1.bf16.msra.mxu0 0
      %1897 = vmatprep.subr.bf16.mxu0 0
      %1898 = vmatpush1.bf16.msra.mxu0 0
      %1899 = vmatprep.subr.bf16.mxu0 0
      %1900 = vmatpush1.bf16.msra.mxu0 0
      %1901 = vmatprep.subr.bf16.mxu0 0
      %1902 = vmatpush1.bf16.msra.mxu0 0
      %1903 = vmatprep.subr.bf16.mxu0 0
      %1904 = vmatpush1.bf16.msra.mxu0 0
      %1905 = vmatprep.subr.bf16.mxu0 0
      %1906 = vmatpush1.bf16.msra.mxu0 0
      %1907 = vmatprep.subr.bf16.mxu0 0
      %1908 = vmatpush1.bf16.msra.mxu0 0
      %1909 = vmatprep.subr.bf16.mxu0 0
      %1910 = vmatpush1.bf16.msra.mxu0 0
      %1911 = vmatprep.subr.bf16.mxu0 0
      %1912 = vmatpush1.bf16.msra.mxu0 0
      %1913 = vmatprep.subr.bf16.mxu0 0
      %1914 = vmatpush1.bf16.msra.mxu0 0
      %1915 = vmatprep.subr.bf16.mxu0 0
      %1916 = vmatpush1.bf16.msra.mxu0 0
      %1917 = vmatprep.subr.bf16.mxu0 0
      %1918 = vmatpush1.bf16.msra.mxu0 0
      %1919 = vmatprep.mubr.bf16.mxu0 0
      %1920 = vmatmul.mubr.bf16.gmra.mrb[0].mxu0 %v1221
      %v1921 = vpop.f32.mrb[0].mxu0
      %v1922 = vadd.f32 0.0, %v1921
      %v1923 = vpop.f32.mrb[0].mxu0
      %v1924 = vpop.f32.mrb[0].mxu0
      %v1925 = vadd.f32 0.0, %v1924
      %v1926 = vpop.f32.mrb[0].mxu0
      %1927 = vmatprep.mubr.bf16.mxu0 0
      %1928 = vmatmul.mubr.bf16.gmra.mrb[0].mxu0 %v1224
      %v1929 = vpop.f32.mrb[0].mxu0
      %v1930 = vadd.f32 0.0, %v1929
      %v1931 = vpop.f32.mrb[0].mxu0
      %v1932 = vpop.f32.mrb[0].mxu0
      %v1933 = vadd.f32 0.0, %v1932
      %v1934 = vpop.f32.mrb[0].mxu0
      %1935 = vmatprep.mubr.bf16.mxu0 0
      %1936 = vmatmul.mubr.bf16.gmra.mrb[0].mxu0 %v1227
      %v1937 = vpop.f32.mrb[0].mxu0
      %v1938 = vadd.f32 0.0, %v1937
      %v1939 = vpop.f32.mrb[0].mxu0
      %v1940 = vpop.f32.mrb[0].mxu0
      %v1941 = vadd.f32 0.0, %v1940
      %v1942 = vpop.f32.mrb[0].mxu0
      %1943 = vmatprep.mubr.bf16.mxu0 0
      %1944 = vmatmul.mubr.bf16.gmra.mrb[0].mxu0 %v1230
      %v1945 = vpop.f32.mrb[0].mxu0
      %v1946 = vadd.f32 0.0, %v1945
      %v1947 = vpop.f32.mrb[0].mxu0
      %v1948 = vpop.f32.mrb[0].mxu0
      %v1949 = vadd.f32 0.0, %v1948
      %v1950 = vpop.f32.mrb[0].mxu0
      %1951 = vmatprep.mubr.bf16.mxu0 0
      %1952 = vmatmul.mubr.bf16.gmra.mrb[0].mxu0 %v1233
      %v1953 = vpop.f32.mrb[0].mxu0
      %v1954 = vadd.f32 0.0, %v1953
      %v1955 = vpop.f32.mrb[0].mxu0
      %v1956 = vpop.f32.mrb[0].mxu0
      %v1957 = vadd.f32 0.0, %v1956
      %v1958 = vpop.f32.mrb[0].mxu0
      %1959 = vmatprep.mubr.bf16.mxu0 0
      %1960 = vmatmul.mubr.bf16.gmra.mrb[0].mxu0 %v1236
      %v1961 = vpop.f32.mrb[0].mxu0
      %v1962 = vadd.f32 0.0, %v1961
      %v1963 = vpop.f32.mrb[0].mxu0
      %v1964 = vpop.f32.mrb[0].mxu0
      %v1965 = vadd.f32 0.0, %v1964
      %v1966 = vpop.f32.mrb[0].mxu0
      %1967 = vmatprep.mubr.bf16.mxu0 0
      %1968 = vmatmul.mubr.bf16.gmra.mrb[0].mxu0 %v1239
      %v1969 = vpop.f32.mrb[0].mxu0
      %v1970 = vadd.f32 0.0, %v1969
      %v1971 = vpop.f32.mrb[0].mxu0
      %v1972 = vpop.f32.mrb[0].mxu0
      %v1973 = vadd.f32 0.0, %v1972
      %v1974 = vpop.f32.mrb[0].mxu0
      %1975 = vmatprep.mubr.bf16.mxu0 0
      %1976 = vmatmul.mubr.bf16.gmra.mrb[0].mxu0 %v1242
      %v1977 = vpop.f32.mrb[0].mxu0
      %v1978 = vadd.f32 0.0, %v1977
      %v1979 = vpop.f32.mrb[0].mxu0
      %v1980 = vpop.f32.mrb[0].mxu0
      %v1981 = vadd.f32 0.0, %v1980
      %v1982 = vpop.f32.mrb[0].mxu0
      %1983 = vmatprep.mubr.bf16.mxu0 0
      %1984 = vmatmul.mubr.bf16.gmra.mrb[0].mxu0 %v1245
      %v1985 = vpop.f32.mrb[0].mxu0
      %v1986 = vadd.f32 0.0, %v1985
      %v1987 = vpop.f32.mrb[0].mxu0
      %v1988 = vpop.f32.mrb[0].mxu0
      %v1989 = vadd.f32 0.0, %v1988
      %v1990 = vpop.f32.mrb[0].mxu0
      %1991 = vmatprep.mubr.bf16.mxu0 0
      %1992 = vmatmul.mubr.bf16.gmra.mrb[0].mxu0 %v1248
      %v1993 = vpop.f32.mrb[0].mxu0
      %v1994 = vadd.f32 0.0, %v1993
      %v1995 = vpop.f32.mrb[0].mxu0
      %v1996 = vpop.f32.mrb[0].mxu0
      %v1997 = vadd.f32 0.0, %v1996
      %v1998 = vpop.f32.mrb[0].mxu0
      %1999 = vmatprep.mubr.bf16.mxu0 0
      %2000 = vmatmul.mubr.bf16.gmra.mrb[0].mxu0 %v1251
      %v2001 = vpop.f32.mrb[0].mxu0
      %v2002 = vadd.f32 0.0, %v2001
      %v2003 = vpop.f32.mrb[0].mxu0
      %v2004 = vpop.f32.mrb[0].mxu0
      %v2005 = vadd.f32 0.0, %v2004
      %v2006 = vpop.f32.mrb[0].mxu0
      %2007 = vmatprep.mubr.bf16.mxu0 0
      %2008 = vmatmul.mubr.bf16.gmra.mrb[0].mxu0 %v1254
      %v2009 = vpop.f32.mrb[0].mxu0
      %v2010 = vadd.f32 0.0, %v2009
      %v2011 = vpop.f32.mrb[0].mxu0
      %v2012 = vpop.f32.mrb[0].mxu0
      %v2013 = vadd.f32 0.0, %v2012
      %v2014 = vpop.f32.mrb[0].mxu0
      %2015 = vmatprep.mubr.bf16.mxu0 0
      %2016 = vmatmul.mubr.bf16.gmra.mrb[0].mxu0 %v1257
      %v2017 = vpop.f32.mrb[0].mxu0
      %v2018 = vadd.f32 0.0, %v2017
      %v2019 = vpop.f32.mrb[0].mxu0
      %v2020 = vpop.f32.mrb[0].mxu0
      %v2021 = vadd.f32 0.0, %v2020
      %v2022 = vpop.f32.mrb[0].mxu0
      %2023 = vmatprep.mubr.bf16.mxu0 0
      %2024 = vmatmul.mubr.bf16.gmra.mrb[0].mxu0 %v1260
      %v2025 = vpop.f32.mrb[0].mxu0
      %v2026 = vadd.f32 0.0, %v2025
      %v2027 = vpop.f32.mrb[0].mxu0
      %v2028 = vpop.f32.mrb[0].mxu0
      %v2029 = vadd.f32 0.0, %v2028
      %v2030 = vpop.f32.mrb[0].mxu0
      %2031 = vmatprep.mubr.bf16.mxu0 0
      %2032 = vmatmul.mubr.bf16.gmra.mrb[0].mxu0 %v1263
      %v2033 = vpop.f32.mrb[0].mxu0
      %v2034 = vadd.f32 0.0, %v2033
      %v2035 = vpop.f32.mrb[0].mxu0
      %v2036 = vpop.f32.mrb[0].mxu0
      %v2037 = vadd.f32 0.0, %v2036
      %v2038 = vpop.f32.mrb[0].mxu0
      %2039 = vmatprep.mubr.bf16.mxu0 0
      %2040 = vmatmul.mubr.bf16.gmra.mrb[0].mxu0 %v1882
      %v2041 = vpop.f32.mrb[0].mxu0
      %v2042 = vadd.f32 0.0, %v2041
      %v2043 = vpop.f32.mrb[0].mxu0
      %v2044 = vpop.f32.mrb[0].mxu0
      %v2045 = vadd.f32 0.0, %v2044
      %v2046 = vpop.f32.mrb[0].mxu0
      %2047 = vdwg.mxu0
      %v2048 = vadd.f32 %v1842, %v1922
      %v2049 = vadd.f32 %v1843, %v1925
      %v2050 = vadd.f32 %v1844, %v1930
      %v2051 = vadd.f32 %v1845, %v1933
      %v2052 = vadd.f32 %v1846, %v1938
      %v2053 = vadd.f32 %v1847, %v1941
      %v2054 = vadd.f32 %v1848, %v1946
      %v2055 = vadd.f32 %v1849, %v1949
      %v2056 = vadd.f32 %v1850, %v1954
      %v2057 = vadd.f32 %v1851, %v1957
      %v2058 = vadd.f32 %v1852, %v1962
      %v2059 = vadd.f32 %v1853, %v1965
      %v2060 = vadd.f32 %v1854, %v1970
      %v2061 = vadd.f32 %v1855, %v1973
      %v2062 = vadd.f32 %v1856, %v1978
      %v2063 = vadd.f32 %v1857, %v1981
      %v2064 = vadd.f32 %v1858, %v1986
      %v2065 = vadd.f32 %v1859, %v1989
      %v2066 = vadd.f32 %v1860, %v1994
      %v2067 = vadd.f32 %v1861, %v1997
      %v2068 = vadd.f32 %v1862, %v2002
      %v2069 = vadd.f32 %v1863, %v2005
      %v2070 = vadd.f32 %v1864, %v2010
      %v2071 = vadd.f32 %v1865, %v2013
      %v2072 = vadd.f32 %v1866, %v2018
      %v2073 = vadd.f32 %v1867, %v2021
      %v2074 = vadd.f32 %v1868, %v2026
      %v2075 = vadd.f32 %v1869, %v2029
      %v2076 = vadd.f32 %v1870, %v2034
      %v2077 = vadd.f32 %v1871, %v2037
      %v2078 = vadd.f32 %v1872, %v2042
      %v2079 = vadd.f32 %v1873, %v2045
      %s2080 = scalar_lea.vmem %s1, 24
      %v2081 = vld [vmem:[%s2080] sm:$0xf]
      %v2083 = vsel %vm773, %v2081, 0
      %2085 = vmatprep.subr.bf16.mxu0 0
      %2086 = vmatpush1.bf16.msra.mxu0 %v2083
      %2087 = vmatprep.subr.bf16.mxu0 0
      %2088 = vmatpush1.bf16.msra.mxu0 0
      %2089 = vmatprep.subr.bf16.mxu0 0
      %2090 = vmatpush1.bf16.msra.mxu0 0
      %2091 = vmatprep.subr.bf16.mxu0 0
      %2092 = vmatpush1.bf16.msra.mxu0 0
      %2093 = vmatprep.subr.bf16.mxu0 0
      %2094 = vmatpush1.bf16.msra.mxu0 0
      %2095 = vmatprep.subr.bf16.mxu0 0
      %2096 = vmatpush1.bf16.msra.mxu0 0
      %2097 = vmatprep.subr.bf16.mxu0 0
      %2098 = vmatpush1.bf16.msra.mxu0 0
      %2099 = vmatprep.subr.bf16.mxu0 0
      %2100 = vmatpush1.bf16.msra.mxu0 0
      %2101 = vmatprep.subr.bf16.mxu0 0
      %2102 = vmatpush1.bf16.msra.mxu0 0
      %2103 = vmatprep.subr.bf16.mxu0 0
      %2104 = vmatpush1.bf16.msra.mxu0 0
      %2105 = vmatprep.subr.bf16.mxu0 0
      %2106 = vmatpush1.bf16.msra.mxu0 0
      %2107 = vmatprep.subr.bf16.mxu0 0
      %2108 = vmatpush1.bf16.msra.mxu0 0
      %2109 = vmatprep.subr.bf16.mxu0 0
      %2110 = vmatpush1.bf16.msra.mxu0 0
      %2111 = vmatprep.subr.bf16.mxu0 0
      %2112 = vmatpush1.bf16.msra.mxu0 0
      %2113 = vmatprep.subr.bf16.mxu0 0
      %2114 = vmatpush1.bf16.msra.mxu0 0
      %2115 = vmatprep.subr.bf16.mxu0 0
      %2116 = vmatpush1.bf16.msra.mxu0 0
      %2117 = vmatprep.mubr.bf16.mxu0 0
      %2118 = vmatmul.mubr.bf16.gmra.mrb[0].mxu0 %v942
      %v2119 = vpop.f32.mrb[0].mxu0
      %v2120 = vadd.f32 0.0, %v2119
      %v2121 = vpop.f32.mrb[0].mxu0
      %v2122 = vpop.f32.mrb[0].mxu0
      %v2123 = vadd.f32 0.0, %v2122
      %v2124 = vpop.f32.mrb[0].mxu0
      %2125 = vmatprep.mubr.bf16.mxu0 0
      %2126 = vmatmul.mubr.bf16.gmra.mrb[0].mxu0 %v944
      %v2127 = vpop.f32.mrb[0].mxu0
      %v2128 = vadd.f32 0.0, %v2127
      %v2129 = vpop.f32.mrb[0].mxu0
      %v2130 = vpop.f32.mrb[0].mxu0
      %v2131 = vadd.f32 0.0, %v2130
      %v2132 = vpop.f32.mrb[0].mxu0
      %2133 = vmatprep.mubr.bf16.mxu0 0
      %2134 = vmatmul.mubr.bf16.gmra.mrb[0].mxu0 %v946
      %v2135 = vpop.f32.mrb[0].mxu0
      %v2136 = vadd.f32 0.0, %v2135
      %v2137 = vpop.f32.mrb[0].mxu0
      %v2138 = vpop.f32.mrb[0].mxu0
      %v2139 = vadd.f32 0.0, %v2138
      %v2140 = vpop.f32.mrb[0].mxu0
      %2141 = vmatprep.mubr.bf16.mxu0 0
      %2142 = vmatmul.mubr.bf16.gmra.mrb[0].mxu0 %v948
      %v2143 = vpop.f32.mrb[0].mxu0
      %v2144 = vadd.f32 0.0, %v2143
      %v2145 = vpop.f32.mrb[0].mxu0
      %v2146 = vpop.f32.mrb[0].mxu0
      %v2147 = vadd.f32 0.0, %v2146
      %v2148 = vpop.f32.mrb[0].mxu0
      %2149 = vmatprep.mubr.bf16.mxu0 0
      %2150 = vmatmul.mubr.bf16.gmra.mrb[0].mxu0 %v950
      %v2151 = vpop.f32.mrb[0].mxu0
      %v2152 = vadd.f32 0.0, %v2151
      %v2153 = vpop.f32.mrb[0].mxu0
      %v2154 = vpop.f32.mrb[0].mxu0
      %v2155 = vadd.f32 0.0, %v2154
      %v2156 = vpop.f32.mrb[0].mxu0
      %2157 = vmatprep.mubr.bf16.mxu0 0
      %2158 = vmatmul.mubr.bf16.gmra.mrb[0].mxu0 %v952
      %v2159 = vpop.f32.mrb[0].mxu0
      %v2160 = vadd.f32 0.0, %v2159
      %v2161 = vpop.f32.mrb[0].mxu0
      %v2162 = vpop.f32.mrb[0].mxu0
      %v2163 = vadd.f32 0.0, %v2162
      %v2164 = vpop.f32.mrb[0].mxu0
      %2165 = vmatprep.mubr.bf16.mxu0 0
      %2166 = vmatmul.mubr.bf16.gmra.mrb[0].mxu0 %v954
      %v2167 = vpop.f32.mrb[0].mxu0
      %v2168 = vadd.f32 0.0, %v2167
      %v2169 = vpop.f32.mrb[0].mxu0
      %v2170 = vpop.f32.mrb[0].mxu0
      %v2171 = vadd.f32 0.0, %v2170
      %v2172 = vpop.f32.mrb[0].mxu0
      %2173 = vmatprep.mubr.bf16.mxu0 0
      %2174 = vmatmul.mubr.bf16.gmra.mrb[0].mxu0 %v956
      %v2175 = vpop.f32.mrb[0].mxu0
      %v2176 = vadd.f32 0.0, %v2175
      %v2177 = vpop.f32.mrb[0].mxu0
      %v2178 = vpop.f32.mrb[0].mxu0
      %v2179 = vadd.f32 0.0, %v2178
      %v2180 = vpop.f32.mrb[0].mxu0
      %2181 = vmatprep.mubr.bf16.mxu0 0
      %2182 = vmatmul.mubr.bf16.gmra.mrb[0].mxu0 %v958
      %v2183 = vpop.f32.mrb[0].mxu0
      %v2184 = vadd.f32 0.0, %v2183
      %v2185 = vpop.f32.mrb[0].mxu0
      %v2186 = vpop.f32.mrb[0].mxu0
      %v2187 = vadd.f32 0.0, %v2186
      %v2188 = vpop.f32.mrb[0].mxu0
      %2189 = vmatprep.mubr.bf16.mxu0 0
      %2190 = vmatmul.mubr.bf16.gmra.mrb[0].mxu0 %v960
      %v2191 = vpop.f32.mrb[0].mxu0
      %v2192 = vadd.f32 0.0, %v2191
      %v2193 = vpop.f32.mrb[0].mxu0
      %v2194 = vpop.f32.mrb[0].mxu0
      %v2195 = vadd.f32 0.0, %v2194
      %v2196 = vpop.f32.mrb[0].mxu0
      %2197 = vmatprep.mubr.bf16.mxu0 0
      %2198 = vmatmul.mubr.bf16.gmra.mrb[0].mxu0 %v962
      %v2199 = vpop.f32.mrb[0].mxu0
      %v2200 = vadd.f32 0.0, %v2199
      %v2201 = vpop.f32.mrb[0].mxu0
      %v2202 = vpop.f32.mrb[0].mxu0
      %v2203 = vadd.f32 0.0, %v2202
      %v2204 = vpop.f32.mrb[0].mxu0
      %2205 = vmatprep.mubr.bf16.mxu0 0
      %2206 = vmatmul.mubr.bf16.gmra.mrb[0].mxu0 %v964
      %v2207 = vpop.f32.mrb[0].mxu0
      %v2208 = vadd.f32 0.0, %v2207
      %v2209 = vpop.f32.mrb[0].mxu0
      %v2210 = vpop.f32.mrb[0].mxu0
      %v2211 = vadd.f32 0.0, %v2210
      %v2212 = vpop.f32.mrb[0].mxu0
      %2213 = vmatprep.mubr.bf16.mxu0 0
      %2214 = vmatmul.mubr.bf16.gmra.mrb[0].mxu0 %v966
      %v2215 = vpop.f32.mrb[0].mxu0
      %v2216 = vadd.f32 0.0, %v2215
      %v2217 = vpop.f32.mrb[0].mxu0
      %v2218 = vpop.f32.mrb[0].mxu0
      %v2219 = vadd.f32 0.0, %v2218
      %v2220 = vpop.f32.mrb[0].mxu0
      %2221 = vmatprep.mubr.bf16.mxu0 0
      %2222 = vmatmul.mubr.bf16.gmra.mrb[0].mxu0 %v968
      %v2223 = vpop.f32.mrb[0].mxu0
      %v2224 = vadd.f32 0.0, %v2223
      %v2225 = vpop.f32.mrb[0].mxu0
      %v2226 = vpop.f32.mrb[0].mxu0
      %v2227 = vadd.f32 0.0, %v2226
      %v2228 = vpop.f32.mrb[0].mxu0
      %2229 = vmatprep.mubr.bf16.mxu0 0
      %2230 = vmatmul.mubr.bf16.gmra.mrb[0].mxu0 %v1464
      %v2231 = vpop.f32.mrb[0].mxu0
      %v2232 = vadd.f32 0.0, %v2231
      %v2233 = vpop.f32.mrb[0].mxu0
      %v2234 = vpop.f32.mrb[0].mxu0
      %v2235 = vadd.f32 0.0, %v2234
      %v2236 = vpop.f32.mrb[0].mxu0
      %2237 = vmatprep.mubr.bf16.mxu0 0
      %2238 = vmatmul.mubr.bf16.gmra.mrb[0].mxu0 %v938
      %v2239 = vpop.f32.mrb[0].mxu0
      %v2240 = vadd.f32 0.0, %v2239
      %v2241 = vpop.f32.mrb[0].mxu0
      %v2242 = vpop.f32.mrb[0].mxu0
      %v2243 = vadd.f32 0.0, %v2242
      %v2244 = vpop.f32.mrb[0].mxu0
      %2245 = vdwg.mxu0
      %v2246 = vadd.f32 %v2048, %v2120
      %v2247 = vadd.f32 %v2049, %v2123
      %v2248 = vadd.f32 %v2050, %v2128
      %v2249 = vadd.f32 %v2051, %v2131
      %v2250 = vadd.f32 %v2052, %v2136
      %v2251 = vadd.f32 %v2053, %v2139
      %v2252 = vadd.f32 %v2054, %v2144
      %v2253 = vadd.f32 %v2055, %v2147
      %v2254 = vadd.f32 %v2056, %v2152
      %v2255 = vadd.f32 %v2057, %v2155
      %v2256 = vadd.f32 %v2058, %v2160
      %v2257 = vadd.f32 %v2059, %v2163
      %v2258 = vadd.f32 %v2060, %v2168
      %v2259 = vadd.f32 %v2061, %v2171
      %v2260 = vadd.f32 %v2062, %v2176
      %v2261 = vadd.f32 %v2063, %v2179
      %v2262 = vadd.f32 %v2064, %v2184
      %v2263 = vadd.f32 %v2065, %v2187
      %v2264 = vadd.f32 %v2066, %v2192
      %v2265 = vadd.f32 %v2067, %v2195
      %v2266 = vadd.f32 %v2068, %v2200
      %v2267 = vadd.f32 %v2069, %v2203
      %v2268 = vadd.f32 %v2070, %v2208
      %v2269 = vadd.f32 %v2071, %v2211
      %v2270 = vadd.f32 %v2072, %v2216
      %v2271 = vadd.f32 %v2073, %v2219
      %v2272 = vadd.f32 %v2074, %v2224
      %v2273 = vadd.f32 %v2075, %v2227
      %v2274 = vadd.f32 %v2076, %v2232
      %v2275 = vadd.f32 %v2077, %v2235
      %v2276 = vadd.f32 %v2078, %v2240
      %v2277 = vadd.f32 %v2079, %v2243
      %s2278 = scalar_lea.vmem %s1, 28
      %v2279 = vld [vmem:[%s2278] sm:$0xf]
      %v2281 = vsel %vm773, %v2279, 0
      %2283 = vmatprep.subr.bf16.mxu0 0
      %2284 = vmatpush1.bf16.msra.mxu0 %v2281
      %2285 = vmatprep.subr.bf16.mxu0 0
      %2286 = vmatpush1.bf16.msra.mxu0 0
      %2287 = vmatprep.subr.bf16.mxu0 0
      %2288 = vmatpush1.bf16.msra.mxu0 0
      %2289 = vmatprep.subr.bf16.mxu0 0
      %2290 = vmatpush1.bf16.msra.mxu0 0
      %2291 = vmatprep.subr.bf16.mxu0 0
      %2292 = vmatpush1.bf16.msra.mxu0 0
      %2293 = vmatprep.subr.bf16.mxu0 0
      %2294 = vmatpush1.bf16.msra.mxu0 0
      %2295 = vmatprep.subr.bf16.mxu0 0
      %2296 = vmatpush1.bf16.msra.mxu0 0
      %2297 = vmatprep.subr.bf16.mxu0 0
      %2298 = vmatpush1.bf16.msra.mxu0 0
      %2299 = vmatprep.subr.bf16.mxu0 0
      %2300 = vmatpush1.bf16.msra.mxu0 0
      %2301 = vmatprep.subr.bf16.mxu0 0
      %2302 = vmatpush1.bf16.msra.mxu0 0
      %2303 = vmatprep.subr.bf16.mxu0 0
      %2304 = vmatpush1.bf16.msra.mxu0 0
      %2305 = vmatprep.subr.bf16.mxu0 0
      %2306 = vmatpush1.bf16.msra.mxu0 0
      %2307 = vmatprep.subr.bf16.mxu0 0
      %2308 = vmatpush1.bf16.msra.mxu0 0
      %2309 = vmatprep.subr.bf16.mxu0 0
      %2310 = vmatpush1.bf16.msra.mxu0 0
      %2311 = vmatprep.subr.bf16.mxu0 0
      %2312 = vmatpush1.bf16.msra.mxu0 0
      %2313 = vmatprep.subr.bf16.mxu0 0
      %2314 = vmatpush1.bf16.msra.mxu0 0
      %2315 = vmatprep.mubr.bf16.mxu0 0
      %2316 = vmatmul.mubr.bf16.gmra.mrb[0].mxu0 %v732
      %v2317 = vpop.f32.mrb[0].mxu0
      %v2318 = vadd.f32 0.0, %v2317
      %v2319 = vpop.f32.mrb[0].mxu0
      %v2320 = vpop.f32.mrb[0].mxu0
      %v2321 = vadd.f32 0.0, %v2320
      %v2322 = vpop.f32.mrb[0].mxu0
      %2323 = vmatprep.mubr.bf16.mxu0 0
      %2324 = vmatmul.mubr.bf16.gmra.mrb[0].mxu0 %v735
      %v2325 = vpop.f32.mrb[0].mxu0
      %v2326 = vadd.f32 0.0, %v2325
      %v2327 = vpop.f32.mrb[0].mxu0
      %v2328 = vpop.f32.mrb[0].mxu0
      %v2329 = vadd.f32 0.0, %v2328
      %v2330 = vpop.f32.mrb[0].mxu0
      %2331 = vmatprep.mubr.bf16.mxu0 0
      %2332 = vmatmul.mubr.bf16.gmra.mrb[0].mxu0 %v738
      %v2333 = vpop.f32.mrb[0].mxu0
      %v2334 = vadd.f32 0.0, %v2333
      %v2335 = vpop.f32.mrb[0].mxu0
      %v2336 = vpop.f32.mrb[0].mxu0
      %v2337 = vadd.f32 0.0, %v2336
      %v2338 = vpop.f32.mrb[0].mxu0
      %2339 = vmatprep.mubr.bf16.mxu0 0
      %2340 = vmatmul.mubr.bf16.gmra.mrb[0].mxu0 %v741
      %v2341 = vpop.f32.mrb[0].mxu0
      %v2342 = vadd.f32 0.0, %v2341
      %v2343 = vpop.f32.mrb[0].mxu0
      %v2344 = vpop.f32.mrb[0].mxu0
      %v2345 = vadd.f32 0.0, %v2344
      %v2346 = vpop.f32.mrb[0].mxu0
      %2347 = vmatprep.mubr.bf16.mxu0 0
      %2348 = vmatmul.mubr.bf16.gmra.mrb[0].mxu0 %v744
      %v2349 = vpop.f32.mrb[0].mxu0
      %v2350 = vadd.f32 0.0, %v2349
      %v2351 = vpop.f32.mrb[0].mxu0
      %v2352 = vpop.f32.mrb[0].mxu0
      %v2353 = vadd.f32 0.0, %v2352
      %v2354 = vpop.f32.mrb[0].mxu0
      %2355 = vmatprep.mubr.bf16.mxu0 0
      %2356 = vmatmul.mubr.bf16.gmra.mrb[0].mxu0 %v747
      %v2357 = vpop.f32.mrb[0].mxu0
      %v2358 = vadd.f32 0.0, %v2357
      %v2359 = vpop.f32.mrb[0].mxu0
      %v2360 = vpop.f32.mrb[0].mxu0
      %v2361 = vadd.f32 0.0, %v2360
      %v2362 = vpop.f32.mrb[0].mxu0
      %2363 = vmatprep.mubr.bf16.mxu0 0
      %2364 = vmatmul.mubr.bf16.gmra.mrb[0].mxu0 %v750
      %v2365 = vpop.f32.mrb[0].mxu0
      %v2366 = vadd.f32 0.0, %v2365
      %v2367 = vpop.f32.mrb[0].mxu0
      %v2368 = vpop.f32.mrb[0].mxu0
      %v2369 = vadd.f32 0.0, %v2368
      %v2370 = vpop.f32.mrb[0].mxu0
      %2371 = vmatprep.mubr.bf16.mxu0 0
      %2372 = vmatmul.mubr.bf16.gmra.mrb[0].mxu0 %v753
      %v2373 = vpop.f32.mrb[0].mxu0
      %v2374 = vadd.f32 0.0, %v2373
      %v2375 = vpop.f32.mrb[0].mxu0
      %v2376 = vpop.f32.mrb[0].mxu0
      %v2377 = vadd.f32 0.0, %v2376
      %v2378 = vpop.f32.mrb[0].mxu0
      %2379 = vmatprep.mubr.bf16.mxu0 0
      %2380 = vmatmul.mubr.bf16.gmra.mrb[0].mxu0 %v756
      %v2381 = vpop.f32.mrb[0].mxu0
      %v2382 = vadd.f32 0.0, %v2381
      %v2383 = vpop.f32.mrb[0].mxu0
      %v2384 = vpop.f32.mrb[0].mxu0
      %v2385 = vadd.f32 0.0, %v2384
      %v2386 = vpop.f32.mrb[0].mxu0
      %2387 = vmatprep.mubr.bf16.mxu0 0
      %2388 = vmatmul.mubr.bf16.gmra.mrb[0].mxu0 %v759
      %v2389 = vpop.f32.mrb[0].mxu0
      %v2390 = vadd.f32 0.0, %v2389
      %v2391 = vpop.f32.mrb[0].mxu0
      %v2392 = vpop.f32.mrb[0].mxu0
      %v2393 = vadd.f32 0.0, %v2392
      %v2394 = vpop.f32.mrb[0].mxu0
      %2395 = vmatprep.mubr.bf16.mxu0 0
      %2396 = vmatmul.mubr.bf16.gmra.mrb[0].mxu0 %v762
      %v2397 = vpop.f32.mrb[0].mxu0
      %v2398 = vadd.f32 0.0, %v2397
      %v2399 = vpop.f32.mrb[0].mxu0
      %v2400 = vpop.f32.mrb[0].mxu0
      %v2401 = vadd.f32 0.0, %v2400
      %v2402 = vpop.f32.mrb[0].mxu0
      %2403 = vmatprep.mubr.bf16.mxu0 0
      %2404 = vmatmul.mubr.bf16.gmra.mrb[0].mxu0 %v765
      %v2405 = vpop.f32.mrb[0].mxu0
      %v2406 = vadd.f32 0.0, %v2405
      %v2407 = vpop.f32.mrb[0].mxu0
      %v2408 = vpop.f32.mrb[0].mxu0
      %v2409 = vadd.f32 0.0, %v2408
      %v2410 = vpop.f32.mrb[0].mxu0
      %2411 = vmatprep.mubr.bf16.mxu0 0
      %2412 = vmatmul.mubr.bf16.gmra.mrb[0].mxu0 %v768
      %v2413 = vpop.f32.mrb[0].mxu0
      %v2414 = vadd.f32 0.0, %v2413
      %v2415 = vpop.f32.mrb[0].mxu0
      %v2416 = vpop.f32.mrb[0].mxu0
      %v2417 = vadd.f32 0.0, %v2416
      %v2418 = vpop.f32.mrb[0].mxu0
      %2419 = vmatprep.mubr.bf16.mxu0 0
      %2420 = vmatmul.mubr.bf16.gmra.mrb[0].mxu0 %v771
      %v2421 = vpop.f32.mrb[0].mxu0
      %v2422 = vadd.f32 0.0, %v2421
      %v2423 = vpop.f32.mrb[0].mxu0
      %v2424 = vpop.f32.mrb[0].mxu0
      %v2425 = vadd.f32 0.0, %v2424
      %v2426 = vpop.f32.mrb[0].mxu0
      %2427 = vmatprep.mubr.bf16.mxu0 0
      %2428 = vmatmul.mubr.bf16.gmra.mrb[0].mxu0 %v1676
      %v2429 = vpop.f32.mrb[0].mxu0
      %v2430 = vadd.f32 0.0, %v2429
      %v2431 = vpop.f32.mrb[0].mxu0
      %v2432 = vpop.f32.mrb[0].mxu0
      %v2433 = vadd.f32 0.0, %v2432
      %v2434 = vpop.f32.mrb[0].mxu0
      %2435 = vmatprep.mubr.bf16.mxu0 0
      %2436 = vmatmul.mubr.bf16.gmra.mrb[0].mxu0 %v726
      %v2437 = vpop.f32.mrb[0].mxu0
      %v2438 = vadd.f32 0.0, %v2437
      %v2439 = vpop.f32.mrb[0].mxu0
      %v2440 = vpop.f32.mrb[0].mxu0
      %v2441 = vadd.f32 0.0, %v2440
      %v2442 = vpop.f32.mrb[0].mxu0
      %2443 = vdwg.mxu0
      %v2444 = vadd.f32 %v2246, %v2318
      %v2445 = vadd.f32 %v2247, %v2321
      %v2446 = vadd.f32 %v2248, %v2326
      %v2447 = vadd.f32 %v2249, %v2329
      %v2448 = vadd.f32 %v2250, %v2334
      %v2449 = vadd.f32 %v2251, %v2337
      %v2450 = vadd.f32 %v2252, %v2342
      %v2451 = vadd.f32 %v2253, %v2345
      %v2452 = vadd.f32 %v2254, %v2350
      %v2453 = vadd.f32 %v2255, %v2353
      %v2454 = vadd.f32 %v2256, %v2358
      %v2455 = vadd.f32 %v2257, %v2361
      %v2456 = vadd.f32 %v2258, %v2366
      %v2457 = vadd.f32 %v2259, %v2369
      %v2458 = vadd.f32 %v2260, %v2374
      %v2459 = vadd.f32 %v2261, %v2377
      %v2460 = vadd.f32 %v2262, %v2382
      %v2461 = vadd.f32 %v2263, %v2385
      %v2462 = vadd.f32 %v2264, %v2390
      %v2463 = vadd.f32 %v2265, %v2393
      %v2464 = vadd.f32 %v2266, %v2398
      %v2465 = vadd.f32 %v2267, %v2401
      %v2466 = vadd.f32 %v2268, %v2406
      %v2467 = vadd.f32 %v2269, %v2409
      %v2468 = vadd.f32 %v2270, %v2414
      %v2469 = vadd.f32 %v2271, %v2417
      %v2470 = vadd.f32 %v2272, %v2422
      %v2471 = vadd.f32 %v2273, %v2425
      %v2472 = vadd.f32 %v2274, %v2430
      %v2473 = vadd.f32 %v2275, %v2433
      %v2474 = vadd.f32 %v2276, %v2438
      %v2475 = vadd.f32 %v2277, %v2441
      %s2476 = scalar_lea.vmem %s1, 32
      %v2477 = vld [vmem:[%s2476] sm:$0xf]
      %v2479 = vsel %vm773, %v2477, 0
      %2481 = vmatprep.subr.bf16.mxu0 0
      %2482 = vmatpush1.bf16.msra.mxu0 %v2479
      %2483 = vmatprep.subr.bf16.mxu0 0
      %2484 = vmatpush1.bf16.msra.mxu0 0
      %2485 = vmatprep.subr.bf16.mxu0 0
      %2486 = vmatpush1.bf16.msra.mxu0 0
      %2487 = vmatprep.subr.bf16.mxu0 0
      %2488 = vmatpush1.bf16.msra.mxu0 0
      %2489 = vmatprep.subr.bf16.mxu0 0
      %2490 = vmatpush1.bf16.msra.mxu0 0
      %2491 = vmatprep.subr.bf16.mxu0 0
      %2492 = vmatpush1.bf16.msra.mxu0 0
      %2493 = vmatprep.subr.bf16.mxu0 0
      %2494 = vmatpush1.bf16.msra.mxu0 0
      %2495 = vmatprep.subr.bf16.mxu0 0
      %2496 = vmatpush1.bf16.msra.mxu0 0
      %2497 = vmatprep.subr.bf16.mxu0 0
      %2498 = vmatpush1.bf16.msra.mxu0 0
      %2499 = vmatprep.subr.bf16.mxu0 0
      %2500 = vmatpush1.bf16.msra.mxu0 0
      %2501 = vmatprep.subr.bf16.mxu0 0
      %2502 = vmatpush1.bf16.msra.mxu0 0
      %2503 = vmatprep.subr.bf16.mxu0 0
      %2504 = vmatpush1.bf16.msra.mxu0 0
      %2505 = vmatprep.subr.bf16.mxu0 0
      %2506 = vmatpush1.bf16.msra.mxu0 0
      %2507 = vmatprep.subr.bf16.mxu0 0
      %2508 = vmatpush1.bf16.msra.mxu0 0
      %2509 = vmatprep.subr.bf16.mxu0 0
      %2510 = vmatpush1.bf16.msra.mxu0 0
      %2511 = vmatprep.subr.bf16.mxu0 0
      %2512 = vmatpush1.bf16.msra.mxu0 0
      %2513 = vmatprep.mubr.bf16.mxu0 0
      %2514 = vmatmul.mubr.bf16.gmra.mrb[0].mxu0 %v1224
      %v2515 = vpop.f32.mrb[0].mxu0
      %v2516 = vadd.f32 0.0, %v2515
      %v2517 = vpop.f32.mrb[0].mxu0
      %v2518 = vpop.f32.mrb[0].mxu0
      %v2519 = vadd.f32 0.0, %v2518
      %v2520 = vpop.f32.mrb[0].mxu0
      %2521 = vmatprep.mubr.bf16.mxu0 0
      %2522 = vmatmul.mubr.bf16.gmra.mrb[0].mxu0 %v1227
      %v2523 = vpop.f32.mrb[0].mxu0
      %v2524 = vadd.f32 0.0, %v2523
      %v2525 = vpop.f32.mrb[0].mxu0
      %v2526 = vpop.f32.mrb[0].mxu0
      %v2527 = vadd.f32 0.0, %v2526
      %v2528 = vpop.f32.mrb[0].mxu0
      %2529 = vmatprep.mubr.bf16.mxu0 0
      %2530 = vmatmul.mubr.bf16.gmra.mrb[0].mxu0 %v1230
      %v2531 = vpop.f32.mrb[0].mxu0
      %v2532 = vadd.f32 0.0, %v2531
      %v2533 = vpop.f32.mrb[0].mxu0
      %v2534 = vpop.f32.mrb[0].mxu0
      %v2535 = vadd.f32 0.0, %v2534
      %v2536 = vpop.f32.mrb[0].mxu0
      %2537 = vmatprep.mubr.bf16.mxu0 0
      %2538 = vmatmul.mubr.bf16.gmra.mrb[0].mxu0 %v1233
      %v2539 = vpop.f32.mrb[0].mxu0
      %v2540 = vadd.f32 0.0, %v2539
      %v2541 = vpop.f32.mrb[0].mxu0
      %v2542 = vpop.f32.mrb[0].mxu0
      %v2543 = vadd.f32 0.0, %v2542
      %v2544 = vpop.f32.mrb[0].mxu0
      %2545 = vmatprep.mubr.bf16.mxu0 0
      %2546 = vmatmul.mubr.bf16.gmra.mrb[0].mxu0 %v1236
      %v2547 = vpop.f32.mrb[0].mxu0
      %v2548 = vadd.f32 0.0, %v2547
      %v2549 = vpop.f32.mrb[0].mxu0
      %v2550 = vpop.f32.mrb[0].mxu0
      %v2551 = vadd.f32 0.0, %v2550
      %v2552 = vpop.f32.mrb[0].mxu0
      %2553 = vmatprep.mubr.bf16.mxu0 0
      %2554 = vmatmul.mubr.bf16.gmra.mrb[0].mxu0 %v1239
      %v2555 = vpop.f32.mrb[0].mxu0
      %v2556 = vadd.f32 0.0, %v2555
      %v2557 = vpop.f32.mrb[0].mxu0
      %v2558 = vpop.f32.mrb[0].mxu0
      %v2559 = vadd.f32 0.0, %v2558
      %v2560 = vpop.f32.mrb[0].mxu0
      %2561 = vmatprep.mubr.bf16.mxu0 0
      %2562 = vmatmul.mubr.bf16.gmra.mrb[0].mxu0 %v1242
      %v2563 = vpop.f32.mrb[0].mxu0
      %v2564 = vadd.f32 0.0, %v2563
      %v2565 = vpop.f32.mrb[0].mxu0
      %v2566 = vpop.f32.mrb[0].mxu0
      %v2567 = vadd.f32 0.0, %v2566
      %v2568 = vpop.f32.mrb[0].mxu0
      %2569 = vmatprep.mubr.bf16.mxu0 0
      %2570 = vmatmul.mubr.bf16.gmra.mrb[0].mxu0 %v1245
      %v2571 = vpop.f32.mrb[0].mxu0
      %v2572 = vadd.f32 0.0, %v2571
      %v2573 = vpop.f32.mrb[0].mxu0
      %v2574 = vpop.f32.mrb[0].mxu0
      %v2575 = vadd.f32 0.0, %v2574
      %v2576 = vpop.f32.mrb[0].mxu0
      %2577 = vmatprep.mubr.bf16.mxu0 0
      %2578 = vmatmul.mubr.bf16.gmra.mrb[0].mxu0 %v1248
      %v2579 = vpop.f32.mrb[0].mxu0
      %v2580 = vadd.f32 0.0, %v2579
      %v2581 = vpop.f32.mrb[0].mxu0
      %v2582 = vpop.f32.mrb[0].mxu0
      %v2583 = vadd.f32 0.0, %v2582
      %v2584 = vpop.f32.mrb[0].mxu0
      %2585 = vmatprep.mubr.bf16.mxu0 0
      %2586 = vmatmul.mubr.bf16.gmra.mrb[0].mxu0 %v1251
      %v2587 = vpop.f32.mrb[0].mxu0
      %v2588 = vadd.f32 0.0, %v2587
      %v2589 = vpop.f32.mrb[0].mxu0
      %v2590 = vpop.f32.mrb[0].mxu0
      %v2591 = vadd.f32 0.0, %v2590
      %v2592 = vpop.f32.mrb[0].mxu0
      %2593 = vmatprep.mubr.bf16.mxu0 0
      %2594 = vmatmul.mubr.bf16.gmra.mrb[0].mxu0 %v1254
      %v2595 = vpop.f32.mrb[0].mxu0
      %v2596 = vadd.f32 0.0, %v2595
      %v2597 = vpop.f32.mrb[0].mxu0
      %v2598 = vpop.f32.mrb[0].mxu0
      %v2599 = vadd.f32 0.0, %v2598
      %v2600 = vpop.f32.mrb[0].mxu0
      %2601 = vmatprep.mubr.bf16.mxu0 0
      %2602 = vmatmul.mubr.bf16.gmra.mrb[0].mxu0 %v1257
      %v2603 = vpop.f32.mrb[0].mxu0
      %v2604 = vadd.f32 0.0, %v2603
      %v2605 = vpop.f32.mrb[0].mxu0
      %v2606 = vpop.f32.mrb[0].mxu0
      %v2607 = vadd.f32 0.0, %v2606
      %v2608 = vpop.f32.mrb[0].mxu0
      %2609 = vmatprep.mubr.bf16.mxu0 0
      %2610 = vmatmul.mubr.bf16.gmra.mrb[0].mxu0 %v1260
      %v2611 = vpop.f32.mrb[0].mxu0
      %v2612 = vadd.f32 0.0, %v2611
      %v2613 = vpop.f32.mrb[0].mxu0
      %v2614 = vpop.f32.mrb[0].mxu0
      %v2615 = vadd.f32 0.0, %v2614
      %v2616 = vpop.f32.mrb[0].mxu0
      %2617 = vmatprep.mubr.bf16.mxu0 0
      %2618 = vmatmul.mubr.bf16.gmra.mrb[0].mxu0 %v1263
      %v2619 = vpop.f32.mrb[0].mxu0
      %v2620 = vadd.f32 0.0, %v2619
      %v2621 = vpop.f32.mrb[0].mxu0
      %v2622 = vpop.f32.mrb[0].mxu0
      %v2623 = vadd.f32 0.0, %v2622
      %v2624 = vpop.f32.mrb[0].mxu0
      %2625 = vmatprep.mubr.bf16.mxu0 0
      %2626 = vmatmul.mubr.bf16.gmra.mrb[0].mxu0 %v1882
      %v2627 = vpop.f32.mrb[0].mxu0
      %v2628 = vadd.f32 0.0, %v2627
      %v2629 = vpop.f32.mrb[0].mxu0
      %v2630 = vpop.f32.mrb[0].mxu0
      %v2631 = vadd.f32 0.0, %v2630
      %v2632 = vpop.f32.mrb[0].mxu0
      %2633 = vmatprep.mubr.bf16.mxu0 0
      %2634 = vmatmul.mubr.bf16.gmra.mrb[0].mxu0 %v1218
      %v2635 = vpop.f32.mrb[0].mxu0
      %v2636 = vadd.f32 0.0, %v2635
      %v2637 = vpop.f32.mrb[0].mxu0
      %v2638 = vpop.f32.mrb[0].mxu0
      %v2639 = vadd.f32 0.0, %v2638
      %v2640 = vpop.f32.mrb[0].mxu0
      %2641 = vdwg.mxu0
      %v2642 = vadd.f32 %v2444, %v2516
      %v2643 = vadd.f32 %v2445, %v2519
      %v2644 = vadd.f32 %v2446, %v2524
      %v2645 = vadd.f32 %v2447, %v2527
      %v2646 = vadd.f32 %v2448, %v2532
      %v2647 = vadd.f32 %v2449, %v2535
      %v2648 = vadd.f32 %v2450, %v2540
      %v2649 = vadd.f32 %v2451, %v2543
      %v2650 = vadd.f32 %v2452, %v2548
      %v2651 = vadd.f32 %v2453, %v2551
      %v2652 = vadd.f32 %v2454, %v2556
      %v2653 = vadd.f32 %v2455, %v2559
      %v2654 = vadd.f32 %v2456, %v2564
      %v2655 = vadd.f32 %v2457, %v2567
      %v2656 = vadd.f32 %v2458, %v2572
      %v2657 = vadd.f32 %v2459, %v2575
      %v2658 = vadd.f32 %v2460, %v2580
      %v2659 = vadd.f32 %v2461, %v2583
      %v2660 = vadd.f32 %v2462, %v2588
      %v2661 = vadd.f32 %v2463, %v2591
      %v2662 = vadd.f32 %v2464, %v2596
      %v2663 = vadd.f32 %v2465, %v2599
      %v2664 = vadd.f32 %v2466, %v2604
      %v2665 = vadd.f32 %v2467, %v2607
      %v2666 = vadd.f32 %v2468, %v2612
      %v2667 = vadd.f32 %v2469, %v2615
      %v2668 = vadd.f32 %v2470, %v2620
      %v2669 = vadd.f32 %v2471, %v2623
      %v2670 = vadd.f32 %v2472, %v2628
      %v2671 = vadd.f32 %v2473, %v2631
      %v2672 = vadd.f32 %v2474, %v2636
      %v2673 = vadd.f32 %v2475, %v2639
      %v2674 = vld [vmem:[%s2] sm:$0x1]
      %v2676 = vlaneseq
      %v2677 = vshrl.u32 %v2676, 7
      %v2678 = vsub.s32 0, %v2677
      %v2679 = vrot.slane %v2674, %v2678
      %v2681 = vadd.f32 %v2642, %v2679
      %v2682 = vadd.f32 %v2643, %v2679
      %v2683 = vadd.f32 %v2644, %v2679
      %v2684 = vadd.f32 %v2645, %v2679
      %v2685 = vadd.f32 %v2646, %v2679
      %v2686 = vadd.f32 %v2647, %v2679
      %v2687 = vadd.f32 %v2648, %v2679
      %v2688 = vadd.f32 %v2649, %v2679
      %v2689 = vadd.f32 %v2650, %v2679
      %v2690 = vadd.f32 %v2651, %v2679
      %v2691 = vadd.f32 %v2652, %v2679
      %v2692 = vadd.f32 %v2653, %v2679
      %v2693 = vadd.f32 %v2654, %v2679
      %v2694 = vadd.f32 %v2655, %v2679
      %v2695 = vadd.f32 %v2656, %v2679
      %v2696 = vadd.f32 %v2657, %v2679
      %v2697 = vadd.f32 %v2658, %v2679
      %v2698 = vadd.f32 %v2659, %v2679
      %v2699 = vadd.f32 %v2660, %v2679
      %v2700 = vadd.f32 %v2661, %v2679
      %v2701 = vadd.f32 %v2662, %v2679
      %v2702 = vadd.f32 %v2663, %v2679
      %v2703 = vadd.f32 %v2664, %v2679
      %v2704 = vadd.f32 %v2665, %v2679
      %v2705 = vadd.f32 %v2666, %v2679
      %v2706 = vadd.f32 %v2667, %v2679
      %v2707 = vadd.f32 %v2668, %v2679
      %v2708 = vadd.f32 %v2669, %v2679
      %v2709 = vadd.f32 %v2670, %v2679
      %v2710 = vadd.f32 %v2671, %v2679
      %v2711 = vadd.f32 %v2672, %v2679
      %v2712 = vadd.f32 %v2673, %v2679
      %v2713 = vxor.u32 %v2681, 2147483648
      %v2714 = vxor.u32 %v2682, 2147483648
      %v2715 = vxor.u32 %v2683, 2147483648
      %v2716 = vxor.u32 %v2684, 2147483648
      %v2717 = vxor.u32 %v2685, 2147483648
      %v2718 = vxor.u32 %v2686, 2147483648
      %v2719 = vxor.u32 %v2687, 2147483648
      %v2720 = vxor.u32 %v2688, 2147483648
      %v2721 = vxor.u32 %v2689, 2147483648
      %v2722 = vxor.u32 %v2690, 2147483648
      %v2723 = vxor.u32 %v2691, 2147483648
      %v2724 = vxor.u32 %v2692, 2147483648
      %v2725 = vxor.u32 %v2693, 2147483648
      %v2726 = vxor.u32 %v2694, 2147483648
      %v2727 = vxor.u32 %v2695, 2147483648
      %v2728 = vxor.u32 %v2696, 2147483648
      %v2729 = vxor.u32 %v2697, 2147483648
      %v2730 = vxor.u32 %v2698, 2147483648
      %v2731 = vxor.u32 %v2699, 2147483648
      %v2732 = vxor.u32 %v2700, 2147483648
      %v2733 = vxor.u32 %v2701, 2147483648
      %v2734 = vxor.u32 %v2702, 2147483648
      %v2735 = vxor.u32 %v2703, 2147483648
      %v2736 = vxor.u32 %v2704, 2147483648
      %v2737 = vxor.u32 %v2705, 2147483648
      %v2738 = vxor.u32 %v2706, 2147483648
      %v2739 = vxor.u32 %v2707, 2147483648
      %v2740 = vxor.u32 %v2708, 2147483648
      %v2741 = vxor.u32 %v2709, 2147483648
      %v2742 = vxor.u32 %v2710, 2147483648
      %v2743 = vxor.u32 %v2711, 2147483648
      %v2744 = vxor.u32 %v2712, 2147483648
      %v2745 = vmul.f32 %v2713, 1.442695
      %v2746 = vpow.pop %v2745
      %v2747 = vmul.f32 %v2714, 1.442695
      %v2748 = vpow.pop %v2747
      %v2749 = vmul.f32 %v2715, 1.442695
      %v2750 = vpow.pop %v2749
      %v2751 = vmul.f32 %v2716, 1.442695
      %v2752 = vpow.pop %v2751
      %v2753 = vmul.f32 %v2717, 1.442695
      %v2754 = vpow.pop %v2753
      %v2755 = vmul.f32 %v2718, 1.442695
      %v2756 = vpow.pop %v2755
      %v2757 = vmul.f32 %v2719, 1.442695
      %v2758 = vpow.pop %v2757
      %v2759 = vmul.f32 %v2720, 1.442695
      %v2760 = vpow.pop %v2759
      %v2761 = vmul.f32 %v2721, 1.442695
      %v2762 = vpow.pop %v2761
      %v2763 = vmul.f32 %v2722, 1.442695
      %v2764 = vpow.pop %v2763
      %v2765 = vmul.f32 %v2723, 1.442695
      %v2766 = vpow.pop %v2765
      %v2767 = vmul.f32 %v2724, 1.442695
      %v2768 = vpow.pop %v2767
      %v2769 = vmul.f32 %v2725, 1.442695
      %v2770 = vpow.pop %v2769
      %v2771 = vmul.f32 %v2726, 1.442695
      %v2772 = vpow.pop %v2771
      %v2773 = vmul.f32 %v2727, 1.442695
      %v2774 = vpow.pop %v2773
      %v2775 = vmul.f32 %v2728, 1.442695
      %v2776 = vpow.pop %v2775
      %v2777 = vmul.f32 %v2729, 1.442695
      %v2778 = vpow.pop %v2777
      %v2779 = vmul.f32 %v2730, 1.442695
      %v2780 = vpow.pop %v2779
      %v2781 = vmul.f32 %v2731, 1.442695
      %v2782 = vpow.pop %v2781
      %v2783 = vmul.f32 %v2732, 1.442695
      %v2784 = vpow.pop %v2783
      %v2785 = vmul.f32 %v2733, 1.442695
      %v2786 = vpow.pop %v2785
      %v2787 = vmul.f32 %v2734, 1.442695
      %v2788 = vpow.pop %v2787
      %v2789 = vmul.f32 %v2735, 1.442695
      %v2790 = vpow.pop %v2789
      %v2791 = vmul.f32 %v2736, 1.442695
      %v2792 = vpow.pop %v2791
      %v2793 = vmul.f32 %v2737, 1.442695
      %v2794 = vpow.pop %v2793
      %v2795 = vmul.f32 %v2738, 1.442695
      %v2796 = vpow.pop %v2795
      %v2797 = vmul.f32 %v2739, 1.442695
      %v2798 = vpow.pop %v2797
      %v2799 = vmul.f32 %v2740, 1.442695
      %v2800 = vpow.pop %v2799
      %v2801 = vmul.f32 %v2741, 1.442695
      %v2802 = vpow.pop %v2801
      %v2803 = vmul.f32 %v2742, 1.442695
      %v2804 = vpow.pop %v2803
      %v2805 = vmul.f32 %v2743, 1.442695
      %v2806 = vpow.pop %v2805
      %v2807 = vmul.f32 %v2744, 1.442695
      %v2808 = vpow.pop %v2807
      %v2809 = vadd.f32 %v2746, 1.0
      %v2810 = vadd.f32 %v2748, 1.0
      %v2811 = vadd.f32 %v2750, 1.0
      %v2812 = vadd.f32 %v2752, 1.0
      %v2813 = vadd.f32 %v2754, 1.0
      %v2814 = vadd.f32 %v2756, 1.0
      %v2815 = vadd.f32 %v2758, 1.0
      %v2816 = vadd.f32 %v2760, 1.0
      %v2817 = vadd.f32 %v2762, 1.0
      %v2818 = vadd.f32 %v2764, 1.0
      %v2819 = vadd.f32 %v2766, 1.0
      %v2820 = vadd.f32 %v2768, 1.0
      %v2821 = vadd.f32 %v2770, 1.0
      %v2822 = vadd.f32 %v2772, 1.0
      %v2823 = vadd.f32 %v2774, 1.0
      %v2824 = vadd.f32 %v2776, 1.0
      %v2825 = vadd.f32 %v2778, 1.0
      %v2826 = vadd.f32 %v2780, 1.0
      %v2827 = vadd.f32 %v2782, 1.0
      %v2828 = vadd.f32 %v2784, 1.0
      %v2829 = vadd.f32 %v2786, 1.0
      %v2830 = vadd.f32 %v2788, 1.0
      %v2831 = vadd.f32 %v2790, 1.0
      %v2832 = vadd.f32 %v2792, 1.0
      %v2833 = vadd.f32 %v2794, 1.0
      %v2834 = vadd.f32 %v2796, 1.0
      %v2835 = vadd.f32 %v2798, 1.0
      %v2836 = vadd.f32 %v2800, 1.0
      %v2837 = vadd.f32 %v2802, 1.0
      %v2838 = vadd.f32 %v2804, 1.0
      %v2839 = vadd.f32 %v2806, 1.0
      %v2840 = vadd.f32 %v2808, 1.0
      %v2841 = vrcp.pop %v2809
      %v2842 = vmul.f32 1.0, %v2841
      %v2843 = vrcp.pop %v2810
      %v2844 = vmul.f32 1.0, %v2843
      %v2845 = vrcp.pop %v2811
      %v2846 = vmul.f32 1.0, %v2845
      %v2847 = vrcp.pop %v2812
      %v2848 = vmul.f32 1.0, %v2847
      %v2849 = vrcp.pop %v2813
      %v2850 = vmul.f32 1.0, %v2849
      %v2851 = vrcp.pop %v2814
      %v2852 = vmul.f32 1.0, %v2851
      %v2853 = vrcp.pop %v2815
      %v2854 = vmul.f32 1.0, %v2853
      %v2855 = vrcp.pop %v2816
      %v2856 = vmul.f32 1.0, %v2855
      %v2857 = vrcp.pop %v2817
      %v2858 = vmul.f32 1.0, %v2857
      %v2859 = vrcp.pop %v2818
      %v2860 = vmul.f32 1.0, %v2859
      %v2861 = vrcp.pop %v2819
      %v2862 = vmul.f32 1.0, %v2861
      %v2863 = vrcp.pop %v2820
      %v2864 = vmul.f32 1.0, %v2863
      %v2865 = vrcp.pop %v2821
      %v2866 = vmul.f32 1.0, %v2865
      %v2867 = vrcp.pop %v2822
      %v2868 = vmul.f32 1.0, %v2867
      %v2869 = vrcp.pop %v2823
      %v2870 = vmul.f32 1.0, %v2869
      %v2871 = vrcp.pop %v2824
      %v2872 = vmul.f32 1.0, %v2871
      %v2873 = vrcp.pop %v2825
      %v2874 = vmul.f32 1.0, %v2873
      %v2875 = vrcp.pop %v2826
      %v2876 = vmul.f32 1.0, %v2875
      %v2877 = vrcp.pop %v2827
      %v2878 = vmul.f32 1.0, %v2877
      %v2879 = vrcp.pop %v2828
      %v2880 = vmul.f32 1.0, %v2879
      %v2881 = vrcp.pop %v2829
      %v2882 = vmul.f32 1.0, %v2881
      %v2883 = vrcp.pop %v2830
      %v2884 = vmul.f32 1.0, %v2883
      %v2885 = vrcp.pop %v2831
      %v2886 = vmul.f32 1.0, %v2885
      %v2887 = vrcp.pop %v2832
      %v2888 = vmul.f32 1.0, %v2887
      %v2889 = vrcp.pop %v2833
      %v2890 = vmul.f32 1.0, %v2889
      %v2891 = vrcp.pop %v2834
      %v2892 = vmul.f32 1.0, %v2891
      %v2893 = vrcp.pop %v2835
      %v2894 = vmul.f32 1.0, %v2893
      %v2895 = vrcp.pop %v2836
      %v2896 = vmul.f32 1.0, %v2895
      %v2897 = vrcp.pop %v2837
      %v2898 = vmul.f32 1.0, %v2897
      %v2899 = vrcp.pop %v2838
      %v2900 = vmul.f32 1.0, %v2899
      %v2901 = vrcp.pop %v2839
      %v2902 = vmul.f32 1.0, %v2901
      %v2903 = vrcp.pop %v2840
      %v2904 = vmul.f32 1.0, %v2903
      %v2905 = vmul.f32 %v2681, %v2842
      %v2906 = vmul.f32 %v2682, %v2844
      %v2907 = vmul.f32 %v2683, %v2846
      %v2908 = vmul.f32 %v2684, %v2848
      %v2909 = vmul.f32 %v2685, %v2850
      %v2910 = vmul.f32 %v2686, %v2852
      %v2911 = vmul.f32 %v2687, %v2854
      %v2912 = vmul.f32 %v2688, %v2856
      %v2913 = vmul.f32 %v2689, %v2858
      %v2914 = vmul.f32 %v2690, %v2860
      %v2915 = vmul.f32 %v2691, %v2862
      %v2916 = vmul.f32 %v2692, %v2864
      %v2917 = vmul.f32 %v2693, %v2866
      %v2918 = vmul.f32 %v2694, %v2868
      %v2919 = vmul.f32 %v2695, %v2870
      %v2920 = vmul.f32 %v2696, %v2872
      %v2921 = vmul.f32 %v2697, %v2874
      %v2922 = vmul.f32 %v2698, %v2876
      %v2923 = vmul.f32 %v2699, %v2878
      %v2924 = vmul.f32 %v2700, %v2880
      %v2925 = vmul.f32 %v2701, %v2882
      %v2926 = vmul.f32 %v2702, %v2884
      %v2927 = vmul.f32 %v2703, %v2886
      %v2928 = vmul.f32 %v2704, %v2888
      %v2929 = vmul.f32 %v2705, %v2890
      %v2930 = vmul.f32 %v2706, %v2892
      %v2931 = vmul.f32 %v2707, %v2894
      %v2932 = vmul.f32 %v2708, %v2896
      %v2933 = vmul.f32 %v2709, %v2898
      %v2934 = vmul.f32 %v2710, %v2900
      %v2935 = vmul.f32 %v2711, %v2902
      %v2936 = vmul.f32 %v2712, %v2904
      %v2937 = vpack.c.bf16 %v2906, %v2905
      %v2938 = vpack.c.bf16 %v2908, %v2907
      %v2939 = vpack.c.bf16 %v2910, %v2909
      %v2940 = vpack.c.bf16 %v2912, %v2911
      %v2941 = vpack.c.bf16 %v2914, %v2913
      %v2942 = vpack.c.bf16 %v2916, %v2915
      %v2943 = vpack.c.bf16 %v2918, %v2917
      %v2944 = vpack.c.bf16 %v2920, %v2919
      %v2945 = vpack.c.bf16 %v2922, %v2921
      %v2946 = vpack.c.bf16 %v2924, %v2923
      %v2947 = vpack.c.bf16 %v2926, %v2925
      %v2948 = vpack.c.bf16 %v2928, %v2927
      %v2949 = vpack.c.bf16 %v2930, %v2929
      %v2950 = vpack.c.bf16 %v2932, %v2931
      %v2951 = vpack.c.bf16 %v2934, %v2933
      %v2952 = vpack.c.bf16 %v2936, %v2935
      %v2953 = vld [vmem:[%s3] sm:$0xf]
      %v2954 = vld [vmem:[%s4] sm:$0x1]
      %v2956 = vlaneseq
      %v2957 = vshrl.u32 %v2956, 7
      %v2958 = vsub.s32 0, %v2957
      %v2959 = vrot.slane %v2954, %v2958
      %v2962 = vsel %vm724, %v2937, 0
      %v2965 = vsel %vm724, %v2938, 0
      %v2968 = vsel %vm724, %v2939, 0
      %v2971 = vsel %vm724, %v2940, 0
      %v2974 = vsel %vm724, %v2941, 0
      %v2977 = vsel %vm724, %v2942, 0
      %v2980 = vsel %vm724, %v2943, 0
      %v2983 = vsel %vm724, %v2944, 0
      %v2986 = vsel %vm724, %v2945, 0
      %v2989 = vsel %vm724, %v2946, 0
      %v2992 = vsel %vm724, %v2947, 0
      %v2995 = vsel %vm724, %v2948, 0
      %v2998 = vsel %vm724, %v2949, 0
      %v3001 = vsel %vm724, %v2950, 0
      %v3004 = vsel %vm724, %v2951, 0
      %v3007 = vsel %vm724, %v2952, 0
      %v3010 = vsel %vm773, %v2953, 0
      %3012 = vmatprep.subr.bf16.mxu0 0
      %3013 = vmatpush1.bf16.msra.mxu0 %v3010
      %3014 = vmatprep.subr.bf16.mxu0 0
      %3015 = vmatpush1.bf16.msra.mxu0 0
      %3016 = vmatprep.subr.bf16.mxu0 0
      %3017 = vmatpush1.bf16.msra.mxu0 0
      %3018 = vmatprep.subr.bf16.mxu0 0
      %3019 = vmatpush1.bf16.msra.mxu0 0
      %3020 = vmatprep.subr.bf16.mxu0 0
      %3021 = vmatpush1.bf16.msra.mxu0 0
      %3022 = vmatprep.subr.bf16.mxu0 0
      %3023 = vmatpush1.bf16.msra.mxu0 0
      %3024 = vmatprep.subr.bf16.mxu0 0
      %3025 = vmatpush1.bf16.msra.mxu0 0
      %3026 = vmatprep.subr.bf16.mxu0 0
      %3027 = vmatpush1.bf16.msra.mxu0 0
      %3028 = vmatprep.subr.bf16.mxu0 0
      %3029 = vmatpush1.bf16.msra.mxu0 0
      %3030 = vmatprep.subr.bf16.mxu0 0
      %3031 = vmatpush1.bf16.msra.mxu0 0
      %3032 = vmatprep.subr.bf16.mxu0 0
      %3033 = vmatpush1.bf16.msra.mxu0 0
      %3034 = vmatprep.subr.bf16.mxu0 0
      %3035 = vmatpush1.bf16.msra.mxu0 0
      %3036 = vmatprep.subr.bf16.mxu0 0
      %3037 = vmatpush1.bf16.msra.mxu0 0
      %3038 = vmatprep.subr.bf16.mxu0 0
      %3039 = vmatpush1.bf16.msra.mxu0 0
      %3040 = vmatprep.subr.bf16.mxu0 0
      %3041 = vmatpush1.bf16.msra.mxu0 0
      %3042 = vmatprep.subr.bf16.mxu0 0
      %3043 = vmatpush1.bf16.msra.mxu0 0
      %3044 = vmatprep.mubr.bf16.mxu0 0
      %3045 = vmatmul.mubr.bf16.gmra.mrb[0].mxu0 %v2962
      %v3046 = vpop.f32.mrb[0].mxu0
      %v3047 = vadd.f32 %v2959, %v3046
      %v3048 = vpop.f32.mrb[0].mxu0
      %v3049 = vpop.f32.mrb[0].mxu0
      %v3050 = vadd.f32 %v2959, %v3049
      %v3051 = vpop.f32.mrb[0].mxu0
      %3052 = vmatprep.mubr.bf16.mxu0 0
      %3053 = vmatmul.mubr.bf16.gmra.mrb[0].mxu0 %v2965
      %v3054 = vpop.f32.mrb[0].mxu0
      %v3055 = vadd.f32 %v2959, %v3054
      %v3056 = vpop.f32.mrb[0].mxu0
      %v3057 = vpop.f32.mrb[0].mxu0
      %v3058 = vadd.f32 %v2959, %v3057
      %v3059 = vpop.f32.mrb[0].mxu0
      %3060 = vmatprep.mubr.bf16.mxu0 0
      %3061 = vmatmul.mubr.bf16.gmra.mrb[0].mxu0 %v2968
      %v3062 = vpop.f32.mrb[0].mxu0
      %v3063 = vadd.f32 %v2959, %v3062
      %v3064 = vpop.f32.mrb[0].mxu0
      %v3065 = vpop.f32.mrb[0].mxu0
      %v3066 = vadd.f32 %v2959, %v3065
      %v3067 = vpop.f32.mrb[0].mxu0
      %3068 = vmatprep.mubr.bf16.mxu0 0
      %3069 = vmatmul.mubr.bf16.gmra.mrb[0].mxu0 %v2971
      %v3070 = vpop.f32.mrb[0].mxu0
      %v3071 = vadd.f32 %v2959, %v3070
      %v3072 = vpop.f32.mrb[0].mxu0
      %v3073 = vpop.f32.mrb[0].mxu0
      %v3074 = vadd.f32 %v2959, %v3073
      %v3075 = vpop.f32.mrb[0].mxu0
      %3076 = vmatprep.mubr.bf16.mxu0 0
      %3077 = vmatmul.mubr.bf16.gmra.mrb[0].mxu0 %v2974
      %v3078 = vpop.f32.mrb[0].mxu0
      %v3079 = vadd.f32 %v2959, %v3078
      %v3080 = vpop.f32.mrb[0].mxu0
      %v3081 = vpop.f32.mrb[0].mxu0
      %v3082 = vadd.f32 %v2959, %v3081
      %v3083 = vpop.f32.mrb[0].mxu0
      %3084 = vmatprep.mubr.bf16.mxu0 0
      %3085 = vmatmul.mubr.bf16.gmra.mrb[0].mxu0 %v2977
      %v3086 = vpop.f32.mrb[0].mxu0
      %v3087 = vadd.f32 %v2959, %v3086
      %v3088 = vpop.f32.mrb[0].mxu0
      %v3089 = vpop.f32.mrb[0].mxu0
      %v3090 = vadd.f32 %v2959, %v3089
      %v3091 = vpop.f32.mrb[0].mxu0
      %3092 = vmatprep.mubr.bf16.mxu0 0
      %3093 = vmatmul.mubr.bf16.gmra.mrb[0].mxu0 %v2980
      %v3094 = vpop.f32.mrb[0].mxu0
      %v3095 = vadd.f32 %v2959, %v3094
      %v3096 = vpop.f32.mrb[0].mxu0
      %v3097 = vpop.f32.mrb[0].mxu0
      %v3098 = vadd.f32 %v2959, %v3097
      %v3099 = vpop.f32.mrb[0].mxu0
      %3100 = vmatprep.mubr.bf16.mxu0 0
      %3101 = vmatmul.mubr.bf16.gmra.mrb[0].mxu0 %v2983
      %v3102 = vpop.f32.mrb[0].mxu0
      %v3103 = vadd.f32 %v2959, %v3102
      %v3104 = vpop.f32.mrb[0].mxu0
      %v3105 = vpop.f32.mrb[0].mxu0
      %v3106 = vadd.f32 %v2959, %v3105
      %v3107 = vpop.f32.mrb[0].mxu0
      %3108 = vmatprep.mubr.bf16.mxu0 0
      %3109 = vmatmul.mubr.bf16.gmra.mrb[0].mxu0 %v2986
      %v3110 = vpop.f32.mrb[0].mxu0
      %v3111 = vadd.f32 %v2959, %v3110
      %v3112 = vpop.f32.mrb[0].mxu0
      %v3113 = vpop.f32.mrb[0].mxu0
      %v3114 = vadd.f32 %v2959, %v3113
      %v3115 = vpop.f32.mrb[0].mxu0
      %3116 = vmatprep.mubr.bf16.mxu0 0
      %3117 = vmatmul.mubr.bf16.gmra.mrb[0].mxu0 %v2989
      %v3118 = vpop.f32.mrb[0].mxu0
      %v3119 = vadd.f32 %v2959, %v3118
      %v3120 = vpop.f32.mrb[0].mxu0
      %v3121 = vpop.f32.mrb[0].mxu0
      %v3122 = vadd.f32 %v2959, %v3121
      %v3123 = vpop.f32.mrb[0].mxu0
      %3124 = vmatprep.mubr.bf16.mxu0 0
      %3125 = vmatmul.mubr.bf16.gmra.mrb[0].mxu0 %v2992
      %v3126 = vpop.f32.mrb[0].mxu0
      %v3127 = vadd.f32 %v2959, %v3126
      %v3128 = vpop.f32.mrb[0].mxu0
      %v3129 = vpop.f32.mrb[0].mxu0
      %v3130 = vadd.f32 %v2959, %v3129
      %v3131 = vpop.f32.mrb[0].mxu0
      %3132 = vmatprep.mubr.bf16.mxu0 0
      %3133 = vmatmul.mubr.bf16.gmra.mrb[0].mxu0 %v2995
      %v3134 = vpop.f32.mrb[0].mxu0
      %v3135 = vadd.f32 %v2959, %v3134
      %v3136 = vpop.f32.mrb[0].mxu0
      %v3137 = vpop.f32.mrb[0].mxu0
      %v3138 = vadd.f32 %v2959, %v3137
      %v3139 = vpop.f32.mrb[0].mxu0
      %3140 = vmatprep.mubr.bf16.mxu0 0
      %3141 = vmatmul.mubr.bf16.gmra.mrb[0].mxu0 %v2998
      %v3142 = vpop.f32.mrb[0].mxu0
      %v3143 = vadd.f32 %v2959, %v3142
      %v3144 = vpop.f32.mrb[0].mxu0
      %v3145 = vpop.f32.mrb[0].mxu0
      %v3146 = vadd.f32 %v2959, %v3145
      %v3147 = vpop.f32.mrb[0].mxu0
      %3148 = vmatprep.mubr.bf16.mxu0 0
      %3149 = vmatmul.mubr.bf16.gmra.mrb[0].mxu0 %v3001
      %v3150 = vpop.f32.mrb[0].mxu0
      %v3151 = vadd.f32 %v2959, %v3150
      %v3152 = vpop.f32.mrb[0].mxu0
      %v3153 = vpop.f32.mrb[0].mxu0
      %v3154 = vadd.f32 %v2959, %v3153
      %v3155 = vpop.f32.mrb[0].mxu0
      %3156 = vmatprep.mubr.bf16.mxu0 0
      %3157 = vmatmul.mubr.bf16.gmra.mrb[0].mxu0 %v3004
      %v3158 = vpop.f32.mrb[0].mxu0
      %v3159 = vadd.f32 %v2959, %v3158
      %v3160 = vpop.f32.mrb[0].mxu0
      %v3161 = vpop.f32.mrb[0].mxu0
      %v3162 = vadd.f32 %v2959, %v3161
      %v3163 = vpop.f32.mrb[0].mxu0
      %3164 = vmatprep.mubr.bf16.mxu0 0
      %3165 = vmatmul.mubr.bf16.gmra.mrb[0].mxu0 %v3007
      %v3166 = vpop.f32.mrb[0].mxu0
      %v3167 = vadd.f32 %v2959, %v3166
      %v3168 = vpop.f32.mrb[0].mxu0
      %v3169 = vpop.f32.mrb[0].mxu0
      %v3170 = vadd.f32 %v2959, %v3169
      %v3171 = vpop.f32.mrb[0].mxu0
      %3172 = vdwg.mxu0
      %v3173 = vxor.u32 %v3047, 2147483648
      %v3174 = vxor.u32 %v3050, 2147483648
      %v3175 = vxor.u32 %v3055, 2147483648
      %v3176 = vxor.u32 %v3058, 2147483648
      %v3177 = vxor.u32 %v3063, 2147483648
      %v3178 = vxor.u32 %v3066, 2147483648
      %v3179 = vxor.u32 %v3071, 2147483648
      %v3180 = vxor.u32 %v3074, 2147483648
      %v3181 = vxor.u32 %v3079, 2147483648
      %v3182 = vxor.u32 %v3082, 2147483648
      %v3183 = vxor.u32 %v3087, 2147483648
      %v3184 = vxor.u32 %v3090, 2147483648
      %v3185 = vxor.u32 %v3095, 2147483648
      %v3186 = vxor.u32 %v3098, 2147483648
      %v3187 = vxor.u32 %v3103, 2147483648
      %v3188 = vxor.u32 %v3106, 2147483648
      %v3189 = vxor.u32 %v3111, 2147483648
      %v3190 = vxor.u32 %v3114, 2147483648
      %v3191 = vxor.u32 %v3119, 2147483648
      %v3192 = vxor.u32 %v3122, 2147483648
      %v3193 = vxor.u32 %v3127, 2147483648
      %v3194 = vxor.u32 %v3130, 2147483648
      %v3195 = vxor.u32 %v3135, 2147483648
      %v3196 = vxor.u32 %v3138, 2147483648
      %v3197 = vxor.u32 %v3143, 2147483648
      %v3198 = vxor.u32 %v3146, 2147483648
      %v3199 = vxor.u32 %v3151, 2147483648
      %v3200 = vxor.u32 %v3154, 2147483648
      %v3201 = vxor.u32 %v3159, 2147483648
      %v3202 = vxor.u32 %v3162, 2147483648
      %v3203 = vxor.u32 %v3167, 2147483648
      %v3204 = vxor.u32 %v3170, 2147483648
      %v3205 = vmul.f32 %v3173, 1.442695
      %v3206 = vpow.pop %v3205
      %v3207 = vmul.f32 %v3174, 1.442695
      %v3208 = vpow.pop %v3207
      %v3209 = vmul.f32 %v3175, 1.442695
      %v3210 = vpow.pop %v3209
      %v3211 = vmul.f32 %v3176, 1.442695
      %v3212 = vpow.pop %v3211
      %v3213 = vmul.f32 %v3177, 1.442695
      %v3214 = vpow.pop %v3213
      %v3215 = vmul.f32 %v3178, 1.442695
      %v3216 = vpow.pop %v3215
      %v3217 = vmul.f32 %v3179, 1.442695
      %v3218 = vpow.pop %v3217
      %v3219 = vmul.f32 %v3180, 1.442695
      %v3220 = vpow.pop %v3219
      %v3221 = vmul.f32 %v3181, 1.442695
      %v3222 = vpow.pop %v3221
      %v3223 = vmul.f32 %v3182, 1.442695
      %v3224 = vpow.pop %v3223
      %v3225 = vmul.f32 %v3183, 1.442695
      %v3226 = vpow.pop %v3225
      %v3227 = vmul.f32 %v3184, 1.442695
      %v3228 = vpow.pop %v3227
      %v3229 = vmul.f32 %v3185, 1.442695
      %v3230 = vpow.pop %v3229
      %v3231 = vmul.f32 %v3186, 1.442695
      %v3232 = vpow.pop %v3231
      %v3233 = vmul.f32 %v3187, 1.442695
      %v3234 = vpow.pop %v3233
      %v3235 = vmul.f32 %v3188, 1.442695
      %v3236 = vpow.pop %v3235
      %v3237 = vmul.f32 %v3189, 1.442695
      %v3238 = vpow.pop %v3237
      %v3239 = vmul.f32 %v3190, 1.442695
      %v3240 = vpow.pop %v3239
      %v3241 = vmul.f32 %v3191, 1.442695
      %v3242 = vpow.pop %v3241
      %v3243 = vmul.f32 %v3192, 1.442695
      %v3244 = vpow.pop %v3243
      %v3245 = vmul.f32 %v3193, 1.442695
      %v3246 = vpow.pop %v3245
      %v3247 = vmul.f32 %v3194, 1.442695
      %v3248 = vpow.pop %v3247
      %v3249 = vmul.f32 %v3195, 1.442695
      %v3250 = vpow.pop %v3249
      %v3251 = vmul.f32 %v3196, 1.442695
      %v3252 = vpow.pop %v3251
      %v3253 = vmul.f32 %v3197, 1.442695
      %v3254 = vpow.pop %v3253
      %v3255 = vmul.f32 %v3198, 1.442695
      %v3256 = vpow.pop %v3255
      %v3257 = vmul.f32 %v3199, 1.442695
      %v3258 = vpow.pop %v3257
      %v3259 = vmul.f32 %v3200, 1.442695
      %v3260 = vpow.pop %v3259
      %v3261 = vmul.f32 %v3201, 1.442695
      %v3262 = vpow.pop %v3261
      %v3263 = vmul.f32 %v3202, 1.442695
      %v3264 = vpow.pop %v3263
      %v3265 = vmul.f32 %v3203, 1.442695
      %v3266 = vpow.pop %v3265
      %v3267 = vmul.f32 %v3204, 1.442695
      %v3268 = vpow.pop %v3267
      %v3269 = vadd.f32 %v3206, 1.0
      %v3270 = vadd.f32 %v3208, 1.0
      %v3271 = vadd.f32 %v3210, 1.0
      %v3272 = vadd.f32 %v3212, 1.0
      %v3273 = vadd.f32 %v3214, 1.0
      %v3274 = vadd.f32 %v3216, 1.0
      %v3275 = vadd.f32 %v3218, 1.0
      %v3276 = vadd.f32 %v3220, 1.0
      %v3277 = vadd.f32 %v3222, 1.0
      %v3278 = vadd.f32 %v3224, 1.0
      %v3279 = vadd.f32 %v3226, 1.0
      %v3280 = vadd.f32 %v3228, 1.0
      %v3281 = vadd.f32 %v3230, 1.0
      %v3282 = vadd.f32 %v3232, 1.0
      %v3283 = vadd.f32 %v3234, 1.0
      %v3284 = vadd.f32 %v3236, 1.0
      %v3285 = vadd.f32 %v3238, 1.0
      %v3286 = vadd.f32 %v3240, 1.0
      %v3287 = vadd.f32 %v3242, 1.0
      %v3288 = vadd.f32 %v3244, 1.0
      %v3289 = vadd.f32 %v3246, 1.0
      %v3290 = vadd.f32 %v3248, 1.0
      %v3291 = vadd.f32 %v3250, 1.0
      %v3292 = vadd.f32 %v3252, 1.0
      %v3293 = vadd.f32 %v3254, 1.0
      %v3294 = vadd.f32 %v3256, 1.0
      %v3295 = vadd.f32 %v3258, 1.0
      %v3296 = vadd.f32 %v3260, 1.0
      %v3297 = vadd.f32 %v3262, 1.0
      %v3298 = vadd.f32 %v3264, 1.0
      %v3299 = vadd.f32 %v3266, 1.0
      %v3300 = vadd.f32 %v3268, 1.0
      %v3301 = vrcp.pop %v3269
      %v3302 = vmul.f32 1.0, %v3301
      %v3303 = vrcp.pop %v3270
      %v3304 = vmul.f32 1.0, %v3303
      %v3305 = vrcp.pop %v3271
      %v3306 = vmul.f32 1.0, %v3305
      %v3307 = vrcp.pop %v3272
      %v3308 = vmul.f32 1.0, %v3307
      %v3309 = vrcp.pop %v3273
      %v3310 = vmul.f32 1.0, %v3309
      %v3311 = vrcp.pop %v3274
      %v3312 = vmul.f32 1.0, %v3311
      %v3313 = vrcp.pop %v3275
      %v3314 = vmul.f32 1.0, %v3313
      %v3315 = vrcp.pop %v3276
      %v3316 = vmul.f32 1.0, %v3315
      %v3317 = vrcp.pop %v3277
      %v3318 = vmul.f32 1.0, %v3317
      %v3319 = vrcp.pop %v3278
      %v3320 = vmul.f32 1.0, %v3319
      %v3321 = vrcp.pop %v3279
      %v3322 = vmul.f32 1.0, %v3321
      %v3323 = vrcp.pop %v3280
      %v3324 = vmul.f32 1.0, %v3323
      %v3325 = vrcp.pop %v3281
      %v3326 = vmul.f32 1.0, %v3325
      %v3327 = vrcp.pop %v3282
      %v3328 = vmul.f32 1.0, %v3327
      %v3329 = vrcp.pop %v3283
      %v3330 = vmul.f32 1.0, %v3329
      %v3331 = vrcp.pop %v3284
      %v3332 = vmul.f32 1.0, %v3331
      %v3333 = vrcp.pop %v3285
      %v3334 = vmul.f32 1.0, %v3333
      %v3335 = vrcp.pop %v3286
      %v3336 = vmul.f32 1.0, %v3335
      %v3337 = vrcp.pop %v3287
      %v3338 = vmul.f32 1.0, %v3337
      %v3339 = vrcp.pop %v3288
      %v3340 = vmul.f32 1.0, %v3339
      %v3341 = vrcp.pop %v3289
      %v3342 = vmul.f32 1.0, %v3341
      %v3343 = vrcp.pop %v3290
      %v3344 = vmul.f32 1.0, %v3343
      %v3345 = vrcp.pop %v3291
      %v3346 = vmul.f32 1.0, %v3345
      %v3347 = vrcp.pop %v3292
      %v3348 = vmul.f32 1.0, %v3347
      %v3349 = vrcp.pop %v3293
      %v3350 = vmul.f32 1.0, %v3349
      %v3351 = vrcp.pop %v3294
      %v3352 = vmul.f32 1.0, %v3351
      %v3353 = vrcp.pop %v3295
      %v3354 = vmul.f32 1.0, %v3353
      %v3355 = vrcp.pop %v3296
      %v3356 = vmul.f32 1.0, %v3355
      %v3357 = vrcp.pop %v3297
      %v3358 = vmul.f32 1.0, %v3357
      %v3359 = vrcp.pop %v3298
      %v3360 = vmul.f32 1.0, %v3359
      %v3361 = vrcp.pop %v3299
      %v3362 = vmul.f32 1.0, %v3361
      %v3363 = vrcp.pop %v3300
      %v3364 = vmul.f32 1.0, %v3363
      %v3365 = vmul.f32 %v3047, %v3302
      %v3366 = vmul.f32 %v3050, %v3304
      %v3367 = vmul.f32 %v3055, %v3306
      %v3368 = vmul.f32 %v3058, %v3308
      %v3369 = vmul.f32 %v3063, %v3310
      %v3370 = vmul.f32 %v3066, %v3312
      %v3371 = vmul.f32 %v3071, %v3314
      %v3372 = vmul.f32 %v3074, %v3316
      %v3373 = vmul.f32 %v3079, %v3318
      %v3374 = vmul.f32 %v3082, %v3320
      %v3375 = vmul.f32 %v3087, %v3322
      %v3376 = vmul.f32 %v3090, %v3324
      %v3377 = vmul.f32 %v3095, %v3326
      %v3378 = vmul.f32 %v3098, %v3328
      %v3379 = vmul.f32 %v3103, %v3330
      %v3380 = vmul.f32 %v3106, %v3332
      %v3381 = vmul.f32 %v3111, %v3334
      %v3382 = vmul.f32 %v3114, %v3336
      %v3383 = vmul.f32 %v3119, %v3338
      %v3384 = vmul.f32 %v3122, %v3340
      %v3385 = vmul.f32 %v3127, %v3342
      %v3386 = vmul.f32 %v3130, %v3344
      %v3387 = vmul.f32 %v3135, %v3346
      %v3388 = vmul.f32 %v3138, %v3348
      %v3389 = vmul.f32 %v3143, %v3350
      %v3390 = vmul.f32 %v3146, %v3352
      %v3391 = vmul.f32 %v3151, %v3354
      %v3392 = vmul.f32 %v3154, %v3356
      %v3393 = vmul.f32 %v3159, %v3358
      %v3394 = vmul.f32 %v3162, %v3360
      %v3395 = vmul.f32 %v3167, %v3362
      %v3396 = vmul.f32 %v3170, %v3364
      %v3397 = vpack.c.bf16 %v3366, %v3365
      %v3398 = vpack.c.bf16 %v3368, %v3367
      %v3399 = vpack.c.bf16 %v3370, %v3369
      %v3400 = vpack.c.bf16 %v3372, %v3371
      %v3401 = vpack.c.bf16 %v3374, %v3373
      %v3402 = vpack.c.bf16 %v3376, %v3375
      %v3403 = vpack.c.bf16 %v3378, %v3377
      %v3404 = vpack.c.bf16 %v3380, %v3379
      %v3405 = vpack.c.bf16 %v3382, %v3381
      %v3406 = vpack.c.bf16 %v3384, %v3383
      %v3407 = vpack.c.bf16 %v3386, %v3385
      %v3408 = vpack.c.bf16 %v3388, %v3387
      %v3409 = vpack.c.bf16 %v3390, %v3389
      %v3410 = vpack.c.bf16 %v3392, %v3391
      %v3411 = vpack.c.bf16 %v3394, %v3393
      %v3412 = vpack.c.bf16 %v3396, %v3395
      %v3429 = vunpack.c.l.b16 %v3397
      %v3430 = vunpack.c.h.b16 %v3397
      %v3431 = vunpack.c.l.b16 %v3398
      %v3432 = vunpack.c.h.b16 %v3398
      %v3433 = vunpack.c.l.b16 %v3399
      %v3434 = vunpack.c.h.b16 %v3399
      %v3435 = vunpack.c.l.b16 %v3400
      %v3436 = vunpack.c.h.b16 %v3400
      %v3437 = vunpack.c.l.b16 %v3401
      %v3438 = vunpack.c.h.b16 %v3401
      %v3439 = vunpack.c.l.b16 %v3402
      %v3440 = vunpack.c.h.b16 %v3402
      %v3441 = vunpack.c.l.b16 %v3403
      %v3442 = vunpack.c.h.b16 %v3403
      %v3443 = vunpack.c.l.b16 %v3404
      %v3444 = vunpack.c.h.b16 %v3404
      %v3445 = vunpack.c.l.b16 %v3405
      %v3446 = vunpack.c.h.b16 %v3405
      %v3447 = vunpack.c.l.b16 %v3406
      %v3448 = vunpack.c.h.b16 %v3406
      %v3449 = vunpack.c.l.b16 %v3407
      %v3450 = vunpack.c.h.b16 %v3407
      %v3451 = vunpack.c.l.b16 %v3408
      %v3452 = vunpack.c.h.b16 %v3408
      %v3453 = vunpack.c.l.b16 %v3409
      %v3454 = vunpack.c.h.b16 %v3409
      %v3455 = vunpack.c.l.b16 %v3410
      %v3456 = vunpack.c.h.b16 %v3410
      %v3457 = vunpack.c.l.b16 %v3411
      %v3458 = vunpack.c.h.b16 %v3411
      %v3459 = vunpack.c.l.b16 %v3412
      %v3460 = vunpack.c.h.b16 %v3412
      %v3461 = vpack.c.b16 %v3429, %v3429
      %v3462 = vpack.c.b16 %v3430, %v3430
      %v3463 = vpack.c.b16 %v3431, %v3431
      %v3464 = vpack.c.b16 %v3432, %v3432
      %v3465 = vpack.c.b16 %v3433, %v3433
      %v3466 = vpack.c.b16 %v3434, %v3434
      %v3467 = vpack.c.b16 %v3435, %v3435
      %v3468 = vpack.c.b16 %v3436, %v3436
      %v3469 = vpack.c.b16 %v3437, %v3437
      %v3470 = vpack.c.b16 %v3438, %v3438
      %v3471 = vpack.c.b16 %v3439, %v3439
      %v3472 = vpack.c.b16 %v3440, %v3440
      %v3473 = vpack.c.b16 %v3441, %v3441
      %v3474 = vpack.c.b16 %v3442, %v3442
      %v3475 = vpack.c.b16 %v3443, %v3443
      %v3476 = vpack.c.b16 %v3444, %v3444
      %v3477 = vpack.c.b16 %v3445, %v3445
      %v3478 = vpack.c.b16 %v3446, %v3446
      %v3479 = vpack.c.b16 %v3447, %v3447
      %v3480 = vpack.c.b16 %v3448, %v3448
      %v3481 = vpack.c.b16 %v3449, %v3449
      %v3482 = vpack.c.b16 %v3450, %v3450
      %v3483 = vpack.c.b16 %v3451, %v3451
      %v3484 = vpack.c.b16 %v3452, %v3452
      %v3485 = vpack.c.b16 %v3453, %v3453
      %v3486 = vpack.c.b16 %v3454, %v3454
      %v3487 = vpack.c.b16 %v3455, %v3455
      %v3488 = vpack.c.b16 %v3456, %v3456
      %v3489 = vpack.c.b16 %v3457, %v3457
      %v3490 = vpack.c.b16 %v3458, %v3458
      %v3491 = vpack.c.b16 %v3459, %v3459
      %v3492 = vpack.c.b16 %v3460, %v3460
      %vm3525 = vcmask 60416
      %3526 = vst.msk [vmem:[%s224] sm:$0xf] %vm3525, %v3461
      %3527 = vst.msk [vmem:[%s224 + $0x4] sm:$0xf] %vm3525, %v3462
      %3528 = vst.msk [vmem:[%s224 + $0x8] sm:$0xf] %vm3525, %v3463
      %3529 = vst.msk [vmem:[%s224 + $0xc] sm:$0xf] %vm3525, %v3464
      %3530 = vst.msk [vmem:[%s224 + $0x10] sm:$0xf] %vm3525, %v3465
      %3531 = vst.msk [vmem:[%s224 + $0x14] sm:$0xf] %vm3525, %v3466
      %3532 = vst.msk [vmem:[%s224 + $0x18] sm:$0xf] %vm3525, %v3467
      %3533 = vst.msk [vmem:[%s224 + $0x1c] sm:$0xf] %vm3525, %v3468
      %3534 = vst.msk [vmem:[%s224 + $0x20] sm:$0xf] %vm3525, %v3469
      %3535 = vst.msk [vmem:[%s224 + $0x24] sm:$0xf] %vm3525, %v3470
      %3536 = vst.msk [vmem:[%s224 + $0x28] sm:$0xf] %vm3525, %v3471
      %3537 = vst.msk [vmem:[%s224 + $0x2c] sm:$0xf] %vm3525, %v3472
      %3538 = vst.msk [vmem:[%s224 + $0x30] sm:$0xf] %vm3525, %v3473
      %3539 = vst.msk [vmem:[%s224 + $0x34] sm:$0xf] %vm3525, %v3474
      %3540 = vst.msk [vmem:[%s224 + $0x38] sm:$0xf] %vm3525, %v3475
      %3541 = vst.msk [vmem:[%s224 + $0x3c] sm:$0xf] %vm3525, %v3476
      %3542 = vst.msk [vmem:[%s224 + $0x40] sm:$0xf] %vm3525, %v3477
      %3543 = vst.msk [vmem:[%s224 + $0x44] sm:$0xf] %vm3525, %v3478
      %3544 = vst.msk [vmem:[%s224 + $0x48] sm:$0xf] %vm3525, %v3479
      %3545 = vst.msk [vmem:[%s224 + $0x4c] sm:$0xf] %vm3525, %v3480
      %3546 = vst.msk [vmem:[%s224 + $0x50] sm:$0xf] %vm3525, %v3481
      %3547 = vst.msk [vmem:[%s224 + $0x54] sm:$0xf] %vm3525, %v3482
      %3548 = vst.msk [vmem:[%s224 + $0x58] sm:$0xf] %vm3525, %v3483
      %3549 = vst.msk [vmem:[%s224 + $0x5c] sm:$0xf] %vm3525, %v3484
      %3550 = vst.msk [vmem:[%s224 + $0x60] sm:$0xf] %vm3525, %v3485
      %3551 = vst.msk [vmem:[%s224 + $0x64] sm:$0xf] %vm3525, %v3486
      %3552 = vst.msk [vmem:[%s224 + $0x68] sm:$0xf] %vm3525, %v3487
      %3553 = vst.msk [vmem:[%s224 + $0x6c] sm:$0xf] %vm3525, %v3488
      %3554 = vst.msk [vmem:[%s224 + $0x70] sm:$0xf] %vm3525, %v3489
      %3555 = vst.msk [vmem:[%s224 + $0x74] sm:$0xf] %vm3525, %v3490
      %3556 = vst.msk [vmem:[%s224 + $0x78] sm:$0xf] %vm3525, %v3491
      %3557 = vst.msk [vmem:[%s224 + $0x7c] sm:$0xf] %vm3525, %v3492
      %p3558 = scmp.lt.s32.totalorder %s16, 1
      %s3559 = scalar_select %p3558, %s16, 1
      %s3560 = smul.addr %s3559, 32
      %s3561 = smul.addr %s3560, 4
      %s3562 = scalar_lea.vmem %s5, %s3561
      // Predicated region
      $region41: #{sppcspc_forward.5} parent=39 // pred_check
        %p3563 = pneg %p144
      $region42: #{sppcspc_forward.5} parent=39 // pred_check_branch
        %3565 = sbr.rel (%p3563) target = $region44
      $region43: #{sppcspc_forward.5} parent=39 // pred_region
        _
      $region44: #{sppcspc_forward.5} parent=39 // pred_fallthru
        _
    $region40: #{sppcspc_forward.5} parent=5 // pred_fallthru
      _
    %p3566 = scmp.le.s32.totalorder 2, %s11
    // Predicated region
    $region45: #{sppcspc_forward.5} parent=5 // pred_check
      %p3567 = pneg %p3566
    $region46: #{sppcspc_forward.5} parent=5 // pred_check_branch
      %3569 = sbr.rel (%p3567) target = $region48
    $region47: #{sppcspc_forward.5} parent=5 // pred_region
      %s3570 = ssub.s32 %s11, 2
      // Predicated region
      $region49: #{sppcspc_forward.5} parent=47 // pred_check
        %p3571 = pneg %p150
      $region50: #{sppcspc_forward.5} parent=47 // pred_check_branch
        %3573 = sbr.rel (%p3571) target = $region52
      $region51: #{sppcspc_forward.5} parent=47 // pred_region
        %p3574 = scmp.lt.s32.totalorder %s17, 1
        %s3575 = scalar_select %p3574, %s17, 1
        %s3576 = smul.addr %s3575, 32
        %s3577 = smul.addr %s3576, 4
        %s3578 = scalar_lea.vmem %s5, %s3577
      $region52: #{sppcspc_forward.5} parent=47 // pred_fallthru
        _
    $region48: #{sppcspc_forward.5} parent=5 // pred_fallthru
      _
  $region6: #{sppcspc_forward.5} parent=0 // loop_footer
    %s15 = sadd.s32 1, %s11
  $region7: #{sppcspc_forward.5} parent=0 // loop_footer_branch
    %10 = sbr.rel target = $region3
  $region8: #{sppcspc_forward.5} parent=0 // loop_exit
    _

// kernel: sppcspc_forward.6
$region0: #{sppcspc_forward.6}
  #allocation0 [shape = 'u32[]', space=smem, size = 0x4, offset = 0x4, fixed_abs, tag = 'smem constant byte address 0x4 - core index']
  #allocation1 [shape = 'u32[144,128]{1,0:T(1,128)}', space=vmem, size = 0x12000, scoped, tag = 'internal scratch']
  %s0 = inlined_call_operand.vmem [shape: bf16[2,16,16,8], index: 0, kind: input, shape index: {}]
  %s1 = inlined_call_operand.vmem [shape: bf16[8,8], index: 1, kind: input, shape index: {}]
  %s2 = inlined_call_operand.vmem [shape: bf16[8,8], index: 2, kind: input, shape index: {}]
  %s3 = inlined_call_operand.vmem [shape: bf16[8,8], index: 3, kind: input, shape index: {}]
  %s4 = inlined_call_operand.vmem [shape: bf16[8,8], index: 4, kind: input, shape index: {}]
  %s5 = inlined_call_operand.vmem [shape: f32[1,8], index: 5, kind: input, shape index: {}]
  %s6 = inlined_call_operand.vmem [shape: bf16[2,256,8], index: 6, kind: output, shape index: {}]
  %s7 = sld [smem:[#allocation0]]
  $region57: #{sppcspc_forward.6} parent=0
    _
  %s9 = ssub.s32 1, %s7
  %s10 = scalar_select 0, %s9, %s7
  loop: start=0, step=1, limit=4
  $region2: #{sppcspc_forward.6} parent=0 // loop_pre_header
    _
  $region3: #{sppcspc_forward.6} parent=0 // loop_header
    %s12 = sphi 0, %s16
    %p13 = scmp.ge.s32.totalorder %s12, 4
    %s22 = sphi 0, %s24
    %s25 = sphi 0, %s22
    %s26 = sphi 0, %s25
    %s42 = sphi 0, %s26
    %s46 = sphi 0, %s46
    %s48 = sphi 0, %s46
    %s49 = sphi 0, %s48
    %s63 = sphi 0, %s49
    %s67 = sphi 0, %s67
    %s69 = sphi 0, %s67
    %s70 = sphi 0, %s69
    %s84 = sphi 0, %s70
    %s88 = sphi 0, %s88
    %s90 = sphi 0, %s88
    %s91 = sphi 0, %s90
    %s105 = sphi 0, %s91
    %s109 = sphi 0, %s109
    %s111 = sphi 0, %s109
    %s112 = sphi 0, %s111
    %s126 = sphi 0, %s112
    %s130 = sphi 0, %s130
    %s132 = sphi 0, %s130
    %s133 = sphi 0, %s132
    %s147 = sphi 0, %s133
    %s153 = sphi 0, %s155
    %s156 = sphi 0, %s153
    %s157 = sphi 0, %s156
    %s173 = sphi 0, %s157
  $region4: #{sppcspc_forward.6} parent=0 // loop_header_branch
    %15 = sbr.rel (%p13) target = $region8
  $region5: #{sppcspc_forward.6} parent=0 // loop_body
    %s17 = ssub.s32 %s12, 1
    %s18 = ssub.s32 %s12, 2
    %s19 = sadd.s32 %s12, 1
    %s20 = ssub.s32 %s12, %s19
    %p21 = scmp.eq.s32.totalorder %s20, 0
    %s23 = sadd.s32 %s22, 1
    %s24 = scalar_select %p21, %s22, %s23
    %p27 = pneg %p21
    %p28 = scmp.eq.s32.totalorder %s12, 1
    %p29 = por %p27, %p28
    %p30 = scmp.ne.s32.totalorder %s22, %s25
    %p31 = scmp.eq.s32.totalorder %s12, 0
    %p32 = por %p30, %p31
    %p33 = scmp.ne.s32.totalorder %s22, %s25
    %p34 = scmp.eq.s32.totalorder %s17, 1
    %p35 = por %p33, %p34
    %p36 = scmp.ne.s32.totalorder %s25, %s26
    %p37 = scmp.eq.s32.totalorder %s17, 0
    %p38 = por %p36, %p37
    %p39 = scmp.ne.s32.totalorder %s25, %s26
    %p40 = scmp.eq.s32.totalorder %s18, 1
    %p41 = por %p39, %p40
    %p43 = scmp.ne.s32.totalorder %s26, %s42
    %p44 = scmp.eq.s32.totalorder %s18, 0
    %p45 = por %p43, %p44
    %s47 = sadd.s32 %s46, 1
    %p50 = scmp.eq.s32.totalorder %s12, 1
    %p51 = scmp.ne.s32.totalorder %s46, %s48
    %p52 = scmp.eq.s32.totalorder %s12, 0
    %p53 = por %p51, %p52
    %p54 = scmp.ne.s32.totalorder %s46, %s48
    %p55 = scmp.eq.s32.totalorder %s17, 1
    %p56 = por %p54, %p55
    %p57 = scmp.ne.s32.totalorder %s48, %s49
    %p58 = scmp.eq.s32.totalorder %s17, 0
    %p59 = por %p57, %p58
    %p60 = scmp.ne.s32.totalorder %s48, %s49
    %p61 = scmp.eq.s32.totalorder %s18, 1
    %p62 = por %p60, %p61
    %p64 = scmp.ne.s32.totalorder %s49, %s63
    %p65 = scmp.eq.s32.totalorder %s18, 0
    %p66 = por %p64, %p65
    %s68 = sadd.s32 %s67, 1
    %p71 = scmp.eq.s32.totalorder %s12, 1
    %p72 = scmp.ne.s32.totalorder %s67, %s69
    %p73 = scmp.eq.s32.totalorder %s12, 0
    %p74 = por %p72, %p73
    %p75 = scmp.ne.s32.totalorder %s67, %s69
    %p76 = scmp.eq.s32.totalorder %s17, 1
    %p77 = por %p75, %p76
    %p78 = scmp.ne.s32.totalorder %s69, %s70
    %p79 = scmp.eq.s32.totalorder %s17, 0
    %p80 = por %p78, %p79
    %p81 = scmp.ne.s32.totalorder %s69, %s70
    %p82 = scmp.eq.s32.totalorder %s18, 1
    %p83 = por %p81, %p82
    %p85 = scmp.ne.s32.totalorder %s70, %s84
    %p86 = scmp.eq.s32.totalorder %s18, 0
    %p87 = por %p85, %p86
    %s89 = sadd.s32 %s88, 1
    %p92 = scmp.eq.s32.totalorder %s12, 1
    %p93 = scmp.ne.s32.totalorder %s88, %s90
    %p94 = scmp.eq.s32.totalorder %s12, 0
    %p95 = por %p93, %p94
    %p96 = scmp.ne.s32.totalorder %s88, %s90
    %p97 = scmp.eq.s32.totalorder %s17, 1
    %p98 = por %p96, %p97
    %p99 = scmp.ne.s32.totalorder %s90, %s91
    %p100 = scmp.eq.s32.totalorder %s17, 0
    %p101 = por %p99, %p100
    %p102 = scmp.ne.s32.totalorder %s90, %s91
    %p103 = scmp.eq.s32.totalorder %s18, 1
    %p104 = por %p102, %p103
    %p106 = scmp.ne.s32.totalorder %s91, %s105
    %p107 = scmp.eq.s32.totalorder %s18, 0
    %p108 = por %p106, %p107
    %s110 = sadd.s32 %s109, 1
    %p113 = scmp.eq.s32.totalorder %s12, 1
    %p114 = scmp.ne.s32.totalorder %s109, %s111
    %p115 = scmp.eq.s32.totalorder %s12, 0
    %p116 = por %p114, %p115
    %p117 = scmp.ne.s32.totalorder %s109, %s111
    %p118 = scmp.eq.s32.totalorder %s17, 1
    %p119 = por %p117, %p118
    %p120 = scmp.ne.s32.totalorder %s111, %s112
    %p121 = scmp.eq.s32.totalorder %s17, 0
    %p122 = por %p120, %p121
    %p123 = scmp.ne.s32.totalorder %s111, %s112
    %p124 = scmp.eq.s32.totalorder %s18, 1
    %p125 = por %p123, %p124
    %p127 = scmp.ne.s32.totalorder %s112, %s126
    %p128 = scmp.eq.s32.totalorder %s18, 0
    %p129 = por %p127, %p128
    %s131 = sadd.s32 %s130, 1
    %p134 = scmp.eq.s32.totalorder %s12, 1
    %p135 = scmp.ne.s32.totalorder %s130, %s132
    %p136 = scmp.eq.s32.totalorder %s12, 0
    %p137 = por %p135, %p136
    %p138 = scmp.ne.s32.totalorder %s130, %s132
    %p139 = scmp.eq.s32.totalorder %s17, 1
    %p140 = por %p138, %p139
    %p141 = scmp.ne.s32.totalorder %s132, %s133
    %p142 = scmp.eq.s32.totalorder %s17, 0
    %p143 = por %p141, %p142
    %p144 = scmp.ne.s32.totalorder %s132, %s133
    %p145 = scmp.eq.s32.totalorder %s18, 1
    %p146 = por %p144, %p145
    %p148 = scmp.ne.s32.totalorder %s133, %s147
    %p149 = scmp.eq.s32.totalorder %s18, 0
    %p150 = por %p148, %p149
    %s151 = ssub.s32 %s12, %s19
    %p152 = scmp.eq.s32.totalorder %s151, 0
    %s154 = sadd.s32 %s153, 1
    %s155 = scalar_select %p152, %s153, %s154
    %p158 = pneg %p152
    %p159 = scmp.eq.s32.totalorder %s12, 1
    %p160 = por %p158, %p159
    %p161 = scmp.ne.s32.totalorder %s153, %s156
    %p162 = scmp.eq.s32.totalorder %s12, 0
    %p163 = por %p161, %p162
    %p164 = scmp.ne.s32.totalorder %s153, %s156
    %p165 = scmp.eq.s32.totalorder %s17, 1
    %p166 = por %p164, %p165
    %p167 = scmp.ne.s32.totalorder %s156, %s157
    %p168 = scmp.eq.s32.totalorder %s17, 0
    %p169 = por %p167, %p168
    %p170 = scmp.ne.s32.totalorder %s156, %s157
    %p171 = scmp.eq.s32.totalorder %s18, 1
    %p172 = por %p170, %p171
    %p174 = scmp.ne.s32.totalorder %s157, %s173
    %p175 = scmp.eq.s32.totalorder %s18, 0
    %p176 = por %p174, %p175
    %p177 = scmp.le.s32.totalorder 1, %s12
    %p178 = scmp.lt.s32.totalorder %s12, 3
    %p179 = pnand %p177, %p178
    %p180 = pneg %p179
    // Predicated region
    $region9: #{sppcspc_forward.6} parent=5 // pred_check
      _
    $region10: #{sppcspc_forward.6} parent=5 // pred_check_branch
      %182 = sbr.rel (%p179) target = $region12
    $region11: #{sppcspc_forward.6} parent=5 // pred_region
      %s183 = ssub.s32 %s12, 1
      // Predicated region
      $region13: #{sppcspc_forward.6} parent=11 // pred_check
        %p184 = pneg %p59
      $region14: #{sppcspc_forward.6} parent=11 // pred_check_branch
        %186 = sbr.rel (%p184) target = $region16
      $region15: #{sppcspc_forward.6} parent=11 // pred_region
        _
      $region16: #{sppcspc_forward.6} parent=11 // pred_fallthru
        _
      // Predicated region
      $region17: #{sppcspc_forward.6} parent=11 // pred_check
        %p187 = pneg %p80
      $region18: #{sppcspc_forward.6} parent=11 // pred_check_branch
        %189 = sbr.rel (%p187) target = $region20
      $region19: #{sppcspc_forward.6} parent=11 // pred_region
        _
      $region20: #{sppcspc_forward.6} parent=11 // pred_fallthru
        _
      // Predicated region
      $region21: #{sppcspc_forward.6} parent=11 // pred_check
        %p190 = pneg %p101
      $region22: #{sppcspc_forward.6} parent=11 // pred_check_branch
        %192 = sbr.rel (%p190) target = $region24
      $region23: #{sppcspc_forward.6} parent=11 // pred_region
        _
      $region24: #{sppcspc_forward.6} parent=11 // pred_fallthru
        _
      // Predicated region
      $region25: #{sppcspc_forward.6} parent=11 // pred_check
        %p193 = pneg %p122
      $region26: #{sppcspc_forward.6} parent=11 // pred_check_branch
        %195 = sbr.rel (%p193) target = $region28
      $region27: #{sppcspc_forward.6} parent=11 // pred_region
        _
      $region28: #{sppcspc_forward.6} parent=11 // pred_fallthru
        _
      // Predicated region
      $region29: #{sppcspc_forward.6} parent=11 // pred_check
        %p196 = pneg %p143
      $region30: #{sppcspc_forward.6} parent=11 // pred_check_branch
        %198 = sbr.rel (%p196) target = $region32
      $region31: #{sppcspc_forward.6} parent=11 // pred_region
        _
      $region32: #{sppcspc_forward.6} parent=11 // pred_fallthru
        _
    $region12: #{sppcspc_forward.6} parent=5 // pred_fallthru
      _
    %p199 = scmp.lt.s32.totalorder %s12, 2
    // Predicated region
    $region33: #{sppcspc_forward.6} parent=5 // pred_check
      %p200 = pneg %p199
    $region34: #{sppcspc_forward.6} parent=5 // pred_check_branch
      %202 = sbr.rel (%p200) target = $region36
    $region35: #{sppcspc_forward.6} parent=5 // pred_region
      // Predicated region
      $region37: #{sppcspc_forward.6} parent=35 // pred_check
        %p203 = pneg %p32
      $region38: #{sppcspc_forward.6} parent=35 // pred_check_branch
        %205 = sbr.rel (%p203) target = $region40
      $region39: #{sppcspc_forward.6} parent=35 // pred_region
        %p206 = scmp.lt.s32.totalorder %s12, 1
        %s207 = scalar_select %p206, %s12, 1
        %s208 = smul.addr %s207, 32
        %s209 = smul.addr %s208, 4
        %s210 = scalar_lea.vmem %s0, %s209
      $region40: #{sppcspc_forward.6} parent=35 // pred_fallthru
        _
    $region36: #{sppcspc_forward.6} parent=5 // pred_fallthru
      _
    %p211 = scmp.le.s32.totalorder 1, %s12
    %p212 = scmp.lt.s32.totalorder %s12, 3
    %p213 = pnand %p211, %p212
    %p214 = pneg %p213
    // Predicated region
    $region41: #{sppcspc_forward.6} parent=5 // pred_check
      _
    $region42: #{sppcspc_forward.6} parent=5 // pred_check_branch
      %216 = sbr.rel (%p213) target = $region44
    $region43: #{sppcspc_forward.6} parent=5 // pred_region
      %s217 = ssub.s32 %s12, 1
      %p218 = scmp.lt.s32.totalorder %s17, 1
      %s219 = scalar_select %p218, %s17, 1
      %s220 = smul.addr %s219, 32
      %s221 = smul.addr %s220, 4
      %s222 = scalar_lea.vmem %s0, %s221
      %p223 = pneg %p38
      %p224 = pneg %p35
      %p225 = pneg %p59
      %p226 = pneg %p56
      %p227 = pneg %p80
      %p228 = pneg %p77
      %p229 = pneg %p101
      %p230 = pneg %p98
      %p231 = pneg %p122
      %p232 = pneg %p119
      %p233 = pneg %p143
      %p234 = pneg %p140
      %p235 = pneg %p169
      %p236 = pneg %p166
      %p237 = scmp.lt.s32.totalorder %s17, 1
      %s238 = scalar_select %p237, %s17, 1
      %s239 = smul.addr %s238, 32
      %s240 = smul.addr %s239, 4
      %s241 = scalar_lea.vmem %s6, %s240
      %p242 = scmp.lt.s32.totalorder %s17, 1
      %s243 = scalar_select %p242, %s17, 1
      %s244 = smul.addr %s243, 32
      %s245 = smul.addr %s244, 4
      %s246 = scalar_lea.vmem %s0, %s245
      %p247 = scmp.lt.s32.totalorder %s17, 1
      %s248 = scalar_select %p247, %s17, 1
      %s249 = smul.addr %s248, 32
      %s250 = smul.addr %s249, 4
      %s251 = scalar_lea.vmem %s6, %s250
      %v254 = vld [vmem:[%s246] sm:$0xf]
      %v255 = vld [vmem:[%s246 + $0x4] sm:$0xf]
      %v256 = vld [vmem:[%s246 + $0x8] sm:$0xf]
      %v257 = vld [vmem:[%s246 + $0xc] sm:$0xf]
      %v258 = vld [vmem:[%s246 + $0x10] sm:$0xf]
      %v259 = vld [vmem:[%s246 + $0x14] sm:$0xf]
      %v260 = vld [vmem:[%s246 + $0x18] sm:$0xf]
      %v261 = vld [vmem:[%s246 + $0x1c] sm:$0xf]
      %v262 = vld [vmem:[%s246 + $0x20] sm:$0xf]
      %v263 = vld [vmem:[%s246 + $0x24] sm:$0xf]
      %v264 = vld [vmem:[%s246 + $0x28] sm:$0xf]
      %v265 = vld [vmem:[%s246 + $0x2c] sm:$0xf]
      %v266 = vld [vmem:[%s246 + $0x30] sm:$0xf]
      %v267 = vld [vmem:[%s246 + $0x34] sm:$0xf]
      %v268 = vld [vmem:[%s246 + $0x38] sm:$0xf]
      %v269 = vld [vmem:[%s246 + $0x3c] sm:$0xf]
      %v270 = vld [vmem:[%s246 + $0x40] sm:$0xf]
      %v271 = vld [vmem:[%s246 + $0x44] sm:$0xf]
      %v272 = vld [vmem:[%s246 + $0x48] sm:$0xf]
      %v273 = vld [vmem:[%s246 + $0x4c] sm:$0xf]
      %v274 = vld [vmem:[%s246 + $0x50] sm:$0xf]
      %v275 = vld [vmem:[%s246 + $0x54] sm:$0xf]
      %v276 = vld [vmem:[%s246 + $0x58] sm:$0xf]
      %v277 = vld [vmem:[%s246 + $0x5c] sm:$0xf]
      %v278 = vld [vmem:[%s246 + $0x60] sm:$0xf]
      %v279 = vld [vmem:[%s246 + $0x64] sm:$0xf]
      %v280 = vld [vmem:[%s246 + $0x68] sm:$0xf]
      %v281 = vld [vmem:[%s246 + $0x6c] sm:$0xf]
      %v282 = vld [vmem:[%s246 + $0x70] sm:$0xf]
      %v283 = vld [vmem:[%s246 + $0x74] sm:$0xf]
      %v284 = vld [vmem:[%s246 + $0x78] sm:$0xf]
      %v285 = vld [vmem:[%s246 + $0x7c] sm:$0xf]
      %v318 = vunpack.c.l.b16 %v254
      %v319 = vunpack.c.l.b16 %v255
      %v320 = vunpack.c.l.b16 %v256
      %v321 = vunpack.c.l.b16 %v257
      %v322 = vunpack.c.l.b16 %v258
      %v323 = vunpack.c.l.b16 %v259
      %v324 = vunpack.c.l.b16 %v260
      %v325 = vunpack.c.l.b16 %v261
      %v326 = vunpack.c.l.b16 %v262
      %v327 = vunpack.c.l.b16 %v263
      %v328 = vunpack.c.l.b16 %v264
      %v329 = vunpack.c.l.b16 %v265
      %v330 = vunpack.c.l.b16 %v266
      %v331 = vunpack.c.l.b16 %v267
      %v332 = vunpack.c.l.b16 %v268
      %v333 = vunpack.c.l.b16 %v269
      %v334 = vunpack.c.l.b16 %v270
      %v335 = vunpack.c.l.b16 %v271
      %v336 = vunpack.c.l.b16 %v272
      %v337 = vunpack.c.l.b16 %v273
      %v338 = vunpack.c.l.b16 %v274
      %v339 = vunpack.c.l.b16 %v275
      %v340 = vunpack.c.l.b16 %v276
      %v341 = vunpack.c.l.b16 %v277
      %v342 = vunpack.c.l.b16 %v278
      %v343 = vunpack.c.l.b16 %v279
      %v344 = vunpack.c.l.b16 %v280
      %v345 = vunpack.c.l.b16 %v281
      %v346 = vunpack.c.l.b16 %v282
      %v347 = vunpack.c.l.b16 %v283
      %v348 = vunpack.c.l.b16 %v284
      %v349 = vunpack.c.l.b16 %v285
      %v350 = vpack.c.b16 %v319, %v318
      %v351 = vpack.c.b16 %v321, %v320
      %v352 = vpack.c.b16 %v323, %v322
      %v353 = vpack.c.b16 %v325, %v324
      %v354 = vpack.c.b16 %v327, %v326
      %v355 = vpack.c.b16 %v329, %v328
      %v356 = vpack.c.b16 %v331, %v330
      %v357 = vpack.c.b16 %v333, %v332
      %v358 = vpack.c.b16 %v335, %v334
      %v359 = vpack.c.b16 %v337, %v336
      %v360 = vpack.c.b16 %v339, %v338
      %v361 = vpack.c.b16 %v341, %v340
      %v362 = vpack.c.b16 %v343, %v342
      %v363 = vpack.c.b16 %v345, %v344
      %v364 = vpack.c.b16 %v347, %v346
      %v365 = vpack.c.b16 %v349, %v348
      %v382 = vmax.bf16 %v350, %v351
      %v383 = vmax.bf16 %v351, %v352
      %v384 = vmax.bf16 %v352, %v353
      %v385 = vmax.bf16 %v353, %v354
      %v386 = vmax.bf16 %v354, %v355
      %v387 = vmax.bf16 %v355, %v356
      %v388 = vmax.bf16 %v356, %v357
      %v389 = vmax.bf16 %v357, %v358
      %v390 = vmax.bf16 %v358, %v359
      %v391 = vmax.bf16 %v359, %v360
      %v392 = vmax.bf16 %v360, %v361
      %v393 = vmax.bf16 %v361, %v362
      %v394 = vmax.bf16 %v362, %v363
      %v395 = vmax.bf16 %v363, %v364
      %v396 = vmax.bf16 %v382, %v352
      %v397 = vmax.bf16 %v383, %v353
      %v398 = vmax.bf16 %v384, %v354
      %v399 = vmax.bf16 %v385, %v355
      %v400 = vmax.bf16 %v386, %v356
      %v401 = vmax.bf16 %v387, %v357
      %v402 = vmax.bf16 %v388, %v358
      %v403 = vmax.bf16 %v389, %v359
      %v404 = vmax.bf16 %v390, %v360
      %v405 = vmax.bf16 %v391, %v361
      %v406 = vmax.bf16 %v392, %v362
      %v407 = vmax.bf16 %v393, %v363
      %v408 = vmax.bf16 %v394, %v364
      %v409 = vmax.bf16 %v395, %v365
      %v410 = vmax.bf16 %v396, %v353
      %v411 = vmax.bf16 %v397, %v354
      %v412 = vmax.bf16 %v398, %v355
      %v413 = vmax.bf16 %v399, %v356
      %v414 = vmax.bf16 %v400, %v357
      %v415 = vmax.bf16 %v401, %v358
      %v416 = vmax.bf16 %v402, %v359
      %v417 = vmax.bf16 %v403, %v360
      %v418 = vmax.bf16 %v404, %v361
      %v419 = vmax.bf16 %v405, %v362
      %v420 = vmax.bf16 %v406, %v363
      %v421 = vmax.bf16 %v407, %v364
      %v422 = vmax.bf16 %v408, %v365
      %v423 = vmax.bf16 %v410, %v354
      %v424 = vmax.bf16 %v411, %v355
      %v425 = vmax.bf16 %v412, %v356
      %v426 = vmax.bf16 %v413, %v357
      %v427 = vmax.bf16 %v414, %v358
      %v428 = vmax.bf16 %v415, %v359
      %v429 = vmax.bf16 %v416, %v360
      %v430 = vmax.bf16 %v417, %v361
      %v431 = vmax.bf16 %v418, %v362
      %v432 = vmax.bf16 %v419, %v363
      %v433 = vmax.bf16 %v420, %v364
      %v434 = vmax.bf16 %v421, %v365
      %v451 = vrot.slane %v396, 7
      %v452 = vrot.slane %v410, 7
      %v453 = vrot.slane %v423, 7
      %v454 = vrot.slane %v424, 7
      %v455 = vrot.slane %v425, 7
      %v456 = vrot.slane %v426, 7
      %v457 = vrot.slane %v427, 7
      %v458 = vrot.slane %v428, 7
      %v459 = vrot.slane %v429, 7
      %v460 = vrot.slane %v430, 7
      %v461 = vrot.slane %v431, 7
      %v462 = vrot.slane %v432, 7
      %v463 = vrot.slane %v433, 7
      %v464 = vrot.slane %v434, 7
      %v465 = vrot.slane %v422, 7
      %v466 = vrot.slane %v409, 7
      %vm467 = vcmask 1040384
      %v470 = vsel %vm467, 4286644096, %v451
      %v473 = vsel %vm467, 4286644096, %v452
      %v476 = vsel %vm467, 4286644096, %v453
      %v479 = vsel %vm467, 4286644096, %v454
      %v482 = vsel %vm467, 4286644096, %v455
      %v485 = vsel %vm467, 4286644096, %v456
      %v488 = vsel %vm467, 4286644096, %v457
      %v491 = vsel %vm467, 4286644096, %v458
      %v494 = vsel %vm467, 4286644096, %v459
      %v497 = vsel %vm467, 4286644096, %v460
      %v500 = vsel %vm467, 4286644096, %v461
      %v503 = vsel %vm467, 4286644096, %v462
      %v506 = vsel %vm467, 4286644096, %v463
      %v509 = vsel %vm467, 4286644096, %v464
      %v512 = vsel %vm467, 4286644096, %v465
      %v515 = vsel %vm467, 4286644096, %v466
      %v517 = vsel %vm467, %v451, 4286644096
      %v518 = vsel %vm467, %v452, 4286644096
      %v519 = vsel %vm467, %v453, 4286644096
      %v520 = vsel %vm467, %v454, 4286644096
      %v521 = vsel %vm467, %v455, 4286644096
      %v522 = vsel %vm467, %v456, 4286644096
      %v523 = vsel %vm467, %v457, 4286644096
      %v524 = vsel %vm467, %v458, 4286644096
      %v525 = vsel %vm467, %v459, 4286644096
      %v526 = vsel %vm467, %v460, 4286644096
      %v527 = vsel %vm467, %v461, 4286644096
      %v528 = vsel %vm467, %v462, 4286644096
      %v529 = vsel %vm467, %v463, 4286644096
      %v530 = vsel %vm467, %v464, 4286644096
      %v531 = vsel %vm467, %v465, 4286644096
      %v532 = vsel %vm467, %v466, 4286644096
      %vm533 = vsmask.f32 7424
      %v534 = vshrl.u32 %v470, 16
      %v536 = vshll.u32 %v470, 16
      %v538 = vrot.slane %v536, 1
      %v539 = vor.u32 %v534, %v538
      %v540 = vshll.u32 %v517, 16
      %v542 = vrot.slane %v540, 1
      %v543 = vsel %vm533, %v539, %v542
      %v544 = vshrl.u32 %v473, 16
      %v546 = vshll.u32 %v473, 16
      %v548 = vrot.slane %v546, 1
      %v549 = vor.u32 %v544, %v548
      %v550 = vshll.u32 %v518, 16
      %v552 = vrot.slane %v550, 1
      %v553 = vsel %vm533, %v549, %v552
      %v554 = vshrl.u32 %v476, 16
      %v556 = vshll.u32 %v476, 16
      %v558 = vrot.slane %v556, 1
      %v559 = vor.u32 %v554, %v558
      %v560 = vshll.u32 %v519, 16
      %v562 = vrot.slane %v560, 1
      %v563 = vsel %vm533, %v559, %v562
      %v564 = vshrl.u32 %v479, 16
      %v566 = vshll.u32 %v479, 16
      %v568 = vrot.slane %v566, 1
      %v569 = vor.u32 %v564, %v568
      %v570 = vshll.u32 %v520, 16
      %v572 = vrot.slane %v570, 1
      %v573 = vsel %vm533, %v569, %v572
      %v574 = vshrl.u32 %v482, 16
      %v576 = vshll.u32 %v482, 16
      %v578 = vrot.slane %v576, 1
      %v579 = vor.u32 %v574, %v578
      %v580 = vshll.u32 %v521, 16
      %v582 = vrot.slane %v580, 1
      %v583 = vsel %vm533, %v579, %v582
      %v584 = vshrl.u32 %v485, 16
      %v586 = vshll.u32 %v485, 16
      %v588 = vrot.slane %v586, 1
      %v589 = vor.u32 %v584, %v588
      %v590 = vshll.u32 %v522, 16
      %v592 = vrot.slane %v590, 1
      %v593 = vsel %vm533, %v589, %v592
      %v594 = vshrl.u32 %v488, 16
      %v596 = vshll.u32 %v488, 16
      %v598 = vrot.slane %v596, 1
      %v599 = vor.u32 %v594, %v598
      %v600 = vshll.u32 %v523, 16
      %v602 = vrot.slane %v600, 1
      %v603 = vsel %vm533, %v599, %v602
      %v604 = vshrl.u32 %v491, 16
      %v606 = vshll.u32 %v491, 16
      %v608 = vrot.slane %v606, 1
      %v609 = vor.u32 %v604, %v608
      %v610 = vshll.u32 %v524, 16
      %v612 = vrot.slane %v610, 1
      %v613 = vsel %vm533, %v609, %v612
      %v614 = vshrl.u32 %v494, 16
      %v616 = vshll.u32 %v494, 16
      %v618 = vrot.slane %v616, 1
      %v619 = vor.u32 %v614, %v618
      %v620 = vshll.u32 %v525, 16
      %v622 = vrot.slane %v620, 1
      %v623 = vsel %vm533, %v619, %v622
      %v624 = vshrl.u32 %v497, 16
      %v626 = vshll.u32 %v497, 16
      %v628 = vrot.slane %v626, 1
      %v629 = vor.u32 %v624, %v628
      %v630 = vshll.u32 %v526, 16
      %v632 = vrot.slane %v630, 1
      %v633 = vsel %vm533, %v629, %v632
      %v634 = vshrl.u32 %v500, 16
      %v636 = vshll.u32 %v500, 16
      %v638 = vrot.slane %v636, 1
      %v639 = vor.u32 %v634, %v638
      %v640 = vshll.u32 %v527, 16
      %v642 = vrot.slane %v640, 1
      %v643 = vsel %vm533, %v639, %v642
      %v644 = vshrl.u32 %v503, 16
      %v646 = vshll.u32 %v503, 16
      %v648 = vrot.slane %v646, 1
      %v649 = vor.u32 %v644, %v648
      %v650 = vshll.u32 %v528, 16
      %v652 = vrot.slane %v650, 1
      %v653 = vsel %vm533, %v649, %v652
      %v654 = vshrl.u32 %v506, 16
      %v656 = vshll.u32 %v506, 16
      %v658 = vrot.slane %v656, 1
      %v659 = vor.u32 %v654, %v658
      %v660 = vshll.u32 %v529, 16
      %v662 = vrot.slane %v660, 1
      %v663 = vsel %vm533, %v659, %v662
      %v664 = vshrl.u32 %v509, 16
      %v666 = vshll.u32 %v509, 16
      %v668 = vrot.slane %v666, 1
      %v669 = vor.u32 %v664, %v668
      %v670 = vshll.u32 %v530, 16
      %v672 = vrot.slane %v670, 1
      %v673 = vsel %vm533, %v669, %v672
      %v674 = vshrl.u32 %v512, 16
      %v676 = vshll.u32 %v512, 16
      %v678 = vrot.slane %v676, 1
      %v679 = vor.u32 %v674, %v678
      %v680 = vshll.u32 %v531, 16
      %v682 = vrot.slane %v680, 1
      %v683 = vsel %vm533, %v679, %v682
      %v684 = vshrl.u32 %v515, 16
      %v686 = vshll.u32 %v515, 16
      %v688 = vrot.slane %v686, 1
      %v689 = vor.u32 %v684, %v688
      %v690 = vshll.u32 %v532, 16
      %v692 = vrot.slane %v690, 1
      %v693 = vsel %vm533, %v689, %v692
      %v710 = vmax.bf16 %v470, %v543
      %v711 = vmax.bf16 %v473, %v553
      %v712 = vmax.bf16 %v476, %v563
      %v713 = vmax.bf16 %v479, %v573
      %v714 = vmax.bf16 %v482, %v583
      %v715 = vmax.bf16 %v485, %v593
      %v716 = vmax.bf16 %v488, %v603
      %v717 = vmax.bf16 %v491, %v613
      %v718 = vmax.bf16 %v494, %v623
      %v719 = vmax.bf16 %v497, %v633
      %v720 = vmax.bf16 %v500, %v643
      %v721 = vmax.bf16 %v503, %v653
      %v722 = vmax.bf16 %v506, %v663
      %v723 = vmax.bf16 %v509, %v673
      %v724 = vmax.bf16 %v512, %v683
      %v725 = vmax.bf16 %v515, %v693
      %vm758 = vcmask 1046528
      %v759 = vrot.slane %v470, 1
      %v760 = vrot.slane %v517, 1
      %v761 = vsel %vm758, %v759, %v760
      %v762 = vrot.slane %v473, 1
      %v763 = vrot.slane %v518, 1
      %v764 = vsel %vm758, %v762, %v763
      %v765 = vrot.slane %v476, 1
      %v766 = vrot.slane %v519, 1
      %v767 = vsel %vm758, %v765, %v766
      %v768 = vrot.slane %v479, 1
      %v769 = vrot.slane %v520, 1
      %v770 = vsel %vm758, %v768, %v769
      %v771 = vrot.slane %v482, 1
      %v772 = vrot.slane %v521, 1
      %v773 = vsel %vm758, %v771, %v772
      %v774 = vrot.slane %v485, 1
      %v775 = vrot.slane %v522, 1
      %v776 = vsel %vm758, %v774, %v775
      %v777 = vrot.slane %v488, 1
      %v778 = vrot.slane %v523, 1
      %v779 = vsel %vm758, %v777, %v778
      %v780 = vrot.slane %v491, 1
      %v781 = vrot.slane %v524, 1
      %v782 = vsel %vm758, %v780, %v781
      %v783 = vrot.slane %v494, 1
      %v784 = vrot.slane %v525, 1
      %v785 = vsel %vm758, %v783, %v784
      %v786 = vrot.slane %v497, 1
      %v787 = vrot.slane %v526, 1
      %v788 = vsel %vm758, %v786, %v787
      %v789 = vrot.slane %v500, 1
      %v790 = vrot.slane %v527, 1
      %v791 = vsel %vm758, %v789, %v790
      %v792 = vrot.slane %v503, 1
      %v793 = vrot.slane %v528, 1
      %v794 = vsel %vm758, %v792, %v793
      %v795 = vrot.slane %v506, 1
      %v796 = vrot.slane %v529, 1
      %v797 = vsel %vm758, %v795, %v796
      %v798 = vrot.slane %v509, 1
      %v799 = vrot.slane %v530, 1
      %v800 = vsel %vm758, %v798, %v799
      %v801 = vrot.slane %v512, 1
      %v802 = vrot.slane %v531, 1
      %v803 = vsel %vm758, %v801, %v802
      %v804 = vrot.slane %v515, 1
      %v805 = vrot.slane %v532, 1
      %v806 = vsel %vm758, %v804, %v805
      %v823 = vmax.bf16 %v710, %v761
      %v824 = vmax.bf16 %v711, %v764
      %v825 = vmax.bf16 %v712, %v767
      %v826 = vmax.bf16 %v713, %v770
      %v827 = vmax.bf16 %v714, %v773
      %v828 = vmax.bf16 %v715, %v776
      %v829 = vmax.bf16 %v716, %v779
      %v830 = vmax.bf16 %v717, %v782
      %v831 = vmax.bf16 %v718, %v785
      %v832 = vmax.bf16 %v719, %v788
      %v833 = vmax.bf16 %v720, %v791
      %v834 = vmax.bf16 %v721, %v794
      %v835 = vmax.bf16 %v722, %v797
      %v836 = vmax.bf16 %v723, %v800
      %v837 = vmax.bf16 %v724, %v803
      %v838 = vmax.bf16 %v725, %v806
      %vm839 = vsmask.f32 6400
      %v840 = vrot.slane %v534, 1
      %v841 = vrot.slane %v536, 2
      %v842 = vor.u32 %v840, %v841
      %v843 = vshrl.u32 %v517, 16
      %v845 = vrot.slane %v843, 1
      %v846 = vrot.slane %v540, 2
      %v847 = vor.u32 %v845, %v846
      %v848 = vsel %vm839, %v842, %v847
      %v849 = vrot.slane %v544, 1
      %v850 = vrot.slane %v546, 2
      %v851 = vor.u32 %v849, %v850
      %v852 = vshrl.u32 %v518, 16
      %v854 = vrot.slane %v852, 1
      %v855 = vrot.slane %v550, 2
      %v856 = vor.u32 %v854, %v855
      %v857 = vsel %vm839, %v851, %v856
      %v858 = vrot.slane %v554, 1
      %v859 = vrot.slane %v556, 2
      %v860 = vor.u32 %v858, %v859
      %v861 = vshrl.u32 %v519, 16
      %v863 = vrot.slane %v861, 1
      %v864 = vrot.slane %v560, 2
      %v865 = vor.u32 %v863, %v864
      %v866 = vsel %vm839, %v860, %v865
      %v867 = vrot.slane %v564, 1
      %v868 = vrot.slane %v566, 2
      %v869 = vor.u32 %v867, %v868
      %v870 = vshrl.u32 %v520, 16
      %v872 = vrot.slane %v870, 1
      %v873 = vrot.slane %v570, 2
      %v874 = vor.u32 %v872, %v873
      %v875 = vsel %vm839, %v869, %v874
      %v876 = vrot.slane %v574, 1
      %v877 = vrot.slane %v576, 2
      %v878 = vor.u32 %v876, %v877
      %v879 = vshrl.u32 %v521, 16
      %v881 = vrot.slane %v879, 1
      %v882 = vrot.slane %v580, 2
      %v883 = vor.u32 %v881, %v882
      %v884 = vsel %vm839, %v878, %v883
      %v885 = vrot.slane %v584, 1
      %v886 = vrot.slane %v586, 2
      %v887 = vor.u32 %v885, %v886
      %v888 = vshrl.u32 %v522, 16
      %v890 = vrot.slane %v888, 1
      %v891 = vrot.slane %v590, 2
      %v892 = vor.u32 %v890, %v891
      %v893 = vsel %vm839, %v887, %v892
      %v894 = vrot.slane %v594, 1
      %v895 = vrot.slane %v596, 2
      %v896 = vor.u32 %v894, %v895
      %v897 = vshrl.u32 %v523, 16
      %v899 = vrot.slane %v897, 1
      %v900 = vrot.slane %v600, 2
      %v901 = vor.u32 %v899, %v900
      %v902 = vsel %vm839, %v896, %v901
      %v903 = vrot.slane %v604, 1
      %v904 = vrot.slane %v606, 2
      %v905 = vor.u32 %v903, %v904
      %v906 = vshrl.u32 %v524, 16
      %v908 = vrot.slane %v906, 1
      %v909 = vrot.slane %v610, 2
      %v910 = vor.u32 %v908, %v909
      %v911 = vsel %vm839, %v905, %v910
      %v912 = vrot.slane %v614, 1
      %v913 = vrot.slane %v616, 2
      %v914 = vor.u32 %v912, %v913
      %v915 = vshrl.u32 %v525, 16
      %v917 = vrot.slane %v915, 1
      %v918 = vrot.slane %v620, 2
      %v919 = vor.u32 %v917, %v918
      %v920 = vsel %vm839, %v914, %v919
      %v921 = vrot.slane %v624, 1
      %v922 = vrot.slane %v626, 2
      %v923 = vor.u32 %v921, %v922
      %v924 = vshrl.u32 %v526, 16
      %v926 = vrot.slane %v924, 1
      %v927 = vrot.slane %v630, 2
      %v928 = vor.u32 %v926, %v927
      %v929 = vsel %vm839, %v923, %v928
      %v930 = vrot.slane %v634, 1
      %v931 = vrot.slane %v636, 2
      %v932 = vor.u32 %v930, %v931
      %v933 = vshrl.u32 %v527, 16
      %v935 = vrot.slane %v933, 1
      %v936 = vrot.slane %v640, 2
      %v937 = vor.u32 %v935, %v936
      %v938 = vsel %vm839, %v932, %v937
      %v939 = vrot.slane %v644, 1
      %v940 = vrot.slane %v646, 2
      %v941 = vor.u32 %v939, %v940
      %v942 = vshrl.u32 %v528, 16
      %v944 = vrot.slane %v942, 1
      %v945 = vrot.slane %v650, 2
      %v946 = vor.u32 %v944, %v945
      %v947 = vsel %vm839, %v941, %v946
      %v948 = vrot.slane %v654, 1
      %v949 = vrot.slane %v656, 2
      %v950 = vor.u32 %v948, %v949
      %v951 = vshrl.u32 %v529, 16
      %v953 = vrot.slane %v951, 1
      %v954 = vrot.slane %v660, 2
      %v955 = vor.u32 %v953, %v954
      %v956 = vsel %vm839, %v950, %v955
      %v957 = vrot.slane %v664, 1
      %v958 = vrot.slane %v666, 2
      %v959 = vor.u32 %v957, %v958
      %v960 = vshrl.u32 %v530, 16
      %v962 = vrot.slane %v960, 1
      %v963 = vrot.slane %v670, 2
      %v964 = vor.u32 %v962, %v963
      %v965 = vsel %vm839, %v959, %v964
      %v966 = vrot.slane %v674, 1
      %v967 = vrot.slane %v676, 2
      %v968 = vor.u32 %v966, %v967
      %v969 = vshrl.u32 %v531, 16
      %v971 = vrot.slane %v969, 1
      %v972 = vrot.slane %v680, 2
      %v973 = vor.u32 %v971, %v972
      %v974 = vsel %vm839, %v968, %v973
      %v975 = vrot.slane %v684, 1
      %v976 = vrot.slane %v686, 2
      %v977 = vor.u32 %v975, %v976
      %v978 = vshrl.u32 %v532, 16
      %v980 = vrot.slane %v978, 1
      %v981 = vrot.slane %v690, 2
      %v982 = vor.u32 %v980, %v981
      %v983 = vsel %vm839, %v977, %v982
      %v1000 = vmax.bf16 %v823, %v848
      %v1001 = vmax.bf16 %v824, %v857
      %v1002 = vmax.bf16 %v825, %v866
      %v1003 = vmax.bf16 %v826, %v875
      %v1004 = vmax.bf16 %v827, %v884
      %v1005 = vmax.bf16 %v828, %v893
      %v1006 = vmax.bf16 %v829, %v902
      %v1007 = vmax.bf16 %v830, %v911
      %v1008 = vmax.bf16 %v831, %v920
      %v1009 = vmax.bf16 %v832, %v929
      %v1010 = vmax.bf16 %v833, %v938
      %v1011 = vmax.bf16 %v834, %v947
      %v1012 = vmax.bf16 %v835, %v956
      %v1013 = vmax.bf16 %v836, %v965
      %v1014 = vmax.bf16 %v837, %v974
      %v1015 = vmax.bf16 %v838, %v983
      %vm1016 = vcmask 1045504
      %v1017 = vrot.slane %v470, 2
      %v1018 = vrot.slane %v517, 2
      %v1019 = vsel %vm1016, %v1017, %v1018
      %v1020 = vrot.slane %v473, 2
      %v1021 = vrot.slane %v518, 2
      %v1022 = vsel %vm1016, %v1020, %v1021
      %v1023 = vrot.slane %v476, 2
      %v1024 = vrot.slane %v519, 2
      %v1025 = vsel %vm1016, %v1023, %v1024
      %v1026 = vrot.slane %v479, 2
      %v1027 = vrot.slane %v520, 2
      %v1028 = vsel %vm1016, %v1026, %v1027
      %v1029 = vrot.slane %v482, 2
      %v1030 = vrot.slane %v521, 2
      %v1031 = vsel %vm1016, %v1029, %v1030
      %v1032 = vrot.slane %v485, 2
      %v1033 = vrot.slane %v522, 2
      %v1034 = vsel %vm1016, %v1032, %v1033
      %v1035 = vrot.slane %v488, 2
      %v1036 = vrot.slane %v523, 2
      %v1037 = vsel %vm1016, %v1035, %v1036
      %v1038 = vrot.slane %v491, 2
      %v1039 = vrot.slane %v524, 2
      %v1040 = vsel %vm1016, %v1038, %v1039
      %v1041 = vrot.slane %v494, 2
      %v1042 = vrot.slane %v525, 2
      %v1043 = vsel %vm1016, %v1041, %v1042
      %v1044 = vrot.slane %v497, 2
      %v1045 = vrot.slane %v526, 2
      %v1046 = vsel %vm1016, %v1044, %v1045
      %v1047 = vrot.slane %v500, 2
      %v1048 = vrot.slane %v527, 2
      %v1049 = vsel %vm1016, %v1047, %v1048
      %v1050 = vrot.slane %v503, 2
      %v1051 = vrot.slane %v528, 2
      %v1052 = vsel %vm1016, %v1050, %v1051
      %v1053 = vrot.slane %v506, 2
      %v1054 = vrot.slane %v529, 2
      %v1055 = vsel %vm1016, %v1053, %v1054
      %v1056 = vrot.slane %v509, 2
      %v1057 = vrot.slane %v530, 2
      %v1058 = vsel %vm1016, %v1056, %v1057
      %v1059 = vrot.slane %v512, 2
      %v1060 = vrot.slane %v531, 2
      %v1061 = vsel %vm1016, %v1059, %v1060
      %v1062 = vrot.slane %v515, 2
      %v1063 = vrot.slane %v532, 2
      %v1064 = vsel %vm1016, %v1062, %v1063
      %v1081 = vmax.bf16 %v1000, %v1019
      %v1082 = vmax.bf16 %v1001, %v1022
      %v1083 = vmax.bf16 %v1002, %v1025
      %v1084 = vmax.bf16 %v1003, %v1028
      %v1085 = vmax.bf16 %v1004, %v1031
      %v1086 = vmax.bf16 %v1005, %v1034
      %v1087 = vmax.bf16 %v1006, %v1037
      %v1088 = vmax.bf16 %v1007, %v1040
      %v1089 = vmax.bf16 %v1008, %v1043
      %v1090 = vmax.bf16 %v1009, %v1046
      %v1091 = vmax.bf16 %v1010, %v1049
      %v1092 = vmax.bf16 %v1011, %v1052
      %v1093 = vmax.bf16 %v1012, %v1055
      %v1094 = vmax.bf16 %v1013, %v1058
      %v1095 = vmax.bf16 %v1014, %v1061
      %v1096 = vmax.bf16 %v1015, %v1064
      %v1097 = vmax.bf16 %v1081, %v1082
      %v1098 = vmax.bf16 %v1082, %v1083
      %v1099 = vmax.bf16 %v1083, %v1084
      %v1100 = vmax.bf16 %v1084, %v1085
      %v1101 = vmax.bf16 %v1085, %v1086
      %v1102 = vmax.bf16 %v1086, %v1087
      %v1103 = vmax.bf16 %v1087, %v1088
      %v1104 = vmax.bf16 %v1088, %v1089
      %v1105 = vmax.bf16 %v1089, %v1090
      %v1106 = vmax.bf16 %v1090, %v1091
      %v1107 = vmax.bf16 %v1091, %v1092
      %v1108 = vmax.bf16 %v1092, %v1093
      %v1109 = vmax.bf16 %v1093, %v1094
      %v1110 = vmax.bf16 %v1094, %v1095
      %v1111 = vmax.bf16 %v1097, %v1083
      %v1112 = vmax.bf16 %v1098, %v1084
      %v1113 = vmax.bf16 %v1099, %v1085
      %v1114 = vmax.bf16 %v1100, %v1086
      %v1115 = vmax.bf16 %v1101, %v1087
      %v1116 = vmax.bf16 %v1102, %v1088
      %v1117 = vmax.bf16 %v1103, %v1089
      %v1118 = vmax.bf16 %v1104, %v1090
      %v1119 = vmax.bf16 %v1105, %v1091
      %v1120 = vmax.bf16 %v1106, %v1092
      %v1121 = vmax.bf16 %v1107, %v1093
      %v1122 = vmax.bf16 %v1108, %v1094
      %v1123 = vmax.bf16 %v1109, %v1095
      %v1124 = vmax.bf16 %v1110, %v1096
      %v1125 = vmax.bf16 %v1111, %v1084
      %v1126 = vmax.bf16 %v1112, %v1085
      %v1127 = vmax.bf16 %v1113, %v1086
      %v1128 = vmax.bf16 %v1114, %v1087
      %v1129 = vmax.bf16 %v1115, %v1088
      %v1130 = vmax.bf16 %v1116, %v1089
      %v1131 = vmax.bf16 %v1117, %v1090
      %v1132 = vmax.bf16 %v1118, %v1091
      %v1133 = vmax.bf16 %v1119, %v1092
      %v1134 = vmax.bf16 %v1120, %v1093
      %v1135 = vmax.bf16 %v1121, %v1094
      %v1136 = vmax.bf16 %v1122, %v1095
      %v1137 = vmax.bf16 %v1123, %v1096
      %v1138 = vmax.bf16 %v1125, %v1085
      %v1139 = vmax.bf16 %v1126, %v1086
      %v1140 = vmax.bf16 %v1127, %v1087
      %v1141 = vmax.bf16 %v1128, %v1088
      %v1142 = vmax.bf16 %v1129, %v1089
      %v1143 = vmax.bf16 %v1130, %v1090
      %v1144 = vmax.bf16 %v1131, %v1091
      %v1145 = vmax.bf16 %v1132, %v1092
      %v1146 = vmax.bf16 %v1133, %v1093
      %v1147 = vmax.bf16 %v1134, %v1094
      %v1148 = vmax.bf16 %v1135, %v1095
      %v1149 = vmax.bf16 %v1136, %v1096
      %v1166 = vrot.slane %v1111, 7
      %v1167 = vrot.slane %v1125, 7
      %v1168 = vrot.slane %v1138, 7
      %v1169 = vrot.slane %v1139, 7
      %v1170 = vrot.slane %v1140, 7
      %v1171 = vrot.slane %v1141, 7
      %v1172 = vrot.slane %v1142, 7
      %v1173 = vrot.slane %v1143, 7
      %v1174 = vrot.slane %v1144, 7
      %v1175 = vrot.slane %v1145, 7
      %v1176 = vrot.slane %v1146, 7
      %v1177 = vrot.slane %v1147, 7
      %v1178 = vrot.slane %v1148, 7
      %v1179 = vrot.slane %v1149, 7
      %v1180 = vrot.slane %v1137, 7
      %v1181 = vrot.slane %v1124, 7
      %v1183 = vsel %vm467, 4286644096, %v1166
      %v1186 = vsel %vm467, 4286644096, %v1167
      %v1189 = vsel %vm467, 4286644096, %v1168
      %v1192 = vsel %vm467, 4286644096, %v1169
      %v1195 = vsel %vm467, 4286644096, %v1170
      %v1198 = vsel %vm467, 4286644096, %v1171
      %v1201 = vsel %vm467, 4286644096, %v1172
      %v1204 = vsel %vm467, 4286644096, %v1173
      %v1207 = vsel %vm467, 4286644096, %v1174
      %v1210 = vsel %vm467, 4286644096, %v1175
      %v1213 = vsel %vm467, 4286644096, %v1176
      %v1216 = vsel %vm467, 4286644096, %v1177
      %v1219 = vsel %vm467, 4286644096, %v1178
      %v1222 = vsel %vm467, 4286644096, %v1179
      %v1225 = vsel %vm467, 4286644096, %v1180
      %v1228 = vsel %vm467, 4286644096, %v1181
      %v1230 = vsel %vm467, %v1166, 4286644096
      %v1231 = vsel %vm467, %v1167, 4286644096
      %v1232 = vsel %vm467, %v1168, 4286644096
      %v1233 = vsel %vm467, %v1169, 4286644096
      %v1234 = vsel %vm467, %v1170, 4286644096
      %v1235 = vsel %vm467, %v1171, 4286644096
      %v1236 = vsel %vm467, %v1172, 4286644096
      %v1237 = vsel %vm467, %v1173, 4286644096
      %v1238 = vsel %vm467, %v1174, 4286644096
      %v1239 = vsel %vm467, %v1175, 4286644096
      %v1240 = vsel %vm467, %v1176, 4286644096
      %v1241 = vsel %vm467, %v1177, 4286644096
      %v1242 = vsel %vm467, %v1178, 4286644096
      %v1243 = vsel %vm467, %v1179, 4286644096
      %v1244 = vsel %vm467, %v1180, 4286644096
      %v1245 = vsel %vm467, %v1181, 4286644096
      %v1246 = vshrl.u32 %v1183, 16
      %v1248 = vshll.u32 %v1183, 16
      %v1250 = vrot.slane %v1248, 1
      %v1251 = vor.u32 %v1246, %v1250
      %v1252 = vshll.u32 %v1230, 16
      %v1254 = vrot.slane %v1252, 1
      %v1255 = vsel %vm533, %v1251, %v1254
      %v1256 = vshrl.u32 %v1186, 16
      %v1258 = vshll.u32 %v1186, 16
      %v1260 = vrot.slane %v1258, 1
      %v1261 = vor.u32 %v1256, %v1260
      %v1262 = vshll.u32 %v1231, 16
      %v1264 = vrot.slane %v1262, 1
      %v1265 = vsel %vm533, %v1261, %v1264
      %v1266 = vshrl.u32 %v1189, 16
      %v1268 = vshll.u32 %v1189, 16
      %v1270 = vrot.slane %v1268, 1
      %v1271 = vor.u32 %v1266, %v1270
      %v1272 = vshll.u32 %v1232, 16
      %v1274 = vrot.slane %v1272, 1
      %v1275 = vsel %vm533, %v1271, %v1274
      %v1276 = vshrl.u32 %v1192, 16
      %v1278 = vshll.u32 %v1192, 16
      %v1280 = vrot.slane %v1278, 1
      %v1281 = vor.u32 %v1276, %v1280
      %v1282 = vshll.u32 %v1233, 16
      %v1284 = vrot.slane %v1282, 1
      %v1285 = vsel %vm533, %v1281, %v1284
      %v1286 = vshrl.u32 %v1195, 16
      %v1288 = vshll.u32 %v1195, 16
      %v1290 = vrot.slane %v1288, 1
      %v1291 = vor.u32 %v1286, %v1290
      %v1292 = vshll.u32 %v1234, 16
      %v1294 = vrot.slane %v1292, 1
      %v1295 = vsel %vm533, %v1291, %v1294
      %v1296 = vshrl.u32 %v1198, 16
      %v1298 = vshll.u32 %v1198, 16
      %v1300 = vrot.slane %v1298, 1
      %v1301 = vor.u32 %v1296, %v1300
      %v1302 = vshll.u32 %v1235, 16
      %v1304 = vrot.slane %v1302, 1
      %v1305 = vsel %vm533, %v1301, %v1304
      %v1306 = vshrl.u32 %v1201, 16
      %v1308 = vshll.u32 %v1201, 16
      %v1310 = vrot.slane %v1308, 1
      %v1311 = vor.u32 %v1306, %v1310
      %v1312 = vshll.u32 %v1236, 16
      %v1314 = vrot.slane %v1312, 1
      %v1315 = vsel %vm533, %v1311, %v1314
      %v1316 = vshrl.u32 %v1204, 16
      %v1318 = vshll.u32 %v1204, 16
      %v1320 = vrot.slane %v1318, 1
      %v1321 = vor.u32 %v1316, %v1320
      %v1322 = vshll.u32 %v1237, 16
      %v1324 = vrot.slane %v1322, 1
      %v1325 = vsel %vm533, %v1321, %v1324
      %v1326 = vshrl.u32 %v1207, 16
      %v1328 = vshll.u32 %v1207, 16
      %v1330 = vrot.slane %v1328, 1
      %v1331 = vor.u32 %v1326, %v1330
      %v1332 = vshll.u32 %v1238, 16
      %v1334 = vrot.slane %v1332, 1
      %v1335 = vsel %vm533, %v1331, %v1334
      %v1336 = vshrl.u32 %v1210, 16
      %v1338 = vshll.u32 %v1210, 16
      %v1340 = vrot.slane %v1338, 1
      %v1341 = vor.u32 %v1336, %v1340
      %v1342 = vshll.u32 %v1239, 16
      %v1344 = vrot.slane %v1342, 1
      %v1345 = vsel %vm533, %v1341, %v1344
      %v1346 = vshrl.u32 %v1213, 16
      %v1348 = vshll.u32 %v1213, 16
      %v1350 = vrot.slane %v1348, 1
      %v1351 = vor.u32 %v1346, %v1350
      %v1352 = vshll.u32 %v1240, 16
      %v1354 = vrot.slane %v1352, 1
      %v1355 = vsel %vm533, %v1351, %v1354
      %v1356 = vshrl.u32 %v1216, 16
      %v1358 = vshll.u32 %v1216, 16
      %v1360 = vrot.slane %v1358, 1
      %v1361 = vor.u32 %v1356, %v1360
      %v1362 = vshll.u32 %v1241, 16
      %v1364 = vrot.slane %v1362, 1
      %v1365 = vsel %vm533, %v1361, %v1364
      %v1366 = vshrl.u32 %v1219, 16
      %v1368 = vshll.u32 %v1219, 16
      %v1370 = vrot.slane %v1368, 1
      %v1371 = vor.u32 %v1366, %v1370
      %v1372 = vshll.u32 %v1242, 16
      %v1374 = vrot.slane %v1372, 1
      %v1375 = vsel %vm533, %v1371, %v1374
      %v1376 = vshrl.u32 %v1222, 16
      %v1378 = vshll.u32 %v1222, 16
      %v1380 = vrot.slane %v1378, 1
      %v1381 = vor.u32 %v1376, %v1380
      %v1382 = vshll.u32 %v1243, 16
      %v1384 = vrot.slane %v1382, 1
      %v1385 = vsel %vm533, %v1381, %v1384
      %v1386 = vshrl.u32 %v1225, 16
      %v1388 = vshll.u32 %v1225, 16
      %v1390 = vrot.slane %v1388, 1
      %v1391 = vor.u32 %v1386, %v1390
      %v1392 = vshll.u32 %v1244, 16
      %v1394 = vrot.slane %v1392, 1
      %v1395 = vsel %vm533, %v1391, %v1394
      %v1396 = vshrl.u32 %v1228, 16
      %v1398 = vshll.u32 %v1228, 16
      %v1400 = vrot.slane %v1398, 1
      %v1401 = vor.u32 %v1396, %v1400
      %v1402 = vshll.u32 %v1245, 16
      %v1404 = vrot.slane %v1402, 1
      %v1405 = vsel %vm533, %v1401, %v1404
      %v1422 = vmax.bf16 %v1183, %v1255
      %v1423 = vmax.bf16 %v1186, %v1265
      %v1424 = vmax.bf16 %v1189, %v1275
      %v1425 = vmax.bf16 %v1192, %v1285
      %v1426 = vmax.bf16 %v1195, %v1295
      %v1427 = vmax.bf16 %v1198, %v1305
      %v1428 = vmax.bf16 %v1201, %v1315
      %v1429 = vmax.bf16 %v1204, %v1325
      %v1430 = vmax.bf16 %v1207, %v1335
      %v1431 = vmax.bf16 %v1210, %v1345
      %v1432 = vmax.bf16 %v1213, %v1355
      %v1433 = vmax.bf16 %v1216, %v1365
      %v1434 = vmax.bf16 %v1219, %v1375
      %v1435 = vmax.bf16 %v1222, %v1385
      %v1436 = vmax.bf16 %v1225, %v1395
      %v1437 = vmax.bf16 %v1228, %v1405
      %v1470 = vrot.slane %v1183, 1
      %v1471 = vrot.slane %v1230, 1
      %v1472 = vsel %vm758, %v1470, %v1471
      %v1473 = vrot.slane %v1186, 1
      %v1474 = vrot.slane %v1231, 1
      %v1475 = vsel %vm758, %v1473, %v1474
      %v1476 = vrot.slane %v1189, 1
      %v1477 = vrot.slane %v1232, 1
      %v1478 = vsel %vm758, %v1476, %v1477
      %v1479 = vrot.slane %v1192, 1
      %v1480 = vrot.slane %v1233, 1
      %v1481 = vsel %vm758, %v1479, %v1480
      %v1482 = vrot.slane %v1195, 1
      %v1483 = vrot.slane %v1234, 1
      %v1484 = vsel %vm758, %v1482, %v1483
      %v1485 = vrot.slane %v1198, 1
      %v1486 = vrot.slane %v1235, 1
      %v1487 = vsel %vm758, %v1485, %v1486
      %v1488 = vrot.slane %v1201, 1
      %v1489 = vrot.slane %v1236, 1
      %v1490 = vsel %vm758, %v1488, %v1489
      %v1491 = vrot.slane %v1204, 1
      %v1492 = vrot.slane %v1237, 1
      %v1493 = vsel %vm758, %v1491, %v1492
      %v1494 = vrot.slane %v1207, 1
      %v1495 = vrot.slane %v1238, 1
      %v1496 = vsel %vm758, %v1494, %v1495
      %v1497 = vrot.slane %v1210, 1
      %v1498 = vrot.slane %v1239, 1
      %v1499 = vsel %vm758, %v1497, %v1498
      %v1500 = vrot.slane %v1213, 1
      %v1501 = vrot.slane %v1240, 1
      %v1502 = vsel %vm758, %v1500, %v1501
      %v1503 = vrot.slane %v1216, 1
      %v1504 = vrot.slane %v1241, 1
      %v1505 = vsel %vm758, %v1503, %v1504
      %v1506 = vrot.slane %v1219, 1
      %v1507 = vrot.slane %v1242, 1
      %v1508 = vsel %vm758, %v1506, %v1507
      %v1509 = vrot.slane %v1222, 1
      %v1510 = vrot.slane %v1243, 1
      %v1511 = vsel %vm758, %v1509, %v1510
      %v1512 = vrot.slane %v1225, 1
      %v1513 = vrot.slane %v1244, 1
      %v1514 = vsel %vm758, %v1512, %v1513
      %v1515 = vrot.slane %v1228, 1
      %v1516 = vrot.slane %v1245, 1
      %v1517 = vsel %vm758, %v1515, %v1516
      %v1534 = vmax.bf16 %v1422, %v1472
      %v1535 = vmax.bf16 %v1423, %v1475
      %v1536 = vmax.bf16 %v1424, %v1478
      %v1537 = vmax.bf16 %v1425, %v1481
      %v1538 = vmax.bf16 %v1426, %v1484
      %v1539 = vmax.bf16 %v1427, %v1487
      %v1540 = vmax.bf16 %v1428, %v1490
      %v1541 = vmax.bf16 %v1429, %v1493
      %v1542 = vmax.bf16 %v1430, %v1496
      %v1543 = vmax.bf16 %v1431, %v1499
      %v1544 = vmax.bf16 %v1432, %v1502
      %v1545 = vmax.bf16 %v1433, %v1505
      %v1546 = vmax.bf16 %v1434, %v1508
      %v1547 = vmax.bf16 %v1435, %v1511
      %v1548 = vmax.bf16 %v1436, %v1514
      %v1549 = vmax.bf16 %v1437, %v1517
      %v1550 = vrot.slane %v1246, 1
      %v1551 = vrot.slane %v1248, 2
      %v1552 = vor.u32 %v1550, %v1551
      %v1553 = vshrl.u32 %v1230, 16
      %v1555 = vrot.slane %v1553, 1
      %v1556 = vrot.slane %v1252, 2
      %v1557 = vor.u32 %v1555, %v1556
      %v1558 = vsel %vm839, %v1552, %v1557
      %v1559 = vrot.slane %v1256, 1
      %v1560 = vrot.slane %v1258, 2
      %v1561 = vor.u32 %v1559, %v1560
      %v1562 = vshrl.u32 %v1231, 16
      %v1564 = vrot.slane %v1562, 1
      %v1565 = vrot.slane %v1262, 2
      %v1566 = vor.u32 %v1564, %v1565
      %v1567 = vsel %vm839, %v1561, %v1566
      %v1568 = vrot.slane %v1266, 1
      %v1569 = vrot.slane %v1268, 2
      %v1570 = vor.u32 %v1568, %v1569
      %v1571 = vshrl.u32 %v1232, 16
      %v1573 = vrot.slane %v1571, 1
      %v1574 = vrot.slane %v1272, 2
      %v1575 = vor.u32 %v1573, %v1574
      %v1576 = vsel %vm839, %v1570, %v1575
      %v1577 = vrot.slane %v1276, 1
      %v1578 = vrot.slane %v1278, 2
      %v1579 = vor.u32 %v1577, %v1578
      %v1580 = vshrl.u32 %v1233, 16
      %v1582 = vrot.slane %v1580, 1
      %v1583 = vrot.slane %v1282, 2
      %v1584 = vor.u32 %v1582, %v1583
      %v1585 = vsel %vm839, %v1579, %v1584
      %v1586 = vrot.slane %v1286, 1
      %v1587 = vrot.slane %v1288, 2
      %v1588 = vor.u32 %v1586, %v1587
      %v1589 = vshrl.u32 %v1234, 16
      %v1591 = vrot.slane %v1589, 1
      %v1592 = vrot.slane %v1292, 2
      %v1593 = vor.u32 %v1591, %v1592
      %v1594 = vsel %vm839, %v1588, %v1593
      %v1595 = vrot.slane %v1296, 1
      %v1596 = vrot.slane %v1298, 2
      %v1597 = vor.u32 %v1595, %v1596
      %v1598 = vshrl.u32 %v1235, 16
      %v1600 = vrot.slane %v1598, 1
      %v1601 = vrot.slane %v1302, 2
      %v1602 = vor.u32 %v1600, %v1601
      %v1603 = vsel %vm839, %v1597, %v1602
      %v1604 = vrot.slane %v1306, 1
      %v1605 = vrot.slane %v1308, 2
      %v1606 = vor.u32 %v1604, %v1605
      %v1607 = vshrl.u32 %v1236, 16
      %v1609 = vrot.slane %v1607, 1
      %v1610 = vrot.slane %v1312, 2
      %v1611 = vor.u32 %v1609, %v1610
      %v1612 = vsel %vm839, %v1606, %v1611
      %v1613 = vrot.slane %v1316, 1
      %v1614 = vrot.slane %v1318, 2
      %v1615 = vor.u32 %v1613, %v1614
      %v1616 = vshrl.u32 %v1237, 16
      %v1618 = vrot.slane %v1616, 1
      %v1619 = vrot.slane %v1322, 2
      %v1620 = vor.u32 %v1618, %v1619
      %v1621 = vsel %vm839, %v1615, %v1620
      %v1622 = vrot.slane %v1326, 1
      %v1623 = vrot.slane %v1328, 2
      %v1624 = vor.u32 %v1622, %v1623
      %v1625 = vshrl.u32 %v1238, 16
      %v1627 = vrot.slane %v1625, 1
      %v1628 = vrot.slane %v1332, 2
      %v1629 = vor.u32 %v1627, %v1628
      %v1630 = vsel %vm839, %v1624, %v1629
      %v1631 = vrot.slane %v1336, 1
      %v1632 = vrot.slane %v1338, 2
      %v1633 = vor.u32 %v1631, %v1632
      %v1634 = vshrl.u32 %v1239, 16
      %v1636 = vrot.slane %v1634, 1
      %v1637 = vrot.slane %v1342, 2
      %v1638 = vor.u32 %v1636, %v1637
      %v1639 = vsel %vm839, %v1633, %v1638
      %v1640 = vrot.slane %v1346, 1
      %v1641 = vrot.slane %v1348, 2
      %v1642 = vor.u32 %v1640, %v1641
      %v1643 = vshrl.u32 %v1240, 16
      %v1645 = vrot.slane %v1643, 1
      %v1646 = vrot.slane %v1352, 2
      %v1647 = vor.u32 %v1645, %v1646
      %v1648 = vsel %vm839, %v1642, %v1647
      %v1649 = vrot.slane %v1356, 1
      %v1650 = vrot.slane %v1358, 2
      %v1651 = vor.u32 %v1649, %v1650
      %v1652 = vshrl.u32 %v1241, 16
      %v1654 = vrot.slane %v1652, 1
      %v1655 = vrot.slane %v1362, 2
      %v1656 = vor.u32 %v1654, %v1655
      %v1657 = vsel %vm839, %v1651, %v1656
      %v1658 = vrot.slane %v1366, 1
      %v1659 = vrot.slane %v1368, 2
      %v1660 = vor.u32 %v1658, %v1659
      %v1661 = vshrl.u32 %v1242, 16
      %v1663 = vrot.slane %v1661, 1
      %v1664 = vrot.slane %v1372, 2
      %v1665 = vor.u32 %v1663, %v1664
      %v1666 = vsel %vm839, %v1660, %v1665
      %v1667 = vrot.slane %v1376, 1
      %v1668 = vrot.slane %v1378, 2
      %v1669 = vor.u32 %v1667, %v1668
      %v1670 = vshrl.u32 %v1243, 16
      %v1672 = vrot.slane %v1670, 1
      %v1673 = vrot.slane %v1382, 2
      %v1674 = vor.u32 %v1672, %v1673
      %v1675 = vsel %vm839, %v1669, %v1674
      %v1676 = vrot.slane %v1386, 1
      %v1677 = vrot.slane %v1388, 2
      %v1678 = vor.u32 %v1676, %v1677
      %v1679 = vshrl.u32 %v1244, 16
      %v1681 = vrot.slane %v1679, 1
      %v1682 = vrot.slane %v1392, 2
      %v1683 = vor.u32 %v1681, %v1682
      %v1684 = vsel %vm839, %v1678, %v1683
      %v1685 = vrot.slane %v1396, 1
      %v1686 = vrot.slane %v1398, 2
      %v1687 = vor.u32 %v1685, %v1686
      %v1688 = vshrl.u32 %v1245, 16
      %v1690 = vrot.slane %v1688, 1
      %v1691 = vrot.slane %v1402, 2
      %v1692 = vor.u32 %v1690, %v1691
      %v1693 = vsel %vm839, %v1687, %v1692
      %v1710 = vmax.bf16 %v1534, %v1558
      %v1711 = vmax.bf16 %v1535, %v1567
      %v1712 = vmax.bf16 %v1536, %v1576
      %v1713 = vmax.bf16 %v1537, %v1585
      %v1714 = vmax.bf16 %v1538, %v1594
      %v1715 = vmax.bf16 %v1539, %v1603
      %v1716 = vmax.bf16 %v1540, %v1612
      %v1717 = vmax.bf16 %v1541, %v1621
      %v1718 = vmax.bf16 %v1542, %v1630
      %v1719 = vmax.bf16 %v1543, %v1639
      %v1720 = vmax.bf16 %v1544, %v1648
      %v1721 = vmax.bf16 %v1545, %v1657
      %v1722 = vmax.bf16 %v1546, %v1666
      %v1723 = vmax.bf16 %v1547, %v1675
      %v1724 = vmax.bf16 %v1548, %v1684
      %v1725 = vmax.bf16 %v1549, %v1693
      %v1726 = vrot.slane %v1183, 2
      %v1727 = vrot.slane %v1230, 2
      %v1728 = vsel %vm1016, %v1726, %v1727
      %v1729 = vrot.slane %v1186, 2
      %v1730 = vrot.slane %v1231, 2
      %v1731 = vsel %vm1016, %v1729, %v1730
      %v1732 = vrot.slane %v1189, 2
      %v1733 = vrot.slane %v1232, 2
      %v1734 = vsel %vm1016, %v1732, %v1733
      %v1735 = vrot.slane %v1192, 2
      %v1736 = vrot.slane %v1233, 2
      %v1737 = vsel %vm1016, %v1735, %v1736
      %v1738 = vrot.slane %v1195, 2
      %v1739 = vrot.slane %v1234, 2
      %v1740 = vsel %vm1016, %v1738, %v1739
      %v1741 = vrot.slane %v1198, 2
      %v1742 = vrot.slane %v1235, 2
      %v1743 = vsel %vm1016, %v1741, %v1742
      %v1744 = vrot.slane %v1201, 2
      %v1745 = vrot.slane %v1236, 2
      %v1746 = vsel %vm1016, %v1744, %v1745
      %v1747 = vrot.slane %v1204, 2
      %v1748 = vrot.slane %v1237, 2
      %v1749 = vsel %vm1016, %v1747, %v1748
      %v1750 = vrot.slane %v1207, 2
      %v1751 = vrot.slane %v1238, 2
      %v1752 = vsel %vm1016, %v1750, %v1751
      %v1753 = vrot.slane %v1210, 2
      %v1754 = vrot.slane %v1239, 2
      %v1755 = vsel %vm1016, %v1753, %v1754
      %v1756 = vrot.slane %v1213, 2
      %v1757 = vrot.slane %v1240, 2
      %v1758 = vsel %vm1016, %v1756, %v1757
      %v1759 = vrot.slane %v1216, 2
      %v1760 = vrot.slane %v1241, 2
      %v1761 = vsel %vm1016, %v1759, %v1760
      %v1762 = vrot.slane %v1219, 2
      %v1763 = vrot.slane %v1242, 2
      %v1764 = vsel %vm1016, %v1762, %v1763
      %v1765 = vrot.slane %v1222, 2
      %v1766 = vrot.slane %v1243, 2
      %v1767 = vsel %vm1016, %v1765, %v1766
      %v1768 = vrot.slane %v1225, 2
      %v1769 = vrot.slane %v1244, 2
      %v1770 = vsel %vm1016, %v1768, %v1769
      %v1771 = vrot.slane %v1228, 2
      %v1772 = vrot.slane %v1245, 2
      %v1773 = vsel %vm1016, %v1771, %v1772
      %v1790 = vmax.bf16 %v1710, %v1728
      %v1791 = vmax.bf16 %v1711, %v1731
      %v1792 = vmax.bf16 %v1712, %v1734
      %v1793 = vmax.bf16 %v1713, %v1737
      %v1794 = vmax.bf16 %v1714, %v1740
      %v1795 = vmax.bf16 %v1715, %v1743
      %v1796 = vmax.bf16 %v1716, %v1746
      %v1797 = vmax.bf16 %v1717, %v1749
      %v1798 = vmax.bf16 %v1718, %v1752
      %v1799 = vmax.bf16 %v1719, %v1755
      %v1800 = vmax.bf16 %v1720, %v1758
      %v1801 = vmax.bf16 %v1721, %v1761
      %v1802 = vmax.bf16 %v1722, %v1764
      %v1803 = vmax.bf16 %v1723, %v1767
      %v1804 = vmax.bf16 %v1724, %v1770
      %v1805 = vmax.bf16 %v1725, %v1773
      %v1806 = vmax.bf16 %v1790, %v1791
      %v1807 = vmax.bf16 %v1791, %v1792
      %v1808 = vmax.bf16 %v1792, %v1793
      %v1809 = vmax.bf16 %v1793, %v1794
      %v1810 = vmax.bf16 %v1794, %v1795
      %v1811 = vmax.bf16 %v1795, %v1796
      %v1812 = vmax.bf16 %v1796, %v1797
      %v1813 = vmax.bf16 %v1797, %v1798
      %v1814 = vmax.bf16 %v1798, %v1799
      %v1815 = vmax.bf16 %v1799, %v1800
      %v1816 = vmax.bf16 %v1800, %v1801
      %v1817 = vmax.bf16 %v1801, %v1802
      %v1818 = vmax.bf16 %v1802, %v1803
      %v1819 = vmax.bf16 %v1803, %v1804
      %v1820 = vmax.bf16 %v1806, %v1792
      %v1821 = vmax.bf16 %v1807, %v1793
      %v1822 = vmax.bf16 %v1808, %v1794
      %v1823 = vmax.bf16 %v1809, %v1795
      %v1824 = vmax.bf16 %v1810, %v1796
      %v1825 = vmax.bf16 %v1811, %v1797
      %v1826 = vmax.bf16 %v1812, %v1798
      %v1827 = vmax.bf16 %v1813, %v1799
      %v1828 = vmax.bf16 %v1814, %v1800
      %v1829 = vmax.bf16 %v1815, %v1801
      %v1830 = vmax.bf16 %v1816, %v1802
      %v1831 = vmax.bf16 %v1817, %v1803
      %v1832 = vmax.bf16 %v1818, %v1804
      %v1833 = vmax.bf16 %v1819, %v1805
      %v1834 = vmax.bf16 %v1820, %v1793
      %v1835 = vmax.bf16 %v1821, %v1794
      %v1836 = vmax.bf16 %v1822, %v1795
      %v1837 = vmax.bf16 %v1823, %v1796
      %v1838 = vmax.bf16 %v1824, %v1797
      %v1839 = vmax.bf16 %v1825, %v1798
      %v1840 = vmax.bf16 %v1826, %v1799
      %v1841 = vmax.bf16 %v1827, %v1800
      %v1842 = vmax.bf16 %v1828, %v1801
      %v1843 = vmax.bf16 %v1829, %v1802
      %v1844 = vmax.bf16 %v1830, %v1803
      %v1845 = vmax.bf16 %v1831, %v1804
      %v1846 = vmax.bf16 %v1832, %v1805
      %v1847 = vmax.bf16 %v1834, %v1794
      %v1848 = vmax.bf16 %v1835, %v1795
      %v1849 = vmax.bf16 %v1836, %v1796
      %v1850 = vmax.bf16 %v1837, %v1797
      %v1851 = vmax.bf16 %v1838, %v1798
      %v1852 = vmax.bf16 %v1839, %v1799
      %v1853 = vmax.bf16 %v1840, %v1800
      %v1854 = vmax.bf16 %v1841, %v1801
      %v1855 = vmax.bf16 %v1842, %v1802
      %v1856 = vmax.bf16 %v1843, %v1803
      %v1857 = vmax.bf16 %v1844, %v1804
      %v1858 = vmax.bf16 %v1845, %v1805
      %v1875 = vrot.slane %v1820, 7
      %v1876 = vrot.slane %v1834, 7
      %v1877 = vrot.slane %v1847, 7
      %v1878 = vrot.slane %v1848, 7
      %v1879 = vrot.slane %v1849, 7
      %v1880 = vrot.slane %v1850, 7
      %v1881 = vrot.slane %v1851, 7
      %v1882 = vrot.slane %v1852, 7
      %v1883 = vrot.slane %v1853, 7
      %v1884 = vrot.slane %v1854, 7
      %v1885 = vrot.slane %v1855, 7
      %v1886 = vrot.slane %v1856, 7
      %v1887 = vrot.slane %v1857, 7
      %v1888 = vrot.slane %v1858, 7
      %v1889 = vrot.slane %v1846, 7
      %v1890 = vrot.slane %v1833, 7
      %v1892 = vsel %vm467, 4286644096, %v1875
      %v1895 = vsel %vm467, 4286644096, %v1876
      %v1898 = vsel %vm467, 4286644096, %v1877
      %v1901 = vsel %vm467, 4286644096, %v1878
      %v1904 = vsel %vm467, 4286644096, %v1879
      %v1907 = vsel %vm467, 4286644096, %v1880
      %v1910 = vsel %vm467, 4286644096, %v1881
      %v1913 = vsel %vm467, 4286644096, %v1882
      %v1916 = vsel %vm467, 4286644096, %v1883
      %v1919 = vsel %vm467, 4286644096, %v1884
      %v1922 = vsel %vm467, 4286644096, %v1885
      %v1925 = vsel %vm467, 4286644096, %v1886
      %v1928 = vsel %vm467, 4286644096, %v1887
      %v1931 = vsel %vm467, 4286644096, %v1888
      %v1934 = vsel %vm467, 4286644096, %v1889
      %v1937 = vsel %vm467, 4286644096, %v1890
      %v1939 = vsel %vm467, %v1875, 4286644096
      %v1940 = vsel %vm467, %v1876, 4286644096
      %v1941 = vsel %vm467, %v1877, 4286644096
      %v1942 = vsel %vm467, %v1878, 4286644096
      %v1943 = vsel %vm467, %v1879, 4286644096
      %v1944 = vsel %vm467, %v1880, 4286644096
      %v1945 = vsel %vm467, %v1881, 4286644096
      %v1946 = vsel %vm467, %v1882, 4286644096
      %v1947 = vsel %vm467, %v1883, 4286644096
      %v1948 = vsel %vm467, %v1884, 4286644096
      %v1949 = vsel %vm467, %v1885, 4286644096
      %v1950 = vsel %vm467, %v1886, 4286644096
      %v1951 = vsel %vm467, %v1887, 4286644096
      %v1952 = vsel %vm467, %v1888, 4286644096
      %v1953 = vsel %vm467, %v1889, 4286644096
      %v1954 = vsel %vm467, %v1890, 4286644096
      %v1955 = vshrl.u32 %v1892, 16
      %v1957 = vshll.u32 %v1892, 16
      %v1959 = vrot.slane %v1957, 1
      %v1960 = vor.u32 %v1955, %v1959
      %v1961 = vshll.u32 %v1939, 16
      %v1963 = vrot.slane %v1961, 1
      %v1964 = vsel %vm533, %v1960, %v1963
      %v1965 = vshrl.u32 %v1895, 16
      %v1967 = vshll.u32 %v1895, 16
      %v1969 = vrot.slane %v1967, 1
      %v1970 = vor.u32 %v1965, %v1969
      %v1971 = vshll.u32 %v1940, 16
      %v1973 = vrot.slane %v1971, 1
      %v1974 = vsel %vm533, %v1970, %v1973
      %v1975 = vshrl.u32 %v1898, 16
      %v1977 = vshll.u32 %v1898, 16
      %v1979 = vrot.slane %v1977, 1
      %v1980 = vor.u32 %v1975, %v1979
      %v1981 = vshll.u32 %v1941, 16
      %v1983 = vrot.slane %v1981, 1
      %v1984 = vsel %vm533, %v1980, %v1983
      %v1985 = vshrl.u32 %v1901, 16
      %v1987 = vshll.u32 %v1901, 16
      %v1989 = vrot.slane %v1987, 1
      %v1990 = vor.u32 %v1985, %v1989
      %v1991 = vshll.u32 %v1942, 16
      %v1993 = vrot.slane %v1991, 1
      %v1994 = vsel %vm533, %v1990, %v1993
      %v1995 = vshrl.u32 %v1904, 16
      %v1997 = vshll.u32 %v1904, 16
      %v1999 = vrot.slane %v1997, 1
      %v2000 = vor.u32 %v1995, %v1999
      %v2001 = vshll.u32 %v1943, 16
      %v2003 = vrot.slane %v2001, 1
      %v2004 = vsel %vm533, %v2000, %v2003
      %v2005 = vshrl.u32 %v1907, 16
      %v2007 = vshll.u32 %v1907, 16
      %v2009 = vrot.slane %v2007, 1
      %v2010 = vor.u32 %v2005, %v2009
      %v2011 = vshll.u32 %v1944, 16
      %v2013 = vrot.slane %v2011, 1
      %v2014 = vsel %vm533, %v2010, %v2013
      %v2015 = vshrl.u32 %v1910, 16
      %v2017 = vshll.u32 %v1910, 16
      %v2019 = vrot.slane %v2017, 1
      %v2020 = vor.u32 %v2015, %v2019
      %v2021 = vshll.u32 %v1945, 16
      %v2023 = vrot.slane %v2021, 1
      %v2024 = vsel %vm533, %v2020, %v2023
      %v2025 = vshrl.u32 %v1913, 16
      %v2027 = vshll.u32 %v1913, 16
      %v2029 = vrot.slane %v2027, 1
      %v2030 = vor.u32 %v2025, %v2029
      %v2031 = vshll.u32 %v1946, 16
      %v2033 = vrot.slane %v2031, 1
      %v2034 = vsel %vm533, %v2030, %v2033
      %v2035 = vshrl.u32 %v1916, 16
      %v2037 = vshll.u32 %v1916, 16
      %v2039 = vrot.slane %v2037, 1
      %v2040 = vor.u32 %v2035, %v2039
      %v2041 = vshll.u32 %v1947, 16
      %v2043 = vrot.slane %v2041, 1
      %v2044 = vsel %vm533, %v2040, %v2043
      %v2045 = vshrl.u32 %v1919, 16
      %v2047 = vshll.u32 %v1919, 16
      %v2049 = vrot.slane %v2047, 1
      %v2050 = vor.u32 %v2045, %v2049
      %v2051 = vshll.u32 %v1948, 16
      %v2053 = vrot.slane %v2051, 1
      %v2054 = vsel %vm533, %v2050, %v2053
      %v2055 = vshrl.u32 %v1922, 16
      %v2057 = vshll.u32 %v1922, 16
      %v2059 = vrot.slane %v2057, 1
      %v2060 = vor.u32 %v2055, %v2059
      %v2061 = vshll.u32 %v1949, 16
      %v2063 = vrot.slane %v2061, 1
      %v2064 = vsel %vm533, %v2060, %v2063
      %v2065 = vshrl.u32 %v1925, 16
      %v2067 = vshll.u32 %v1925, 16
      %v2069 = vrot.slane %v2067, 1
      %v2070 = vor.u32 %v2065, %v2069
      %v2071 = vshll.u32 %v1950, 16
      %v2073 = vrot.slane %v2071, 1
      %v2074 = vsel %vm533, %v2070, %v2073
      %v2075 = vshrl.u32 %v1928, 16
      %v2077 = vshll.u32 %v1928, 16
      %v2079 = vrot.slane %v2077, 1
      %v2080 = vor.u32 %v2075, %v2079
      %v2081 = vshll.u32 %v1951, 16
      %v2083 = vrot.slane %v2081, 1
      %v2084 = vsel %vm533, %v2080, %v2083
      %v2085 = vshrl.u32 %v1931, 16
      %v2087 = vshll.u32 %v1931, 16
      %v2089 = vrot.slane %v2087, 1
      %v2090 = vor.u32 %v2085, %v2089
      %v2091 = vshll.u32 %v1952, 16
      %v2093 = vrot.slane %v2091, 1
      %v2094 = vsel %vm533, %v2090, %v2093
      %v2095 = vshrl.u32 %v1934, 16
      %v2097 = vshll.u32 %v1934, 16
      %v2099 = vrot.slane %v2097, 1
      %v2100 = vor.u32 %v2095, %v2099
      %v2101 = vshll.u32 %v1953, 16
      %v2103 = vrot.slane %v2101, 1
      %v2104 = vsel %vm533, %v2100, %v2103
      %v2105 = vshrl.u32 %v1937, 16
      %v2107 = vshll.u32 %v1937, 16
      %v2109 = vrot.slane %v2107, 1
      %v2110 = vor.u32 %v2105, %v2109
      %v2111 = vshll.u32 %v1954, 16
      %v2113 = vrot.slane %v2111, 1
      %v2114 = vsel %vm533, %v2110, %v2113
      %v2131 = vmax.bf16 %v1892, %v1964
      %v2132 = vmax.bf16 %v1895, %v1974
      %v2133 = vmax.bf16 %v1898, %v1984
      %v2134 = vmax.bf16 %v1901, %v1994
      %v2135 = vmax.bf16 %v1904, %v2004
      %v2136 = vmax.bf16 %v1907, %v2014
      %v2137 = vmax.bf16 %v1910, %v2024
      %v2138 = vmax.bf16 %v1913, %v2034
      %v2139 = vmax.bf16 %v1916, %v2044
      %v2140 = vmax.bf16 %v1919, %v2054
      %v2141 = vmax.bf16 %v1922, %v2064
      %v2142 = vmax.bf16 %v1925, %v2074
      %v2143 = vmax.bf16 %v1928, %v2084
      %v2144 = vmax.bf16 %v1931, %v2094
      %v2145 = vmax.bf16 %v1934, %v2104
      %v2146 = vmax.bf16 %v1937, %v2114
      %v2179 = vrot.slane %v1892, 1
      %v2180 = vrot.slane %v1939, 1
      %v2181 = vsel %vm758, %v2179, %v2180
      %v2182 = vrot.slane %v1895, 1
      %v2183 = vrot.slane %v1940, 1
      %v2184 = vsel %vm758, %v2182, %v2183
      %v2185 = vrot.slane %v1898, 1
      %v2186 = vrot.slane %v1941, 1
      %v2187 = vsel %vm758, %v2185, %v2186
      %v2188 = vrot.slane %v1901, 1
      %v2189 = vrot.slane %v1942, 1
      %v2190 = vsel %vm758, %v2188, %v2189
      %v2191 = vrot.slane %v1904, 1
      %v2192 = vrot.slane %v1943, 1
      %v2193 = vsel %vm758, %v2191, %v2192
      %v2194 = vrot.slane %v1907, 1
      %v2195 = vrot.slane %v1944, 1
      %v2196 = vsel %vm758, %v2194, %v2195
      %v2197 = vrot.slane %v1910, 1
      %v2198 = vrot.slane %v1945, 1
      %v2199 = vsel %vm758, %v2197, %v2198
      %v2200 = vrot.slane %v1913, 1
      %v2201 = vrot.slane %v1946, 1
      %v2202 = vsel %vm758, %v2200, %v2201
      %v2203 = vrot.slane %v1916, 1
      %v2204 = vrot.slane %v1947, 1
      %v2205 = vsel %vm758, %v2203, %v2204
      %v2206 = vrot.slane %v1919, 1
      %v2207 = vrot.slane %v1948, 1
      %v2208 = vsel %vm758, %v2206, %v2207
      %v2209 = vrot.slane %v1922, 1
      %v2210 = vrot.slane %v1949, 1
      %v2211 = vsel %vm758, %v2209, %v2210
      %v2212 = vrot.slane %v1925, 1
      %v2213 = vrot.slane %v1950, 1
      %v2214 = vsel %vm758, %v2212, %v2213
      %v2215 = vrot.slane %v1928, 1
      %v2216 = vrot.slane %v1951, 1
      %v2217 = vsel %vm758, %v2215, %v2216
      %v2218 = vrot.slane %v1931, 1
      %v2219 = vrot.slane %v1952, 1
      %v2220 = vsel %vm758, %v2218, %v2219
      %v2221 = vrot.slane %v1934, 1
      %v2222 = vrot.slane %v1953, 1
      %v2223 = vsel %vm758, %v2221, %v2222
      %v2224 = vrot.slane %v1937, 1
      %v2225 = vrot.slane %v1954, 1
      %v2226 = vsel %vm758, %v2224, %v2225
      %v2243 = vmax.bf16 %v2131, %v2181
      %v2244 = vmax.bf16 %v2132, %v2184
      %v2245 = vmax.bf16 %v2133, %v2187
      %v2246 = vmax.bf16 %v2134, %v2190
      %v2247 = vmax.bf16 %v2135, %v2193
      %v2248 = vmax.bf16 %v2136, %v2196
      %v2249 = vmax.bf16 %v2137, %v2199
      %v2250 = vmax.bf16 %v2138, %v2202
      %v2251 = vmax.bf16 %v2139, %v2205
      %v2252 = vmax.bf16 %v2140, %v2208
      %v2253 = vmax.bf16 %v2141, %v2211
      %v2254 = vmax.bf16 %v2142, %v2214
      %v2255 = vmax.bf16 %v2143, %v2217
      %v2256 = vmax.bf16 %v2144, %v2220
      %v2257 = vmax.bf16 %v2145, %v2223
      %v2258 = vmax.bf16 %v2146, %v2226
      %v2259 = vrot.slane %v1955, 1
      %v2260 = vrot.slane %v1957, 2
      %v2261 = vor.u32 %v2259, %v2260
      %v2262 = vshrl.u32 %v1939, 16
      %v2264 = vrot.slane %v2262, 1
      %v2265 = vrot.slane %v1961, 2
      %v2266 = vor.u32 %v2264, %v2265
      %v2267 = vsel %vm839, %v2261, %v2266
      %v2268 = vrot.slane %v1965, 1
      %v2269 = vrot.slane %v1967, 2
      %v2270 = vor.u32 %v2268, %v2269
      %v2271 = vshrl.u32 %v1940, 16
      %v2273 = vrot.slane %v2271, 1
      %v2274 = vrot.slane %v1971, 2
      %v2275 = vor.u32 %v2273, %v2274
      %v2276 = vsel %vm839, %v2270, %v2275
      %v2277 = vrot.slane %v1975, 1
      %v2278 = vrot.slane %v1977, 2
      %v2279 = vor.u32 %v2277, %v2278
      %v2280 = vshrl.u32 %v1941, 16
      %v2282 = vrot.slane %v2280, 1
      %v2283 = vrot.slane %v1981, 2
      %v2284 = vor.u32 %v2282, %v2283
      %v2285 = vsel %vm839, %v2279, %v2284
      %v2286 = vrot.slane %v1985, 1
      %v2287 = vrot.slane %v1987, 2
      %v2288 = vor.u32 %v2286, %v2287
      %v2289 = vshrl.u32 %v1942, 16
      %v2291 = vrot.slane %v2289, 1
      %v2292 = vrot.slane %v1991, 2
      %v2293 = vor.u32 %v2291, %v2292
      %v2294 = vsel %vm839, %v2288, %v2293
      %v2295 = vrot.slane %v1995, 1
      %v2296 = vrot.slane %v1997, 2
      %v2297 = vor.u32 %v2295, %v2296
      %v2298 = vshrl.u32 %v1943, 16
      %v2300 = vrot.slane %v2298, 1
      %v2301 = vrot.slane %v2001, 2
      %v2302 = vor.u32 %v2300, %v2301
      %v2303 = vsel %vm839, %v2297, %v2302
      %v2304 = vrot.slane %v2005, 1
      %v2305 = vrot.slane %v2007, 2
      %v2306 = vor.u32 %v2304, %v2305
      %v2307 = vshrl.u32 %v1944, 16
      %v2309 = vrot.slane %v2307, 1
      %v2310 = vrot.slane %v2011, 2
      %v2311 = vor.u32 %v2309, %v2310
      %v2312 = vsel %vm839, %v2306, %v2311
      %v2313 = vrot.slane %v2015, 1
      %v2314 = vrot.slane %v2017, 2
      %v2315 = vor.u32 %v2313, %v2314
      %v2316 = vshrl.u32 %v1945, 16
      %v2318 = vrot.slane %v2316, 1
      %v2319 = vrot.slane %v2021, 2
      %v2320 = vor.u32 %v2318, %v2319
      %v2321 = vsel %vm839, %v2315, %v2320
      %v2322 = vrot.slane %v2025, 1
      %v2323 = vrot.slane %v2027, 2
      %v2324 = vor.u32 %v2322, %v2323
      %v2325 = vshrl.u32 %v1946, 16
      %v2327 = vrot.slane %v2325, 1
      %v2328 = vrot.slane %v2031, 2
      %v2329 = vor.u32 %v2327, %v2328
      %v2330 = vsel %vm839, %v2324, %v2329
      %v2331 = vrot.slane %v2035, 1
      %v2332 = vrot.slane %v2037, 2
      %v2333 = vor.u32 %v2331, %v2332
      %v2334 = vshrl.u32 %v1947, 16
      %v2336 = vrot.slane %v2334, 1
      %v2337 = vrot.slane %v2041, 2
      %v2338 = vor.u32 %v2336, %v2337
      %v2339 = vsel %vm839, %v2333, %v2338
      %v2340 = vrot.slane %v2045, 1
      %v2341 = vrot.slane %v2047, 2
      %v2342 = vor.u32 %v2340, %v2341
      %v2343 = vshrl.u32 %v1948, 16
      %v2345 = vrot.slane %v2343, 1
      %v2346 = vrot.slane %v2051, 2
      %v2347 = vor.u32 %v2345, %v2346
      %v2348 = vsel %vm839, %v2342, %v2347
      %v2349 = vrot.slane %v2055, 1
      %v2350 = vrot.slane %v2057, 2
      %v2351 = vor.u32 %v2349, %v2350
      %v2352 = vshrl.u32 %v1949, 16
      %v2354 = vrot.slane %v2352, 1
      %v2355 = vrot.slane %v2061, 2
      %v2356 = vor.u32 %v2354, %v2355
      %v2357 = vsel %vm839, %v2351, %v2356
      %v2358 = vrot.slane %v2065, 1
      %v2359 = vrot.slane %v2067, 2
      %v2360 = vor.u32 %v2358, %v2359
      %v2361 = vshrl.u32 %v1950, 16
      %v2363 = vrot.slane %v2361, 1
      %v2364 = vrot.slane %v2071, 2
      %v2365 = vor.u32 %v2363, %v2364
      %v2366 = vsel %vm839, %v2360, %v2365
      %v2367 = vrot.slane %v2075, 1
      %v2368 = vrot.slane %v2077, 2
      %v2369 = vor.u32 %v2367, %v2368
      %v2370 = vshrl.u32 %v1951, 16
      %v2372 = vrot.slane %v2370, 1
      %v2373 = vrot.slane %v2081, 2
      %v2374 = vor.u32 %v2372, %v2373
      %v2375 = vsel %vm839, %v2369, %v2374
      %v2376 = vrot.slane %v2085, 1
      %v2377 = vrot.slane %v2087, 2
      %v2378 = vor.u32 %v2376, %v2377
      %v2379 = vshrl.u32 %v1952, 16
      %v2381 = vrot.slane %v2379, 1
      %v2382 = vrot.slane %v2091, 2
      %v2383 = vor.u32 %v2381, %v2382
      %v2384 = vsel %vm839, %v2378, %v2383
      %v2385 = vrot.slane %v2095, 1
      %v2386 = vrot.slane %v2097, 2
      %v2387 = vor.u32 %v2385, %v2386
      %v2388 = vshrl.u32 %v1953, 16
      %v2390 = vrot.slane %v2388, 1
      %v2391 = vrot.slane %v2101, 2
      %v2392 = vor.u32 %v2390, %v2391
      %v2393 = vsel %vm839, %v2387, %v2392
      %v2394 = vrot.slane %v2105, 1
      %v2395 = vrot.slane %v2107, 2
      %v2396 = vor.u32 %v2394, %v2395
      %v2397 = vshrl.u32 %v1954, 16
      %v2399 = vrot.slane %v2397, 1
      %v2400 = vrot.slane %v2111, 2
      %v2401 = vor.u32 %v2399, %v2400
      %v2402 = vsel %vm839, %v2396, %v2401
      %v2419 = vmax.bf16 %v2243, %v2267
      %v2420 = vmax.bf16 %v2244, %v2276
      %v2421 = vmax.bf16 %v2245, %v2285
      %v2422 = vmax.bf16 %v2246, %v2294
      %v2423 = vmax.bf16 %v2247, %v2303
      %v2424 = vmax.bf16 %v2248, %v2312
      %v2425 = vmax.bf16 %v2249, %v2321
      %v2426 = vmax.bf16 %v2250, %v2330
      %v2427 = vmax.bf16 %v2251, %v2339
      %v2428 = vmax.bf16 %v2252, %v2348
      %v2429 = vmax.bf16 %v2253, %v2357
      %v2430 = vmax.bf16 %v2254, %v2366
      %v2431 = vmax.bf16 %v2255, %v2375
      %v2432 = vmax.bf16 %v2256, %v2384
      %v2433 = vmax.bf16 %v2257, %v2393
      %v2434 = vmax.bf16 %v2258, %v2402
      %v2435 = vrot.slane %v1892, 2
      %v2436 = vrot.slane %v1939, 2
      %v2437 = vsel %vm1016, %v2435, %v2436
      %v2438 = vrot.slane %v1895, 2
      %v2439 = vrot.slane %v1940, 2
      %v2440 = vsel %vm1016, %v2438, %v2439
      %v2441 = vrot.slane %v1898, 2
      %v2442 = vrot.slane %v1941, 2
      %v2443 = vsel %vm1016, %v2441, %v2442
      %v2444 = vrot.slane %v1901, 2
      %v2445 = vrot.slane %v1942, 2
      %v2446 = vsel %vm1016, %v2444, %v2445
      %v2447 = vrot.slane %v1904, 2
      %v2448 = vrot.slane %v1943, 2
      %v2449 = vsel %vm1016, %v2447, %v2448
      %v2450 = vrot.slane %v1907, 2
      %v2451 = vrot.slane %v1944, 2
      %v2452 = vsel %vm1016, %v2450, %v2451
      %v2453 = vrot.slane %v1910, 2
      %v2454 = vrot.slane %v1945, 2
      %v2455 = vsel %vm1016, %v2453, %v2454
      %v2456 = vrot.slane %v1913, 2
      %v2457 = vrot.slane %v1946, 2
      %v2458 = vsel %vm1016, %v2456, %v2457
      %v2459 = vrot.slane %v1916, 2
      %v2460 = vrot.slane %v1947, 2
      %v2461 = vsel %vm1016, %v2459, %v2460
      %v2462 = vrot.slane %v1919, 2
      %v2463 = vrot.slane %v1948, 2
      %v2464 = vsel %vm1016, %v2462, %v2463
      %v2465 = vrot.slane %v1922, 2
      %v2466 = vrot.slane %v1949, 2
      %v2467 = vsel %vm1016, %v2465, %v2466
      %v2468 = vrot.slane %v1925, 2
      %v2469 = vrot.slane %v1950, 2
      %v2470 = vsel %vm1016, %v2468, %v2469
      %v2471 = vrot.slane %v1928, 2
      %v2472 = vrot.slane %v1951, 2
      %v2473 = vsel %vm1016, %v2471, %v2472
      %v2474 = vrot.slane %v1931, 2
      %v2475 = vrot.slane %v1952, 2
      %v2476 = vsel %vm1016, %v2474, %v2475
      %v2477 = vrot.slane %v1934, 2
      %v2478 = vrot.slane %v1953, 2
      %v2479 = vsel %vm1016, %v2477, %v2478
      %v2480 = vrot.slane %v1937, 2
      %v2481 = vrot.slane %v1954, 2
      %v2482 = vsel %vm1016, %v2480, %v2481
      %v2499 = vmax.bf16 %v2419, %v2437
      %v2500 = vmax.bf16 %v2420, %v2440
      %v2501 = vmax.bf16 %v2421, %v2443
      %v2502 = vmax.bf16 %v2422, %v2446
      %v2503 = vmax.bf16 %v2423, %v2449
      %v2504 = vmax.bf16 %v2424, %v2452
      %v2505 = vmax.bf16 %v2425, %v2455
      %v2506 = vmax.bf16 %v2426, %v2458
      %v2507 = vmax.bf16 %v2427, %v2461
      %v2508 = vmax.bf16 %v2428, %v2464
      %v2509 = vmax.bf16 %v2429, %v2467
      %v2510 = vmax.bf16 %v2430, %v2470
      %v2511 = vmax.bf16 %v2431, %v2473
      %v2512 = vmax.bf16 %v2432, %v2476
      %v2513 = vmax.bf16 %v2433, %v2479
      %v2514 = vmax.bf16 %v2434, %v2482
      %v2515 = vld [vmem:[%s1] sm:$0xf]
      %v2516 = vld [vmem:[%s2] sm:$0xf]
      %vm2517 = vcmask 64512
      %v2519 = vsel %vm2517, %v1081, 0
      %v2522 = vsel %vm2517, %v1082, 0
      %v2525 = vsel %vm2517, %v1083, 0
      %v2528 = vsel %vm2517, %v1084, 0
      %v2531 = vsel %vm2517, %v1085, 0
      %v2534 = vsel %vm2517, %v1086, 0
      %v2537 = vsel %vm2517, %v1087, 0
      %v2540 = vsel %vm2517, %v1088, 0
      %v2543 = vsel %vm2517, %v1089, 0
      %v2546 = vsel %vm2517, %v1090, 0
      %v2549 = vsel %vm2517, %v1091, 0
      %v2552 = vsel %vm2517, %v1092, 0
      %v2555 = vsel %vm2517, %v1093, 0
      %v2558 = vsel %vm2517, %v1094, 0
      %v2561 = vsel %vm2517, %v1095, 0
      %v2564 = vsel %vm2517, %v1096, 0
      %vm2566 = vcmask 1043456
      %v2568 = vsel %vm2566, %v2516, 0
      %2570 = vmatprep.subr.bf16.mxu0 0
      %2571 = vmatpush1.bf16.msra.mxu0 %v2568
      %2572 = vmatprep.subr.bf16.mxu0 0
      %2573 = vmatpush1.bf16.msra.mxu0 0
      %2574 = vmatprep.subr.bf16.mxu0 0
      %2575 = vmatpush1.bf16.msra.mxu0 0
      %2576 = vmatprep.subr.bf16.mxu0 0
      %2577 = vmatpush1.bf16.msra.mxu0 0
      %2578 = vmatprep.subr.bf16.mxu0 0
      %2579 = vmatpush1.bf16.msra.mxu0 0
      %2580 = vmatprep.subr.bf16.mxu0 0
      %2581 = vmatpush1.bf16.msra.mxu0 0
      %2582 = vmatprep.subr.bf16.mxu0 0
      %2583 = vmatpush1.bf16.msra.mxu0 0
      %2584 = vmatprep.subr.bf16.mxu0 0
      %2585 = vmatpush1.bf16.msra.mxu0 0
      %2586 = vmatprep.subr.bf16.mxu0 0
      %2587 = vmatpush1.bf16.msra.mxu0 0
      %2588 = vmatprep.subr.bf16.mxu0 0
      %2589 = vmatpush1.bf16.msra.mxu0 0
      %2590 = vmatprep.subr.bf16.mxu0 0
      %2591 = vmatpush1.bf16.msra.mxu0 0
      %2592 = vmatprep.subr.bf16.mxu0 0
      %2593 = vmatpush1.bf16.msra.mxu0 0
      %2594 = vmatprep.subr.bf16.mxu0 0
      %2595 = vmatpush1.bf16.msra.mxu0 0
      %2596 = vmatprep.subr.bf16.mxu0 0
      %2597 = vmatpush1.bf16.msra.mxu0 0
      %2598 = vmatprep.subr.bf16.mxu0 0
      %2599 = vmatpush1.bf16.msra.mxu0 0
      %2600 = vmatprep.subr.bf16.mxu0 0
      %2601 = vmatpush1.bf16.msra.mxu0 0
      %2602 = vmatprep.mubr.bf16.mxu0 0
      %2603 = vmatmul.mubr.bf16.gmra.mrb[0].mxu0 %v2519
      %v2604 = vpop.f32.mrb[0].mxu0
      %v2605 = vadd.f32 0.0, %v2604
      %v2606 = vpop.f32.mrb[0].mxu0
      %v2607 = vpop.f32.mrb[0].mxu0
      %v2608 = vadd.f32 0.0, %v2607
      %v2609 = vpop.f32.mrb[0].mxu0
      %2610 = vmatprep.mubr.bf16.mxu0 0
      %2611 = vmatmul.mubr.bf16.gmra.mrb[0].mxu0 %v2522
      %v2612 = vpop.f32.mrb[0].mxu0
      %v2613 = vadd.f32 0.0, %v2612
      %v2614 = vpop.f32.mrb[0].mxu0
      %v2615 = vpop.f32.mrb[0].mxu0
      %v2616 = vadd.f32 0.0, %v2615
      %v2617 = vpop.f32.mrb[0].mxu0
      %2618 = vmatprep.mubr.bf16.mxu0 0
      %2619 = vmatmul.mubr.bf16.gmra.mrb[0].mxu0 %v2525
      %v2620 = vpop.f32.mrb[0].mxu0
      %v2621 = vadd.f32 0.0, %v2620
      %v2622 = vpop.f32.mrb[0].mxu0
      %v2623 = vpop.f32.mrb[0].mxu0
      %v2624 = vadd.f32 0.0, %v2623
      %v2625 = vpop.f32.mrb[0].mxu0
      %2626 = vmatprep.mubr.bf16.mxu0 0
      %2627 = vmatmul.mubr.bf16.gmra.mrb[0].mxu0 %v2528
      %v2628 = vpop.f32.mrb[0].mxu0
      %v2629 = vadd.f32 0.0, %v2628
      %v2630 = vpop.f32.mrb[0].mxu0
      %v2631 = vpop.f32.mrb[0].mxu0
      %v2632 = vadd.f32 0.0, %v2631
      %v2633 = vpop.f32.mrb[0].mxu0
      %2634 = vmatprep.mubr.bf16.mxu0 0
      %2635 = vmatmul.mubr.bf16.gmra.mrb[0].mxu0 %v2531
      %v2636 = vpop.f32.mrb[0].mxu0
      %v2637 = vadd.f32 0.0, %v2636
      %v2638 = vpop.f32.mrb[0].mxu0
      %v2639 = vpop.f32.mrb[0].mxu0
      %v2640 = vadd.f32 0.0, %v2639
      %v2641 = vpop.f32.mrb[0].mxu0
      %2642 = vmatprep.mubr.bf16.mxu0 0
      %2643 = vmatmul.mubr.bf16.gmra.mrb[0].mxu0 %v2534
      %v2644 = vpop.f32.mrb[0].mxu0
      %v2645 = vadd.f32 0.0, %v2644
      %v2646 = vpop.f32.mrb[0].mxu0
      %v2647 = vpop.f32.mrb[0].mxu0
      %v2648 = vadd.f32 0.0, %v2647
      %v2649 = vpop.f32.mrb[0].mxu0
      %2650 = vmatprep.mubr.bf16.mxu0 0
      %2651 = vmatmul.mubr.bf16.gmra.mrb[0].mxu0 %v2537
      %v2652 = vpop.f32.mrb[0].mxu0
      %v2653 = vadd.f32 0.0, %v2652
      %v2654 = vpop.f32.mrb[0].mxu0
      %v2655 = vpop.f32.mrb[0].mxu0
      %v2656 = vadd.f32 0.0, %v2655
      %v2657 = vpop.f32.mrb[0].mxu0
      %2658 = vmatprep.mubr.bf16.mxu0 0
      %2659 = vmatmul.mubr.bf16.gmra.mrb[0].mxu0 %v2540
      %v2660 = vpop.f32.mrb[0].mxu0
      %v2661 = vadd.f32 0.0, %v2660
      %v2662 = vpop.f32.mrb[0].mxu0
      %v2663 = vpop.f32.mrb[0].mxu0
      %v2664 = vadd.f32 0.0, %v2663
      %v2665 = vpop.f32.mrb[0].mxu0
      %2666 = vmatprep.mubr.bf16.mxu0 0
      %2667 = vmatmul.mubr.bf16.gmra.mrb[0].mxu0 %v2543
      %v2668 = vpop.f32.mrb[0].mxu0
      %v2669 = vadd.f32 0.0, %v2668
      %v2670 = vpop.f32.mrb[0].mxu0
      %v2671 = vpop.f32.mrb[0].mxu0
      %v2672 = vadd.f32 0.0, %v2671
      %v2673 = vpop.f32.mrb[0].mxu0
      %2674 = vmatprep.mubr.bf16.mxu0 0
      %2675 = vmatmul.mubr.bf16.gmra.mrb[0].mxu0 %v2546
      %v2676 = vpop.f32.mrb[0].mxu0
      %v2677 = vadd.f32 0.0, %v2676
      %v2678 = vpop.f32.mrb[0].mxu0
      %v2679 = vpop.f32.mrb[0].mxu0
      %v2680 = vadd.f32 0.0, %v2679
      %v2681 = vpop.f32.mrb[0].mxu0
      %2682 = vmatprep.mubr.bf16.mxu0 0
      %2683 = vmatmul.mubr.bf16.gmra.mrb[0].mxu0 %v2549
      %v2684 = vpop.f32.mrb[0].mxu0
      %v2685 = vadd.f32 0.0, %v2684
      %v2686 = vpop.f32.mrb[0].mxu0
      %v2687 = vpop.f32.mrb[0].mxu0
      %v2688 = vadd.f32 0.0, %v2687
      %v2689 = vpop.f32.mrb[0].mxu0
      %2690 = vmatprep.mubr.bf16.mxu0 0
      %2691 = vmatmul.mubr.bf16.gmra.mrb[0].mxu0 %v2552
      %v2692 = vpop.f32.mrb[0].mxu0
      %v2693 = vadd.f32 0.0, %v2692
      %v2694 = vpop.f32.mrb[0].mxu0
      %v2695 = vpop.f32.mrb[0].mxu0
      %v2696 = vadd.f32 0.0, %v2695
      %v2697 = vpop.f32.mrb[0].mxu0
      %2698 = vmatprep.mubr.bf16.mxu0 0
      %2699 = vmatmul.mubr.bf16.gmra.mrb[0].mxu0 %v2555
      %v2700 = vpop.f32.mrb[0].mxu0
      %v2701 = vadd.f32 0.0, %v2700
      %v2702 = vpop.f32.mrb[0].mxu0
      %v2703 = vpop.f32.mrb[0].mxu0
      %v2704 = vadd.f32 0.0, %v2703
      %v2705 = vpop.f32.mrb[0].mxu0
      %2706 = vmatprep.mubr.bf16.mxu0 0
      %2707 = vmatmul.mubr.bf16.gmra.mrb[0].mxu0 %v2558
      %v2708 = vpop.f32.mrb[0].mxu0
      %v2709 = vadd.f32 0.0, %v2708
      %v2710 = vpop.f32.mrb[0].mxu0
      %v2711 = vpop.f32.mrb[0].mxu0
      %v2712 = vadd.f32 0.0, %v2711
      %v2713 = vpop.f32.mrb[0].mxu0
      %2714 = vmatprep.mubr.bf16.mxu0 0
      %2715 = vmatmul.mubr.bf16.gmra.mrb[0].mxu0 %v2561
      %v2716 = vpop.f32.mrb[0].mxu0
      %v2717 = vadd.f32 0.0, %v2716
      %v2718 = vpop.f32.mrb[0].mxu0
      %v2719 = vpop.f32.mrb[0].mxu0
      %v2720 = vadd.f32 0.0, %v2719
      %v2721 = vpop.f32.mrb[0].mxu0
      %2722 = vmatprep.mubr.bf16.mxu0 0
      %2723 = vmatmul.mubr.bf16.gmra.mrb[0].mxu0 %v2564
      %v2724 = vpop.f32.mrb[0].mxu0
      %v2725 = vadd.f32 0.0, %v2724
      %v2726 = vpop.f32.mrb[0].mxu0
      %v2727 = vpop.f32.mrb[0].mxu0
      %v2728 = vadd.f32 0.0, %v2727
      %v2729 = vpop.f32.mrb[0].mxu0
      %2730 = vdwg.mxu0
      %v2732 = vsel %vm2517, %v350, 0
      %v2735 = vsel %vm2517, %v351, 0
      %v2738 = vsel %vm2517, %v352, 0
      %v2741 = vsel %vm2517, %v353, 0
      %v2744 = vsel %vm2517, %v354, 0
      %v2747 = vsel %vm2517, %v355, 0
      %v2750 = vsel %vm2517, %v356, 0
      %v2753 = vsel %vm2517, %v357, 0
      %v2756 = vsel %vm2517, %v358, 0
      %v2759 = vsel %vm2517, %v359, 0
      %v2762 = vsel %vm2517, %v360, 0
      %v2765 = vsel %vm2517, %v361, 0
      %v2768 = vsel %vm2517, %v362, 0
      %v2771 = vsel %vm2517, %v363, 0
      %v2774 = vsel %vm2517, %v364, 0
      %v2777 = vsel %vm2517, %v365, 0
      %v2780 = vsel %vm2566, %v2515, 0
      %2782 = vmatprep.subr.bf16.mxu0 0
      %2783 = vmatpush1.bf16.msra.mxu0 %v2780
      %2784 = vmatprep.subr.bf16.mxu0 0
      %2785 = vmatpush1.bf16.msra.mxu0 0
      %2786 = vmatprep.subr.bf16.mxu0 0
      %2787 = vmatpush1.bf16.msra.mxu0 0
      %2788 = vmatprep.subr.bf16.mxu0 0
      %2789 = vmatpush1.bf16.msra.mxu0 0
      %2790 = vmatprep.subr.bf16.mxu0 0
      %2791 = vmatpush1.bf16.msra.mxu0 0
      %2792 = vmatprep.subr.bf16.mxu0 0
      %2793 = vmatpush1.bf16.msra.mxu0 0
      %2794 = vmatprep.subr.bf16.mxu0 0
      %2795 = vmatpush1.bf16.msra.mxu0 0
      %2796 = vmatprep.subr.bf16.mxu0 0
      %2797 = vmatpush1.bf16.msra.mxu0 0
      %2798 = vmatprep.subr.bf16.mxu0 0
      %2799 = vmatpush1.bf16.msra.mxu0 0
      %2800 = vmatprep.subr.bf16.mxu0 0
      %2801 = vmatpush1.bf16.msra.mxu0 0
      %2802 = vmatprep.subr.bf16.mxu0 0
      %2803 = vmatpush1.bf16.msra.mxu0 0
      %2804 = vmatprep.subr.bf16.mxu0 0
      %2805 = vmatpush1.bf16.msra.mxu0 0
      %2806 = vmatprep.subr.bf16.mxu0 0
      %2807 = vmatpush1.bf16.msra.mxu0 0
      %2808 = vmatprep.subr.bf16.mxu0 0
      %2809 = vmatpush1.bf16.msra.mxu0 0
      %2810 = vmatprep.subr.bf16.mxu0 0
      %2811 = vmatpush1.bf16.msra.mxu0 0
      %2812 = vmatprep.subr.bf16.mxu0 0
      %2813 = vmatpush1.bf16.msra.mxu0 0
      %2814 = vmatprep.mubr.bf16.mxu0 0
      %2815 = vmatmul.mubr.bf16.gmra.mrb[0].mxu0 %v2732
      %v2816 = vpop.f32.mrb[0].mxu0
      %v2817 = vadd.f32 %v2605, %v2816
      %v2818 = vpop.f32.mrb[0].mxu0
      %v2819 = vpop.f32.mrb[0].mxu0
      %v2820 = vadd.f32 %v2608, %v2819
      %v2821 = vpop.f32.mrb[0].mxu0
      %2822 = vmatprep.mubr.bf16.mxu0 0
      %2823 = vmatmul.mubr.bf16.gmra.mrb[0].mxu0 %v2735
      %v2824 = vpop.f32.mrb[0].mxu0
      %v2825 = vadd.f32 %v2613, %v2824
      %v2826 = vpop.f32.mrb[0].mxu0
      %v2827 = vpop.f32.mrb[0].mxu0
      %v2828 = vadd.f32 %v2616, %v2827
      %v2829 = vpop.f32.mrb[0].mxu0
      %2830 = vmatprep.mubr.bf16.mxu0 0
      %2831 = vmatmul.mubr.bf16.gmra.mrb[0].mxu0 %v2738
      %v2832 = vpop.f32.mrb[0].mxu0
      %v2833 = vadd.f32 %v2621, %v2832
      %v2834 = vpop.f32.mrb[0].mxu0
      %v2835 = vpop.f32.mrb[0].mxu0
      %v2836 = vadd.f32 %v2624, %v2835
      %v2837 = vpop.f32.mrb[0].mxu0
      %2838 = vmatprep.mubr.bf16.mxu0 0
      %2839 = vmatmul.mubr.bf16.gmra.mrb[0].mxu0 %v2741
      %v2840 = vpop.f32.mrb[0].mxu0
      %v2841 = vadd.f32 %v2629, %v2840
      %v2842 = vpop.f32.mrb[0].mxu0
      %v2843 = vpop.f32.mrb[0].mxu0
      %v2844 = vadd.f32 %v2632, %v2843
      %v2845 = vpop.f32.mrb[0].mxu0
      %2846 = vmatprep.mubr.bf16.mxu0 0
      %2847 = vmatmul.mubr.bf16.gmra.mrb[0].mxu0 %v2744
      %v2848 = vpop.f32.mrb[0].mxu0
      %v2849 = vadd.f32 %v2637, %v2848
      %v2850 = vpop.f32.mrb[0].mxu0
      %v2851 = vpop.f32.mrb[0].mxu0
      %v2852 = vadd.f32 %v2640, %v2851
      %v2853 = vpop.f32.mrb[0].mxu0
      %2854 = vmatprep.mubr.bf16.mxu0 0
      %2855 = vmatmul.mubr.bf16.gmra.mrb[0].mxu0 %v2747
      %v2856 = vpop.f32.mrb[0].mxu0
      %v2857 = vadd.f32 %v2645, %v2856
      %v2858 = vpop.f32.mrb[0].mxu0
      %v2859 = vpop.f32.mrb[0].mxu0
      %v2860 = vadd.f32 %v2648, %v2859
      %v2861 = vpop.f32.mrb[0].mxu0
      %2862 = vmatprep.mubr.bf16.mxu0 0
      %2863 = vmatmul.mubr.bf16.gmra.mrb[0].mxu0 %v2750
      %v2864 = vpop.f32.mrb[0].mxu0
      %v2865 = vadd.f32 %v2653, %v2864
      %v2866 = vpop.f32.mrb[0].mxu0
      %v2867 = vpop.f32.mrb[0].mxu0
      %v2868 = vadd.f32 %v2656, %v2867
      %v2869 = vpop.f32.mrb[0].mxu0
      %2870 = vmatprep.mubr.bf16.mxu0 0
      %2871 = vmatmul.mubr.bf16.gmra.mrb[0].mxu0 %v2753
      %v2872 = vpop.f32.mrb[0].mxu0
      %v2873 = vadd.f32 %v2661, %v2872
      %v2874 = vpop.f32.mrb[0].mxu0
      %v2875 = vpop.f32.mrb[0].mxu0
      %v2876 = vadd.f32 %v2664, %v2875
      %v2877 = vpop.f32.mrb[0].mxu0
      %2878 = vmatprep.mubr.bf16.mxu0 0
      %2879 = vmatmul.mubr.bf16.gmra.mrb[0].mxu0 %v2756
      %v2880 = vpop.f32.mrb[0].mxu0
      %v2881 = vadd.f32 %v2669, %v2880
      %v2882 = vpop.f32.mrb[0].mxu0
      %v2883 = vpop.f32.mrb[0].mxu0
      %v2884 = vadd.f32 %v2672, %v2883
      %v2885 = vpop.f32.mrb[0].mxu0
      %2886 = vmatprep.mubr.bf16.mxu0 0
      %2887 = vmatmul.mubr.bf16.gmra.mrb[0].mxu0 %v2759
      %v2888 = vpop.f32.mrb[0].mxu0
      %v2889 = vadd.f32 %v2677, %v2888
      %v2890 = vpop.f32.mrb[0].mxu0
      %v2891 = vpop.f32.mrb[0].mxu0
      %v2892 = vadd.f32 %v2680, %v2891
      %v2893 = vpop.f32.mrb[0].mxu0
      %2894 = vmatprep.mubr.bf16.mxu0 0
      %2895 = vmatmul.mubr.bf16.gmra.mrb[0].mxu0 %v2762
      %v2896 = vpop.f32.mrb[0].mxu0
      %v2897 = vadd.f32 %v2685, %v2896
      %v2898 = vpop.f32.mrb[0].mxu0
      %v2899 = vpop.f32.mrb[0].mxu0
      %v2900 = vadd.f32 %v2688, %v2899
      %v2901 = vpop.f32.mrb[0].mxu0
      %2902 = vmatprep.mubr.bf16.mxu0 0
      %2903 = vmatmul.mubr.bf16.gmra.mrb[0].mxu0 %v2765
      %v2904 = vpop.f32.mrb[0].mxu0
      %v2905 = vadd.f32 %v2693, %v2904
      %v2906 = vpop.f32.mrb[0].mxu0
      %v2907 = vpop.f32.mrb[0].mxu0
      %v2908 = vadd.f32 %v2696, %v2907
      %v2909 = vpop.f32.mrb[0].mxu0
      %2910 = vmatprep.mubr.bf16.mxu0 0
      %2911 = vmatmul.mubr.bf16.gmra.mrb[0].mxu0 %v2768
      %v2912 = vpop.f32.mrb[0].mxu0
      %v2913 = vadd.f32 %v2701, %v2912
      %v2914 = vpop.f32.mrb[0].mxu0
      %v2915 = vpop.f32.mrb[0].mxu0
      %v2916 = vadd.f32 %v2704, %v2915
      %v2917 = vpop.f32.mrb[0].mxu0
      %2918 = vmatprep.mubr.bf16.mxu0 0
      %2919 = vmatmul.mubr.bf16.gmra.mrb[0].mxu0 %v2771
      %v2920 = vpop.f32.mrb[0].mxu0
      %v2921 = vadd.f32 %v2709, %v2920
      %v2922 = vpop.f32.mrb[0].mxu0
      %v2923 = vpop.f32.mrb[0].mxu0
      %v2924 = vadd.f32 %v2712, %v2923
      %v2925 = vpop.f32.mrb[0].mxu0
      %2926 = vmatprep.mubr.bf16.mxu0 0
      %2927 = vmatmul.mubr.bf16.gmra.mrb[0].mxu0 %v2774
      %v2928 = vpop.f32.mrb[0].mxu0
      %v2929 = vadd.f32 %v2717, %v2928
      %v2930 = vpop.f32.mrb[0].mxu0
      %v2931 = vpop.f32.mrb[0].mxu0
      %v2932 = vadd.f32 %v2720, %v2931
      %v2933 = vpop.f32.mrb[0].mxu0
      %2934 = vmatprep.mubr.bf16.mxu0 0
      %2935 = vmatmul.mubr.bf16.gmra.mrb[0].mxu0 %v2777
      %v2936 = vpop.f32.mrb[0].mxu0
      %v2937 = vadd.f32 %v2725, %v2936
      %v2938 = vpop.f32.mrb[0].mxu0
      %v2939 = vpop.f32.mrb[0].mxu0
      %v2940 = vadd.f32 %v2728, %v2939
      %v2941 = vpop.f32.mrb[0].mxu0
      %2942 = vdwg.mxu0
      %v2943 = vld [vmem:[%s3] sm:$0xf]
      %v2945 = vsel %vm2517, %v1790, 0
      %v2948 = vsel %vm2517, %v1791, 0
      %v2951 = vsel %vm2517, %v1792, 0
      %v2954 = vsel %vm2517, %v1793, 0
      %v2957 = vsel %vm2517, %v1794, 0
      %v2960 = vsel %vm2517, %v1795, 0
      %v2963 = vsel %vm2517, %v1796, 0
      %v2966 = vsel %vm2517, %v1797, 0
      %v2969 = vsel %vm2517, %v1798, 0
      %v2972 = vsel %vm2517, %v1799, 0
      %v2975 = vsel %vm2517, %v1800, 0
      %v2978 = vsel %vm2517, %v1801, 0
      %v2981 = vsel %vm2517, %v1802, 0
      %v2984 = vsel %vm2517, %v1803, 0
      %v2987 = vsel %vm2517, %v1804, 0
      %v2990 = vsel %vm2517, %v1805, 0
      %v2993 = vsel %vm2566, %v2943, 0
      %2995 = vmatprep.subr.bf16.mxu0 0
      %2996 = vmatpush1.bf16.msra.mxu0 %v2993
      %2997 = vmatprep.subr.bf16.mxu0 0
      %2998 = vmatpush1.bf16.msra.mxu0 0
      %2999 = vmatprep.subr.bf16.mxu0 0
      %3000 = vmatpush1.bf16.msra.mxu0 0
      %3001 = vmatprep.subr.bf16.mxu0 0
      %3002 = vmatpush1.bf16.msra.mxu0 0
      %3003 = vmatprep.subr.bf16.mxu0 0
      %3004 = vmatpush1.bf16.msra.mxu0 0
      %3005 = vmatprep.subr.bf16.mxu0 0
      %3006 = vmatpush1.bf16.msra.mxu0 0
      %3007 = vmatprep.subr.bf16.mxu0 0
      %3008 = vmatpush1.bf16.msra.mxu0 0
      %3009 = vmatprep.subr.bf16.mxu0 0
      %3010 = vmatpush1.bf16.msra.mxu0 0
      %3011 = vmatprep.subr.bf16.mxu0 0
      %3012 = vmatpush1.bf16.msra.mxu0 0
      %3013 = vmatprep.subr.bf16.mxu0 0
      %3014 = vmatpush1.bf16.msra.mxu0 0
      %3015 = vmatprep.subr.bf16.mxu0 0
      %3016 = vmatpush1.bf16.msra.mxu0 0
      %3017 = vmatprep.subr.bf16.mxu0 0
      %3018 = vmatpush1.bf16.msra.mxu0 0
      %3019 = vmatprep.subr.bf16.mxu0 0
      %3020 = vmatpush1.bf16.msra.mxu0 0
      %3021 = vmatprep.subr.bf16.mxu0 0
      %3022 = vmatpush1.bf16.msra.mxu0 0
      %3023 = vmatprep.subr.bf16.mxu0 0
      %3024 = vmatpush1.bf16.msra.mxu0 0
      %3025 = vmatprep.subr.bf16.mxu0 0
      %3026 = vmatpush1.bf16.msra.mxu0 0
      %3027 = vmatprep.mubr.bf16.mxu0 0
      %3028 = vmatmul.mubr.bf16.gmra.mrb[0].mxu0 %v2945
      %v3029 = vpop.f32.mrb[0].mxu0
      %v3030 = vadd.f32 0.0, %v3029
      %v3031 = vpop.f32.mrb[0].mxu0
      %v3032 = vpop.f32.mrb[0].mxu0
      %v3033 = vadd.f32 0.0, %v3032
      %v3034 = vpop.f32.mrb[0].mxu0
      %3035 = vmatprep.mubr.bf16.mxu0 0
      %3036 = vmatmul.mubr.bf16.gmra.mrb[0].mxu0 %v2948
      %v3037 = vpop.f32.mrb[0].mxu0
      %v3038 = vadd.f32 0.0, %v3037
      %v3039 = vpop.f32.mrb[0].mxu0
      %v3040 = vpop.f32.mrb[0].mxu0
      %v3041 = vadd.f32 0.0, %v3040
      %v3042 = vpop.f32.mrb[0].mxu0
      %3043 = vmatprep.mubr.bf16.mxu0 0
      %3044 = vmatmul.mubr.bf16.gmra.mrb[0].mxu0 %v2951
      %v3045 = vpop.f32.mrb[0].mxu0
      %v3046 = vadd.f32 0.0, %v3045
      %v3047 = vpop.f32.mrb[0].mxu0
      %v3048 = vpop.f32.mrb[0].mxu0
      %v3049 = vadd.f32 0.0, %v3048
      %v3050 = vpop.f32.mrb[0].mxu0
      %3051 = vmatprep.mubr.bf16.mxu0 0
      %3052 = vmatmul.mubr.bf16.gmra.mrb[0].mxu0 %v2954
      %v3053 = vpop.f32.mrb[0].mxu0
      %v3054 = vadd.f32 0.0, %v3053
      %v3055 = vpop.f32.mrb[0].mxu0
      %v3056 = vpop.f32.mrb[0].mxu0
      %v3057 = vadd.f32 0.0, %v3056
      %v3058 = vpop.f32.mrb[0].mxu0
      %3059 = vmatprep.mubr.bf16.mxu0 0
      %3060 = vmatmul.mubr.bf16.gmra.mrb[0].mxu0 %v2957
      %v3061 = vpop.f32.mrb[0].mxu0
      %v3062 = vadd.f32 0.0, %v3061
      %v3063 = vpop.f32.mrb[0].mxu0
      %v3064 = vpop.f32.mrb[0].mxu0
      %v3065 = vadd.f32 0.0, %v3064
      %v3066 = vpop.f32.mrb[0].mxu0
      %3067 = vmatprep.mubr.bf16.mxu0 0
      %3068 = vmatmul.mubr.bf16.gmra.mrb[0].mxu0 %v2960
      %v3069 = vpop.f32.mrb[0].mxu0
      %v3070 = vadd.f32 0.0, %v3069
      %v3071 = vpop.f32.mrb[0].mxu0
      %v3072 = vpop.f32.mrb[0].mxu0
      %v3073 = vadd.f32 0.0, %v3072
      %v3074 = vpop.f32.mrb[0].mxu0
      %3075 = vmatprep.mubr.bf16.mxu0 0
      %3076 = vmatmul.mubr.bf16.gmra.mrb[0].mxu0 %v2963
      %v3077 = vpop.f32.mrb[0].mxu0
      %v3078 = vadd.f32 0.0, %v3077
      %v3079 = vpop.f32.mrb[0].mxu0
      %v3080 = vpop.f32.mrb[0].mxu0
      %v3081 = vadd.f32 0.0, %v3080
      %v3082 = vpop.f32.mrb[0].mxu0
      %3083 = vmatprep.mubr.bf16.mxu0 0
      %3084 = vmatmul.mubr.bf16.gmra.mrb[0].mxu0 %v2966
      %v3085 = vpop.f32.mrb[0].mxu0
      %v3086 = vadd.f32 0.0, %v3085
      %v3087 = vpop.f32.mrb[0].mxu0
      %v3088 = vpop.f32.mrb[0].mxu0
      %v3089 = vadd.f32 0.0, %v3088
      %v3090 = vpop.f32.mrb[0].mxu0
      %3091 = vmatprep.mubr.bf16.mxu0 0
      %3092 = vmatmul.mubr.bf16.gmra.mrb[0].mxu0 %v2969
      %v3093 = vpop.f32.mrb[0].mxu0
      %v3094 = vadd.f32 0.0, %v3093
      %v3095 = vpop.f32.mrb[0].mxu0
      %v3096 = vpop.f32.mrb[0].mxu0
      %v3097 = vadd.f32 0.0, %v3096
      %v3098 = vpop.f32.mrb[0].mxu0
      %3099 = vmatprep.mubr.bf16.mxu0 0
      %3100 = vmatmul.mubr.bf16.gmra.mrb[0].mxu0 %v2972
      %v3101 = vpop.f32.mrb[0].mxu0
      %v3102 = vadd.f32 0.0, %v3101
      %v3103 = vpop.f32.mrb[0].mxu0
      %v3104 = vpop.f32.mrb[0].mxu0
      %v3105 = vadd.f32 0.0, %v3104
      %v3106 = vpop.f32.mrb[0].mxu0
      %3107 = vmatprep.mubr.bf16.mxu0 0
      %3108 = vmatmul.mubr.bf16.gmra.mrb[0].mxu0 %v2975
      %v3109 = vpop.f32.mrb[0].mxu0
      %v3110 = vadd.f32 0.0, %v3109
      %v3111 = vpop.f32.mrb[0].mxu0
      %v3112 = vpop.f32.mrb[0].mxu0
      %v3113 = vadd.f32 0.0, %v3112
      %v3114 = vpop.f32.mrb[0].mxu0
      %3115 = vmatprep.mubr.bf16.mxu0 0
      %3116 = vmatmul.mubr.bf16.gmra.mrb[0].mxu0 %v2978
      %v3117 = vpop.f32.mrb[0].mxu0
      %v3118 = vadd.f32 0.0, %v3117
      %v3119 = vpop.f32.mrb[0].mxu0
      %v3120 = vpop.f32.mrb[0].mxu0
      %v3121 = vadd.f32 0.0, %v3120
      %v3122 = vpop.f32.mrb[0].mxu0
      %3123 = vmatprep.mubr.bf16.mxu0 0
      %3124 = vmatmul.mubr.bf16.gmra.mrb[0].mxu0 %v2981
      %v3125 = vpop.f32.mrb[0].mxu0
      %v3126 = vadd.f32 0.0, %v3125
      %v3127 = vpop.f32.mrb[0].mxu0
      %v3128 = vpop.f32.mrb[0].mxu0
      %v3129 = vadd.f32 0.0, %v3128
      %v3130 = vpop.f32.mrb[0].mxu0
      %3131 = vmatprep.mubr.bf16.mxu0 0
      %3132 = vmatmul.mubr.bf16.gmra.mrb[0].mxu0 %v2984
      %v3133 = vpop.f32.mrb[0].mxu0
      %v3134 = vadd.f32 0.0, %v3133
      %v3135 = vpop.f32.mrb[0].mxu0
      %v3136 = vpop.f32.mrb[0].mxu0
      %v3137 = vadd.f32 0.0, %v3136
      %v3138 = vpop.f32.mrb[0].mxu0
      %3139 = vmatprep.mubr.bf16.mxu0 0
      %3140 = vmatmul.mubr.bf16.gmra.mrb[0].mxu0 %v2987
      %v3141 = vpop.f32.mrb[0].mxu0
      %v3142 = vadd.f32 0.0, %v3141
      %v3143 = vpop.f32.mrb[0].mxu0
      %v3144 = vpop.f32.mrb[0].mxu0
      %v3145 = vadd.f32 0.0, %v3144
      %v3146 = vpop.f32.mrb[0].mxu0
      %3147 = vmatprep.mubr.bf16.mxu0 0
      %3148 = vmatmul.mubr.bf16.gmra.mrb[0].mxu0 %v2990
      %v3149 = vpop.f32.mrb[0].mxu0
      %v3150 = vadd.f32 0.0, %v3149
      %v3151 = vpop.f32.mrb[0].mxu0
      %v3152 = vpop.f32.mrb[0].mxu0
      %v3153 = vadd.f32 0.0, %v3152
      %v3154 = vpop.f32.mrb[0].mxu0
      %3155 = vdwg.mxu0
      %v3156 = vadd.f32 %v2817, %v3030
      %v3157 = vadd.f32 %v2820, %v3033
      %v3158 = vadd.f32 %v2825, %v3038
      %v3159 = vadd.f32 %v2828, %v3041
      %v3160 = vadd.f32 %v2833, %v3046
      %v3161 = vadd.f32 %v2836, %v3049
      %v3162 = vadd.f32 %v2841, %v3054
      %v3163 = vadd.f32 %v2844, %v3057
      %v3164 = vadd.f32 %v2849, %v3062
      %v3165 = vadd.f32 %v2852, %v3065
      %v3166 = vadd.f32 %v2857, %v3070
      %v3167 = vadd.f32 %v2860, %v3073
      %v3168 = vadd.f32 %v2865, %v3078
      %v3169 = vadd.f32 %v2868, %v3081
      %v3170 = vadd.f32 %v2873, %v3086
      %v3171 = vadd.f32 %v2876, %v3089
      %v3172 = vadd.f32 %v2881, %v3094
      %v3173 = vadd.f32 %v2884, %v3097
      %v3174 = vadd.f32 %v2889, %v3102
      %v3175 = vadd.f32 %v2892, %v3105
      %v3176 = vadd.f32 %v2897, %v3110
      %v3177 = vadd.f32 %v2900, %v3113
      %v3178 = vadd.f32 %v2905, %v3118
      %v3179 = vadd.f32 %v2908, %v3121
      %v3180 = vadd.f32 %v2913, %v3126
      %v3181 = vadd.f32 %v2916, %v3129
      %v3182 = vadd.f32 %v2921, %v3134
      %v3183 = vadd.f32 %v2924, %v3137
      %v3184 = vadd.f32 %v2929, %v3142
      %v3185 = vadd.f32 %v2932, %v3145
      %v3186 = vadd.f32 %v2937, %v3150
      %v3187 = vadd.f32 %v2940, %v3153
      %v3188 = vld [vmem:[%s4] sm:$0xf]
      %v3190 = vsel %vm2517, %v2499, 0
      %v3193 = vsel %vm2517, %v2500, 0
      %v3196 = vsel %vm2517, %v2501, 0
      %v3199 = vsel %vm2517, %v2502, 0
      %v3202 = vsel %vm2517, %v2503, 0
      %v3205 = vsel %vm2517, %v2504, 0
      %v3208 = vsel %vm2517, %v2505, 0
      %v3211 = vsel %vm2517, %v2506, 0
      %v3214 = vsel %vm2517, %v2507, 0
      %v3217 = vsel %vm2517, %v2508, 0
      %v3220 = vsel %vm2517, %v2509, 0
      %v3223 = vsel %vm2517, %v2510, 0
      %v3226 = vsel %vm2517, %v2511, 0
      %v3229 = vsel %vm2517, %v2512, 0
      %v3232 = vsel %vm2517, %v2513, 0
      %v3235 = vsel %vm2517, %v2514, 0
      %v3238 = vsel %vm2566, %v3188, 0
      %3240 = vmatprep.subr.bf16.mxu0 0
      %3241 = vmatpush1.bf16.msra.mxu0 %v3238
      %3242 = vmatprep.subr.bf16.mxu0 0
      %3243 = vmatpush1.bf16.msra.mxu0 0
      %3244 = vmatprep.subr.bf16.mxu0 0
      %3245 = vmatpush1.bf16.msra.mxu0 0
      %3246 = vmatprep.subr.bf16.mxu0 0
      %3247 = vmatpush1.bf16.msra.mxu0 0
      %3248 = vmatprep.subr.bf16.mxu0 0
      %3249 = vmatpush1.bf16.msra.mxu0 0
      %3250 = vmatprep.subr.bf16.mxu0 0
      %3251 = vmatpush1.bf16.msra.mxu0 0
      %3252 = vmatprep.subr.bf16.mxu0 0
      %3253 = vmatpush1.bf16.msra.mxu0 0
      %3254 = vmatprep.subr.bf16.mxu0 0
      %3255 = vmatpush1.bf16.msra.mxu0 0
      %3256 = vmatprep.subr.bf16.mxu0 0
      %3257 = vmatpush1.bf16.msra.mxu0 0
      %3258 = vmatprep.subr.bf16.mxu0 0
      %3259 = vmatpush1.bf16.msra.mxu0 0
      %3260 = vmatprep.subr.bf16.mxu0 0
      %3261 = vmatpush1.bf16.msra.mxu0 0
      %3262 = vmatprep.subr.bf16.mxu0 0
      %3263 = vmatpush1.bf16.msra.mxu0 0
      %3264 = vmatprep.subr.bf16.mxu0 0
      %3265 = vmatpush1.bf16.msra.mxu0 0
      %3266 = vmatprep.subr.bf16.mxu0 0
      %3267 = vmatpush1.bf16.msra.mxu0 0
      %3268 = vmatprep.subr.bf16.mxu0 0
      %3269 = vmatpush1.bf16.msra.mxu0 0
      %3270 = vmatprep.subr.bf16.mxu0 0
      %3271 = vmatpush1.bf16.msra.mxu0 0
      %3272 = vmatprep.mubr.bf16.mxu0 0
      %3273 = vmatmul.mubr.bf16.gmra.mrb[0].mxu0 %v3190
      %v3274 = vpop.f32.mrb[0].mxu0
      %v3275 = vadd.f32 0.0, %v3274
      %v3276 = vpop.f32.mrb[0].mxu0
      %v3277 = vpop.f32.mrb[0].mxu0
      %v3278 = vadd.f32 0.0, %v3277
      %v3279 = vpop.f32.mrb[0].mxu0
      %3280 = vmatprep.mubr.bf16.mxu0 0
      %3281 = vmatmul.mubr.bf16.gmra.mrb[0].mxu0 %v3193
      %v3282 = vpop.f32.mrb[0].mxu0
      %v3283 = vadd.f32 0.0, %v3282
      %v3284 = vpop.f32.mrb[0].mxu0
      %v3285 = vpop.f32.mrb[0].mxu0
      %v3286 = vadd.f32 0.0, %v3285
      %v3287 = vpop.f32.mrb[0].mxu0
      %3288 = vmatprep.mubr.bf16.mxu0 0
      %3289 = vmatmul.mubr.bf16.gmra.mrb[0].mxu0 %v3196
      %v3290 = vpop.f32.mrb[0].mxu0
      %v3291 = vadd.f32 0.0, %v3290
      %v3292 = vpop.f32.mrb[0].mxu0
      %v3293 = vpop.f32.mrb[0].mxu0
      %v3294 = vadd.f32 0.0, %v3293
      %v3295 = vpop.f32.mrb[0].mxu0
      %3296 = vmatprep.mubr.bf16.mxu0 0
      %3297 = vmatmul.mubr.bf16.gmra.mrb[0].mxu0 %v3199
      %v3298 = vpop.f32.mrb[0].mxu0
      %v3299 = vadd.f32 0.0, %v3298
      %v3300 = vpop.f32.mrb[0].mxu0
      %v3301 = vpop.f32.mrb[0].mxu0
      %v3302 = vadd.f32 0.0, %v3301
      %v3303 = vpop.f32.mrb[0].mxu0
      %3304 = vmatprep.mubr.bf16.mxu0 0
      %3305 = vmatmul.mubr.bf16.gmra.mrb[0].mxu0 %v3202
      %v3306 = vpop.f32.mrb[0].mxu0
      %v3307 = vadd.f32 0.0, %v3306
      %v3308 = vpop.f32.mrb[0].mxu0
      %v3309 = vpop.f32.mrb[0].mxu0
      %v3310 = vadd.f32 0.0, %v3309
      %v3311 = vpop.f32.mrb[0].mxu0
      %3312 = vmatprep.mubr.bf16.mxu0 0
      %3313 = vmatmul.mubr.bf16.gmra.mrb[0].mxu0 %v3205
      %v3314 = vpop.f32.mrb[0].mxu0
      %v3315 = vadd.f32 0.0, %v3314
      %v3316 = vpop.f32.mrb[0].mxu0
      %v3317 = vpop.f32.mrb[0].mxu0
      %v3318 = vadd.f32 0.0, %v3317
      %v3319 = vpop.f32.mrb[0].mxu0
      %3320 = vmatprep.mubr.bf16.mxu0 0
      %3321 = vmatmul.mubr.bf16.gmra.mrb[0].mxu0 %v3208
      %v3322 = vpop.f32.mrb[0].mxu0
      %v3323 = vadd.f32 0.0, %v3322
      %v3324 = vpop.f32.mrb[0].mxu0
      %v3325 = vpop.f32.mrb[0].mxu0
      %v3326 = vadd.f32 0.0, %v3325
      %v3327 = vpop.f32.mrb[0].mxu0
      %3328 = vmatprep.mubr.bf16.mxu0 0
      %3329 = vmatmul.mubr.bf16.gmra.mrb[0].mxu0 %v3211
      %v3330 = vpop.f32.mrb[0].mxu0
      %v3331 = vadd.f32 0.0, %v3330
      %v3332 = vpop.f32.mrb[0].mxu0
      %v3333 = vpop.f32.mrb[0].mxu0
      %v3334 = vadd.f32 0.0, %v3333
      %v3335 = vpop.f32.mrb[0].mxu0
      %3336 = vmatprep.mubr.bf16.mxu0 0
      %3337 = vmatmul.mubr.bf16.gmra.mrb[0].mxu0 %v3214
      %v3338 = vpop.f32.mrb[0].mxu0
      %v3339 = vadd.f32 0.0, %v3338
      %v3340 = vpop.f32.mrb[0].mxu0
      %v3341 = vpop.f32.mrb[0].mxu0
      %v3342 = vadd.f32 0.0, %v3341
      %v3343 = vpop.f32.mrb[0].mxu0
      %3344 = vmatprep.mubr.bf16.mxu0 0
      %3345 = vmatmul.mubr.bf16.gmra.mrb[0].mxu0 %v3217
      %v3346 = vpop.f32.mrb[0].mxu0
      %v3347 = vadd.f32 0.0, %v3346
      %v3348 = vpop.f32.mrb[0].mxu0
      %v3349 = vpop.f32.mrb[0].mxu0
      %v3350 = vadd.f32 0.0, %v3349
      %v3351 = vpop.f32.mrb[0].mxu0
      %3352 = vmatprep.mubr.bf16.mxu0 0
      %3353 = vmatmul.mubr.bf16.gmra.mrb[0].mxu0 %v3220
      %v3354 = vpop.f32.mrb[0].mxu0
      %v3355 = vadd.f32 0.0, %v3354
      %v3356 = vpop.f32.mrb[0].mxu0
      %v3357 = vpop.f32.mrb[0].mxu0
      %v3358 = vadd.f32 0.0, %v3357
      %v3359 = vpop.f32.mrb[0].mxu0
      %3360 = vmatprep.mubr.bf16.mxu0 0
      %3361 = vmatmul.mubr.bf16.gmra.mrb[0].mxu0 %v3223
      %v3362 = vpop.f32.mrb[0].mxu0
      %v3363 = vadd.f32 0.0, %v3362
      %v3364 = vpop.f32.mrb[0].mxu0
      %v3365 = vpop.f32.mrb[0].mxu0
      %v3366 = vadd.f32 0.0, %v3365
      %v3367 = vpop.f32.mrb[0].mxu0
      %3368 = vmatprep.mubr.bf16.mxu0 0
      %3369 = vmatmul.mubr.bf16.gmra.mrb[0].mxu0 %v3226
      %v3370 = vpop.f32.mrb[0].mxu0
      %v3371 = vadd.f32 0.0, %v3370
      %v3372 = vpop.f32.mrb[0].mxu0
      %v3373 = vpop.f32.mrb[0].mxu0
      %v3374 = vadd.f32 0.0, %v3373
      %v3375 = vpop.f32.mrb[0].mxu0
      %3376 = vmatprep.mubr.bf16.mxu0 0
      %3377 = vmatmul.mubr.bf16.gmra.mrb[0].mxu0 %v3229
      %v3378 = vpop.f32.mrb[0].mxu0
      %v3379 = vadd.f32 0.0, %v3378
      %v3380 = vpop.f32.mrb[0].mxu0
      %v3381 = vpop.f32.mrb[0].mxu0
      %v3382 = vadd.f32 0.0, %v3381
      %v3383 = vpop.f32.mrb[0].mxu0
      %3384 = vmatprep.mubr.bf16.mxu0 0
      %3385 = vmatmul.mubr.bf16.gmra.mrb[0].mxu0 %v3232
      %v3386 = vpop.f32.mrb[0].mxu0
      %v3387 = vadd.f32 0.0, %v3386
      %v3388 = vpop.f32.mrb[0].mxu0
      %v3389 = vpop.f32.mrb[0].mxu0
      %v3390 = vadd.f32 0.0, %v3389
      %v3391 = vpop.f32.mrb[0].mxu0
      %3392 = vmatprep.mubr.bf16.mxu0 0
      %3393 = vmatmul.mubr.bf16.gmra.mrb[0].mxu0 %v3235
      %v3394 = vpop.f32.mrb[0].mxu0
      %v3395 = vadd.f32 0.0, %v3394
      %v3396 = vpop.f32.mrb[0].mxu0
      %v3397 = vpop.f32.mrb[0].mxu0
      %v3398 = vadd.f32 0.0, %v3397
      %v3399 = vpop.f32.mrb[0].mxu0
      %3400 = vdwg.mxu0
      %v3401 = vadd.f32 %v3156, %v3275
      %v3402 = vadd.f32 %v3157, %v3278
      %v3403 = vadd.f32 %v3158, %v3283
      %v3404 = vadd.f32 %v3159, %v3286
      %v3405 = vadd.f32 %v3160, %v3291
      %v3406 = vadd.f32 %v3161, %v3294
      %v3407 = vadd.f32 %v3162, %v3299
      %v3408 = vadd.f32 %v3163, %v3302
      %v3409 = vadd.f32 %v3164, %v3307
      %v3410 = vadd.f32 %v3165, %v3310
      %v3411 = vadd.f32 %v3166, %v3315
      %v3412 = vadd.f32 %v3167, %v3318
      %v3413 = vadd.f32 %v3168, %v3323
      %v3414 = vadd.f32 %v3169, %v3326
      %v3415 = vadd.f32 %v3170, %v3331
      %v3416 = vadd.f32 %v3171, %v3334
      %v3417 = vadd.f32 %v3172, %v3339
      %v3418 = vadd.f32 %v3173, %v3342
      %v3419 = vadd.f32 %v3174, %v3347
      %v3420 = vadd.f32 %v3175, %v3350
      %v3421 = vadd.f32 %v3176, %v3355
      %v3422 = vadd.f32 %v3177, %v3358
      %v3423 = vadd.f32 %v3178, %v3363
      %v3424 = vadd.f32 %v3179, %v3366
      %v3425 = vadd.f32 %v3180, %v3371
      %v3426 = vadd.f32 %v3181, %v3374
      %v3427 = vadd.f32 %v3182, %v3379
      %v3428 = vadd.f32 %v3183, %v3382
      %v3429 = vadd.f32 %v3184, %v3387
      %v3430 = vadd.f32 %v3185, %v3390
      %v3431 = vadd.f32 %v3186, %v3395
      %v3432 = vadd.f32 %v3187, %v3398
      %v3433 = vld [vmem:[%s5] sm:$0x1]
      %v3435 = vlaneseq
      %v3436 = vshrl.u32 %v3435, 7
      %v3437 = vsub.s32 0, %v3436
      %v3438 = vrot.slane %v3433, %v3437
      %v3440 = vadd.f32 %v3401, %v3438
      %v3441 = vadd.f32 %v3402, %v3438
      %v3442 = vadd.f32 %v3403, %v3438
      %v3443 = vadd.f32 %v3404, %v3438
      %v3444 = vadd.f32 %v3405, %v3438
      %v3445 = vadd.f32 %v3406, %v3438
      %v3446 = vadd.f32 %v3407, %v3438
      %v3447 = vadd.f32 %v3408, %v3438
      %v3448 = vadd.f32 %v3409, %v3438
      %v3449 = vadd.f32 %v3410, %v3438
      %v3450 = vadd.f32 %v3411, %v3438
      %v3451 = vadd.f32 %v3412, %v3438
      %v3452 = vadd.f32 %v3413, %v3438
      %v3453 = vadd.f32 %v3414, %v3438
      %v3454 = vadd.f32 %v3415, %v3438
      %v3455 = vadd.f32 %v3416, %v3438
      %v3456 = vadd.f32 %v3417, %v3438
      %v3457 = vadd.f32 %v3418, %v3438
      %v3458 = vadd.f32 %v3419, %v3438
      %v3459 = vadd.f32 %v3420, %v3438
      %v3460 = vadd.f32 %v3421, %v3438
      %v3461 = vadd.f32 %v3422, %v3438
      %v3462 = vadd.f32 %v3423, %v3438
      %v3463 = vadd.f32 %v3424, %v3438
      %v3464 = vadd.f32 %v3425, %v3438
      %v3465 = vadd.f32 %v3426, %v3438
      %v3466 = vadd.f32 %v3427, %v3438
      %v3467 = vadd.f32 %v3428, %v3438
      %v3468 = vadd.f32 %v3429, %v3438
      %v3469 = vadd.f32 %v3430, %v3438
      %v3470 = vadd.f32 %v3431, %v3438
      %v3471 = vadd.f32 %v3432, %v3438
      %v3472 = vxor.u32 %v3440, 2147483648
      %v3473 = vxor.u32 %v3441, 2147483648
      %v3474 = vxor.u32 %v3442, 2147483648
      %v3475 = vxor.u32 %v3443, 2147483648
      %v3476 = vxor.u32 %v3444, 2147483648
      %v3477 = vxor.u32 %v3445, 2147483648
      %v3478 = vxor.u32 %v3446, 2147483648
      %v3479 = vxor.u32 %v3447, 2147483648
      %v3480 = vxor.u32 %v3448, 2147483648
      %v3481 = vxor.u32 %v3449, 2147483648
      %v3482 = vxor.u32 %v3450, 2147483648
      %v3483 = vxor.u32 %v3451, 2147483648
      %v3484 = vxor.u32 %v3452, 2147483648
      %v3485 = vxor.u32 %v3453, 2147483648
      %v3486 = vxor.u32 %v3454, 2147483648
      %v3487 = vxor.u32 %v3455, 2147483648
      %v3488 = vxor.u32 %v3456, 2147483648
      %v3489 = vxor.u32 %v3457, 2147483648
      %v3490 = vxor.u32 %v3458, 2147483648
      %v3491 = vxor.u32 %v3459, 2147483648
      %v3492 = vxor.u32 %v3460, 2147483648
      %v3493 = vxor.u32 %v3461, 2147483648
      %v3494 = vxor.u32 %v3462, 2147483648
      %v3495 = vxor.u32 %v3463, 2147483648
      %v3496 = vxor.u32 %v3464, 2147483648
      %v3497 = vxor.u32 %v3465, 2147483648
      %v3498 = vxor.u32 %v3466, 2147483648
      %v3499 = vxor.u32 %v3467, 2147483648
      %v3500 = vxor.u32 %v3468, 2147483648
      %v3501 = vxor.u32 %v3469, 2147483648
      %v3502 = vxor.u32 %v3470, 2147483648
      %v3503 = vxor.u32 %v3471, 2147483648
      %v3504 = vmul.f32 %v3472, 1.442695
      %v3505 = vpow.pop %v3504
      %v3506 = vmul.f32 %v3473, 1.442695
      %v3507 = vpow.pop %v3506
      %v3508 = vmul.f32 %v3474, 1.442695
      %v3509 = vpow.pop %v3508
      %v3510 = vmul.f32 %v3475, 1.442695
      %v3511 = vpow.pop %v3510
      %v3512 = vmul.f32 %v3476, 1.442695
      %v3513 = vpow.pop %v3512
      %v3514 = vmul.f32 %v3477, 1.442695
      %v3515 = vpow.pop %v3514
      %v3516 = vmul.f32 %v3478, 1.442695
      %v3517 = vpow.pop %v3516
      %v3518 = vmul.f32 %v3479, 1.442695
      %v3519 = vpow.pop %v3518
      %v3520 = vmul.f32 %v3480, 1.442695
      %v3521 = vpow.pop %v3520
      %v3522 = vmul.f32 %v3481, 1.442695
      %v3523 = vpow.pop %v3522
      %v3524 = vmul.f32 %v3482, 1.442695
      %v3525 = vpow.pop %v3524
      %v3526 = vmul.f32 %v3483, 1.442695
      %v3527 = vpow.pop %v3526
      %v3528 = vmul.f32 %v3484, 1.442695
      %v3529 = vpow.pop %v3528
      %v3530 = vmul.f32 %v3485, 1.442695
      %v3531 = vpow.pop %v3530
      %v3532 = vmul.f32 %v3486, 1.442695
      %v3533 = vpow.pop %v3532
      %v3534 = vmul.f32 %v3487, 1.442695
      %v3535 = vpow.pop %v3534
      %v3536 = vmul.f32 %v3488, 1.442695
      %v3537 = vpow.pop %v3536
      %v3538 = vmul.f32 %v3489, 1.442695
      %v3539 = vpow.pop %v3538
      %v3540 = vmul.f32 %v3490, 1.442695
      %v3541 = vpow.pop %v3540
      %v3542 = vmul.f32 %v3491, 1.442695
      %v3543 = vpow.pop %v3542
      %v3544 = vmul.f32 %v3492, 1.442695
      %v3545 = vpow.pop %v3544
      %v3546 = vmul.f32 %v3493, 1.442695
      %v3547 = vpow.pop %v3546
      %v3548 = vmul.f32 %v3494, 1.442695
      %v3549 = vpow.pop %v3548
      %v3550 = vmul.f32 %v3495, 1.442695
      %v3551 = vpow.pop %v3550
      %v3552 = vmul.f32 %v3496, 1.442695
      %v3553 = vpow.pop %v3552
      %v3554 = vmul.f32 %v3497, 1.442695
      %v3555 = vpow.pop %v3554
      %v3556 = vmul.f32 %v3498, 1.442695
      %v3557 = vpow.pop %v3556
      %v3558 = vmul.f32 %v3499, 1.442695
      %v3559 = vpow.pop %v3558
      %v3560 = vmul.f32 %v3500, 1.442695
      %v3561 = vpow.pop %v3560
      %v3562 = vmul.f32 %v3501, 1.442695
      %v3563 = vpow.pop %v3562
      %v3564 = vmul.f32 %v3502, 1.442695
      %v3565 = vpow.pop %v3564
      %v3566 = vmul.f32 %v3503, 1.442695
      %v3567 = vpow.pop %v3566
      %v3568 = vadd.f32 %v3505, 1.0
      %v3569 = vadd.f32 %v3507, 1.0
      %v3570 = vadd.f32 %v3509, 1.0
      %v3571 = vadd.f32 %v3511, 1.0
      %v3572 = vadd.f32 %v3513, 1.0
      %v3573 = vadd.f32 %v3515, 1.0
      %v3574 = vadd.f32 %v3517, 1.0
      %v3575 = vadd.f32 %v3519, 1.0
      %v3576 = vadd.f32 %v3521, 1.0
      %v3577 = vadd.f32 %v3523, 1.0
      %v3578 = vadd.f32 %v3525, 1.0
      %v3579 = vadd.f32 %v3527, 1.0
      %v3580 = vadd.f32 %v3529, 1.0
      %v3581 = vadd.f32 %v3531, 1.0
      %v3582 = vadd.f32 %v3533, 1.0
      %v3583 = vadd.f32 %v3535, 1.0
      %v3584 = vadd.f32 %v3537, 1.0
      %v3585 = vadd.f32 %v3539, 1.0
      %v3586 = vadd.f32 %v3541, 1.0
      %v3587 = vadd.f32 %v3543, 1.0
      %v3588 = vadd.f32 %v3545, 1.0
      %v3589 = vadd.f32 %v3547, 1.0
      %v3590 = vadd.f32 %v3549, 1.0
      %v3591 = vadd.f32 %v3551, 1.0
      %v3592 = vadd.f32 %v3553, 1.0
      %v3593 = vadd.f32 %v3555, 1.0
      %v3594 = vadd.f32 %v3557, 1.0
      %v3595 = vadd.f32 %v3559, 1.0
      %v3596 = vadd.f32 %v3561, 1.0
      %v3597 = vadd.f32 %v3563, 1.0
      %v3598 = vadd.f32 %v3565, 1.0
      %v3599 = vadd.f32 %v3567, 1.0
      %v3600 = vrcp.pop %v3568
      %v3601 = vmul.f32 1.0, %v3600
      %v3602 = vrcp.pop %v3569
      %v3603 = vmul.f32 1.0, %v3602
      %v3604 = vrcp.pop %v3570
      %v3605 = vmul.f32 1.0, %v3604
      %v3606 = vrcp.pop %v3571
      %v3607 = vmul.f32 1.0, %v3606
      %v3608 = vrcp.pop %v3572
      %v3609 = vmul.f32 1.0, %v3608
      %v3610 = vrcp.pop %v3573
      %v3611 = vmul.f32 1.0, %v3610
      %v3612 = vrcp.pop %v3574
      %v3613 = vmul.f32 1.0, %v3612
      %v3614 = vrcp.pop %v3575
      %v3615 = vmul.f32 1.0, %v3614
      %v3616 = vrcp.pop %v3576
      %v3617 = vmul.f32 1.0, %v3616
      %v3618 = vrcp.pop %v3577
      %v3619 = vmul.f32 1.0, %v3618
      %v3620 = vrcp.pop %v3578
      %v3621 = vmul.f32 1.0, %v3620
      %v3622 = vrcp.pop %v3579
      %v3623 = vmul.f32 1.0, %v3622
      %v3624 = vrcp.pop %v3580
      %v3625 = vmul.f32 1.0, %v3624
      %v3626 = vrcp.pop %v3581
      %v3627 = vmul.f32 1.0, %v3626
      %v3628 = vrcp.pop %v3582
      %v3629 = vmul.f32 1.0, %v3628
      %v3630 = vrcp.pop %v3583
      %v3631 = vmul.f32 1.0, %v3630
      %v3632 = vrcp.pop %v3584
      %v3633 = vmul.f32 1.0, %v3632
      %v3634 = vrcp.pop %v3585
      %v3635 = vmul.f32 1.0, %v3634
      %v3636 = vrcp.pop %v3586
      %v3637 = vmul.f32 1.0, %v3636
      %v3638 = vrcp.pop %v3587
      %v3639 = vmul.f32 1.0, %v3638
      %v3640 = vrcp.pop %v3588
      %v3641 = vmul.f32 1.0, %v3640
      %v3642 = vrcp.pop %v3589
      %v3643 = vmul.f32 1.0, %v3642
      %v3644 = vrcp.pop %v3590
      %v3645 = vmul.f32 1.0, %v3644
      %v3646 = vrcp.pop %v3591
      %v3647 = vmul.f32 1.0, %v3646
      %v3648 = vrcp.pop %v3592
      %v3649 = vmul.f32 1.0, %v3648
      %v3650 = vrcp.pop %v3593
      %v3651 = vmul.f32 1.0, %v3650
      %v3652 = vrcp.pop %v3594
      %v3653 = vmul.f32 1.0, %v3652
      %v3654 = vrcp.pop %v3595
      %v3655 = vmul.f32 1.0, %v3654
      %v3656 = vrcp.pop %v3596
      %v3657 = vmul.f32 1.0, %v3656
      %v3658 = vrcp.pop %v3597
      %v3659 = vmul.f32 1.0, %v3658
      %v3660 = vrcp.pop %v3598
      %v3661 = vmul.f32 1.0, %v3660
      %v3662 = vrcp.pop %v3599
      %v3663 = vmul.f32 1.0, %v3662
      %v3664 = vmul.f32 %v3440, %v3601
      %v3665 = vmul.f32 %v3441, %v3603
      %v3666 = vmul.f32 %v3442, %v3605
      %v3667 = vmul.f32 %v3443, %v3607
      %v3668 = vmul.f32 %v3444, %v3609
      %v3669 = vmul.f32 %v3445, %v3611
      %v3670 = vmul.f32 %v3446, %v3613
      %v3671 = vmul.f32 %v3447, %v3615
      %v3672 = vmul.f32 %v3448, %v3617
      %v3673 = vmul.f32 %v3449, %v3619
      %v3674 = vmul.f32 %v3450, %v3621
      %v3675 = vmul.f32 %v3451, %v3623
      %v3676 = vmul.f32 %v3452, %v3625
      %v3677 = vmul.f32 %v3453, %v3627
      %v3678 = vmul.f32 %v3454, %v3629
      %v3679 = vmul.f32 %v3455, %v3631
      %v3680 = vmul.f32 %v3456, %v3633
      %v3681 = vmul.f32 %v3457, %v3635
      %v3682 = vmul.f32 %v3458, %v3637
      %v3683 = vmul.f32 %v3459, %v3639
      %v3684 = vmul.f32 %v3460, %v3641
      %v3685 = vmul.f32 %v3461, %v3643
      %v3686 = vmul.f32 %v3462, %v3645
      %v3687 = vmul.f32 %v3463, %v3647
      %v3688 = vmul.f32 %v3464, %v3649
      %v3689 = vmul.f32 %v3465, %v3651
      %v3690 = vmul.f32 %v3466, %v3653
      %v3691 = vmul.f32 %v3467, %v3655
      %v3692 = vmul.f32 %v3468, %v3657
      %v3693 = vmul.f32 %v3469, %v3659
      %v3694 = vmul.f32 %v3470, %v3661
      %v3695 = vmul.f32 %v3471, %v3663
      %v3696 = vpack.c.bf16 %v3665, %v3664
      %v3697 = vpack.c.bf16 %v3667, %v3666
      %v3698 = vpack.c.bf16 %v3669, %v3668
      %v3699 = vpack.c.bf16 %v3671, %v3670
      %v3700 = vpack.c.bf16 %v3673, %v3672
      %v3701 = vpack.c.bf16 %v3675, %v3674
      %v3702 = vpack.c.bf16 %v3677, %v3676
      %v3703 = vpack.c.bf16 %v3679, %v3678
      %v3704 = vpack.c.bf16 %v3681, %v3680
      %v3705 = vpack.c.bf16 %v3683, %v3682
      %v3706 = vpack.c.bf16 %v3685, %v3684
      %v3707 = vpack.c.bf16 %v3687, %v3686
      %v3708 = vpack.c.bf16 %v3689, %v3688
      %v3709 = vpack.c.bf16 %v3691, %v3690
      %v3710 = vpack.c.bf16 %v3693, %v3692
      %v3711 = vpack.c.bf16 %v3695, %v3694
      %v3728 = vunpack.c.l.b16 %v3696
      %v3729 = vunpack.c.h.b16 %v3696
      %v3730 = vunpack.c.l.b16 %v3697
      %v3731 = vunpack.c.h.b16 %v3697
      %v3732 = vunpack.c.l.b16 %v3698
      %v3733 = vunpack.c.h.b16 %v3698
      %v3734 = vunpack.c.l.b16 %v3699
      %v3735 = vunpack.c.h.b16 %v3699
      %v3736 = vunpack.c.l.b16 %v3700
      %v3737 = vunpack.c.h.b16 %v3700
      %v3738 = vunpack.c.l.b16 %v3701
      %v3739 = vunpack.c.h.b16 %v3701
      %v3740 = vunpack.c.l.b16 %v3702
      %v3741 = vunpack.c.h.b16 %v3702
      %v3742 = vunpack.c.l.b16 %v3703
      %v3743 = vunpack.c.h.b16 %v3703
      %v3744 = vunpack.c.l.b16 %v3704
      %v3745 = vunpack.c.h.b16 %v3704
      %v3746 = vunpack.c.l.b16 %v3705
      %v3747 = vunpack.c.h.b16 %v3705
      %v3748 = vunpack.c.l.b16 %v3706
      %v3749 = vunpack.c.h.b16 %v3706
      %v3750 = vunpack.c.l.b16 %v3707
      %v3751 = vunpack.c.h.b16 %v3707
      %v3752 = vunpack.c.l.b16 %v3708
      %v3753 = vunpack.c.h.b16 %v3708
      %v3754 = vunpack.c.l.b16 %v3709
      %v3755 = vunpack.c.h.b16 %v3709
      %v3756 = vunpack.c.l.b16 %v3710
      %v3757 = vunpack.c.h.b16 %v3710
      %v3758 = vunpack.c.l.b16 %v3711
      %v3759 = vunpack.c.h.b16 %v3711
      %v3760 = vpack.c.b16 %v3728, %v3728
      %v3761 = vpack.c.b16 %v3729, %v3729
      %v3762 = vpack.c.b16 %v3730, %v3730
      %v3763 = vpack.c.b16 %v3731, %v3731
      %v3764 = vpack.c.b16 %v3732, %v3732
      %v3765 = vpack.c.b16 %v3733, %v3733
      %v3766 = vpack.c.b16 %v3734, %v3734
      %v3767 = vpack.c.b16 %v3735, %v3735
      %v3768 = vpack.c.b16 %v3736, %v3736
      %v3769 = vpack.c.b16 %v3737, %v3737
      %v3770 = vpack.c.b16 %v3738, %v3738
      %v3771 = vpack.c.b16 %v3739, %v3739
      %v3772 = vpack.c.b16 %v3740, %v3740
      %v3773 = vpack.c.b16 %v3741, %v3741
      %v3774 = vpack.c.b16 %v3742, %v3742
      %v3775 = vpack.c.b16 %v3743, %v3743
      %v3776 = vpack.c.b16 %v3744, %v3744
      %v3777 = vpack.c.b16 %v3745, %v3745
      %v3778 = vpack.c.b16 %v3746, %v3746
      %v3779 = vpack.c.b16 %v3747, %v3747
      %v3780 = vpack.c.b16 %v3748, %v3748
      %v3781 = vpack.c.b16 %v3749, %v3749
      %v3782 = vpack.c.b16 %v3750, %v3750
      %v3783 = vpack.c.b16 %v3751, %v3751
      %v3784 = vpack.c.b16 %v3752, %v3752
      %v3785 = vpack.c.b16 %v3753, %v3753
      %v3786 = vpack.c.b16 %v3754, %v3754
      %v3787 = vpack.c.b16 %v3755, %v3755
      %v3788 = vpack.c.b16 %v3756, %v3756
      %v3789 = vpack.c.b16 %v3757, %v3757
      %v3790 = vpack.c.b16 %v3758, %v3758
      %v3791 = vpack.c.b16 %v3759, %v3759
      %vm3824 = vcmask 60416
      %3825 = vst.msk [vmem:[%s251] sm:$0xf] %vm3824, %v3760
      %3826 = vst.msk [vmem:[%s251 + $0x4] sm:$0xf] %vm3824, %v3761
      %3827 = vst.msk [vmem:[%s251 + $0x8] sm:$0xf] %vm3824, %v3762
      %3828 = vst.msk [vmem:[%s251 + $0xc] sm:$0xf] %vm3824, %v3763
      %3829 = vst.msk [vmem:[%s251 + $0x10] sm:$0xf] %vm3824, %v3764
      %3830 = vst.msk [vmem:[%s251 + $0x14] sm:$0xf] %vm3824, %v3765
      %3831 = vst.msk [vmem:[%s251 + $0x18] sm:$0xf] %vm3824, %v3766
      %3832 = vst.msk [vmem:[%s251 + $0x1c] sm:$0xf] %vm3824, %v3767
      %3833 = vst.msk [vmem:[%s251 + $0x20] sm:$0xf] %vm3824, %v3768
      %3834 = vst.msk [vmem:[%s251 + $0x24] sm:$0xf] %vm3824, %v3769
      %3835 = vst.msk [vmem:[%s251 + $0x28] sm:$0xf] %vm3824, %v3770
      %3836 = vst.msk [vmem:[%s251 + $0x2c] sm:$0xf] %vm3824, %v3771
      %3837 = vst.msk [vmem:[%s251 + $0x30] sm:$0xf] %vm3824, %v3772
      %3838 = vst.msk [vmem:[%s251 + $0x34] sm:$0xf] %vm3824, %v3773
      %3839 = vst.msk [vmem:[%s251 + $0x38] sm:$0xf] %vm3824, %v3774
      %3840 = vst.msk [vmem:[%s251 + $0x3c] sm:$0xf] %vm3824, %v3775
      %3841 = vst.msk [vmem:[%s251 + $0x40] sm:$0xf] %vm3824, %v3776
      %3842 = vst.msk [vmem:[%s251 + $0x44] sm:$0xf] %vm3824, %v3777
      %3843 = vst.msk [vmem:[%s251 + $0x48] sm:$0xf] %vm3824, %v3778
      %3844 = vst.msk [vmem:[%s251 + $0x4c] sm:$0xf] %vm3824, %v3779
      %3845 = vst.msk [vmem:[%s251 + $0x50] sm:$0xf] %vm3824, %v3780
      %3846 = vst.msk [vmem:[%s251 + $0x54] sm:$0xf] %vm3824, %v3781
      %3847 = vst.msk [vmem:[%s251 + $0x58] sm:$0xf] %vm3824, %v3782
      %3848 = vst.msk [vmem:[%s251 + $0x5c] sm:$0xf] %vm3824, %v3783
      %3849 = vst.msk [vmem:[%s251 + $0x60] sm:$0xf] %vm3824, %v3784
      %3850 = vst.msk [vmem:[%s251 + $0x64] sm:$0xf] %vm3824, %v3785
      %3851 = vst.msk [vmem:[%s251 + $0x68] sm:$0xf] %vm3824, %v3786
      %3852 = vst.msk [vmem:[%s251 + $0x6c] sm:$0xf] %vm3824, %v3787
      %3853 = vst.msk [vmem:[%s251 + $0x70] sm:$0xf] %vm3824, %v3788
      %3854 = vst.msk [vmem:[%s251 + $0x74] sm:$0xf] %vm3824, %v3789
      %3855 = vst.msk [vmem:[%s251 + $0x78] sm:$0xf] %vm3824, %v3790
      %3856 = vst.msk [vmem:[%s251 + $0x7c] sm:$0xf] %vm3824, %v3791
      %p3857 = scmp.lt.s32.totalorder %s17, 1
      %s3858 = scalar_select %p3857, %s17, 1
      %s3859 = smul.addr %s3858, 32
      %s3860 = smul.addr %s3859, 4
      %s3861 = scalar_lea.vmem %s6, %s3860
      // Predicated region
      $region45: #{sppcspc_forward.6} parent=43 // pred_check
        %p3862 = pneg %p166
      $region46: #{sppcspc_forward.6} parent=43 // pred_check_branch
        %3864 = sbr.rel (%p3862) target = $region48
      $region47: #{sppcspc_forward.6} parent=43 // pred_region
        _
      $region48: #{sppcspc_forward.6} parent=43 // pred_fallthru
        _
    $region44: #{sppcspc_forward.6} parent=5 // pred_fallthru
      _
    %p3865 = scmp.le.s32.totalorder 2, %s12
    // Predicated region
    $region49: #{sppcspc_forward.6} parent=5 // pred_check
      %p3866 = pneg %p3865
    $region50: #{sppcspc_forward.6} parent=5 // pred_check_branch
      %3868 = sbr.rel (%p3866) target = $region52
    $region51: #{sppcspc_forward.6} parent=5 // pred_region
      %s3869 = ssub.s32 %s12, 2
      // Predicated region
      $region53: #{sppcspc_forward.6} parent=51 // pred_check
        %p3870 = pneg %p172
      $region54: #{sppcspc_forward.6} parent=51 // pred_check_branch
        %3872 = sbr.rel (%p3870) target = $region56
      $region55: #{sppcspc_forward.6} parent=51 // pred_region
        %p3873 = scmp.lt.s32.totalorder %s18, 1
        %s3874 = scalar_select %p3873, %s18, 1
        %s3875 = smul.addr %s3874, 32
        %s3876 = smul.addr %s3875, 4
        %s3877 = scalar_lea.vmem %s6, %s3876
      $region56: #{sppcspc_forward.6} parent=51 // pred_fallthru
        _
    $region52: #{sppcspc_forward.6} parent=5 // pred_fallthru
      _
  $region6: #{sppcspc_forward.6} parent=0 // loop_footer
    %s16 = sadd.s32 1, %s12
  $region7: #{sppcspc_forward.6} parent=0 // loop_footer_branch
    %11 = sbr.rel target = $region3
  $region8: #{sppcspc_forward.6} parent=0 // loop_exit
    _

// kernel: sppcspc_forward.7
$region0: #{sppcspc_forward.7}
  #allocation0 [shape = 'u32[]', space=smem, size = 0x4, offset = 0x4, fixed_abs, tag = 'smem constant byte address 0x4 - core index']
  #allocation1 [shape = 'u32[144,128]{1,0:T(1,128)}', space=vmem, size = 0x12000, scoped, tag = 'internal scratch']
  %s0 = inlined_call_operand.vmem [shape: bf16[2,16,16,8], index: 0, kind: input, shape index: {}]
  %s1 = inlined_call_operand.vmem [shape: bf16[2,256,8], index: 1, kind: input, shape index: {}]
  %s2 = inlined_call_operand.vmem [shape: bf16[9,8,8], index: 2, kind: input, shape index: {}]
  %s3 = inlined_call_operand.vmem [shape: f32[1,8], index: 3, kind: input, shape index: {}]
  %s4 = inlined_call_operand.vmem [shape: bf16[8,8], index: 4, kind: input, shape index: {}]
  %s5 = inlined_call_operand.vmem [shape: bf16[8,8], index: 5, kind: input, shape index: {}]
  %s6 = inlined_call_operand.vmem [shape: f32[1,8], index: 6, kind: input, shape index: {}]
  %s7 = inlined_call_operand.vmem [shape: f32[2,256,8], index: 7, kind: output, shape index: {}]
  %s8 = sld [smem:[#allocation0]]
  $region61: #{sppcspc_forward.7} parent=0
    _
  %s10 = ssub.s32 1, %s8
  %s11 = scalar_select 0, %s10, %s8
  loop: start=0, step=1, limit=4
  $region2: #{sppcspc_forward.7} parent=0 // loop_pre_header
    _
  $region3: #{sppcspc_forward.7} parent=0 // loop_header
    %s13 = sphi 0, %s17
    %p14 = scmp.ge.s32.totalorder %s13, 4
    %s23 = sphi 0, %s25
    %s26 = sphi 0, %s23
    %s27 = sphi 0, %s26
    %s43 = sphi 0, %s27
    %s49 = sphi 0, %s51
    %s52 = sphi 0, %s49
    %s53 = sphi 0, %s52
    %s69 = sphi 0, %s53
    %s73 = sphi 0, %s73
    %s75 = sphi 0, %s73
    %s76 = sphi 0, %s75
    %s90 = sphi 0, %s76
    %s94 = sphi 0, %s94
    %s96 = sphi 0, %s94
    %s97 = sphi 0, %s96
    %s111 = sphi 0, %s97
    %s115 = sphi 0, %s115
    %s117 = sphi 0, %s115
    %s118 = sphi 0, %s117
    %s132 = sphi 0, %s118
    %s136 = sphi 0, %s136
    %s138 = sphi 0, %s136
    %s139 = sphi 0, %s138
    %s153 = sphi 0, %s139
    %s157 = sphi 0, %s157
    %s159 = sphi 0, %s157
    %s160 = sphi 0, %s159
    %s174 = sphi 0, %s160
    %s180 = sphi 0, %s182
    %s183 = sphi 0, %s180
    %s184 = sphi 0, %s183
    %s200 = sphi 0, %s184
  $region4: #{sppcspc_forward.7} parent=0 // loop_header_branch
    %16 = sbr.rel (%p14) target = $region8
  $region5: #{sppcspc_forward.7} parent=0 // loop_body
    %s18 = ssub.s32 %s13, 1
    %s19 = ssub.s32 %s13, 2
    %s20 = sadd.s32 %s13, 1
    %s21 = ssub.s32 %s13, %s20
    %p22 = scmp.eq.s32.totalorder %s21, 0
    %s24 = sadd.s32 %s23, 1
    %s25 = scalar_select %p22, %s23, %s24
    %p28 = pneg %p22
    %p29 = scmp.eq.s32.totalorder %s13, 1
    %p30 = por %p28, %p29
    %p31 = scmp.ne.s32.totalorder %s23, %s26
    %p32 = scmp.eq.s32.totalorder %s13, 0
    %p33 = por %p31, %p32
    %p34 = scmp.ne.s32.totalorder %s23, %s26
    %p35 = scmp.eq.s32.totalorder %s18, 1
    %p36 = por %p34, %p35
    %p37 = scmp.ne.s32.totalorder %s26, %s27
    %p38 = scmp.eq.s32.totalorder %s18, 0
    %p39 = por %p37, %p38
    %p40 = scmp.ne.s32.totalorder %s26, %s27
    %p41 = scmp.eq.s32.totalorder %s19, 1
    %p42 = por %p40, %p41
    %p44 = scmp.ne.s32.totalorder %s27, %s43
    %p45 = scmp.eq.s32.totalorder %s19, 0
    %p46 = por %p44, %p45
    %s47 = ssub.s32 %s13, %s20
    %p48 = scmp.eq.s32.totalorder %s47, 0
    %s50 = sadd.s32 %s49, 1
    %s51 = scalar_select %p48, %s49, %s50
    %p54 = pneg %p48
    %p55 = scmp.eq.s32.totalorder %s13, 1
    %p56 = por %p54, %p55
    %p57 = scmp.ne.s32.totalorder %s49, %s52
    %p58 = scmp.eq.s32.totalorder %s13, 0
    %p59 = por %p57, %p58
    %p60 = scmp.ne.s32.totalorder %s49, %s52
    %p61 = scmp.eq.s32.totalorder %s18, 1
    %p62 = por %p60, %p61
    %p63 = scmp.ne.s32.totalorder %s52, %s53
    %p64 = scmp.eq.s32.totalorder %s18, 0
    %p65 = por %p63, %p64
    %p66 = scmp.ne.s32.totalorder %s52, %s53
    %p67 = scmp.eq.s32.totalorder %s19, 1
    %p68 = por %p66, %p67
    %p70 = scmp.ne.s32.totalorder %s53, %s69
    %p71 = scmp.eq.s32.totalorder %s19, 0
    %p72 = por %p70, %p71
    %s74 = sadd.s32 %s73, 1
    %p77 = scmp.eq.s32.totalorder %s13, 1
    %p78 = scmp.ne.s32.totalorder %s73, %s75
    %p79 = scmp.eq.s32.totalorder %s13, 0
    %p80 = por %p78, %p79
    %p81 = scmp.ne.s32.totalorder %s73, %s75
    %p82 = scmp.eq.s32.totalorder %s18, 1
    %p83 = por %p81, %p82
    %p84 = scmp.ne.s32.totalorder %s75, %s76
    %p85 = scmp.eq.s32.totalorder %s18, 0
    %p86 = por %p84, %p85
    %p87 = scmp.ne.s32.totalorder %s75, %s76
    %p88 = scmp.eq.s32.totalorder %s19, 1
    %p89 = por %p87, %p88
    %p91 = scmp.ne.s32.totalorder %s76, %s90
    %p92 = scmp.eq.s32.totalorder %s19, 0
    %p93 = por %p91, %p92
    %s95 = sadd.s32 %s94, 1
    %p98 = scmp.eq.s32.totalorder %s13, 1
    %p99 = scmp.ne.s32.totalorder %s94, %s96
    %p100 = scmp.eq.s32.totalorder %s13, 0
    %p101 = por %p99, %p100
    %p102 = scmp.ne.s32.totalorder %s94, %s96
    %p103 = scmp.eq.s32.totalorder %s18, 1
    %p104 = por %p102, %p103
    %p105 = scmp.ne.s32.totalorder %s96, %s97
    %p106 = scmp.eq.s32.totalorder %s18, 0
    %p107 = por %p105, %p106
    %p108 = scmp.ne.s32.totalorder %s96, %s97
    %p109 = scmp.eq.s32.totalorder %s19, 1
    %p110 = por %p108, %p109
    %p112 = scmp.ne.s32.totalorder %s97, %s111
    %p113 = scmp.eq.s32.totalorder %s19, 0
    %p114 = por %p112, %p113
    %s116 = sadd.s32 %s115, 1
    %p119 = scmp.eq.s32.totalorder %s13, 1
    %p120 = scmp.ne.s32.totalorder %s115, %s117
    %p121 = scmp.eq.s32.totalorder %s13, 0
    %p122 = por %p120, %p121
    %p123 = scmp.ne.s32.totalorder %s115, %s117
    %p124 = scmp.eq.s32.totalorder %s18, 1
    %p125 = por %p123, %p124
    %p126 = scmp.ne.s32.totalorder %s117, %s118
    %p127 = scmp.eq.s32.totalorder %s18, 0
    %p128 = por %p126, %p127
    %p129 = scmp.ne.s32.totalorder %s117, %s118
    %p130 = scmp.eq.s32.totalorder %s19, 1
    %p131 = por %p129, %p130
    %p133 = scmp.ne.s32.totalorder %s118, %s132
    %p134 = scmp.eq.s32.totalorder %s19, 0
    %p135 = por %p133, %p134
    %s137 = sadd.s32 %s136, 1
    %p140 = scmp.eq.s32.totalorder %s13, 1
    %p141 = scmp.ne.s32.totalorder %s136, %s138
    %p142 = scmp.eq.s32.totalorder %s13, 0
    %p143 = por %p141, %p142
    %p144 = scmp.ne.s32.totalorder %s136, %s138
    %p145 = scmp.eq.s32.totalorder %s18, 1
    %p146 = por %p144, %p145
    %p147 = scmp.ne.s32.totalorder %s138, %s139
    %p148 = scmp.eq.s32.totalorder %s18, 0
    %p149 = por %p147, %p148
    %p150 = scmp.ne.s32.totalorder %s138, %s139
    %p151 = scmp.eq.s32.totalorder %s19, 1
    %p152 = por %p150, %p151
    %p154 = scmp.ne.s32.totalorder %s139, %s153
    %p155 = scmp.eq.s32.totalorder %s19, 0
    %p156 = por %p154, %p155
    %s158 = sadd.s32 %s157, 1
    %p161 = scmp.eq.s32.totalorder %s13, 1
    %p162 = scmp.ne.s32.totalorder %s157, %s159
    %p163 = scmp.eq.s32.totalorder %s13, 0
    %p164 = por %p162, %p163
    %p165 = scmp.ne.s32.totalorder %s157, %s159
    %p166 = scmp.eq.s32.totalorder %s18, 1
    %p167 = por %p165, %p166
    %p168 = scmp.ne.s32.totalorder %s159, %s160
    %p169 = scmp.eq.s32.totalorder %s18, 0
    %p170 = por %p168, %p169
    %p171 = scmp.ne.s32.totalorder %s159, %s160
    %p172 = scmp.eq.s32.totalorder %s19, 1
    %p173 = por %p171, %p172
    %p175 = scmp.ne.s32.totalorder %s160, %s174
    %p176 = scmp.eq.s32.totalorder %s19, 0
    %p177 = por %p175, %p176
    %s178 = ssub.s32 %s13, %s20
    %p179 = scmp.eq.s32.totalorder %s178, 0
    %s181 = sadd.s32 %s180, 1
    %s182 = scalar_select %p179, %s180, %s181
    %p185 = pneg %p179
    %p186 = scmp.eq.s32.totalorder %s13, 1
    %p187 = por %p185, %p186
    %p188 = scmp.ne.s32.totalorder %s180, %s183
    %p189 = scmp.eq.s32.totalorder %s13, 0
    %p190 = por %p188, %p189
    %p191 = scmp.ne.s32.totalorder %s180, %s183
    %p192 = scmp.eq.s32.totalorder %s18, 1
    %p193 = por %p191, %p192
    %p194 = scmp.ne.s32.totalorder %s183, %s184
    %p195 = scmp.eq.s32.totalorder %s18, 0
    %p196 = por %p194, %p195
    %p197 = scmp.ne.s32.totalorder %s183, %s184
    %p198 = scmp.eq.s32.totalorder %s19, 1
    %p199 = por %p197, %p198
    %p201 = scmp.ne.s32.totalorder %s184, %s200
    %p202 = scmp.eq.s32.totalorder %s19, 0
    %p203 = por %p201, %p202
    %p204 = scmp.le.s32.totalorder 1, %s13
    %p205 = scmp.lt.s32.totalorder %s13, 3
    %p206 = pnand %p204, %p205
    %p207 = pneg %p206
    // Predicated region
    $region9: #{sppcspc_forward.7} parent=5 // pred_check
      _
    $region10: #{sppcspc_forward.7} parent=5 // pred_check_branch
      %209 = sbr.rel (%p206) target = $region12
    $region11: #{sppcspc_forward.7} parent=5 // pred_region
      %s210 = ssub.s32 %s13, 1
      // Predicated region
      $region13: #{sppcspc_forward.7} parent=11 // pred_check
        %p211 = pneg %p86
      $region14: #{sppcspc_forward.7} parent=11 // pred_check_branch
        %213 = sbr.rel (%p211) target = $region16
      $region15: #{sppcspc_forward.7} parent=11 // pred_region
        _
      $region16: #{sppcspc_forward.7} parent=11 // pred_fallthru
        _
      // Predicated region
      $region17: #{sppcspc_forward.7} parent=11 // pred_check
        %p214 = pneg %p107
      $region18: #{sppcspc_forward.7} parent=11 // pred_check_branch
        %216 = sbr.rel (%p214) target = $region20
      $region19: #{sppcspc_forward.7} parent=11 // pred_region
        _
      $region20: #{sppcspc_forward.7} parent=11 // pred_fallthru
        _
      // Predicated region
      $region21: #{sppcspc_forward.7} parent=11 // pred_check
        %p217 = pneg %p128
      $region22: #{sppcspc_forward.7} parent=11 // pred_check_branch
        %219 = sbr.rel (%p217) target = $region24
      $region23: #{sppcspc_forward.7} parent=11 // pred_region
        _
      $region24: #{sppcspc_forward.7} parent=11 // pred_fallthru
        _
      // Predicated region
      $region25: #{sppcspc_forward.7} parent=11 // pred_check
        %p220 = pneg %p149
      $region26: #{sppcspc_forward.7} parent=11 // pred_check_branch
        %222 = sbr.rel (%p220) target = $region28
      $region27: #{sppcspc_forward.7} parent=11 // pred_region
        _
      $region28: #{sppcspc_forward.7} parent=11 // pred_fallthru
        _
      // Predicated region
      $region29: #{sppcspc_forward.7} parent=11 // pred_check
        %p223 = pneg %p170
      $region30: #{sppcspc_forward.7} parent=11 // pred_check_branch
        %225 = sbr.rel (%p223) target = $region32
      $region31: #{sppcspc_forward.7} parent=11 // pred_region
        _
      $region32: #{sppcspc_forward.7} parent=11 // pred_fallthru
        _
    $region12: #{sppcspc_forward.7} parent=5 // pred_fallthru
      _
    %p226 = scmp.lt.s32.totalorder %s13, 2
    // Predicated region
    $region33: #{sppcspc_forward.7} parent=5 // pred_check
      %p227 = pneg %p226
    $region34: #{sppcspc_forward.7} parent=5 // pred_check_branch
      %229 = sbr.rel (%p227) target = $region36
    $region35: #{sppcspc_forward.7} parent=5 // pred_region
      // Predicated region
      $region37: #{sppcspc_forward.7} parent=35 // pred_check
        %p230 = pneg %p33
      $region38: #{sppcspc_forward.7} parent=35 // pred_check_branch
        %232 = sbr.rel (%p230) target = $region40
      $region39: #{sppcspc_forward.7} parent=35 // pred_region
        %p233 = scmp.lt.s32.totalorder %s13, 1
        %s234 = scalar_select %p233, %s13, 1
        %s235 = smul.addr %s234, 32
        %s236 = smul.addr %s235, 4
        %s237 = scalar_lea.vmem %s0, %s236
      $region40: #{sppcspc_forward.7} parent=35 // pred_fallthru
        _
      // Predicated region
      $region41: #{sppcspc_forward.7} parent=35 // pred_check
        %p238 = pneg %p59
      $region42: #{sppcspc_forward.7} parent=35 // pred_check_branch
        %240 = sbr.rel (%p238) target = $region44
      $region43: #{sppcspc_forward.7} parent=35 // pred_region
        %p241 = scmp.lt.s32.totalorder %s13, 1
        %s242 = scalar_select %p241, %s13, 1
        %s243 = smul.addr %s242, 32
        %s244 = smul.addr %s243, 4
        %s245 = scalar_lea.vmem %s1, %s244
      $region44: #{sppcspc_forward.7} parent=35 // pred_fallthru
        _
    $region36: #{sppcspc_forward.7} parent=5 // pred_fallthru
      _
    %p246 = scmp.le.s32.totalorder 1, %s13
    %p247 = scmp.lt.s32.totalorder %s13, 3
    %p248 = pnand %p246, %p247
    %p249 = pneg %p248
    // Predicated region
    $region45: #{sppcspc_forward.7} parent=5 // pred_check
      _
    $region46: #{sppcspc_forward.7} parent=5 // pred_check_branch
      %251 = sbr.rel (%p248) target = $region48
    $region47: #{sppcspc_forward.7} parent=5 // pred_region
      %s252 = ssub.s32 %s13, 1
      %p253 = scmp.lt.s32.totalorder %s18, 1
      %s254 = scalar_select %p253, %s18, 1
      %s255 = smul.addr %s254, 32
      %s256 = smul.addr %s255, 4
      %s257 = scalar_lea.vmem %s0, %s256
      %p258 = pneg %p39
      %p259 = pneg %p36
      %p260 = scmp.lt.s32.totalorder %s18, 1
      %s261 = scalar_select %p260, %s18, 1
      %s262 = smul.addr %s261, 32
      %s263 = smul.addr %s262, 4
      %s264 = scalar_lea.vmem %s1, %s263
      %p265 = pneg %p65
      %p266 = pneg %p62
      %p267 = pneg %p86
      %p268 = pneg %p83
      %p269 = pneg %p107
      %p270 = pneg %p104
      %p271 = pneg %p128
      %p272 = pneg %p125
      %p273 = pneg %p149
      %p274 = pneg %p146
      %p275 = pneg %p170
      %p276 = pneg %p167
      %p277 = pneg %p196
      %p278 = pneg %p193
      %p279 = scmp.lt.s32.totalorder %s18, 1
      %s280 = scalar_select %p279, %s18, 1
      %s281 = smul.addr %s280, 32
      %s282 = smul.addr %s281, 8
      %s283 = scalar_lea.vmem %s7, %s282
      %p284 = scmp.lt.s32.totalorder %s18, 1
      %s285 = scalar_select %p284, %s18, 1
      %s286 = smul.addr %s285, 32
      %s287 = smul.addr %s286, 4
      %s288 = scalar_lea.vmem %s0, %s287
      %p289 = scmp.lt.s32.totalorder %s18, 1
      %s290 = scalar_select %p289, %s18, 1
      %s291 = smul.addr %s290, 32
      %s292 = smul.addr %s291, 4
      %s293 = scalar_lea.vmem %s1, %s292
      %p294 = scmp.lt.s32.totalorder %s18, 1
      %s295 = scalar_select %p294, %s18, 1
      %s296 = smul.addr %s295, 32
      %s297 = smul.addr %s296, 8
      %s298 = scalar_lea.vmem %s7, %s297
      %v300 = vld [vmem:[%s288] sm:$0xf]
      %v301 = vld [vmem:[%s288 + $0x4] sm:$0xf]
      %v302 = vld [vmem:[%s288 + $0x8] sm:$0xf]
      %v303 = vld [vmem:[%s288 + $0xc] sm:$0xf]
      %v304 = vld [vmem:[%s288 + $0x10] sm:$0xf]
      %v305 = vld [vmem:[%s288 + $0x14] sm:$0xf]
      %v306 = vld [vmem:[%s288 + $0x18] sm:$0xf]
      %v307 = vld [vmem:[%s288 + $0x1c] sm:$0xf]
      %v308 = vld [vmem:[%s288 + $0x20] sm:$0xf]
      %v309 = vld [vmem:[%s288 + $0x24] sm:$0xf]
      %v310 = vld [vmem:[%s288 + $0x28] sm:$0xf]
      %v311 = vld [vmem:[%s288 + $0x2c] sm:$0xf]
      %v312 = vld [vmem:[%s288 + $0x30] sm:$0xf]
      %v313 = vld [vmem:[%s288 + $0x34] sm:$0xf]
      %v314 = vld [vmem:[%s288 + $0x38] sm:$0xf]
      %v315 = vld [vmem:[%s288 + $0x3c] sm:$0xf]
      %v316 = vld [vmem:[%s288 + $0x40] sm:$0xf]
      %v317 = vld [vmem:[%s288 + $0x44] sm:$0xf]
      %v318 = vld [vmem:[%s288 + $0x48] sm:$0xf]
      %v319 = vld [vmem:[%s288 + $0x4c] sm:$0xf]
      %v320 = vld [vmem:[%s288 + $0x50] sm:$0xf]
      %v321 = vld [vmem:[%s288 + $0x54] sm:$0xf]
      %v322 = vld [vmem:[%s288 + $0x58] sm:$0xf]
      %v323 = vld [vmem:[%s288 + $0x5c] sm:$0xf]
      %v324 = vld [vmem:[%s288 + $0x60] sm:$0xf]
      %v325 = vld [vmem:[%s288 + $0x64] sm:$0xf]
      %v326 = vld [vmem:[%s288 + $0x68] sm:$0xf]
      %v327 = vld [vmem:[%s288 + $0x6c] sm:$0xf]
      %v328 = vld [vmem:[%s288 + $0x70] sm:$0xf]
      %v329 = vld [vmem:[%s288 + $0x74] sm:$0xf]
      %v330 = vld [vmem:[%s288 + $0x78] sm:$0xf]
      %v331 = vld [vmem:[%s288 + $0x7c] sm:$0xf]
      %v364 = vunpack.c.l.b16 %v300
      %v365 = vunpack.c.l.b16 %v301
      %v366 = vunpack.c.l.b16 %v302
      %v367 = vunpack.c.l.b16 %v303
      %v368 = vunpack.c.l.b16 %v304
      %v369 = vunpack.c.l.b16 %v305
      %v370 = vunpack.c.l.b16 %v306
      %v371 = vunpack.c.l.b16 %v307
      %v372 = vunpack.c.l.b16 %v308
      %v373 = vunpack.c.l.b16 %v309
      %v374 = vunpack.c.l.b16 %v310
      %v375 = vunpack.c.l.b16 %v311
      %v376 = vunpack.c.l.b16 %v312
      %v377 = vunpack.c.l.b16 %v313
      %v378 = vunpack.c.l.b16 %v314
      %v379 = vunpack.c.l.b16 %v315
      %v380 = vunpack.c.l.b16 %v316
      %v381 = vunpack.c.l.b16 %v317
      %v382 = vunpack.c.l.b16 %v318
      %v383 = vunpack.c.l.b16 %v319
      %v384 = vunpack.c.l.b16 %v320
      %v385 = vunpack.c.l.b16 %v321
      %v386 = vunpack.c.l.b16 %v322
      %v387 = vunpack.c.l.b16 %v323
      %v388 = vunpack.c.l.b16 %v324
      %v389 = vunpack.c.l.b16 %v325
      %v390 = vunpack.c.l.b16 %v326
      %v391 = vunpack.c.l.b16 %v327
      %v392 = vunpack.c.l.b16 %v328
      %v393 = vunpack.c.l.b16 %v329
      %v394 = vunpack.c.l.b16 %v330
      %v395 = vunpack.c.l.b16 %v331
      %v396 = vpack.c.b16 %v365, %v364
      %v397 = vpack.c.b16 %v367, %v366
      %v398 = vpack.c.b16 %v369, %v368
      %v399 = vpack.c.b16 %v371, %v370
      %v400 = vpack.c.b16 %v373, %v372
      %v401 = vpack.c.b16 %v375, %v374
      %v402 = vpack.c.b16 %v377, %v376
      %v403 = vpack.c.b16 %v379, %v378
      %v404 = vpack.c.b16 %v381, %v380
      %v405 = vpack.c.b16 %v383, %v382
      %v406 = vpack.c.b16 %v385, %v384
      %v407 = vpack.c.b16 %v387, %v386
      %v408 = vpack.c.b16 %v389, %v388
      %v409 = vpack.c.b16 %v391, %v390
      %v410 = vpack.c.b16 %v393, %v392
      %v411 = vpack.c.b16 %v395, %v394
      %v413 = vshrl.u32 0, 16
      %v415 = vrot.slane %v413, 7
      %v416 = vshll.u32 0, 16
      %v418 = vor.u32 %v415, %v416
      %v420 = vshrl.u32 %v396, 16
      %v422 = vrot.slane %v420, 7
      %v423 = vshll.u32 %v396, 16
      %v425 = vor.u32 %v422, %v423
      %v427 = vshrl.u32 %v397, 16
      %v429 = vrot.slane %v427, 7
      %v430 = vshll.u32 %v397, 16
      %v432 = vor.u32 %v429, %v430
      %v434 = vshrl.u32 %v398, 16
      %v436 = vrot.slane %v434, 7
      %v437 = vshll.u32 %v398, 16
      %v439 = vor.u32 %v436, %v437
      %v441 = vshrl.u32 %v399, 16
      %v443 = vrot.slane %v441, 7
      %v444 = vshll.u32 %v399, 16
      %v446 = vor.u32 %v443, %v444
      %v448 = vshrl.u32 %v400, 16
      %v450 = vrot.slane %v448, 7
      %v451 = vshll.u32 %v400, 16
      %v453 = vor.u32 %v450, %v451
      %v455 = vshrl.u32 %v401, 16
      %v457 = vrot.slane %v455, 7
      %v458 = vshll.u32 %v401, 16
      %v460 = vor.u32 %v457, %v458
      %v462 = vshrl.u32 %v402, 16
      %v464 = vrot.slane %v462, 7
      %v465 = vshll.u32 %v402, 16
      %v467 = vor.u32 %v464, %v465
      %v469 = vshrl.u32 %v403, 16
      %v471 = vrot.slane %v469, 7
      %v472 = vshll.u32 %v403, 16
      %v474 = vor.u32 %v471, %v472
      %v476 = vshrl.u32 %v404, 16
      %v478 = vrot.slane %v476, 7
      %v479 = vshll.u32 %v404, 16
      %v481 = vor.u32 %v478, %v479
      %v483 = vshrl.u32 %v405, 16
      %v485 = vrot.slane %v483, 7
      %v486 = vshll.u32 %v405, 16
      %v488 = vor.u32 %v485, %v486
      %v490 = vshrl.u32 %v406, 16
      %v492 = vrot.slane %v490, 7
      %v493 = vshll.u32 %v406, 16
      %v495 = vor.u32 %v492, %v493
      %v497 = vshrl.u32 %v407, 16
      %v499 = vrot.slane %v497, 7
      %v500 = vshll.u32 %v407, 16
      %v502 = vor.u32 %v499, %v500
      %v504 = vshrl.u32 %v408, 16
      %v506 = vrot.slane %v504, 7
      %v507 = vshll.u32 %v408, 16
      %v509 = vor.u32 %v506, %v507
      %v511 = vshrl.u32 %v409, 16
      %v513 = vrot.slane %v511, 7
      %v514 = vshll.u32 %v409, 16
      %v516 = vor.u32 %v513, %v514
      %v518 = vshrl.u32 %v410, 16
      %v520 = vrot.slane %v518, 7
      %v521 = vshll.u32 %v410, 16
      %v523 = vor.u32 %v520, %v521
      %v525 = vshrl.u32 %v411, 16
      %v527 = vrot.slane %v525, 7
      %v528 = vshll.u32 %v411, 16
      %v530 = vor.u32 %v527, %v528
      %vm565 = vcmask 1040384
      %vm566 = vsmask.f32 256
      %vm567 = vmand %vm565, %vm566
      %v568 = vsel %vm567, 0, %v418
      %v569 = vsel %vm567, 0, %v425
      %v570 = vsel %vm567, 0, %v432
      %v571 = vsel %vm567, 0, %v439
      %v572 = vsel %vm567, 0, %v446
      %v573 = vsel %vm567, 0, %v453
      %v574 = vsel %vm567, 0, %v460
      %v575 = vsel %vm567, 0, %v467
      %v576 = vsel %vm567, 0, %v474
      %v577 = vsel %vm567, 0, %v481
      %v578 = vsel %vm567, 0, %v488
      %v579 = vsel %vm567, 0, %v495
      %v580 = vsel %vm567, 0, %v502
      %v581 = vsel %vm567, 0, %v509
      %v582 = vsel %vm567, 0, %v516
      %v583 = vsel %vm567, 0, %v523
      %v584 = vsel %vm567, 0, %v530
      %v585 = vsel %vm567, %v415, 0
      %v586 = vsel %vm567, %v422, 0
      %v587 = vsel %vm567, %v429, 0
      %v588 = vsel %vm567, %v436, 0
      %v589 = vsel %vm567, %v443, 0
      %v590 = vsel %vm567, %v450, 0
      %v591 = vsel %vm567, %v457, 0
      %v592 = vsel %vm567, %v464, 0
      %v593 = vsel %vm567, %v471, 0
      %v594 = vsel %vm567, %v478, 0
      %v595 = vsel %vm567, %v485, 0
      %v596 = vsel %vm567, %v492, 0
      %v597 = vsel %vm567, %v499, 0
      %v598 = vsel %vm567, %v506, 0
      %v599 = vsel %vm567, %v513, 0
      %v600 = vsel %vm567, %v520, 0
      %v601 = vsel %vm567, %v527, 0
      %v602 = vld [vmem:[%s2] sm:$0xf]
      %vm603 = vsmask.f32 7424
      %v605 = vshrl.u32 %v568, 16
      %v607 = vshll.u32 %v568, 16
      %v609 = vrot.slane %v607, 1
      %v610 = vor.u32 %v605, %v609
      %v612 = vshll.u32 %v585, 16
      %v614 = vrot.slane %v612, 1
      %v615 = vsel %vm603, %v610, %v614
      %v617 = vshrl.u32 %v569, 16
      %v619 = vshll.u32 %v569, 16
      %v621 = vrot.slane %v619, 1
      %v622 = vor.u32 %v617, %v621
      %v624 = vshll.u32 %v586, 16
      %v626 = vrot.slane %v624, 1
      %v627 = vsel %vm603, %v622, %v626
      %v629 = vshrl.u32 %v570, 16
      %v631 = vshll.u32 %v570, 16
      %v633 = vrot.slane %v631, 1
      %v634 = vor.u32 %v629, %v633
      %v636 = vshll.u32 %v587, 16
      %v638 = vrot.slane %v636, 1
      %v639 = vsel %vm603, %v634, %v638
      %v641 = vshrl.u32 %v571, 16
      %v643 = vshll.u32 %v571, 16
      %v645 = vrot.slane %v643, 1
      %v646 = vor.u32 %v641, %v645
      %v648 = vshll.u32 %v588, 16
      %v650 = vrot.slane %v648, 1
      %v651 = vsel %vm603, %v646, %v650
      %v653 = vshrl.u32 %v572, 16
      %v655 = vshll.u32 %v572, 16
      %v657 = vrot.slane %v655, 1
      %v658 = vor.u32 %v653, %v657
      %v660 = vshll.u32 %v589, 16
      %v662 = vrot.slane %v660, 1
      %v663 = vsel %vm603, %v658, %v662
      %v665 = vshrl.u32 %v573, 16
      %v667 = vshll.u32 %v573, 16
      %v669 = vrot.slane %v667, 1
      %v670 = vor.u32 %v665, %v669
      %v672 = vshll.u32 %v590, 16
      %v674 = vrot.slane %v672, 1
      %v675 = vsel %vm603, %v670, %v674
      %v677 = vshrl.u32 %v574, 16
      %v679 = vshll.u32 %v574, 16
      %v681 = vrot.slane %v679, 1
      %v682 = vor.u32 %v677, %v681
      %v684 = vshll.u32 %v591, 16
      %v686 = vrot.slane %v684, 1
      %v687 = vsel %vm603, %v682, %v686
      %v689 = vshrl.u32 %v575, 16
      %v691 = vshll.u32 %v575, 16
      %v693 = vrot.slane %v691, 1
      %v694 = vor.u32 %v689, %v693
      %v696 = vshll.u32 %v592, 16
      %v698 = vrot.slane %v696, 1
      %v699 = vsel %vm603, %v694, %v698
      %v701 = vshrl.u32 %v576, 16
      %v703 = vshll.u32 %v576, 16
      %v705 = vrot.slane %v703, 1
      %v706 = vor.u32 %v701, %v705
      %v708 = vshll.u32 %v593, 16
      %v710 = vrot.slane %v708, 1
      %v711 = vsel %vm603, %v706, %v710
      %v713 = vshrl.u32 %v577, 16
      %v715 = vshll.u32 %v577, 16
      %v717 = vrot.slane %v715, 1
      %v718 = vor.u32 %v713, %v717
      %v720 = vshll.u32 %v594, 16
      %v722 = vrot.slane %v720, 1
      %v723 = vsel %vm603, %v718, %v722
      %v725 = vshrl.u32 %v578, 16
      %v727 = vshll.u32 %v578, 16
      %v729 = vrot.slane %v727, 1
      %v730 = vor.u32 %v725, %v729
      %v732 = vshll.u32 %v595, 16
      %v734 = vrot.slane %v732, 1
      %v735 = vsel %vm603, %v730, %v734
      %v737 = vshrl.u32 %v579, 16
      %v739 = vshll.u32 %v579, 16
      %v741 = vrot.slane %v739, 1
      %v742 = vor.u32 %v737, %v741
      %v744 = vshll.u32 %v596, 16
      %v746 = vrot.slane %v744, 1
      %v747 = vsel %vm603, %v742, %v746
      %v749 = vshrl.u32 %v580, 16
      %v751 = vshll.u32 %v580, 16
      %v753 = vrot.slane %v751, 1
      %v754 = vor.u32 %v749, %v753
      %v756 = vshll.u32 %v597, 16
      %v758 = vrot.slane %v756, 1
      %v759 = vsel %vm603, %v754, %v758
      %v761 = vshrl.u32 %v581, 16
      %v763 = vshll.u32 %v581, 16
      %v765 = vrot.slane %v763, 1
      %v766 = vor.u32 %v761, %v765
      %v768 = vshll.u32 %v598, 16
      %v770 = vrot.slane %v768, 1
      %v771 = vsel %vm603, %v766, %v770
      %v773 = vshrl.u32 %v582, 16
      %v775 = vshll.u32 %v582, 16
      %v777 = vrot.slane %v775, 1
      %v778 = vor.u32 %v773, %v777
      %v780 = vshll.u32 %v599, 16
      %v782 = vrot.slane %v780, 1
      %v783 = vsel %vm603, %v778, %v782
      %v785 = vshrl.u32 %v583, 16
      %v787 = vshll.u32 %v583, 16
      %v789 = vrot.slane %v787, 1
      %v790 = vor.u32 %v785, %v789
      %v792 = vshll.u32 %v600, 16
      %v794 = vrot.slane %v792, 1
      %v795 = vsel %vm603, %v790, %v794
      %s796 = scalar_lea.vmem %s2, 4
      %v797 = vld [vmem:[%s796] sm:$0xf]
      %vm798 = vcmask 64512
      %v800 = vsel %vm798, %v615, 0
      %v803 = vsel %vm798, %v627, 0
      %v806 = vsel %vm798, %v639, 0
      %v809 = vsel %vm798, %v651, 0
      %v812 = vsel %vm798, %v663, 0
      %v815 = vsel %vm798, %v675, 0
      %v818 = vsel %vm798, %v687, 0
      %v821 = vsel %vm798, %v699, 0
      %v824 = vsel %vm798, %v711, 0
      %v827 = vsel %vm798, %v723, 0
      %v830 = vsel %vm798, %v735, 0
      %v833 = vsel %vm798, %v747, 0
      %v836 = vsel %vm798, %v759, 0
      %v839 = vsel %vm798, %v771, 0
      %v842 = vsel %vm798, %v783, 0
      %v845 = vsel %vm798, %v795, 0
      %vm847 = vcmask 1043456
      %v849 = vsel %vm847, %v797, 0
      %851 = vmatprep.subr.bf16.mxu0 0
      %852 = vmatpush1.bf16.msra.mxu0 %v849
      %853 = vmatprep.subr.bf16.mxu0 0
      %854 = vmatpush1.bf16.msra.mxu0 0
      %855 = vmatprep.subr.bf16.mxu0 0
      %856 = vmatpush1.bf16.msra.mxu0 0
      %857 = vmatprep.subr.bf16.mxu0 0
      %858 = vmatpush1.bf16.msra.mxu0 0
      %859 = vmatprep.subr.bf16.mxu0 0
      %860 = vmatpush1.bf16.msra.mxu0 0
      %861 = vmatprep.subr.bf16.mxu0 0
      %862 = vmatpush1.bf16.msra.mxu0 0
      %863 = vmatprep.subr.bf16.mxu0 0
      %864 = vmatpush1.bf16.msra.mxu0 0
      %865 = vmatprep.subr.bf16.mxu0 0
      %866 = vmatpush1.bf16.msra.mxu0 0
      %867 = vmatprep.subr.bf16.mxu0 0
      %868 = vmatpush1.bf16.msra.mxu0 0
      %869 = vmatprep.subr.bf16.mxu0 0
      %870 = vmatpush1.bf16.msra.mxu0 0
      %871 = vmatprep.subr.bf16.mxu0 0
      %872 = vmatpush1.bf16.msra.mxu0 0
      %873 = vmatprep.subr.bf16.mxu0 0
      %874 = vmatpush1.bf16.msra.mxu0 0
      %875 = vmatprep.subr.bf16.mxu0 0
      %876 = vmatpush1.bf16.msra.mxu0 0
      %877 = vmatprep.subr.bf16.mxu0 0
      %878 = vmatpush1.bf16.msra.mxu0 0
      %879 = vmatprep.subr.bf16.mxu0 0
      %880 = vmatpush1.bf16.msra.mxu0 0
      %881 = vmatprep.subr.bf16.mxu0 0
      %882 = vmatpush1.bf16.msra.mxu0 0
      %883 = vmatprep.mubr.bf16.mxu0 0
      %884 = vmatmul.mubr.bf16.gmra.mrb[0].mxu0 %v800
      %v885 = vpop.f32.mrb[0].mxu0
      %v886 = vadd.f32 0.0, %v885
      %v887 = vpop.f32.mrb[0].mxu0
      %v888 = vpop.f32.mrb[0].mxu0
      %v889 = vadd.f32 0.0, %v888
      %v890 = vpop.f32.mrb[0].mxu0
      %891 = vmatprep.mubr.bf16.mxu0 0
      %892 = vmatmul.mubr.bf16.gmra.mrb[0].mxu0 %v803
      %v893 = vpop.f32.mrb[0].mxu0
      %v894 = vadd.f32 0.0, %v893
      %v895 = vpop.f32.mrb[0].mxu0
      %v896 = vpop.f32.mrb[0].mxu0
      %v897 = vadd.f32 0.0, %v896
      %v898 = vpop.f32.mrb[0].mxu0
      %899 = vmatprep.mubr.bf16.mxu0 0
      %900 = vmatmul.mubr.bf16.gmra.mrb[0].mxu0 %v806
      %v901 = vpop.f32.mrb[0].mxu0
      %v902 = vadd.f32 0.0, %v901
      %v903 = vpop.f32.mrb[0].mxu0
      %v904 = vpop.f32.mrb[0].mxu0
      %v905 = vadd.f32 0.0, %v904
      %v906 = vpop.f32.mrb[0].mxu0
      %907 = vmatprep.mubr.bf16.mxu0 0
      %908 = vmatmul.mubr.bf16.gmra.mrb[0].mxu0 %v809
      %v909 = vpop.f32.mrb[0].mxu0
      %v910 = vadd.f32 0.0, %v909
      %v911 = vpop.f32.mrb[0].mxu0
      %v912 = vpop.f32.mrb[0].mxu0
      %v913 = vadd.f32 0.0, %v912
      %v914 = vpop.f32.mrb[0].mxu0
      %915 = vmatprep.mubr.bf16.mxu0 0
      %916 = vmatmul.mubr.bf16.gmra.mrb[0].mxu0 %v812
      %v917 = vpop.f32.mrb[0].mxu0
      %v918 = vadd.f32 0.0, %v917
      %v919 = vpop.f32.mrb[0].mxu0
      %v920 = vpop.f32.mrb[0].mxu0
      %v921 = vadd.f32 0.0, %v920
      %v922 = vpop.f32.mrb[0].mxu0
      %923 = vmatprep.mubr.bf16.mxu0 0
      %924 = vmatmul.mubr.bf16.gmra.mrb[0].mxu0 %v815
      %v925 = vpop.f32.mrb[0].mxu0
      %v926 = vadd.f32 0.0, %v925
      %v927 = vpop.f32.mrb[0].mxu0
      %v928 = vpop.f32.mrb[0].mxu0
      %v929 = vadd.f32 0.0, %v928
      %v930 = vpop.f32.mrb[0].mxu0
      %931 = vmatprep.mubr.bf16.mxu0 0
      %932 = vmatmul.mubr.bf16.gmra.mrb[0].mxu0 %v818
      %v933 = vpop.f32.mrb[0].mxu0
      %v934 = vadd.f32 0.0, %v933
      %v935 = vpop.f32.mrb[0].mxu0
      %v936 = vpop.f32.mrb[0].mxu0
      %v937 = vadd.f32 0.0, %v936
      %v938 = vpop.f32.mrb[0].mxu0
      %939 = vmatprep.mubr.bf16.mxu0 0
      %940 = vmatmul.mubr.bf16.gmra.mrb[0].mxu0 %v821
      %v941 = vpop.f32.mrb[0].mxu0
      %v942 = vadd.f32 0.0, %v941
      %v943 = vpop.f32.mrb[0].mxu0
      %v944 = vpop.f32.mrb[0].mxu0
      %v945 = vadd.f32 0.0, %v944
      %v946 = vpop.f32.mrb[0].mxu0
      %947 = vmatprep.mubr.bf16.mxu0 0
      %948 = vmatmul.mubr.bf16.gmra.mrb[0].mxu0 %v824
      %v949 = vpop.f32.mrb[0].mxu0
      %v950 = vadd.f32 0.0, %v949
      %v951 = vpop.f32.mrb[0].mxu0
      %v952 = vpop.f32.mrb[0].mxu0
      %v953 = vadd.f32 0.0, %v952
      %v954 = vpop.f32.mrb[0].mxu0
      %955 = vmatprep.mubr.bf16.mxu0 0
      %956 = vmatmul.mubr.bf16.gmra.mrb[0].mxu0 %v827
      %v957 = vpop.f32.mrb[0].mxu0
      %v958 = vadd.f32 0.0, %v957
      %v959 = vpop.f32.mrb[0].mxu0
      %v960 = vpop.f32.mrb[0].mxu0
      %v961 = vadd.f32 0.0, %v960
      %v962 = vpop.f32.mrb[0].mxu0
      %963 = vmatprep.mubr.bf16.mxu0 0
      %964 = vmatmul.mubr.bf16.gmra.mrb[0].mxu0 %v830
      %v965 = vpop.f32.mrb[0].mxu0
      %v966 = vadd.f32 0.0, %v965
      %v967 = vpop.f32.mrb[0].mxu0
      %v968 = vpop.f32.mrb[0].mxu0
      %v969 = vadd.f32 0.0, %v968
      %v970 = vpop.f32.mrb[0].mxu0
      %971 = vmatprep.mubr.bf16.mxu0 0
      %972 = vmatmul.mubr.bf16.gmra.mrb[0].mxu0 %v833
      %v973 = vpop.f32.mrb[0].mxu0
      %v974 = vadd.f32 0.0, %v973
      %v975 = vpop.f32.mrb[0].mxu0
      %v976 = vpop.f32.mrb[0].mxu0
      %v977 = vadd.f32 0.0, %v976
      %v978 = vpop.f32.mrb[0].mxu0
      %979 = vmatprep.mubr.bf16.mxu0 0
      %980 = vmatmul.mubr.bf16.gmra.mrb[0].mxu0 %v836
      %v981 = vpop.f32.mrb[0].mxu0
      %v982 = vadd.f32 0.0, %v981
      %v983 = vpop.f32.mrb[0].mxu0
      %v984 = vpop.f32.mrb[0].mxu0
      %v985 = vadd.f32 0.0, %v984
      %v986 = vpop.f32.mrb[0].mxu0
      %987 = vmatprep.mubr.bf16.mxu0 0
      %988 = vmatmul.mubr.bf16.gmra.mrb[0].mxu0 %v839
      %v989 = vpop.f32.mrb[0].mxu0
      %v990 = vadd.f32 0.0, %v989
      %v991 = vpop.f32.mrb[0].mxu0
      %v992 = vpop.f32.mrb[0].mxu0
      %v993 = vadd.f32 0.0, %v992
      %v994 = vpop.f32.mrb[0].mxu0
      %995 = vmatprep.mubr.bf16.mxu0 0
      %996 = vmatmul.mubr.bf16.gmra.mrb[0].mxu0 %v842
      %v997 = vpop.f32.mrb[0].mxu0
      %v998 = vadd.f32 0.0, %v997
      %v999 = vpop.f32.mrb[0].mxu0
      %v1000 = vpop.f32.mrb[0].mxu0
      %v1001 = vadd.f32 0.0, %v1000
      %v1002 = vpop.f32.mrb[0].mxu0
      %1003 = vmatprep.mubr.bf16.mxu0 0
      %1004 = vmatmul.mubr.bf16.gmra.mrb[0].mxu0 %v845
      %v1005 = vpop.f32.mrb[0].mxu0
      %v1006 = vadd.f32 0.0, %v1005
      %v1007 = vpop.f32.mrb[0].mxu0
      %v1008 = vpop.f32.mrb[0].mxu0
      %v1009 = vadd.f32 0.0, %v1008
      %v1010 = vpop.f32.mrb[0].mxu0
      %1011 = vdwg.mxu0
      %v1012 = vsel %vm798, %v568, 0
      %v1014 = vsel %vm798, %v569, 0
      %v1016 = vsel %vm798, %v570, 0
      %v1018 = vsel %vm798, %v571, 0
      %v1020 = vsel %vm798, %v572, 0
      %v1022 = vsel %vm798, %v573, 0
      %v1024 = vsel %vm798, %v574, 0
      %v1026 = vsel %vm798, %v575, 0
      %v1028 = vsel %vm798, %v576, 0
      %v1030 = vsel %vm798, %v577, 0
      %v1032 = vsel %vm798, %v578, 0
      %v1034 = vsel %vm798, %v579, 0
      %v1036 = vsel %vm798, %v580, 0
      %v1038 = vsel %vm798, %v581, 0
      %v1040 = vsel %vm798, %v582, 0
      %v1042 = vsel %vm798, %v583, 0
      %v1045 = vsel %vm847, %v602, 0
      %1047 = vmatprep.subr.bf16.mxu0 0
      %1048 = vmatpush1.bf16.msra.mxu0 %v1045
      %1049 = vmatprep.subr.bf16.mxu0 0
      %1050 = vmatpush1.bf16.msra.mxu0 0
      %1051 = vmatprep.subr.bf16.mxu0 0
      %1052 = vmatpush1.bf16.msra.mxu0 0
      %1053 = vmatprep.subr.bf16.mxu0 0
      %1054 = vmatpush1.bf16.msra.mxu0 0
      %1055 = vmatprep.subr.bf16.mxu0 0
      %1056 = vmatpush1.bf16.msra.mxu0 0
      %1057 = vmatprep.subr.bf16.mxu0 0
      %1058 = vmatpush1.bf16.msra.mxu0 0
      %1059 = vmatprep.subr.bf16.mxu0 0
      %1060 = vmatpush1.bf16.msra.mxu0 0
      %1061 = vmatprep.subr.bf16.mxu0 0
      %1062 = vmatpush1.bf16.msra.mxu0 0
      %1063 = vmatprep.subr.bf16.mxu0 0
      %1064 = vmatpush1.bf16.msra.mxu0 0
      %1065 = vmatprep.subr.bf16.mxu0 0
      %1066 = vmatpush1.bf16.msra.mxu0 0
      %1067 = vmatprep.subr.bf16.mxu0 0
      %1068 = vmatpush1.bf16.msra.mxu0 0
      %1069 = vmatprep.subr.bf16.mxu0 0
      %1070 = vmatpush1.bf16.msra.mxu0 0
      %1071 = vmatprep.subr.bf16.mxu0 0
      %1072 = vmatpush1.bf16.msra.mxu0 0
      %1073 = vmatprep.subr.bf16.mxu0 0
      %1074 = vmatpush1.bf16.msra.mxu0 0
      %1075 = vmatprep.subr.bf16.mxu0 0
      %1076 = vmatpush1.bf16.msra.mxu0 0
      %1077 = vmatprep.subr.bf16.mxu0 0
      %1078 = vmatpush1.bf16.msra.mxu0 0
      %1079 = vmatprep.mubr.bf16.mxu0 0
      %1080 = vmatmul.mubr.bf16.gmra.mrb[0].mxu0 %v1012
      %v1081 = vpop.f32.mrb[0].mxu0
      %v1082 = vadd.f32 %v886, %v1081
      %v1083 = vpop.f32.mrb[0].mxu0
      %v1084 = vpop.f32.mrb[0].mxu0
      %v1085 = vadd.f32 %v889, %v1084
      %v1086 = vpop.f32.mrb[0].mxu0
      %1087 = vmatprep.mubr.bf16.mxu0 0
      %1088 = vmatmul.mubr.bf16.gmra.mrb[0].mxu0 %v1014
      %v1089 = vpop.f32.mrb[0].mxu0
      %v1090 = vadd.f32 %v894, %v1089
      %v1091 = vpop.f32.mrb[0].mxu0
      %v1092 = vpop.f32.mrb[0].mxu0
      %v1093 = vadd.f32 %v897, %v1092
      %v1094 = vpop.f32.mrb[0].mxu0
      %1095 = vmatprep.mubr.bf16.mxu0 0
      %1096 = vmatmul.mubr.bf16.gmra.mrb[0].mxu0 %v1016
      %v1097 = vpop.f32.mrb[0].mxu0
      %v1098 = vadd.f32 %v902, %v1097
      %v1099 = vpop.f32.mrb[0].mxu0
      %v1100 = vpop.f32.mrb[0].mxu0
      %v1101 = vadd.f32 %v905, %v1100
      %v1102 = vpop.f32.mrb[0].mxu0
      %1103 = vmatprep.mubr.bf16.mxu0 0
      %1104 = vmatmul.mubr.bf16.gmra.mrb[0].mxu0 %v1018
      %v1105 = vpop.f32.mrb[0].mxu0
      %v1106 = vadd.f32 %v910, %v1105
      %v1107 = vpop.f32.mrb[0].mxu0
      %v1108 = vpop.f32.mrb[0].mxu0
      %v1109 = vadd.f32 %v913, %v1108
      %v1110 = vpop.f32.mrb[0].mxu0
      %1111 = vmatprep.mubr.bf16.mxu0 0
      %1112 = vmatmul.mubr.bf16.gmra.mrb[0].mxu0 %v1020
      %v1113 = vpop.f32.mrb[0].mxu0
      %v1114 = vadd.f32 %v918, %v1113
      %v1115 = vpop.f32.mrb[0].mxu0
      %v1116 = vpop.f32.mrb[0].mxu0
      %v1117 = vadd.f32 %v921, %v1116
      %v1118 = vpop.f32.mrb[0].mxu0
      %1119 = vmatprep.mubr.bf16.mxu0 0
      %1120 = vmatmul.mubr.bf16.gmra.mrb[0].mxu0 %v1022
      %v1121 = vpop.f32.mrb[0].mxu0
      %v1122 = vadd.f32 %v926, %v1121
      %v1123 = vpop.f32.mrb[0].mxu0
      %v1124 = vpop.f32.mrb[0].mxu0
      %v1125 = vadd.f32 %v929, %v1124
      %v1126 = vpop.f32.mrb[0].mxu0
      %1127 = vmatprep.mubr.bf16.mxu0 0
      %1128 = vmatmul.mubr.bf16.gmra.mrb[0].mxu0 %v1024
      %v1129 = vpop.f32.mrb[0].mxu0
      %v1130 = vadd.f32 %v934, %v1129
      %v1131 = vpop.f32.mrb[0].mxu0
      %v1132 = vpop.f32.mrb[0].mxu0
      %v1133 = vadd.f32 %v937, %v1132
      %v1134 = vpop.f32.mrb[0].mxu0
      %1135 = vmatprep.mubr.bf16.mxu0 0
      %1136 = vmatmul.mubr.bf16.gmra.mrb[0].mxu0 %v1026
      %v1137 = vpop.f32.mrb[0].mxu0
      %v1138 = vadd.f32 %v942, %v1137
      %v1139 = vpop.f32.mrb[0].mxu0
      %v1140 = vpop.f32.mrb[0].mxu0
      %v1141 = vadd.f32 %v945, %v1140
      %v1142 = vpop.f32.mrb[0].mxu0
      %1143 = vmatprep.mubr.bf16.mxu0 0
      %1144 = vmatmul.mubr.bf16.gmra.mrb[0].mxu0 %v1028
      %v1145 = vpop.f32.mrb[0].mxu0
      %v1146 = vadd.f32 %v950, %v1145
      %v1147 = vpop.f32.mrb[0].mxu0
      %v1148 = vpop.f32.mrb[0].mxu0
      %v1149 = vadd.f32 %v953, %v1148
      %v1150 = vpop.f32.mrb[0].mxu0
      %1151 = vmatprep.mubr.bf16.mxu0 0
      %1152 = vmatmul.mubr.bf16.gmra.mrb[0].mxu0 %v1030
      %v1153 = vpop.f32.mrb[0].mxu0
      %v1154 = vadd.f32 %v958, %v1153
      %v1155 = vpop.f32.mrb[0].mxu0
      %v1156 = vpop.f32.mrb[0].mxu0
      %v1157 = vadd.f32 %v961, %v1156
      %v1158 = vpop.f32.mrb[0].mxu0
      %1159 = vmatprep.mubr.bf16.mxu0 0
      %1160 = vmatmul.mubr.bf16.gmra.mrb[0].mxu0 %v1032
      %v1161 = vpop.f32.mrb[0].mxu0
      %v1162 = vadd.f32 %v966, %v1161
      %v1163 = vpop.f32.mrb[0].mxu0
      %v1164 = vpop.f32.mrb[0].mxu0
      %v1165 = vadd.f32 %v969, %v1164
      %v1166 = vpop.f32.mrb[0].mxu0
      %1167 = vmatprep.mubr.bf16.mxu0 0
      %1168 = vmatmul.mubr.bf16.gmra.mrb[0].mxu0 %v1034
      %v1169 = vpop.f32.mrb[0].mxu0
      %v1170 = vadd.f32 %v974, %v1169
      %v1171 = vpop.f32.mrb[0].mxu0
      %v1172 = vpop.f32.mrb[0].mxu0
      %v1173 = vadd.f32 %v977, %v1172
      %v1174 = vpop.f32.mrb[0].mxu0
      %1175 = vmatprep.mubr.bf16.mxu0 0
      %1176 = vmatmul.mubr.bf16.gmra.mrb[0].mxu0 %v1036
      %v1177 = vpop.f32.mrb[0].mxu0
      %v1178 = vadd.f32 %v982, %v1177
      %v1179 = vpop.f32.mrb[0].mxu0
      %v1180 = vpop.f32.mrb[0].mxu0
      %v1181 = vadd.f32 %v985, %v1180
      %v1182 = vpop.f32.mrb[0].mxu0
      %1183 = vmatprep.mubr.bf16.mxu0 0
      %1184 = vmatmul.mubr.bf16.gmra.mrb[0].mxu0 %v1038
      %v1185 = vpop.f32.mrb[0].mxu0
      %v1186 = vadd.f32 %v990, %v1185
      %v1187 = vpop.f32.mrb[0].mxu0
      %v1188 = vpop.f32.mrb[0].mxu0
      %v1189 = vadd.f32 %v993, %v1188
      %v1190 = vpop.f32.mrb[0].mxu0
      %1191 = vmatprep.mubr.bf16.mxu0 0
      %1192 = vmatmul.mubr.bf16.gmra.mrb[0].mxu0 %v1040
      %v1193 = vpop.f32.mrb[0].mxu0
      %v1194 = vadd.f32 %v998, %v1193
      %v1195 = vpop.f32.mrb[0].mxu0
      %v1196 = vpop.f32.mrb[0].mxu0
      %v1197 = vadd.f32 %v1001, %v1196
      %v1198 = vpop.f32.mrb[0].mxu0
      %1199 = vmatprep.mubr.bf16.mxu0 0
      %1200 = vmatmul.mubr.bf16.gmra.mrb[0].mxu0 %v1042
      %v1201 = vpop.f32.mrb[0].mxu0
      %v1202 = vadd.f32 %v1006, %v1201
      %v1203 = vpop.f32.mrb[0].mxu0
      %v1204 = vpop.f32.mrb[0].mxu0
      %v1205 = vadd.f32 %v1009, %v1204
      %v1206 = vpop.f32.mrb[0].mxu0
      %1207 = vdwg.mxu0
      %vm1240 = vcmask 1046528
      %v1241 = vrot.slane %v568, 1
      %v1242 = vrot.slane %v585, 1
      %v1243 = vsel %vm1240, %v1241, %v1242
      %v1244 = vrot.slane %v569, 1
      %v1245 = vrot.slane %v586, 1
      %v1246 = vsel %vm1240, %v1244, %v1245
      %v1247 = vrot.slane %v570, 1
      %v1248 = vrot.slane %v587, 1
      %v1249 = vsel %vm1240, %v1247, %v1248
      %v1250 = vrot.slane %v571, 1
      %v1251 = vrot.slane %v588, 1
      %v1252 = vsel %vm1240, %v1250, %v1251
      %v1253 = vrot.slane %v572, 1
      %v1254 = vrot.slane %v589, 1
      %v1255 = vsel %vm1240, %v1253, %v1254
      %v1256 = vrot.slane %v573, 1
      %v1257 = vrot.slane %v590, 1
      %v1258 = vsel %vm1240, %v1256, %v1257
      %v1259 = vrot.slane %v574, 1
      %v1260 = vrot.slane %v591, 1
      %v1261 = vsel %vm1240, %v1259, %v1260
      %v1262 = vrot.slane %v575, 1
      %v1263 = vrot.slane %v592, 1
      %v1264 = vsel %vm1240, %v1262, %v1263
      %v1265 = vrot.slane %v576, 1
      %v1266 = vrot.slane %v593, 1
      %v1267 = vsel %vm1240, %v1265, %v1266
      %v1268 = vrot.slane %v577, 1
      %v1269 = vrot.slane %v594, 1
      %v1270 = vsel %vm1240, %v1268, %v1269
      %v1271 = vrot.slane %v578, 1
      %v1272 = vrot.slane %v595, 1
      %v1273 = vsel %vm1240, %v1271, %v1272
      %v1274 = vrot.slane %v579, 1
      %v1275 = vrot.slane %v596, 1
      %v1276 = vsel %vm1240, %v1274, %v1275
      %v1277 = vrot.slane %v580, 1
      %v1278 = vrot.slane %v597, 1
      %v1279 = vsel %vm1240, %v1277, %v1278
      %v1280 = vrot.slane %v581, 1
      %v1281 = vrot.slane %v598, 1
      %v1282 = vsel %vm1240, %v1280, %v1281
      %v1283 = vrot.slane %v582, 1
      %v1284 = vrot.slane %v599, 1
      %v1285 = vsel %vm1240, %v1283, %v1284
      %v1286 = vrot.slane %v583, 1
      %v1287 = vrot.slane %v600, 1
      %v1288 = vsel %vm1240, %v1286, %v1287
      %s1289 = scalar_lea.vmem %s2, 8
      %v1290 = vld [vmem:[%s1289] sm:$0xf]
      %v1292 = vsel %vm798, %v1243, 0
      %v1295 = vsel %vm798, %v1246, 0
      %v1298 = vsel %vm798, %v1249, 0
      %v1301 = vsel %vm798, %v1252, 0
      %v1304 = vsel %vm798, %v1255, 0
      %v1307 = vsel %vm798, %v1258, 0
      %v1310 = vsel %vm798, %v1261, 0
      %v1313 = vsel %vm798, %v1264, 0
      %v1316 = vsel %vm798, %v1267, 0
      %v1319 = vsel %vm798, %v1270, 0
      %v1322 = vsel %vm798, %v1273, 0
      %v1325 = vsel %vm798, %v1276, 0
      %v1328 = vsel %vm798, %v1279, 0
      %v1331 = vsel %vm798, %v1282, 0
      %v1334 = vsel %vm798, %v1285, 0
      %v1337 = vsel %vm798, %v1288, 0
      %v1340 = vsel %vm847, %v1290, 0
      %1342 = vmatprep.subr.bf16.mxu0 0
      %1343 = vmatpush1.bf16.msra.mxu0 %v1340
      %1344 = vmatprep.subr.bf16.mxu0 0
      %1345 = vmatpush1.bf16.msra.mxu0 0
      %1346 = vmatprep.subr.bf16.mxu0 0
      %1347 = vmatpush1.bf16.msra.mxu0 0
      %1348 = vmatprep.subr.bf16.mxu0 0
      %1349 = vmatpush1.bf16.msra.mxu0 0
      %1350 = vmatprep.subr.bf16.mxu0 0
      %1351 = vmatpush1.bf16.msra.mxu0 0
      %1352 = vmatprep.subr.bf16.mxu0 0
      %1353 = vmatpush1.bf16.msra.mxu0 0
      %1354 = vmatprep.subr.bf16.mxu0 0
      %1355 = vmatpush1.bf16.msra.mxu0 0
      %1356 = vmatprep.subr.bf16.mxu0 0
      %1357 = vmatpush1.bf16.msra.mxu0 0
      %1358 = vmatprep.subr.bf16.mxu0 0
      %1359 = vmatpush1.bf16.msra.mxu0 0
      %1360 = vmatprep.subr.bf16.mxu0 0
      %1361 = vmatpush1.bf16.msra.mxu0 0
      %1362 = vmatprep.subr.bf16.mxu0 0
      %1363 = vmatpush1.bf16.msra.mxu0 0
      %1364 = vmatprep.subr.bf16.mxu0 0
      %1365 = vmatpush1.bf16.msra.mxu0 0
      %1366 = vmatprep.subr.bf16.mxu0 0
      %1367 = vmatpush1.bf16.msra.mxu0 0
      %1368 = vmatprep.subr.bf16.mxu0 0
      %1369 = vmatpush1.bf16.msra.mxu0 0
      %1370 = vmatprep.subr.bf16.mxu0 0
      %1371 = vmatpush1.bf16.msra.mxu0 0
      %1372 = vmatprep.subr.bf16.mxu0 0
      %1373 = vmatpush1.bf16.msra.mxu0 0
      %1374 = vmatprep.mubr.bf16.mxu0 0
      %1375 = vmatmul.mubr.bf16.gmra.mrb[0].mxu0 %v1292
      %v1376 = vpop.f32.mrb[0].mxu0
      %v1377 = vadd.f32 0.0, %v1376
      %v1378 = vpop.f32.mrb[0].mxu0
      %v1379 = vpop.f32.mrb[0].mxu0
      %v1380 = vadd.f32 0.0, %v1379
      %v1381 = vpop.f32.mrb[0].mxu0
      %1382 = vmatprep.mubr.bf16.mxu0 0
      %1383 = vmatmul.mubr.bf16.gmra.mrb[0].mxu0 %v1295
      %v1384 = vpop.f32.mrb[0].mxu0
      %v1385 = vadd.f32 0.0, %v1384
      %v1386 = vpop.f32.mrb[0].mxu0
      %v1387 = vpop.f32.mrb[0].mxu0
      %v1388 = vadd.f32 0.0, %v1387
      %v1389 = vpop.f32.mrb[0].mxu0
      %1390 = vmatprep.mubr.bf16.mxu0 0
      %1391 = vmatmul.mubr.bf16.gmra.mrb[0].mxu0 %v1298
      %v1392 = vpop.f32.mrb[0].mxu0
      %v1393 = vadd.f32 0.0, %v1392
      %v1394 = vpop.f32.mrb[0].mxu0
      %v1395 = vpop.f32.mrb[0].mxu0
      %v1396 = vadd.f32 0.0, %v1395
      %v1397 = vpop.f32.mrb[0].mxu0
      %1398 = vmatprep.mubr.bf16.mxu0 0
      %1399 = vmatmul.mubr.bf16.gmra.mrb[0].mxu0 %v1301
      %v1400 = vpop.f32.mrb[0].mxu0
      %v1401 = vadd.f32 0.0, %v1400
      %v1402 = vpop.f32.mrb[0].mxu0
      %v1403 = vpop.f32.mrb[0].mxu0
      %v1404 = vadd.f32 0.0, %v1403
      %v1405 = vpop.f32.mrb[0].mxu0
      %1406 = vmatprep.mubr.bf16.mxu0 0
      %1407 = vmatmul.mubr.bf16.gmra.mrb[0].mxu0 %v1304
      %v1408 = vpop.f32.mrb[0].mxu0
      %v1409 = vadd.f32 0.0, %v1408
      %v1410 = vpop.f32.mrb[0].mxu0
      %v1411 = vpop.f32.mrb[0].mxu0
      %v1412 = vadd.f32 0.0, %v1411
      %v1413 = vpop.f32.mrb[0].mxu0
      %1414 = vmatprep.mubr.bf16.mxu0 0
      %1415 = vmatmul.mubr.bf16.gmra.mrb[0].mxu0 %v1307
      %v1416 = vpop.f32.mrb[0].mxu0
      %v1417 = vadd.f32 0.0, %v1416
      %v1418 = vpop.f32.mrb[0].mxu0
      %v1419 = vpop.f32.mrb[0].mxu0
      %v1420 = vadd.f32 0.0, %v1419
      %v1421 = vpop.f32.mrb[0].mxu0
      %1422 = vmatprep.mubr.bf16.mxu0 0
      %1423 = vmatmul.mubr.bf16.gmra.mrb[0].mxu0 %v1310
      %v1424 = vpop.f32.mrb[0].mxu0
      %v1425 = vadd.f32 0.0, %v1424
      %v1426 = vpop.f32.mrb[0].mxu0
      %v1427 = vpop.f32.mrb[0].mxu0
      %v1428 = vadd.f32 0.0, %v1427
      %v1429 = vpop.f32.mrb[0].mxu0
      %1430 = vmatprep.mubr.bf16.mxu0 0
      %1431 = vmatmul.mubr.bf16.gmra.mrb[0].mxu0 %v1313
      %v1432 = vpop.f32.mrb[0].mxu0
      %v1433 = vadd.f32 0.0, %v1432
      %v1434 = vpop.f32.mrb[0].mxu0
      %v1435 = vpop.f32.mrb[0].mxu0
      %v1436 = vadd.f32 0.0, %v1435
      %v1437 = vpop.f32.mrb[0].mxu0
      %1438 = vmatprep.mubr.bf16.mxu0 0
      %1439 = vmatmul.mubr.bf16.gmra.mrb[0].mxu0 %v1316
      %v1440 = vpop.f32.mrb[0].mxu0
      %v1441 = vadd.f32 0.0, %v1440
      %v1442 = vpop.f32.mrb[0].mxu0
      %v1443 = vpop.f32.mrb[0].mxu0
      %v1444 = vadd.f32 0.0, %v1443
      %v1445 = vpop.f32.mrb[0].mxu0
      %1446 = vmatprep.mubr.bf16.mxu0 0
      %1447 = vmatmul.mubr.bf16.gmra.mrb[0].mxu0 %v1319
      %v1448 = vpop.f32.mrb[0].mxu0
      %v1449 = vadd.f32 0.0, %v1448
      %v1450 = vpop.f32.mrb[0].mxu0
      %v1451 = vpop.f32.mrb[0].mxu0
      %v1452 = vadd.f32 0.0, %v1451
      %v1453 = vpop.f32.mrb[0].mxu0
      %1454 = vmatprep.mubr.bf16.mxu0 0
      %1455 = vmatmul.mubr.bf16.gmra.mrb[0].mxu0 %v1322
      %v1456 = vpop.f32.mrb[0].mxu0
      %v1457 = vadd.f32 0.0, %v1456
      %v1458 = vpop.f32.mrb[0].mxu0
      %v1459 = vpop.f32.mrb[0].mxu0
      %v1460 = vadd.f32 0.0, %v1459
      %v1461 = vpop.f32.mrb[0].mxu0
      %1462 = vmatprep.mubr.bf16.mxu0 0
      %1463 = vmatmul.mubr.bf16.gmra.mrb[0].mxu0 %v1325
      %v1464 = vpop.f32.mrb[0].mxu0
      %v1465 = vadd.f32 0.0, %v1464
      %v1466 = vpop.f32.mrb[0].mxu0
      %v1467 = vpop.f32.mrb[0].mxu0
      %v1468 = vadd.f32 0.0, %v1467
      %v1469 = vpop.f32.mrb[0].mxu0
      %1470 = vmatprep.mubr.bf16.mxu0 0
      %1471 = vmatmul.mubr.bf16.gmra.mrb[0].mxu0 %v1328
      %v1472 = vpop.f32.mrb[0].mxu0
      %v1473 = vadd.f32 0.0, %v1472
      %v1474 = vpop.f32.mrb[0].mxu0
      %v1475 = vpop.f32.mrb[0].mxu0
      %v1476 = vadd.f32 0.0, %v1475
      %v1477 = vpop.f32.mrb[0].mxu0
      %1478 = vmatprep.mubr.bf16.mxu0 0
      %1479 = vmatmul.mubr.bf16.gmra.mrb[0].mxu0 %v1331
      %v1480 = vpop.f32.mrb[0].mxu0
      %v1481 = vadd.f32 0.0, %v1480
      %v1482 = vpop.f32.mrb[0].mxu0
      %v1483 = vpop.f32.mrb[0].mxu0
      %v1484 = vadd.f32 0.0, %v1483
      %v1485 = vpop.f32.mrb[0].mxu0
      %1486 = vmatprep.mubr.bf16.mxu0 0
      %1487 = vmatmul.mubr.bf16.gmra.mrb[0].mxu0 %v1334
      %v1488 = vpop.f32.mrb[0].mxu0
      %v1489 = vadd.f32 0.0, %v1488
      %v1490 = vpop.f32.mrb[0].mxu0
      %v1491 = vpop.f32.mrb[0].mxu0
      %v1492 = vadd.f32 0.0, %v1491
      %v1493 = vpop.f32.mrb[0].mxu0
      %1494 = vmatprep.mubr.bf16.mxu0 0
      %1495 = vmatmul.mubr.bf16.gmra.mrb[0].mxu0 %v1337
      %v1496 = vpop.f32.mrb[0].mxu0
      %v1497 = vadd.f32 0.0, %v1496
      %v1498 = vpop.f32.mrb[0].mxu0
      %v1499 = vpop.f32.mrb[0].mxu0
      %v1500 = vadd.f32 0.0, %v1499
      %v1501 = vpop.f32.mrb[0].mxu0
      %1502 = vdwg.mxu0
      %v1503 = vadd.f32 %v1082, %v1377
      %v1504 = vadd.f32 %v1085, %v1380
      %v1505 = vadd.f32 %v1090, %v1385
      %v1506 = vadd.f32 %v1093, %v1388
      %v1507 = vadd.f32 %v1098, %v1393
      %v1508 = vadd.f32 %v1101, %v1396
      %v1509 = vadd.f32 %v1106, %v1401
      %v1510 = vadd.f32 %v1109, %v1404
      %v1511 = vadd.f32 %v1114, %v1409
      %v1512 = vadd.f32 %v1117, %v1412
      %v1513 = vadd.f32 %v1122, %v1417
      %v1514 = vadd.f32 %v1125, %v1420
      %v1515 = vadd.f32 %v1130, %v1425
      %v1516 = vadd.f32 %v1133, %v1428
      %v1517 = vadd.f32 %v1138, %v1433
      %v1518 = vadd.f32 %v1141, %v1436
      %v1519 = vadd.f32 %v1146, %v1441
      %v1520 = vadd.f32 %v1149, %v1444
      %v1521 = vadd.f32 %v1154, %v1449
      %v1522 = vadd.f32 %v1157, %v1452
      %v1523 = vadd.f32 %v1162, %v1457
      %v1524 = vadd.f32 %v1165, %v1460
      %v1525 = vadd.f32 %v1170, %v1465
      %v1526 = vadd.f32 %v1173, %v1468
      %v1527 = vadd.f32 %v1178, %v1473
      %v1528 = vadd.f32 %v1181, %v1476
      %v1529 = vadd.f32 %v1186, %v1481
      %v1530 = vadd.f32 %v1189, %v1484
      %v1531 = vadd.f32 %v1194, %v1489
      %v1532 = vadd.f32 %v1197, %v1492
      %v1533 = vadd.f32 %v1202, %v1497
      %v1534 = vadd.f32 %v1205, %v1500
      %s1535 = scalar_lea.vmem %s2, 12
      %v1536 = vld [vmem:[%s1535] sm:$0xf]
      %v1538 = vsel %vm798, %v584, 0
      %v1541 = vsel %vm847, %v1536, 0
      %1543 = vmatprep.subr.bf16.mxu0 0
      %1544 = vmatpush1.bf16.msra.mxu0 %v1541
      %1545 = vmatprep.subr.bf16.mxu0 0
      %1546 = vmatpush1.bf16.msra.mxu0 0
      %1547 = vmatprep.subr.bf16.mxu0 0
      %1548 = vmatpush1.bf16.msra.mxu0 0
      %1549 = vmatprep.subr.bf16.mxu0 0
      %1550 = vmatpush1.bf16.msra.mxu0 0
      %1551 = vmatprep.subr.bf16.mxu0 0
      %1552 = vmatpush1.bf16.msra.mxu0 0
      %1553 = vmatprep.subr.bf16.mxu0 0
      %1554 = vmatpush1.bf16.msra.mxu0 0
      %1555 = vmatprep.subr.bf16.mxu0 0
      %1556 = vmatpush1.bf16.msra.mxu0 0
      %1557 = vmatprep.subr.bf16.mxu0 0
      %1558 = vmatpush1.bf16.msra.mxu0 0
      %1559 = vmatprep.subr.bf16.mxu0 0
      %1560 = vmatpush1.bf16.msra.mxu0 0
      %1561 = vmatprep.subr.bf16.mxu0 0
      %1562 = vmatpush1.bf16.msra.mxu0 0
      %1563 = vmatprep.subr.bf16.mxu0 0
      %1564 = vmatpush1.bf16.msra.mxu0 0
      %1565 = vmatprep.subr.bf16.mxu0 0
      %1566 = vmatpush1.bf16.msra.mxu0 0
      %1567 = vmatprep.subr.bf16.mxu0 0
      %1568 = vmatpush1.bf16.msra.mxu0 0
      %1569 = vmatprep.subr.bf16.mxu0 0
      %1570 = vmatpush1.bf16.msra.mxu0 0
      %1571 = vmatprep.subr.bf16.mxu0 0
      %1572 = vmatpush1.bf16.msra.mxu0 0
      %1573 = vmatprep.subr.bf16.mxu0 0
      %1574 = vmatpush1.bf16.msra.mxu0 0
      %1575 = vmatprep.mubr.bf16.mxu0 0
      %1576 = vmatmul.mubr.bf16.gmra.mrb[0].mxu0 %v1014
      %v1577 = vpop.f32.mrb[0].mxu0
      %v1578 = vadd.f32 0.0, %v1577
      %v1579 = vpop.f32.mrb[0].mxu0
      %v1580 = vpop.f32.mrb[0].mxu0
      %v1581 = vadd.f32 0.0, %v1580
      %v1582 = vpop.f32.mrb[0].mxu0
      %1583 = vmatprep.mubr.bf16.mxu0 0
      %1584 = vmatmul.mubr.bf16.gmra.mrb[0].mxu0 %v1016
      %v1585 = vpop.f32.mrb[0].mxu0
      %v1586 = vadd.f32 0.0, %v1585
      %v1587 = vpop.f32.mrb[0].mxu0
      %v1588 = vpop.f32.mrb[0].mxu0
      %v1589 = vadd.f32 0.0, %v1588
      %v1590 = vpop.f32.mrb[0].mxu0
      %1591 = vmatprep.mubr.bf16.mxu0 0
      %1592 = vmatmul.mubr.bf16.gmra.mrb[0].mxu0 %v1018
      %v1593 = vpop.f32.mrb[0].mxu0
      %v1594 = vadd.f32 0.0, %v1593
      %v1595 = vpop.f32.mrb[0].mxu0
      %v1596 = vpop.f32.mrb[0].mxu0
      %v1597 = vadd.f32 0.0, %v1596
      %v1598 = vpop.f32.mrb[0].mxu0
      %1599 = vmatprep.mubr.bf16.mxu0 0
      %1600 = vmatmul.mubr.bf16.gmra.mrb[0].mxu0 %v1020
      %v1601 = vpop.f32.mrb[0].mxu0
      %v1602 = vadd.f32 0.0, %v1601
      %v1603 = vpop.f32.mrb[0].mxu0
      %v1604 = vpop.f32.mrb[0].mxu0
      %v1605 = vadd.f32 0.0, %v1604
      %v1606 = vpop.f32.mrb[0].mxu0
      %1607 = vmatprep.mubr.bf16.mxu0 0
      %1608 = vmatmul.mubr.bf16.gmra.mrb[0].mxu0 %v1022
      %v1609 = vpop.f32.mrb[0].mxu0
      %v1610 = vadd.f32 0.0, %v1609
      %v1611 = vpop.f32.mrb[0].mxu0
      %v1612 = vpop.f32.mrb[0].mxu0
      %v1613 = vadd.f32 0.0, %v1612
      %v1614 = vpop.f32.mrb[0].mxu0
      %1615 = vmatprep.mubr.bf16.mxu0 0
      %1616 = vmatmul.mubr.bf16.gmra.mrb[0].mxu0 %v1024
      %v1617 = vpop.f32.mrb[0].mxu0
      %v1618 = vadd.f32 0.0, %v1617
      %v1619 = vpop.f32.mrb[0].mxu0
      %v1620 = vpop.f32.mrb[0].mxu0
      %v1621 = vadd.f32 0.0, %v1620
      %v1622 = vpop.f32.mrb[0].mxu0
      %1623 = vmatprep.mubr.bf16.mxu0 0
      %1624 = vmatmul.mubr.bf16.gmra.mrb[0].mxu0 %v1026
      %v1625 = vpop.f32.mrb[0].mxu0
      %v1626 = vadd.f32 0.0, %v1625
      %v1627 = vpop.f32.mrb[0].mxu0
      %v1628 = vpop.f32.mrb[0].mxu0
      %v1629 = vadd.f32 0.0, %v1628
      %v1630 = vpop.f32.mrb[0].mxu0
      %1631 = vmatprep.mubr.bf16.mxu0 0
      %1632 = vmatmul.mubr.bf16.gmra.mrb[0].mxu0 %v1028
      %v1633 = vpop.f32.mrb[0].mxu0
      %v1634 = vadd.f32 0.0, %v1633
      %v1635 = vpop.f32.mrb[0].mxu0
      %v1636 = vpop.f32.mrb[0].mxu0
      %v1637 = vadd.f32 0.0, %v1636
      %v1638 = vpop.f32.mrb[0].mxu0
      %1639 = vmatprep.mubr.bf16.mxu0 0
      %1640 = vmatmul.mubr.bf16.gmra.mrb[0].mxu0 %v1030
      %v1641 = vpop.f32.mrb[0].mxu0
      %v1642 = vadd.f32 0.0, %v1641
      %v1643 = vpop.f32.mrb[0].mxu0
      %v1644 = vpop.f32.mrb[0].mxu0
      %v1645 = vadd.f32 0.0, %v1644
      %v1646 = vpop.f32.mrb[0].mxu0
      %1647 = vmatprep.mubr.bf16.mxu0 0
      %1648 = vmatmul.mubr.bf16.gmra.mrb[0].mxu0 %v1032
      %v1649 = vpop.f32.mrb[0].mxu0
      %v1650 = vadd.f32 0.0, %v1649
      %v1651 = vpop.f32.mrb[0].mxu0
      %v1652 = vpop.f32.mrb[0].mxu0
      %v1653 = vadd.f32 0.0, %v1652
      %v1654 = vpop.f32.mrb[0].mxu0
      %1655 = vmatprep.mubr.bf16.mxu0 0
      %1656 = vmatmul.mubr.bf16.gmra.mrb[0].mxu0 %v1034
      %v1657 = vpop.f32.mrb[0].mxu0
      %v1658 = vadd.f32 0.0, %v1657
      %v1659 = vpop.f32.mrb[0].mxu0
      %v1660 = vpop.f32.mrb[0].mxu0
      %v1661 = vadd.f32 0.0, %v1660
      %v1662 = vpop.f32.mrb[0].mxu0
      %1663 = vmatprep.mubr.bf16.mxu0 0
      %1664 = vmatmul.mubr.bf16.gmra.mrb[0].mxu0 %v1036
      %v1665 = vpop.f32.mrb[0].mxu0
      %v1666 = vadd.f32 0.0, %v1665
      %v1667 = vpop.f32.mrb[0].mxu0
      %v1668 = vpop.f32.mrb[0].mxu0
      %v1669 = vadd.f32 0.0, %v1668
      %v1670 = vpop.f32.mrb[0].mxu0
      %1671 = vmatprep.mubr.bf16.mxu0 0
      %1672 = vmatmul.mubr.bf16.gmra.mrb[0].mxu0 %v1038
      %v1673 = vpop.f32.mrb[0].mxu0
      %v1674 = vadd.f32 0.0, %v1673
      %v1675 = vpop.f32.mrb[0].mxu0
      %v1676 = vpop.f32.mrb[0].mxu0
      %v1677 = vadd.f32 0.0, %v1676
      %v1678 = vpop.f32.mrb[0].mxu0
      %1679 = vmatprep.mubr.bf16.mxu0 0
      %1680 = vmatmul.mubr.bf16.gmra.mrb[0].mxu0 %v1040
      %v1681 = vpop.f32.mrb[0].mxu0
      %v1682 = vadd.f32 0.0, %v1681
      %v1683 = vpop.f32.mrb[0].mxu0
      %v1684 = vpop.f32.mrb[0].mxu0
      %v1685 = vadd.f32 0.0, %v1684
      %v1686 = vpop.f32.mrb[0].mxu0
      %1687 = vmatprep.mubr.bf16.mxu0 0
      %1688 = vmatmul.mubr.bf16.gmra.mrb[0].mxu0 %v1042
      %v1689 = vpop.f32.mrb[0].mxu0
      %v1690 = vadd.f32 0.0, %v1689
      %v1691 = vpop.f32.mrb[0].mxu0
      %v1692 = vpop.f32.mrb[0].mxu0
      %v1693 = vadd.f32 0.0, %v1692
      %v1694 = vpop.f32.mrb[0].mxu0
      %1695 = vmatprep.mubr.bf16.mxu0 0
      %1696 = vmatmul.mubr.bf16.gmra.mrb[0].mxu0 %v1538
      %v1697 = vpop.f32.mrb[0].mxu0
      %v1698 = vadd.f32 0.0, %v1697
      %v1699 = vpop.f32.mrb[0].mxu0
      %v1700 = vpop.f32.mrb[0].mxu0
      %v1701 = vadd.f32 0.0, %v1700
      %v1702 = vpop.f32.mrb[0].mxu0
      %1703 = vdwg.mxu0
      %v1704 = vadd.f32 %v1503, %v1578
      %v1705 = vadd.f32 %v1504, %v1581
      %v1706 = vadd.f32 %v1505, %v1586
      %v1707 = vadd.f32 %v1506, %v1589
      %v1708 = vadd.f32 %v1507, %v1594
      %v1709 = vadd.f32 %v1508, %v1597
      %v1710 = vadd.f32 %v1509, %v1602
      %v1711 = vadd.f32 %v1510, %v1605
      %v1712 = vadd.f32 %v1511, %v1610
      %v1713 = vadd.f32 %v1512, %v1613
      %v1714 = vadd.f32 %v1513, %v1618
      %v1715 = vadd.f32 %v1514, %v1621
      %v1716 = vadd.f32 %v1515, %v1626
      %v1717 = vadd.f32 %v1516, %v1629
      %v1718 = vadd.f32 %v1517, %v1634
      %v1719 = vadd.f32 %v1518, %v1637
      %v1720 = vadd.f32 %v1519, %v1642
      %v1721 = vadd.f32 %v1520, %v1645
      %v1722 = vadd.f32 %v1521, %v1650
      %v1723 = vadd.f32 %v1522, %v1653
      %v1724 = vadd.f32 %v1523, %v1658
      %v1725 = vadd.f32 %v1524, %v1661
      %v1726 = vadd.f32 %v1525, %v1666
      %v1727 = vadd.f32 %v1526, %v1669
      %v1728 = vadd.f32 %v1527, %v1674
      %v1729 = vadd.f32 %v1528, %v1677
      %v1730 = vadd.f32 %v1529, %v1682
      %v1731 = vadd.f32 %v1530, %v1685
      %v1732 = vadd.f32 %v1531, %v1690
      %v1733 = vadd.f32 %v1532, %v1693
      %v1734 = vadd.f32 %v1533, %v1698
      %v1735 = vadd.f32 %v1534, %v1701
      %v1736 = vshrl.u32 %v584, 16
      %v1738 = vshll.u32 %v584, 16
      %v1740 = vrot.slane %v1738, 1
      %v1741 = vor.u32 %v1736, %v1740
      %v1743 = vshll.u32 %v601, 16
      %v1745 = vrot.slane %v1743, 1
      %v1746 = vsel %vm603, %v1741, %v1745
      %s1747 = scalar_lea.vmem %s2, 16
      %v1748 = vld [vmem:[%s1747] sm:$0xf]
      %v1750 = vsel %vm798, %v1746, 0
      %v1753 = vsel %vm847, %v1748, 0
      %1755 = vmatprep.subr.bf16.mxu0 0
      %1756 = vmatpush1.bf16.msra.mxu0 %v1753
      %1757 = vmatprep.subr.bf16.mxu0 0
      %1758 = vmatpush1.bf16.msra.mxu0 0
      %1759 = vmatprep.subr.bf16.mxu0 0
      %1760 = vmatpush1.bf16.msra.mxu0 0
      %1761 = vmatprep.subr.bf16.mxu0 0
      %1762 = vmatpush1.bf16.msra.mxu0 0
      %1763 = vmatprep.subr.bf16.mxu0 0
      %1764 = vmatpush1.bf16.msra.mxu0 0
      %1765 = vmatprep.subr.bf16.mxu0 0
      %1766 = vmatpush1.bf16.msra.mxu0 0
      %1767 = vmatprep.subr.bf16.mxu0 0
      %1768 = vmatpush1.bf16.msra.mxu0 0
      %1769 = vmatprep.subr.bf16.mxu0 0
      %1770 = vmatpush1.bf16.msra.mxu0 0
      %1771 = vmatprep.subr.bf16.mxu0 0
      %1772 = vmatpush1.bf16.msra.mxu0 0
      %1773 = vmatprep.subr.bf16.mxu0 0
      %1774 = vmatpush1.bf16.msra.mxu0 0
      %1775 = vmatprep.subr.bf16.mxu0 0
      %1776 = vmatpush1.bf16.msra.mxu0 0
      %1777 = vmatprep.subr.bf16.mxu0 0
      %1778 = vmatpush1.bf16.msra.mxu0 0
      %1779 = vmatprep.subr.bf16.mxu0 0
      %1780 = vmatpush1.bf16.msra.mxu0 0
      %1781 = vmatprep.subr.bf16.mxu0 0
      %1782 = vmatpush1.bf16.msra.mxu0 0
      %1783 = vmatprep.subr.bf16.mxu0 0
      %1784 = vmatpush1.bf16.msra.mxu0 0
      %1785 = vmatprep.subr.bf16.mxu0 0
      %1786 = vmatpush1.bf16.msra.mxu0 0
      %1787 = vmatprep.mubr.bf16.mxu0 0
      %1788 = vmatmul.mubr.bf16.gmra.mrb[0].mxu0 %v803
      %v1789 = vpop.f32.mrb[0].mxu0
      %v1790 = vadd.f32 0.0, %v1789
      %v1791 = vpop.f32.mrb[0].mxu0
      %v1792 = vpop.f32.mrb[0].mxu0
      %v1793 = vadd.f32 0.0, %v1792
      %v1794 = vpop.f32.mrb[0].mxu0
      %1795 = vmatprep.mubr.bf16.mxu0 0
      %1796 = vmatmul.mubr.bf16.gmra.mrb[0].mxu0 %v806
      %v1797 = vpop.f32.mrb[0].mxu0
      %v1798 = vadd.f32 0.0, %v1797
      %v1799 = vpop.f32.mrb[0].mxu0
      %v1800 = vpop.f32.mrb[0].mxu0
      %v1801 = vadd.f32 0.0, %v1800
      %v1802 = vpop.f32.mrb[0].mxu0
      %1803 = vmatprep.mubr.bf16.mxu0 0
      %1804 = vmatmul.mubr.bf16.gmra.mrb[0].mxu0 %v809
      %v1805 = vpop.f32.mrb[0].mxu0
      %v1806 = vadd.f32 0.0, %v1805
      %v1807 = vpop.f32.mrb[0].mxu0
      %v1808 = vpop.f32.mrb[0].mxu0
      %v1809 = vadd.f32 0.0, %v1808
      %v1810 = vpop.f32.mrb[0].mxu0
      %1811 = vmatprep.mubr.bf16.mxu0 0
      %1812 = vmatmul.mubr.bf16.gmra.mrb[0].mxu0 %v812
      %v1813 = vpop.f32.mrb[0].mxu0
      %v1814 = vadd.f32 0.0, %v1813
      %v1815 = vpop.f32.mrb[0].mxu0
      %v1816 = vpop.f32.mrb[0].mxu0
      %v1817 = vadd.f32 0.0, %v1816
      %v1818 = vpop.f32.mrb[0].mxu0
      %1819 = vmatprep.mubr.bf16.mxu0 0
      %1820 = vmatmul.mubr.bf16.gmra.mrb[0].mxu0 %v815
      %v1821 = vpop.f32.mrb[0].mxu0
      %v1822 = vadd.f32 0.0, %v1821
      %v1823 = vpop.f32.mrb[0].mxu0
      %v1824 = vpop.f32.mrb[0].mxu0
      %v1825 = vadd.f32 0.0, %v1824
      %v1826 = vpop.f32.mrb[0].mxu0
      %1827 = vmatprep.mubr.bf16.mxu0 0
      %1828 = vmatmul.mubr.bf16.gmra.mrb[0].mxu0 %v818
      %v1829 = vpop.f32.mrb[0].mxu0
      %v1830 = vadd.f32 0.0, %v1829
      %v1831 = vpop.f32.mrb[0].mxu0
      %v1832 = vpop.f32.mrb[0].mxu0
      %v1833 = vadd.f32 0.0, %v1832
      %v1834 = vpop.f32.mrb[0].mxu0
      %1835 = vmatprep.mubr.bf16.mxu0 0
      %1836 = vmatmul.mubr.bf16.gmra.mrb[0].mxu0 %v821
      %v1837 = vpop.f32.mrb[0].mxu0
      %v1838 = vadd.f32 0.0, %v1837
      %v1839 = vpop.f32.mrb[0].mxu0
      %v1840 = vpop.f32.mrb[0].mxu0
      %v1841 = vadd.f32 0.0, %v1840
      %v1842 = vpop.f32.mrb[0].mxu0
      %1843 = vmatprep.mubr.bf16.mxu0 0
      %1844 = vmatmul.mubr.bf16.gmra.mrb[0].mxu0 %v824
      %v1845 = vpop.f32.mrb[0].mxu0
      %v1846 = vadd.f32 0.0, %v1845
      %v1847 = vpop.f32.mrb[0].mxu0
      %v1848 = vpop.f32.mrb[0].mxu0
      %v1849 = vadd.f32 0.0, %v1848
      %v1850 = vpop.f32.mrb[0].mxu0
      %1851 = vmatprep.mubr.bf16.mxu0 0
      %1852 = vmatmul.mubr.bf16.gmra.mrb[0].mxu0 %v827
      %v1853 = vpop.f32.mrb[0].mxu0
      %v1854 = vadd.f32 0.0, %v1853
      %v1855 = vpop.f32.mrb[0].mxu0
      %v1856 = vpop.f32.mrb[0].mxu0
      %v1857 = vadd.f32 0.0, %v1856
      %v1858 = vpop.f32.mrb[0].mxu0
      %1859 = vmatprep.mubr.bf16.mxu0 0
      %1860 = vmatmul.mubr.bf16.gmra.mrb[0].mxu0 %v830
      %v1861 = vpop.f32.mrb[0].mxu0
      %v1862 = vadd.f32 0.0, %v1861
      %v1863 = vpop.f32.mrb[0].mxu0
      %v1864 = vpop.f32.mrb[0].mxu0
      %v1865 = vadd.f32 0.0, %v1864
      %v1866 = vpop.f32.mrb[0].mxu0
      %1867 = vmatprep.mubr.bf16.mxu0 0
      %1868 = vmatmul.mubr.bf16.gmra.mrb[0].mxu0 %v833
      %v1869 = vpop.f32.mrb[0].mxu0
      %v1870 = vadd.f32 0.0, %v1869
      %v1871 = vpop.f32.mrb[0].mxu0
      %v1872 = vpop.f32.mrb[0].mxu0
      %v1873 = vadd.f32 0.0, %v1872
      %v1874 = vpop.f32.mrb[0].mxu0
      %1875 = vmatprep.mubr.bf16.mxu0 0
      %1876 = vmatmul.mubr.bf16.gmra.mrb[0].mxu0 %v836
      %v1877 = vpop.f32.mrb[0].mxu0
      %v1878 = vadd.f32 0.0, %v1877
      %v1879 = vpop.f32.mrb[0].mxu0
      %v1880 = vpop.f32.mrb[0].mxu0
      %v1881 = vadd.f32 0.0, %v1880
      %v1882 = vpop.f32.mrb[0].mxu0
      %1883 = vmatprep.mubr.bf16.mxu0 0
      %1884 = vmatmul.mubr.bf16.gmra.mrb[0].mxu0 %v839
      %v1885 = vpop.f32.mrb[0].mxu0
      %v1886 = vadd.f32 0.0, %v1885
      %v1887 = vpop.f32.mrb[0].mxu0
      %v1888 = vpop.f32.mrb[0].mxu0
      %v1889 = vadd.f32 0.0, %v1888
      %v1890 = vpop.f32.mrb[0].mxu0
      %1891 = vmatprep.mubr.bf16.mxu0 0
      %1892 = vmatmul.mubr.bf16.gmra.mrb[0].mxu0 %v842
      %v1893 = vpop.f32.mrb[0].mxu0
      %v1894 = vadd.f32 0.0, %v1893
      %v1895 = vpop.f32.mrb[0].mxu0
      %v1896 = vpop.f32.mrb[0].mxu0
      %v1897 = vadd.f32 0.0, %v1896
      %v1898 = vpop.f32.mrb[0].mxu0
      %1899 = vmatprep.mubr.bf16.mxu0 0
      %1900 = vmatmul.mubr.bf16.gmra.mrb[0].mxu0 %v845
      %v1901 = vpop.f32.mrb[0].mxu0
      %v1902 = vadd.f32 0.0, %v1901
      %v1903 = vpop.f32.mrb[0].mxu0
      %v1904 = vpop.f32.mrb[0].mxu0
      %v1905 = vadd.f32 0.0, %v1904
      %v1906 = vpop.f32.mrb[0].mxu0
      %1907 = vmatprep.mubr.bf16.mxu0 0
      %1908 = vmatmul.mubr.bf16.gmra.mrb[0].mxu0 %v1750
      %v1909 = vpop.f32.mrb[0].mxu0
      %v1910 = vadd.f32 0.0, %v1909
      %v1911 = vpop.f32.mrb[0].mxu0
      %v1912 = vpop.f32.mrb[0].mxu0
      %v1913 = vadd.f32 0.0, %v1912
      %v1914 = vpop.f32.mrb[0].mxu0
      %1915 = vdwg.mxu0
      %v1916 = vadd.f32 %v1704, %v1790
      %v1917 = vadd.f32 %v1705, %v1793
      %v1918 = vadd.f32 %v1706, %v1798
      %v1919 = vadd.f32 %v1707, %v1801
      %v1920 = vadd.f32 %v1708, %v1806
      %v1921 = vadd.f32 %v1709, %v1809
      %v1922 = vadd.f32 %v1710, %v1814
      %v1923 = vadd.f32 %v1711, %v1817
      %v1924 = vadd.f32 %v1712, %v1822
      %v1925 = vadd.f32 %v1713, %v1825
      %v1926 = vadd.f32 %v1714, %v1830
      %v1927 = vadd.f32 %v1715, %v1833
      %v1928 = vadd.f32 %v1716, %v1838
      %v1929 = vadd.f32 %v1717, %v1841
      %v1930 = vadd.f32 %v1718, %v1846
      %v1931 = vadd.f32 %v1719, %v1849
      %v1932 = vadd.f32 %v1720, %v1854
      %v1933 = vadd.f32 %v1721, %v1857
      %v1934 = vadd.f32 %v1722, %v1862
      %v1935 = vadd.f32 %v1723, %v1865
      %v1936 = vadd.f32 %v1724, %v1870
      %v1937 = vadd.f32 %v1725, %v1873
      %v1938 = vadd.f32 %v1726, %v1878
      %v1939 = vadd.f32 %v1727, %v1881
      %v1940 = vadd.f32 %v1728, %v1886
      %v1941 = vadd.f32 %v1729, %v1889
      %v1942 = vadd.f32 %v1730, %v1894
      %v1943 = vadd.f32 %v1731, %v1897
      %v1944 = vadd.f32 %v1732, %v1902
      %v1945 = vadd.f32 %v1733, %v1905
      %v1946 = vadd.f32 %v1734, %v1910
      %v1947 = vadd.f32 %v1735, %v1913
      %v1950 = vrot.slane %v584, 1
      %v1951 = vrot.slane %v601, 1
      %v1952 = vsel %vm1240, %v1950, %v1951
      %s1953 = scalar_lea.vmem %s2, 20
      %v1954 = vld [vmem:[%s1953] sm:$0xf]
      %v1956 = vsel %vm798, %v1952, 0
      %v1959 = vsel %vm847, %v1954, 0
      %1961 = vmatprep.subr.bf16.mxu0 0
      %1962 = vmatpush1.bf16.msra.mxu0 %v1959
      %1963 = vmatprep.subr.bf16.mxu0 0
      %1964 = vmatpush1.bf16.msra.mxu0 0
      %1965 = vmatprep.subr.bf16.mxu0 0
      %1966 = vmatpush1.bf16.msra.mxu0 0
      %1967 = vmatprep.subr.bf16.mxu0 0
      %1968 = vmatpush1.bf16.msra.mxu0 0
      %1969 = vmatprep.subr.bf16.mxu0 0
      %1970 = vmatpush1.bf16.msra.mxu0 0
      %1971 = vmatprep.subr.bf16.mxu0 0
      %1972 = vmatpush1.bf16.msra.mxu0 0
      %1973 = vmatprep.subr.bf16.mxu0 0
      %1974 = vmatpush1.bf16.msra.mxu0 0
      %1975 = vmatprep.subr.bf16.mxu0 0
      %1976 = vmatpush1.bf16.msra.mxu0 0
      %1977 = vmatprep.subr.bf16.mxu0 0
      %1978 = vmatpush1.bf16.msra.mxu0 0
      %1979 = vmatprep.subr.bf16.mxu0 0
      %1980 = vmatpush1.bf16.msra.mxu0 0
      %1981 = vmatprep.subr.bf16.mxu0 0
      %1982 = vmatpush1.bf16.msra.mxu0 0
      %1983 = vmatprep.subr.bf16.mxu0 0
      %1984 = vmatpush1.bf16.msra.mxu0 0
      %1985 = vmatprep.subr.bf16.mxu0 0
      %1986 = vmatpush1.bf16.msra.mxu0 0
      %1987 = vmatprep.subr.bf16.mxu0 0
      %1988 = vmatpush1.bf16.msra.mxu0 0
      %1989 = vmatprep.subr.bf16.mxu0 0
      %1990 = vmatpush1.bf16.msra.mxu0 0
      %1991 = vmatprep.subr.bf16.mxu0 0
      %1992 = vmatpush1.bf16.msra.mxu0 0
      %1993 = vmatprep.mubr.bf16.mxu0 0
      %1994 = vmatmul.mubr.bf16.gmra.mrb[0].mxu0 %v1295
      %v1995 = vpop.f32.mrb[0].mxu0
      %v1996 = vadd.f32 0.0, %v1995
      %v1997 = vpop.f32.mrb[0].mxu0
      %v1998 = vpop.f32.mrb[0].mxu0
      %v1999 = vadd.f32 0.0, %v1998
      %v2000 = vpop.f32.mrb[0].mxu0
      %2001 = vmatprep.mubr.bf16.mxu0 0
      %2002 = vmatmul.mubr.bf16.gmra.mrb[0].mxu0 %v1298
      %v2003 = vpop.f32.mrb[0].mxu0
      %v2004 = vadd.f32 0.0, %v2003
      %v2005 = vpop.f32.mrb[0].mxu0
      %v2006 = vpop.f32.mrb[0].mxu0
      %v2007 = vadd.f32 0.0, %v2006
      %v2008 = vpop.f32.mrb[0].mxu0
      %2009 = vmatprep.mubr.bf16.mxu0 0
      %2010 = vmatmul.mubr.bf16.gmra.mrb[0].mxu0 %v1301
      %v2011 = vpop.f32.mrb[0].mxu0
      %v2012 = vadd.f32 0.0, %v2011
      %v2013 = vpop.f32.mrb[0].mxu0
      %v2014 = vpop.f32.mrb[0].mxu0
      %v2015 = vadd.f32 0.0, %v2014
      %v2016 = vpop.f32.mrb[0].mxu0
      %2017 = vmatprep.mubr.bf16.mxu0 0
      %2018 = vmatmul.mubr.bf16.gmra.mrb[0].mxu0 %v1304
      %v2019 = vpop.f32.mrb[0].mxu0
      %v2020 = vadd.f32 0.0, %v2019
      %v2021 = vpop.f32.mrb[0].mxu0
      %v2022 = vpop.f32.mrb[0].mxu0
      %v2023 = vadd.f32 0.0, %v2022
      %v2024 = vpop.f32.mrb[0].mxu0
      %2025 = vmatprep.mubr.bf16.mxu0 0
      %2026 = vmatmul.mubr.bf16.gmra.mrb[0].mxu0 %v1307
      %v2027 = vpop.f32.mrb[0].mxu0
      %v2028 = vadd.f32 0.0, %v2027
      %v2029 = vpop.f32.mrb[0].mxu0
      %v2030 = vpop.f32.mrb[0].mxu0
      %v2031 = vadd.f32 0.0, %v2030
      %v2032 = vpop.f32.mrb[0].mxu0
      %2033 = vmatprep.mubr.bf16.mxu0 0
      %2034 = vmatmul.mubr.bf16.gmra.mrb[0].mxu0 %v1310
      %v2035 = vpop.f32.mrb[0].mxu0
      %v2036 = vadd.f32 0.0, %v2035
      %v2037 = vpop.f32.mrb[0].mxu0
      %v2038 = vpop.f32.mrb[0].mxu0
      %v2039 = vadd.f32 0.0, %v2038
      %v2040 = vpop.f32.mrb[0].mxu0
      %2041 = vmatprep.mubr.bf16.mxu0 0
      %2042 = vmatmul.mubr.bf16.gmra.mrb[0].mxu0 %v1313
      %v2043 = vpop.f32.mrb[0].mxu0
      %v2044 = vadd.f32 0.0, %v2043
      %v2045 = vpop.f32.mrb[0].mxu0
      %v2046 = vpop.f32.mrb[0].mxu0
      %v2047 = vadd.f32 0.0, %v2046
      %v2048 = vpop.f32.mrb[0].mxu0
      %2049 = vmatprep.mubr.bf16.mxu0 0
      %2050 = vmatmul.mubr.bf16.gmra.mrb[0].mxu0 %v1316
      %v2051 = vpop.f32.mrb[0].mxu0
      %v2052 = vadd.f32 0.0, %v2051
      %v2053 = vpop.f32.mrb[0].mxu0
      %v2054 = vpop.f32.mrb[0].mxu0
      %v2055 = vadd.f32 0.0, %v2054
      %v2056 = vpop.f32.mrb[0].mxu0
      %2057 = vmatprep.mubr.bf16.mxu0 0
      %2058 = vmatmul.mubr.bf16.gmra.mrb[0].mxu0 %v1319
      %v2059 = vpop.f32.mrb[0].mxu0
      %v2060 = vadd.f32 0.0, %v2059
      %v2061 = vpop.f32.mrb[0].mxu0
      %v2062 = vpop.f32.mrb[0].mxu0
      %v2063 = vadd.f32 0.0, %v2062
      %v2064 = vpop.f32.mrb[0].mxu0
      %2065 = vmatprep.mubr.bf16.mxu0 0
      %2066 = vmatmul.mubr.bf16.gmra.mrb[0].mxu0 %v1322
      %v2067 = vpop.f32.mrb[0].mxu0
      %v2068 = vadd.f32 0.0, %v2067
      %v2069 = vpop.f32.mrb[0].mxu0
      %v2070 = vpop.f32.mrb[0].mxu0
      %v2071 = vadd.f32 0.0, %v2070
      %v2072 = vpop.f32.mrb[0].mxu0
      %2073 = vmatprep.mubr.bf16.mxu0 0
      %2074 = vmatmul.mubr.bf16.gmra.mrb[0].mxu0 %v1325
      %v2075 = vpop.f32.mrb[0].mxu0
      %v2076 = vadd.f32 0.0, %v2075
      %v2077 = vpop.f32.mrb[0].mxu0
      %v2078 = vpop.f32.mrb[0].mxu0
      %v2079 = vadd.f32 0.0, %v2078
      %v2080 = vpop.f32.mrb[0].mxu0
      %2081 = vmatprep.mubr.bf16.mxu0 0
      %2082 = vmatmul.mubr.bf16.gmra.mrb[0].mxu0 %v1328
      %v2083 = vpop.f32.mrb[0].mxu0
      %v2084 = vadd.f32 0.0, %v2083
      %v2085 = vpop.f32.mrb[0].mxu0
      %v2086 = vpop.f32.mrb[0].mxu0
      %v2087 = vadd.f32 0.0, %v2086
      %v2088 = vpop.f32.mrb[0].mxu0
      %2089 = vmatprep.mubr.bf16.mxu0 0
      %2090 = vmatmul.mubr.bf16.gmra.mrb[0].mxu0 %v1331
      %v2091 = vpop.f32.mrb[0].mxu0
      %v2092 = vadd.f32 0.0, %v2091
      %v2093 = vpop.f32.mrb[0].mxu0
      %v2094 = vpop.f32.mrb[0].mxu0
      %v2095 = vadd.f32 0.0, %v2094
      %v2096 = vpop.f32.mrb[0].mxu0
      %2097 = vmatprep.mubr.bf16.mxu0 0
      %2098 = vmatmul.mubr.bf16.gmra.mrb[0].mxu0 %v1334
      %v2099 = vpop.f32.mrb[0].mxu0
      %v2100 = vadd.f32 0.0, %v2099
      %v2101 = vpop.f32.mrb[0].mxu0
      %v2102 = vpop.f32.mrb[0].mxu0
      %v2103 = vadd.f32 0.0, %v2102
      %v2104 = vpop.f32.mrb[0].mxu0
      %2105 = vmatprep.mubr.bf16.mxu0 0
      %2106 = vmatmul.mubr.bf16.gmra.mrb[0].mxu0 %v1337
      %v2107 = vpop.f32.mrb[0].mxu0
      %v2108 = vadd.f32 0.0, %v2107
      %v2109 = vpop.f32.mrb[0].mxu0
      %v2110 = vpop.f32.mrb[0].mxu0
      %v2111 = vadd.f32 0.0, %v2110
      %v2112 = vpop.f32.mrb[0].mxu0
      %2113 = vmatprep.mubr.bf16.mxu0 0
      %2114 = vmatmul.mubr.bf16.gmra.mrb[0].mxu0 %v1956
      %v2115 = vpop.f32.mrb[0].mxu0
      %v2116 = vadd.f32 0.0, %v2115
      %v2117 = vpop.f32.mrb[0].mxu0
      %v2118 = vpop.f32.mrb[0].mxu0
      %v2119 = vadd.f32 0.0, %v2118
      %v2120 = vpop.f32.mrb[0].mxu0
      %2121 = vdwg.mxu0
      %v2122 = vadd.f32 %v1916, %v1996
      %v2123 = vadd.f32 %v1917, %v1999
      %v2124 = vadd.f32 %v1918, %v2004
      %v2125 = vadd.f32 %v1919, %v2007
      %v2126 = vadd.f32 %v1920, %v2012
      %v2127 = vadd.f32 %v1921, %v2015
      %v2128 = vadd.f32 %v1922, %v2020
      %v2129 = vadd.f32 %v1923, %v2023
      %v2130 = vadd.f32 %v1924, %v2028
      %v2131 = vadd.f32 %v1925, %v2031
      %v2132 = vadd.f32 %v1926, %v2036
      %v2133 = vadd.f32 %v1927, %v2039
      %v2134 = vadd.f32 %v1928, %v2044
      %v2135 = vadd.f32 %v1929, %v2047
      %v2136 = vadd.f32 %v1930, %v2052
      %v2137 = vadd.f32 %v1931, %v2055
      %v2138 = vadd.f32 %v1932, %v2060
      %v2139 = vadd.f32 %v1933, %v2063
      %v2140 = vadd.f32 %v1934, %v2068
      %v2141 = vadd.f32 %v1935, %v2071
      %v2142 = vadd.f32 %v1936, %v2076
      %v2143 = vadd.f32 %v1937, %v2079
      %v2144 = vadd.f32 %v1938, %v2084
      %v2145 = vadd.f32 %v1939, %v2087
      %v2146 = vadd.f32 %v1940, %v2092
      %v2147 = vadd.f32 %v1941, %v2095
      %v2148 = vadd.f32 %v1942, %v2100
      %v2149 = vadd.f32 %v1943, %v2103
      %v2150 = vadd.f32 %v1944, %v2108
      %v2151 = vadd.f32 %v1945, %v2111
      %v2152 = vadd.f32 %v1946, %v2116
      %v2153 = vadd.f32 %v1947, %v2119
      %s2154 = scalar_lea.vmem %s2, 24
      %v2155 = vld [vmem:[%s2154] sm:$0xf]
      %v2157 = vsel %vm847, %v2155, 0
      %2159 = vmatprep.subr.bf16.mxu0 0
      %2160 = vmatpush1.bf16.msra.mxu0 %v2157
      %2161 = vmatprep.subr.bf16.mxu0 0
      %2162 = vmatpush1.bf16.msra.mxu0 0
      %2163 = vmatprep.subr.bf16.mxu0 0
      %2164 = vmatpush1.bf16.msra.mxu0 0
      %2165 = vmatprep.subr.bf16.mxu0 0
      %2166 = vmatpush1.bf16.msra.mxu0 0
      %2167 = vmatprep.subr.bf16.mxu0 0
      %2168 = vmatpush1.bf16.msra.mxu0 0
      %2169 = vmatprep.subr.bf16.mxu0 0
      %2170 = vmatpush1.bf16.msra.mxu0 0
      %2171 = vmatprep.subr.bf16.mxu0 0
      %2172 = vmatpush1.bf16.msra.mxu0 0
      %2173 = vmatprep.subr.bf16.mxu0 0
      %2174 = vmatpush1.bf16.msra.mxu0 0
      %2175 = vmatprep.subr.bf16.mxu0 0
      %2176 = vmatpush1.bf16.msra.mxu0 0
      %2177 = vmatprep.subr.bf16.mxu0 0
      %2178 = vmatpush1.bf16.msra.mxu0 0
      %2179 = vmatprep.subr.bf16.mxu0 0
      %2180 = vmatpush1.bf16.msra.mxu0 0
      %2181 = vmatprep.subr.bf16.mxu0 0
      %2182 = vmatpush1.bf16.msra.mxu0 0
      %2183 = vmatprep.subr.bf16.mxu0 0
      %2184 = vmatpush1.bf16.msra.mxu0 0
      %2185 = vmatprep.subr.bf16.mxu0 0
      %2186 = vmatpush1.bf16.msra.mxu0 0
      %2187 = vmatprep.subr.bf16.mxu0 0
      %2188 = vmatpush1.bf16.msra.mxu0 0
      %2189 = vmatprep.subr.bf16.mxu0 0
      %2190 = vmatpush1.bf16.msra.mxu0 0
      %2191 = vmatprep.mubr.bf16.mxu0 0
      %2192 = vmatmul.mubr.bf16.gmra.mrb[0].mxu0 %v1016
      %v2193 = vpop.f32.mrb[0].mxu0
      %v2194 = vadd.f32 0.0, %v2193
      %v2195 = vpop.f32.mrb[0].mxu0
      %v2196 = vpop.f32.mrb[0].mxu0
      %v2197 = vadd.f32 0.0, %v2196
      %v2198 = vpop.f32.mrb[0].mxu0
      %2199 = vmatprep.mubr.bf16.mxu0 0
      %2200 = vmatmul.mubr.bf16.gmra.mrb[0].mxu0 %v1018
      %v2201 = vpop.f32.mrb[0].mxu0
      %v2202 = vadd.f32 0.0, %v2201
      %v2203 = vpop.f32.mrb[0].mxu0
      %v2204 = vpop.f32.mrb[0].mxu0
      %v2205 = vadd.f32 0.0, %v2204
      %v2206 = vpop.f32.mrb[0].mxu0
      %2207 = vmatprep.mubr.bf16.mxu0 0
      %2208 = vmatmul.mubr.bf16.gmra.mrb[0].mxu0 %v1020
      %v2209 = vpop.f32.mrb[0].mxu0
      %v2210 = vadd.f32 0.0, %v2209
      %v2211 = vpop.f32.mrb[0].mxu0
      %v2212 = vpop.f32.mrb[0].mxu0
      %v2213 = vadd.f32 0.0, %v2212
      %v2214 = vpop.f32.mrb[0].mxu0
      %2215 = vmatprep.mubr.bf16.mxu0 0
      %2216 = vmatmul.mubr.bf16.gmra.mrb[0].mxu0 %v1022
      %v2217 = vpop.f32.mrb[0].mxu0
      %v2218 = vadd.f32 0.0, %v2217
      %v2219 = vpop.f32.mrb[0].mxu0
      %v2220 = vpop.f32.mrb[0].mxu0
      %v2221 = vadd.f32 0.0, %v2220
      %v2222 = vpop.f32.mrb[0].mxu0
      %2223 = vmatprep.mubr.bf16.mxu0 0
      %2224 = vmatmul.mubr.bf16.gmra.mrb[0].mxu0 %v1024
      %v2225 = vpop.f32.mrb[0].mxu0
      %v2226 = vadd.f32 0.0, %v2225
      %v2227 = vpop.f32.mrb[0].mxu0
      %v2228 = vpop.f32.mrb[0].mxu0
      %v2229 = vadd.f32 0.0, %v2228
      %v2230 = vpop.f32.mrb[0].mxu0
      %2231 = vmatprep.mubr.bf16.mxu0 0
      %2232 = vmatmul.mubr.bf16.gmra.mrb[0].mxu0 %v1026
      %v2233 = vpop.f32.mrb[0].mxu0
      %v2234 = vadd.f32 0.0, %v2233
      %v2235 = vpop.f32.mrb[0].mxu0
      %v2236 = vpop.f32.mrb[0].mxu0
      %v2237 = vadd.f32 0.0, %v2236
      %v2238 = vpop.f32.mrb[0].mxu0
      %2239 = vmatprep.mubr.bf16.mxu0 0
      %2240 = vmatmul.mubr.bf16.gmra.mrb[0].mxu0 %v1028
      %v2241 = vpop.f32.mrb[0].mxu0
      %v2242 = vadd.f32 0.0, %v2241
      %v2243 = vpop.f32.mrb[0].mxu0
      %v2244 = vpop.f32.mrb[0].mxu0
      %v2245 = vadd.f32 0.0, %v2244
      %v2246 = vpop.f32.mrb[0].mxu0
      %2247 = vmatprep.mubr.bf16.mxu0 0
      %2248 = vmatmul.mubr.bf16.gmra.mrb[0].mxu0 %v1030
      %v2249 = vpop.f32.mrb[0].mxu0
      %v2250 = vadd.f32 0.0, %v2249
      %v2251 = vpop.f32.mrb[0].mxu0
      %v2252 = vpop.f32.mrb[0].mxu0
      %v2253 = vadd.f32 0.0, %v2252
      %v2254 = vpop.f32.mrb[0].mxu0
      %2255 = vmatprep.mubr.bf16.mxu0 0
      %2256 = vmatmul.mubr.bf16.gmra.mrb[0].mxu0 %v1032
      %v2257 = vpop.f32.mrb[0].mxu0
      %v2258 = vadd.f32 0.0, %v2257
      %v2259 = vpop.f32.mrb[0].mxu0
      %v2260 = vpop.f32.mrb[0].mxu0
      %v2261 = vadd.f32 0.0, %v2260
      %v2262 = vpop.f32.mrb[0].mxu0
      %2263 = vmatprep.mubr.bf16.mxu0 0
      %2264 = vmatmul.mubr.bf16.gmra.mrb[0].mxu0 %v1034
      %v2265 = vpop.f32.mrb[0].mxu0
      %v2266 = vadd.f32 0.0, %v2265
      %v2267 = vpop.f32.mrb[0].mxu0
      %v2268 = vpop.f32.mrb[0].mxu0
      %v2269 = vadd.f32 0.0, %v2268
      %v2270 = vpop.f32.mrb[0].mxu0
      %2271 = vmatprep.mubr.bf16.mxu0 0
      %2272 = vmatmul.mubr.bf16.gmra.mrb[0].mxu0 %v1036
      %v2273 = vpop.f32.mrb[0].mxu0
      %v2274 = vadd.f32 0.0, %v2273
      %v2275 = vpop.f32.mrb[0].mxu0
      %v2276 = vpop.f32.mrb[0].mxu0
      %v2277 = vadd.f32 0.0, %v2276
      %v2278 = vpop.f32.mrb[0].mxu0
      %2279 = vmatprep.mubr.bf16.mxu0 0
      %2280 = vmatmul.mubr.bf16.gmra.mrb[0].mxu0 %v1038
      %v2281 = vpop.f32.mrb[0].mxu0
      %v2282 = vadd.f32 0.0, %v2281
      %v2283 = vpop.f32.mrb[0].mxu0
      %v2284 = vpop.f32.mrb[0].mxu0
      %v2285 = vadd.f32 0.0, %v2284
      %v2286 = vpop.f32.mrb[0].mxu0
      %2287 = vmatprep.mubr.bf16.mxu0 0
      %2288 = vmatmul.mubr.bf16.gmra.mrb[0].mxu0 %v1040
      %v2289 = vpop.f32.mrb[0].mxu0
      %v2290 = vadd.f32 0.0, %v2289
      %v2291 = vpop.f32.mrb[0].mxu0
      %v2292 = vpop.f32.mrb[0].mxu0
      %v2293 = vadd.f32 0.0, %v2292
      %v2294 = vpop.f32.mrb[0].mxu0
      %2295 = vmatprep.mubr.bf16.mxu0 0
      %2296 = vmatmul.mubr.bf16.gmra.mrb[0].mxu0 %v1042
      %v2297 = vpop.f32.mrb[0].mxu0
      %v2298 = vadd.f32 0.0, %v2297
      %v2299 = vpop.f32.mrb[0].mxu0
      %v2300 = vpop.f32.mrb[0].mxu0
      %v2301 = vadd.f32 0.0, %v2300
      %v2302 = vpop.f32.mrb[0].mxu0
      %2303 = vmatprep.mubr.bf16.mxu0 0
      %2304 = vmatmul.mubr.bf16.gmra.mrb[0].mxu0 %v1538
      %v2305 = vpop.f32.mrb[0].mxu0
      %v2306 = vadd.f32 0.0, %v2305
      %v2307 = vpop.f32.mrb[0].mxu0
      %v2308 = vpop.f32.mrb[0].mxu0
      %v2309 = vadd.f32 0.0, %v2308
      %v2310 = vpop.f32.mrb[0].mxu0
      %2311 = vmatprep.mubr.bf16.mxu0 0
      %2312 = vmatmul.mubr.bf16.gmra.mrb[0].mxu0 %v1012
      %v2313 = vpop.f32.mrb[0].mxu0
      %v2314 = vadd.f32 0.0, %v2313
      %v2315 = vpop.f32.mrb[0].mxu0
      %v2316 = vpop.f32.mrb[0].mxu0
      %v2317 = vadd.f32 0.0, %v2316
      %v2318 = vpop.f32.mrb[0].mxu0
      %2319 = vdwg.mxu0
      %v2320 = vadd.f32 %v2122, %v2194
      %v2321 = vadd.f32 %v2123, %v2197
      %v2322 = vadd.f32 %v2124, %v2202
      %v2323 = vadd.f32 %v2125, %v2205
      %v2324 = vadd.f32 %v2126, %v2210
      %v2325 = vadd.f32 %v2127, %v2213
      %v2326 = vadd.f32 %v2128, %v2218
      %v2327 = vadd.f32 %v2129, %v2221
      %v2328 = vadd.f32 %v2130, %v2226
      %v2329 = vadd.f32 %v2131, %v2229
      %v2330 = vadd.f32 %v2132, %v2234
      %v2331 = vadd.f32 %v2133, %v2237
      %v2332 = vadd.f32 %v2134, %v2242
      %v2333 = vadd.f32 %v2135, %v2245
      %v2334 = vadd.f32 %v2136, %v2250
      %v2335 = vadd.f32 %v2137, %v2253
      %v2336 = vadd.f32 %v2138, %v2258
      %v2337 = vadd.f32 %v2139, %v2261
      %v2338 = vadd.f32 %v2140, %v2266
      %v2339 = vadd.f32 %v2141, %v2269
      %v2340 = vadd.f32 %v2142, %v2274
      %v2341 = vadd.f32 %v2143, %v2277
      %v2342 = vadd.f32 %v2144, %v2282
      %v2343 = vadd.f32 %v2145, %v2285
      %v2344 = vadd.f32 %v2146, %v2290
      %v2345 = vadd.f32 %v2147, %v2293
      %v2346 = vadd.f32 %v2148, %v2298
      %v2347 = vadd.f32 %v2149, %v2301
      %v2348 = vadd.f32 %v2150, %v2306
      %v2349 = vadd.f32 %v2151, %v2309
      %v2350 = vadd.f32 %v2152, %v2314
      %v2351 = vadd.f32 %v2153, %v2317
      %s2352 = scalar_lea.vmem %s2, 28
      %v2353 = vld [vmem:[%s2352] sm:$0xf]
      %v2355 = vsel %vm847, %v2353, 0
      %2357 = vmatprep.subr.bf16.mxu0 0
      %2358 = vmatpush1.bf16.msra.mxu0 %v2355
      %2359 = vmatprep.subr.bf16.mxu0 0
      %2360 = vmatpush1.bf16.msra.mxu0 0
      %2361 = vmatprep.subr.bf16.mxu0 0
      %2362 = vmatpush1.bf16.msra.mxu0 0
      %2363 = vmatprep.subr.bf16.mxu0 0
      %2364 = vmatpush1.bf16.msra.mxu0 0
      %2365 = vmatprep.subr.bf16.mxu0 0
      %2366 = vmatpush1.bf16.msra.mxu0 0
      %2367 = vmatprep.subr.bf16.mxu0 0
      %2368 = vmatpush1.bf16.msra.mxu0 0
      %2369 = vmatprep.subr.bf16.mxu0 0
      %2370 = vmatpush1.bf16.msra.mxu0 0
      %2371 = vmatprep.subr.bf16.mxu0 0
      %2372 = vmatpush1.bf16.msra.mxu0 0
      %2373 = vmatprep.subr.bf16.mxu0 0
      %2374 = vmatpush1.bf16.msra.mxu0 0
      %2375 = vmatprep.subr.bf16.mxu0 0
      %2376 = vmatpush1.bf16.msra.mxu0 0
      %2377 = vmatprep.subr.bf16.mxu0 0
      %2378 = vmatpush1.bf16.msra.mxu0 0
      %2379 = vmatprep.subr.bf16.mxu0 0
      %2380 = vmatpush1.bf16.msra.mxu0 0
      %2381 = vmatprep.subr.bf16.mxu0 0
      %2382 = vmatpush1.bf16.msra.mxu0 0
      %2383 = vmatprep.subr.bf16.mxu0 0
      %2384 = vmatpush1.bf16.msra.mxu0 0
      %2385 = vmatprep.subr.bf16.mxu0 0
      %2386 = vmatpush1.bf16.msra.mxu0 0
      %2387 = vmatprep.subr.bf16.mxu0 0
      %2388 = vmatpush1.bf16.msra.mxu0 0
      %2389 = vmatprep.mubr.bf16.mxu0 0
      %2390 = vmatmul.mubr.bf16.gmra.mrb[0].mxu0 %v806
      %v2391 = vpop.f32.mrb[0].mxu0
      %v2392 = vadd.f32 0.0, %v2391
      %v2393 = vpop.f32.mrb[0].mxu0
      %v2394 = vpop.f32.mrb[0].mxu0
      %v2395 = vadd.f32 0.0, %v2394
      %v2396 = vpop.f32.mrb[0].mxu0
      %2397 = vmatprep.mubr.bf16.mxu0 0
      %2398 = vmatmul.mubr.bf16.gmra.mrb[0].mxu0 %v809
      %v2399 = vpop.f32.mrb[0].mxu0
      %v2400 = vadd.f32 0.0, %v2399
      %v2401 = vpop.f32.mrb[0].mxu0
      %v2402 = vpop.f32.mrb[0].mxu0
      %v2403 = vadd.f32 0.0, %v2402
      %v2404 = vpop.f32.mrb[0].mxu0
      %2405 = vmatprep.mubr.bf16.mxu0 0
      %2406 = vmatmul.mubr.bf16.gmra.mrb[0].mxu0 %v812
      %v2407 = vpop.f32.mrb[0].mxu0
      %v2408 = vadd.f32 0.0, %v2407
      %v2409 = vpop.f32.mrb[0].mxu0
      %v2410 = vpop.f32.mrb[0].mxu0
      %v2411 = vadd.f32 0.0, %v2410
      %v2412 = vpop.f32.mrb[0].mxu0
      %2413 = vmatprep.mubr.bf16.mxu0 0
      %2414 = vmatmul.mubr.bf16.gmra.mrb[0].mxu0 %v815
      %v2415 = vpop.f32.mrb[0].mxu0
      %v2416 = vadd.f32 0.0, %v2415
      %v2417 = vpop.f32.mrb[0].mxu0
      %v2418 = vpop.f32.mrb[0].mxu0
      %v2419 = vadd.f32 0.0, %v2418
      %v2420 = vpop.f32.mrb[0].mxu0
      %2421 = vmatprep.mubr.bf16.mxu0 0
      %2422 = vmatmul.mubr.bf16.gmra.mrb[0].mxu0 %v818
      %v2423 = vpop.f32.mrb[0].mxu0
      %v2424 = vadd.f32 0.0, %v2423
      %v2425 = vpop.f32.mrb[0].mxu0
      %v2426 = vpop.f32.mrb[0].mxu0
      %v2427 = vadd.f32 0.0, %v2426
      %v2428 = vpop.f32.mrb[0].mxu0
      %2429 = vmatprep.mubr.bf16.mxu0 0
      %2430 = vmatmul.mubr.bf16.gmra.mrb[0].mxu0 %v821
      %v2431 = vpop.f32.mrb[0].mxu0
      %v2432 = vadd.f32 0.0, %v2431
      %v2433 = vpop.f32.mrb[0].mxu0
      %v2434 = vpop.f32.mrb[0].mxu0
      %v2435 = vadd.f32 0.0, %v2434
      %v2436 = vpop.f32.mrb[0].mxu0
      %2437 = vmatprep.mubr.bf16.mxu0 0
      %2438 = vmatmul.mubr.bf16.gmra.mrb[0].mxu0 %v824
      %v2439 = vpop.f32.mrb[0].mxu0
      %v2440 = vadd.f32 0.0, %v2439
      %v2441 = vpop.f32.mrb[0].mxu0
      %v2442 = vpop.f32.mrb[0].mxu0
      %v2443 = vadd.f32 0.0, %v2442
      %v2444 = vpop.f32.mrb[0].mxu0
      %2445 = vmatprep.mubr.bf16.mxu0 0
      %2446 = vmatmul.mubr.bf16.gmra.mrb[0].mxu0 %v827
      %v2447 = vpop.f32.mrb[0].mxu0
      %v2448 = vadd.f32 0.0, %v2447
      %v2449 = vpop.f32.mrb[0].mxu0
      %v2450 = vpop.f32.mrb[0].mxu0
      %v2451 = vadd.f32 0.0, %v2450
      %v2452 = vpop.f32.mrb[0].mxu0
      %2453 = vmatprep.mubr.bf16.mxu0 0
      %2454 = vmatmul.mubr.bf16.gmra.mrb[0].mxu0 %v830
      %v2455 = vpop.f32.mrb[0].mxu0
      %v2456 = vadd.f32 0.0, %v2455
      %v2457 = vpop.f32.mrb[0].mxu0
      %v2458 = vpop.f32.mrb[0].mxu0
      %v2459 = vadd.f32 0.0, %v2458
      %v2460 = vpop.f32.mrb[0].mxu0
      %2461 = vmatprep.mubr.bf16.mxu0 0
      %2462 = vmatmul.mubr.bf16.gmra.mrb[0].mxu0 %v833
      %v2463 = vpop.f32.mrb[0].mxu0
      %v2464 = vadd.f32 0.0, %v2463
      %v2465 = vpop.f32.mrb[0].mxu0
      %v2466 = vpop.f32.mrb[0].mxu0
      %v2467 = vadd.f32 0.0, %v2466
      %v2468 = vpop.f32.mrb[0].mxu0
      %2469 = vmatprep.mubr.bf16.mxu0 0
      %2470 = vmatmul.mubr.bf16.gmra.mrb[0].mxu0 %v836
      %v2471 = vpop.f32.mrb[0].mxu0
      %v2472 = vadd.f32 0.0, %v2471
      %v2473 = vpop.f32.mrb[0].mxu0
      %v2474 = vpop.f32.mrb[0].mxu0
      %v2475 = vadd.f32 0.0, %v2474
      %v2476 = vpop.f32.mrb[0].mxu0
      %2477 = vmatprep.mubr.bf16.mxu0 0
      %2478 = vmatmul.mubr.bf16.gmra.mrb[0].mxu0 %v839
      %v2479 = vpop.f32.mrb[0].mxu0
      %v2480 = vadd.f32 0.0, %v2479
      %v2481 = vpop.f32.mrb[0].mxu0
      %v2482 = vpop.f32.mrb[0].mxu0
      %v2483 = vadd.f32 0.0, %v2482
      %v2484 = vpop.f32.mrb[0].mxu0
      %2485 = vmatprep.mubr.bf16.mxu0 0
      %2486 = vmatmul.mubr.bf16.gmra.mrb[0].mxu0 %v842
      %v2487 = vpop.f32.mrb[0].mxu0
      %v2488 = vadd.f32 0.0, %v2487
      %v2489 = vpop.f32.mrb[0].mxu0
      %v2490 = vpop.f32.mrb[0].mxu0
      %v2491 = vadd.f32 0.0, %v2490
      %v2492 = vpop.f32.mrb[0].mxu0
      %2493 = vmatprep.mubr.bf16.mxu0 0
      %2494 = vmatmul.mubr.bf16.gmra.mrb[0].mxu0 %v845
      %v2495 = vpop.f32.mrb[0].mxu0
      %v2496 = vadd.f32 0.0, %v2495
      %v2497 = vpop.f32.mrb[0].mxu0
      %v2498 = vpop.f32.mrb[0].mxu0
      %v2499 = vadd.f32 0.0, %v2498
      %v2500 = vpop.f32.mrb[0].mxu0
      %2501 = vmatprep.mubr.bf16.mxu0 0
      %2502 = vmatmul.mubr.bf16.gmra.mrb[0].mxu0 %v1750
      %v2503 = vpop.f32.mrb[0].mxu0
      %v2504 = vadd.f32 0.0, %v2503
      %v2505 = vpop.f32.mrb[0].mxu0
      %v2506 = vpop.f32.mrb[0].mxu0
      %v2507 = vadd.f32 0.0, %v2506
      %v2508 = vpop.f32.mrb[0].mxu0
      %2509 = vmatprep.mubr.bf16.mxu0 0
      %2510 = vmatmul.mubr.bf16.gmra.mrb[0].mxu0 %v800
      %v2511 = vpop.f32.mrb[0].mxu0
      %v2512 = vadd.f32 0.0, %v2511
      %v2513 = vpop.f32.mrb[0].mxu0
      %v2514 = vpop.f32.mrb[0].mxu0
      %v2515 = vadd.f32 0.0, %v2514
      %v2516 = vpop.f32.mrb[0].mxu0
      %2517 = vdwg.mxu0
      %v2518 = vadd.f32 %v2320, %v2392
      %v2519 = vadd.f32 %v2321, %v2395
      %v2520 = vadd.f32 %v2322, %v2400
      %v2521 = vadd.f32 %v2323, %v2403
      %v2522 = vadd.f32 %v2324, %v2408
      %v2523 = vadd.f32 %v2325, %v2411
      %v2524 = vadd.f32 %v2326, %v2416
      %v2525 = vadd.f32 %v2327, %v2419
      %v2526 = vadd.f32 %v2328, %v2424
      %v2527 = vadd.f32 %v2329, %v2427
      %v2528 = vadd.f32 %v2330, %v2432
      %v2529 = vadd.f32 %v2331, %v2435
      %v2530 = vadd.f32 %v2332, %v2440
      %v2531 = vadd.f32 %v2333, %v2443
      %v2532 = vadd.f32 %v2334, %v2448
      %v2533 = vadd.f32 %v2335, %v2451
      %v2534 = vadd.f32 %v2336, %v2456
      %v2535 = vadd.f32 %v2337, %v2459
      %v2536 = vadd.f32 %v2338, %v2464
      %v2537 = vadd.f32 %v2339, %v2467
      %v2538 = vadd.f32 %v2340, %v2472
      %v2539 = vadd.f32 %v2341, %v2475
      %v2540 = vadd.f32 %v2342, %v2480
      %v2541 = vadd.f32 %v2343, %v2483
      %v2542 = vadd.f32 %v2344, %v2488
      %v2543 = vadd.f32 %v2345, %v2491
      %v2544 = vadd.f32 %v2346, %v2496
      %v2545 = vadd.f32 %v2347, %v2499
      %v2546 = vadd.f32 %v2348, %v2504
      %v2547 = vadd.f32 %v2349, %v2507
      %v2548 = vadd.f32 %v2350, %v2512
      %v2549 = vadd.f32 %v2351, %v2515
      %s2550 = scalar_lea.vmem %s2, 32
      %v2551 = vld [vmem:[%s2550] sm:$0xf]
      %v2553 = vsel %vm847, %v2551, 0
      %2555 = vmatprep.subr.bf16.mxu0 0
      %2556 = vmatpush1.bf16.msra.mxu0 %v2553
      %2557 = vmatprep.subr.bf16.mxu0 0
      %2558 = vmatpush1.bf16.msra.mxu0 0
      %2559 = vmatprep.subr.bf16.mxu0 0
      %2560 = vmatpush1.bf16.msra.mxu0 0
      %2561 = vmatprep.subr.bf16.mxu0 0
      %2562 = vmatpush1.bf16.msra.mxu0 0
      %2563 = vmatprep.subr.bf16.mxu0 0
      %2564 = vmatpush1.bf16.msra.mxu0 0
      %2565 = vmatprep.subr.bf16.mxu0 0
      %2566 = vmatpush1.bf16.msra.mxu0 0
      %2567 = vmatprep.subr.bf16.mxu0 0
      %2568 = vmatpush1.bf16.msra.mxu0 0
      %2569 = vmatprep.subr.bf16.mxu0 0
      %2570 = vmatpush1.bf16.msra.mxu0 0
      %2571 = vmatprep.subr.bf16.mxu0 0
      %2572 = vmatpush1.bf16.msra.mxu0 0
      %2573 = vmatprep.subr.bf16.mxu0 0
      %2574 = vmatpush1.bf16.msra.mxu0 0
      %2575 = vmatprep.subr.bf16.mxu0 0
      %2576 = vmatpush1.bf16.msra.mxu0 0
      %2577 = vmatprep.subr.bf16.mxu0 0
      %2578 = vmatpush1.bf16.msra.mxu0 0
      %2579 = vmatprep.subr.bf16.mxu0 0
      %2580 = vmatpush1.bf16.msra.mxu0 0
      %2581 = vmatprep.subr.bf16.mxu0 0
      %2582 = vmatpush1.bf16.msra.mxu0 0
      %2583 = vmatprep.subr.bf16.mxu0 0
      %2584 = vmatpush1.bf16.msra.mxu0 0
      %2585 = vmatprep.subr.bf16.mxu0 0
      %2586 = vmatpush1.bf16.msra.mxu0 0
      %2587 = vmatprep.mubr.bf16.mxu0 0
      %2588 = vmatmul.mubr.bf16.gmra.mrb[0].mxu0 %v1298
      %v2589 = vpop.f32.mrb[0].mxu0
      %v2590 = vadd.f32 0.0, %v2589
      %v2591 = vpop.f32.mrb[0].mxu0
      %v2592 = vpop.f32.mrb[0].mxu0
      %v2593 = vadd.f32 0.0, %v2592
      %v2594 = vpop.f32.mrb[0].mxu0
      %2595 = vmatprep.mubr.bf16.mxu0 0
      %2596 = vmatmul.mubr.bf16.gmra.mrb[0].mxu0 %v1301
      %v2597 = vpop.f32.mrb[0].mxu0
      %v2598 = vadd.f32 0.0, %v2597
      %v2599 = vpop.f32.mrb[0].mxu0
      %v2600 = vpop.f32.mrb[0].mxu0
      %v2601 = vadd.f32 0.0, %v2600
      %v2602 = vpop.f32.mrb[0].mxu0
      %2603 = vmatprep.mubr.bf16.mxu0 0
      %2604 = vmatmul.mubr.bf16.gmra.mrb[0].mxu0 %v1304
      %v2605 = vpop.f32.mrb[0].mxu0
      %v2606 = vadd.f32 0.0, %v2605
      %v2607 = vpop.f32.mrb[0].mxu0
      %v2608 = vpop.f32.mrb[0].mxu0
      %v2609 = vadd.f32 0.0, %v2608
      %v2610 = vpop.f32.mrb[0].mxu0
      %2611 = vmatprep.mubr.bf16.mxu0 0
      %2612 = vmatmul.mubr.bf16.gmra.mrb[0].mxu0 %v1307
      %v2613 = vpop.f32.mrb[0].mxu0
      %v2614 = vadd.f32 0.0, %v2613
      %v2615 = vpop.f32.mrb[0].mxu0
      %v2616 = vpop.f32.mrb[0].mxu0
      %v2617 = vadd.f32 0.0, %v2616
      %v2618 = vpop.f32.mrb[0].mxu0
      %2619 = vmatprep.mubr.bf16.mxu0 0
      %2620 = vmatmul.mubr.bf16.gmra.mrb[0].mxu0 %v1310
      %v2621 = vpop.f32.mrb[0].mxu0
      %v2622 = vadd.f32 0.0, %v2621
      %v2623 = vpop.f32.mrb[0].mxu0
      %v2624 = vpop.f32.mrb[0].mxu0
      %v2625 = vadd.f32 0.0, %v2624
      %v2626 = vpop.f32.mrb[0].mxu0
      %2627 = vmatprep.mubr.bf16.mxu0 0
      %2628 = vmatmul.mubr.bf16.gmra.mrb[0].mxu0 %v1313
      %v2629 = vpop.f32.mrb[0].mxu0
      %v2630 = vadd.f32 0.0, %v2629
      %v2631 = vpop.f32.mrb[0].mxu0
      %v2632 = vpop.f32.mrb[0].mxu0
      %v2633 = vadd.f32 0.0, %v2632
      %v2634 = vpop.f32.mrb[0].mxu0
      %2635 = vmatprep.mubr.bf16.mxu0 0
      %2636 = vmatmul.mubr.bf16.gmra.mrb[0].mxu0 %v1316
      %v2637 = vpop.f32.mrb[0].mxu0
      %v2638 = vadd.f32 0.0, %v2637
      %v2639 = vpop.f32.mrb[0].mxu0
      %v2640 = vpop.f32.mrb[0].mxu0
      %v2641 = vadd.f32 0.0, %v2640
      %v2642 = vpop.f32.mrb[0].mxu0
      %2643 = vmatprep.mubr.bf16.mxu0 0
      %2644 = vmatmul.mubr.bf16.gmra.mrb[0].mxu0 %v1319
      %v2645 = vpop.f32.mrb[0].mxu0
      %v2646 = vadd.f32 0.0, %v2645
      %v2647 = vpop.f32.mrb[0].mxu0
      %v2648 = vpop.f32.mrb[0].mxu0
      %v2649 = vadd.f32 0.0, %v2648
      %v2650 = vpop.f32.mrb[0].mxu0
      %2651 = vmatprep.mubr.bf16.mxu0 0
      %2652 = vmatmul.mubr.bf16.gmra.mrb[0].mxu0 %v1322
      %v2653 = vpop.f32.mrb[0].mxu0
      %v2654 = vadd.f32 0.0, %v2653
      %v2655 = vpop.f32.mrb[0].mxu0
      %v2656 = vpop.f32.mrb[0].mxu0
      %v2657 = vadd.f32 0.0, %v2656
      %v2658 = vpop.f32.mrb[0].mxu0
      %2659 = vmatprep.mubr.bf16.mxu0 0
      %2660 = vmatmul.mubr.bf16.gmra.mrb[0].mxu0 %v1325
      %v2661 = vpop.f32.mrb[0].mxu0
      %v2662 = vadd.f32 0.0, %v2661
      %v2663 = vpop.f32.mrb[0].mxu0
      %v2664 = vpop.f32.mrb[0].mxu0
      %v2665 = vadd.f32 0.0, %v2664
      %v2666 = vpop.f32.mrb[0].mxu0
      %2667 = vmatprep.mubr.bf16.mxu0 0
      %2668 = vmatmul.mubr.bf16.gmra.mrb[0].mxu0 %v1328
      %v2669 = vpop.f32.mrb[0].mxu0
      %v2670 = vadd.f32 0.0, %v2669
      %v2671 = vpop.f32.mrb[0].mxu0
      %v2672 = vpop.f32.mrb[0].mxu0
      %v2673 = vadd.f32 0.0, %v2672
      %v2674 = vpop.f32.mrb[0].mxu0
      %2675 = vmatprep.mubr.bf16.mxu0 0
      %2676 = vmatmul.mubr.bf16.gmra.mrb[0].mxu0 %v1331
      %v2677 = vpop.f32.mrb[0].mxu0
      %v2678 = vadd.f32 0.0, %v2677
      %v2679 = vpop.f32.mrb[0].mxu0
      %v2680 = vpop.f32.mrb[0].mxu0
      %v2681 = vadd.f32 0.0, %v2680
      %v2682 = vpop.f32.mrb[0].mxu0
      %2683 = vmatprep.mubr.bf16.mxu0 0
      %2684 = vmatmul.mubr.bf16.gmra.mrb[0].mxu0 %v1334
      %v2685 = vpop.f32.mrb[0].mxu0
      %v2686 = vadd.f32 0.0, %v2685
      %v2687 = vpop.f32.mrb[0].mxu0
      %v2688 = vpop.f32.mrb[0].mxu0
      %v2689 = vadd.f32 0.0, %v2688
      %v2690 = vpop.f32.mrb[0].mxu0
      %2691 = vmatprep.mubr.bf16.mxu0 0
      %2692 = vmatmul.mubr.bf16.gmra.mrb[0].mxu0 %v1337
      %v2693 = vpop.f32.mrb[0].mxu0
      %v2694 = vadd.f32 0.0, %v2693
      %v2695 = vpop.f32.mrb[0].mxu0
      %v2696 = vpop.f32.mrb[0].mxu0
      %v2697 = vadd.f32 0.0, %v2696
      %v2698 = vpop.f32.mrb[0].mxu0
      %2699 = vmatprep.mubr.bf16.mxu0 0
      %2700 = vmatmul.mubr.bf16.gmra.mrb[0].mxu0 %v1956
      %v2701 = vpop.f32.mrb[0].mxu0
      %v2702 = vadd.f32 0.0, %v2701
      %v2703 = vpop.f32.mrb[0].mxu0
      %v2704 = vpop.f32.mrb[0].mxu0
      %v2705 = vadd.f32 0.0, %v2704
      %v2706 = vpop.f32.mrb[0].mxu0
      %2707 = vmatprep.mubr.bf16.mxu0 0
      %2708 = vmatmul.mubr.bf16.gmra.mrb[0].mxu0 %v1292
      %v2709 = vpop.f32.mrb[0].mxu0
      %v2710 = vadd.f32 0.0, %v2709
      %v2711 = vpop.f32.mrb[0].mxu0
      %v2712 = vpop.f32.mrb[0].mxu0
      %v2713 = vadd.f32 0.0, %v2712
      %v2714 = vpop.f32.mrb[0].mxu0
      %2715 = vdwg.mxu0
      %v2716 = vadd.f32 %v2518, %v2590
      %v2717 = vadd.f32 %v2519, %v2593
      %v2718 = vadd.f32 %v2520, %v2598
      %v2719 = vadd.f32 %v2521, %v2601
      %v2720 = vadd.f32 %v2522, %v2606
      %v2721 = vadd.f32 %v2523, %v2609
      %v2722 = vadd.f32 %v2524, %v2614
      %v2723 = vadd.f32 %v2525, %v2617
      %v2724 = vadd.f32 %v2526, %v2622
      %v2725 = vadd.f32 %v2527, %v2625
      %v2726 = vadd.f32 %v2528, %v2630
      %v2727 = vadd.f32 %v2529, %v2633
      %v2728 = vadd.f32 %v2530, %v2638
      %v2729 = vadd.f32 %v2531, %v2641
      %v2730 = vadd.f32 %v2532, %v2646
      %v2731 = vadd.f32 %v2533, %v2649
      %v2732 = vadd.f32 %v2534, %v2654
      %v2733 = vadd.f32 %v2535, %v2657
      %v2734 = vadd.f32 %v2536, %v2662
      %v2735 = vadd.f32 %v2537, %v2665
      %v2736 = vadd.f32 %v2538, %v2670
      %v2737 = vadd.f32 %v2539, %v2673
      %v2738 = vadd.f32 %v2540, %v2678
      %v2739 = vadd.f32 %v2541, %v2681
      %v2740 = vadd.f32 %v2542, %v2686
      %v2741 = vadd.f32 %v2543, %v2689
      %v2742 = vadd.f32 %v2544, %v2694
      %v2743 = vadd.f32 %v2545, %v2697
      %v2744 = vadd.f32 %v2546, %v2702
      %v2745 = vadd.f32 %v2547, %v2705
      %v2746 = vadd.f32 %v2548, %v2710
      %v2747 = vadd.f32 %v2549, %v2713
      %v2748 = vld [vmem:[%s3] sm:$0x1]
      %v2750 = vlaneseq
      %v2751 = vshrl.u32 %v2750, 7
      %v2752 = vsub.s32 0, %v2751
      %v2753 = vrot.slane %v2748, %v2752
      %v2755 = vadd.f32 %v2716, %v2753
      %v2756 = vadd.f32 %v2717, %v2753
      %v2757 = vadd.f32 %v2718, %v2753
      %v2758 = vadd.f32 %v2719, %v2753
      %v2759 = vadd.f32 %v2720, %v2753
      %v2760 = vadd.f32 %v2721, %v2753
      %v2761 = vadd.f32 %v2722, %v2753
      %v2762 = vadd.f32 %v2723, %v2753
      %v2763 = vadd.f32 %v2724, %v2753
      %v2764 = vadd.f32 %v2725, %v2753
      %v2765 = vadd.f32 %v2726, %v2753
      %v2766 = vadd.f32 %v2727, %v2753
      %v2767 = vadd.f32 %v2728, %v2753
      %v2768 = vadd.f32 %v2729, %v2753
      %v2769 = vadd.f32 %v2730, %v2753
      %v2770 = vadd.f32 %v2731, %v2753
      %v2771 = vadd.f32 %v2732, %v2753
      %v2772 = vadd.f32 %v2733, %v2753
      %v2773 = vadd.f32 %v2734, %v2753
      %v2774 = vadd.f32 %v2735, %v2753
      %v2775 = vadd.f32 %v2736, %v2753
      %v2776 = vadd.f32 %v2737, %v2753
      %v2777 = vadd.f32 %v2738, %v2753
      %v2778 = vadd.f32 %v2739, %v2753
      %v2779 = vadd.f32 %v2740, %v2753
      %v2780 = vadd.f32 %v2741, %v2753
      %v2781 = vadd.f32 %v2742, %v2753
      %v2782 = vadd.f32 %v2743, %v2753
      %v2783 = vadd.f32 %v2744, %v2753
      %v2784 = vadd.f32 %v2745, %v2753
      %v2785 = vadd.f32 %v2746, %v2753
      %v2786 = vadd.f32 %v2747, %v2753
      %v2787 = vxor.u32 %v2755, 2147483648
      %v2788 = vxor.u32 %v2756, 2147483648
      %v2789 = vxor.u32 %v2757, 2147483648
      %v2790 = vxor.u32 %v2758, 2147483648
      %v2791 = vxor.u32 %v2759, 2147483648
      %v2792 = vxor.u32 %v2760, 2147483648
      %v2793 = vxor.u32 %v2761, 2147483648
      %v2794 = vxor.u32 %v2762, 2147483648
      %v2795 = vxor.u32 %v2763, 2147483648
      %v2796 = vxor.u32 %v2764, 2147483648
      %v2797 = vxor.u32 %v2765, 2147483648
      %v2798 = vxor.u32 %v2766, 2147483648
      %v2799 = vxor.u32 %v2767, 2147483648
      %v2800 = vxor.u32 %v2768, 2147483648
      %v2801 = vxor.u32 %v2769, 2147483648
      %v2802 = vxor.u32 %v2770, 2147483648
      %v2803 = vxor.u32 %v2771, 2147483648
      %v2804 = vxor.u32 %v2772, 2147483648
      %v2805 = vxor.u32 %v2773, 2147483648
      %v2806 = vxor.u32 %v2774, 2147483648
      %v2807 = vxor.u32 %v2775, 2147483648
      %v2808 = vxor.u32 %v2776, 2147483648
      %v2809 = vxor.u32 %v2777, 2147483648
      %v2810 = vxor.u32 %v2778, 2147483648
      %v2811 = vxor.u32 %v2779, 2147483648
      %v2812 = vxor.u32 %v2780, 2147483648
      %v2813 = vxor.u32 %v2781, 2147483648
      %v2814 = vxor.u32 %v2782, 2147483648
      %v2815 = vxor.u32 %v2783, 2147483648
      %v2816 = vxor.u32 %v2784, 2147483648
      %v2817 = vxor.u32 %v2785, 2147483648
      %v2818 = vxor.u32 %v2786, 2147483648
      %v2819 = vmul.f32 %v2787, 1.442695
      %v2820 = vpow.pop %v2819
      %v2821 = vmul.f32 %v2788, 1.442695
      %v2822 = vpow.pop %v2821
      %v2823 = vmul.f32 %v2789, 1.442695
      %v2824 = vpow.pop %v2823
      %v2825 = vmul.f32 %v2790, 1.442695
      %v2826 = vpow.pop %v2825
      %v2827 = vmul.f32 %v2791, 1.442695
      %v2828 = vpow.pop %v2827
      %v2829 = vmul.f32 %v2792, 1.442695
      %v2830 = vpow.pop %v2829
      %v2831 = vmul.f32 %v2793, 1.442695
      %v2832 = vpow.pop %v2831
      %v2833 = vmul.f32 %v2794, 1.442695
      %v2834 = vpow.pop %v2833
      %v2835 = vmul.f32 %v2795, 1.442695
      %v2836 = vpow.pop %v2835
      %v2837 = vmul.f32 %v2796, 1.442695
      %v2838 = vpow.pop %v2837
      %v2839 = vmul.f32 %v2797, 1.442695
      %v2840 = vpow.pop %v2839
      %v2841 = vmul.f32 %v2798, 1.442695
      %v2842 = vpow.pop %v2841
      %v2843 = vmul.f32 %v2799, 1.442695
      %v2844 = vpow.pop %v2843
      %v2845 = vmul.f32 %v2800, 1.442695
      %v2846 = vpow.pop %v2845
      %v2847 = vmul.f32 %v2801, 1.442695
      %v2848 = vpow.pop %v2847
      %v2849 = vmul.f32 %v2802, 1.442695
      %v2850 = vpow.pop %v2849
      %v2851 = vmul.f32 %v2803, 1.442695
      %v2852 = vpow.pop %v2851
      %v2853 = vmul.f32 %v2804, 1.442695
      %v2854 = vpow.pop %v2853
      %v2855 = vmul.f32 %v2805, 1.442695
      %v2856 = vpow.pop %v2855
      %v2857 = vmul.f32 %v2806, 1.442695
      %v2858 = vpow.pop %v2857
      %v2859 = vmul.f32 %v2807, 1.442695
      %v2860 = vpow.pop %v2859
      %v2861 = vmul.f32 %v2808, 1.442695
      %v2862 = vpow.pop %v2861
      %v2863 = vmul.f32 %v2809, 1.442695
      %v2864 = vpow.pop %v2863
      %v2865 = vmul.f32 %v2810, 1.442695
      %v2866 = vpow.pop %v2865
      %v2867 = vmul.f32 %v2811, 1.442695
      %v2868 = vpow.pop %v2867
      %v2869 = vmul.f32 %v2812, 1.442695
      %v2870 = vpow.pop %v2869
      %v2871 = vmul.f32 %v2813, 1.442695
      %v2872 = vpow.pop %v2871
      %v2873 = vmul.f32 %v2814, 1.442695
      %v2874 = vpow.pop %v2873
      %v2875 = vmul.f32 %v2815, 1.442695
      %v2876 = vpow.pop %v2875
      %v2877 = vmul.f32 %v2816, 1.442695
      %v2878 = vpow.pop %v2877
      %v2879 = vmul.f32 %v2817, 1.442695
      %v2880 = vpow.pop %v2879
      %v2881 = vmul.f32 %v2818, 1.442695
      %v2882 = vpow.pop %v2881
      %v2883 = vadd.f32 %v2820, 1.0
      %v2884 = vadd.f32 %v2822, 1.0
      %v2885 = vadd.f32 %v2824, 1.0
      %v2886 = vadd.f32 %v2826, 1.0
      %v2887 = vadd.f32 %v2828, 1.0
      %v2888 = vadd.f32 %v2830, 1.0
      %v2889 = vadd.f32 %v2832, 1.0
      %v2890 = vadd.f32 %v2834, 1.0
      %v2891 = vadd.f32 %v2836, 1.0
      %v2892 = vadd.f32 %v2838, 1.0
      %v2893 = vadd.f32 %v2840, 1.0
      %v2894 = vadd.f32 %v2842, 1.0
      %v2895 = vadd.f32 %v2844, 1.0
      %v2896 = vadd.f32 %v2846, 1.0
      %v2897 = vadd.f32 %v2848, 1.0
      %v2898 = vadd.f32 %v2850, 1.0
      %v2899 = vadd.f32 %v2852, 1.0
      %v2900 = vadd.f32 %v2854, 1.0
      %v2901 = vadd.f32 %v2856, 1.0
      %v2902 = vadd.f32 %v2858, 1.0
      %v2903 = vadd.f32 %v2860, 1.0
      %v2904 = vadd.f32 %v2862, 1.0
      %v2905 = vadd.f32 %v2864, 1.0
      %v2906 = vadd.f32 %v2866, 1.0
      %v2907 = vadd.f32 %v2868, 1.0
      %v2908 = vadd.f32 %v2870, 1.0
      %v2909 = vadd.f32 %v2872, 1.0
      %v2910 = vadd.f32 %v2874, 1.0
      %v2911 = vadd.f32 %v2876, 1.0
      %v2912 = vadd.f32 %v2878, 1.0
      %v2913 = vadd.f32 %v2880, 1.0
      %v2914 = vadd.f32 %v2882, 1.0
      %v2915 = vrcp.pop %v2883
      %v2916 = vmul.f32 1.0, %v2915
      %v2917 = vrcp.pop %v2884
      %v2918 = vmul.f32 1.0, %v2917
      %v2919 = vrcp.pop %v2885
      %v2920 = vmul.f32 1.0, %v2919
      %v2921 = vrcp.pop %v2886
      %v2922 = vmul.f32 1.0, %v2921
      %v2923 = vrcp.pop %v2887
      %v2924 = vmul.f32 1.0, %v2923
      %v2925 = vrcp.pop %v2888
      %v2926 = vmul.f32 1.0, %v2925
      %v2927 = vrcp.pop %v2889
      %v2928 = vmul.f32 1.0, %v2927
      %v2929 = vrcp.pop %v2890
      %v2930 = vmul.f32 1.0, %v2929
      %v2931 = vrcp.pop %v2891
      %v2932 = vmul.f32 1.0, %v2931
      %v2933 = vrcp.pop %v2892
      %v2934 = vmul.f32 1.0, %v2933
      %v2935 = vrcp.pop %v2893
      %v2936 = vmul.f32 1.0, %v2935
      %v2937 = vrcp.pop %v2894
      %v2938 = vmul.f32 1.0, %v2937
      %v2939 = vrcp.pop %v2895
      %v2940 = vmul.f32 1.0, %v2939
      %v2941 = vrcp.pop %v2896
      %v2942 = vmul.f32 1.0, %v2941
      %v2943 = vrcp.pop %v2897
      %v2944 = vmul.f32 1.0, %v2943
      %v2945 = vrcp.pop %v2898
      %v2946 = vmul.f32 1.0, %v2945
      %v2947 = vrcp.pop %v2899
      %v2948 = vmul.f32 1.0, %v2947
      %v2949 = vrcp.pop %v2900
      %v2950 = vmul.f32 1.0, %v2949
      %v2951 = vrcp.pop %v2901
      %v2952 = vmul.f32 1.0, %v2951
      %v2953 = vrcp.pop %v2902
      %v2954 = vmul.f32 1.0, %v2953
      %v2955 = vrcp.pop %v2903
      %v2956 = vmul.f32 1.0, %v2955
      %v2957 = vrcp.pop %v2904
      %v2958 = vmul.f32 1.0, %v2957
      %v2959 = vrcp.pop %v2905
      %v2960 = vmul.f32 1.0, %v2959
      %v2961 = vrcp.pop %v2906
      %v2962 = vmul.f32 1.0, %v2961
      %v2963 = vrcp.pop %v2907
      %v2964 = vmul.f32 1.0, %v2963
      %v2965 = vrcp.pop %v2908
      %v2966 = vmul.f32 1.0, %v2965
      %v2967 = vrcp.pop %v2909
      %v2968 = vmul.f32 1.0, %v2967
      %v2969 = vrcp.pop %v2910
      %v2970 = vmul.f32 1.0, %v2969
      %v2971 = vrcp.pop %v2911
      %v2972 = vmul.f32 1.0, %v2971
      %v2973 = vrcp.pop %v2912
      %v2974 = vmul.f32 1.0, %v2973
      %v2975 = vrcp.pop %v2913
      %v2976 = vmul.f32 1.0, %v2975
      %v2977 = vrcp.pop %v2914
      %v2978 = vmul.f32 1.0, %v2977
      %v2979 = vmul.f32 %v2755, %v2916
      %v2980 = vmul.f32 %v2756, %v2918
      %v2981 = vmul.f32 %v2757, %v2920
      %v2982 = vmul.f32 %v2758, %v2922
      %v2983 = vmul.f32 %v2759, %v2924
      %v2984 = vmul.f32 %v2760, %v2926
      %v2985 = vmul.f32 %v2761, %v2928
      %v2986 = vmul.f32 %v2762, %v2930
      %v2987 = vmul.f32 %v2763, %v2932
      %v2988 = vmul.f32 %v2764, %v2934
      %v2989 = vmul.f32 %v2765, %v2936
      %v2990 = vmul.f32 %v2766, %v2938
      %v2991 = vmul.f32 %v2767, %v2940
      %v2992 = vmul.f32 %v2768, %v2942
      %v2993 = vmul.f32 %v2769, %v2944
      %v2994 = vmul.f32 %v2770, %v2946
      %v2995 = vmul.f32 %v2771, %v2948
      %v2996 = vmul.f32 %v2772, %v2950
      %v2997 = vmul.f32 %v2773, %v2952
      %v2998 = vmul.f32 %v2774, %v2954
      %v2999 = vmul.f32 %v2775, %v2956
      %v3000 = vmul.f32 %v2776, %v2958
      %v3001 = vmul.f32 %v2777, %v2960
      %v3002 = vmul.f32 %v2778, %v2962
      %v3003 = vmul.f32 %v2779, %v2964
      %v3004 = vmul.f32 %v2780, %v2966
      %v3005 = vmul.f32 %v2781, %v2968
      %v3006 = vmul.f32 %v2782, %v2970
      %v3007 = vmul.f32 %v2783, %v2972
      %v3008 = vmul.f32 %v2784, %v2974
      %v3009 = vmul.f32 %v2785, %v2976
      %v3010 = vmul.f32 %v2786, %v2978
      %v3011 = vpack.c.bf16 %v2980, %v2979
      %v3012 = vpack.c.bf16 %v2982, %v2981
      %v3013 = vpack.c.bf16 %v2984, %v2983
      %v3014 = vpack.c.bf16 %v2986, %v2985
      %v3015 = vpack.c.bf16 %v2988, %v2987
      %v3016 = vpack.c.bf16 %v2990, %v2989
      %v3017 = vpack.c.bf16 %v2992, %v2991
      %v3018 = vpack.c.bf16 %v2994, %v2993
      %v3019 = vpack.c.bf16 %v2996, %v2995
      %v3020 = vpack.c.bf16 %v2998, %v2997
      %v3021 = vpack.c.bf16 %v3000, %v2999
      %v3022 = vpack.c.bf16 %v3002, %v3001
      %v3023 = vpack.c.bf16 %v3004, %v3003
      %v3024 = vpack.c.bf16 %v3006, %v3005
      %v3025 = vpack.c.bf16 %v3008, %v3007
      %v3026 = vpack.c.bf16 %v3010, %v3009
      %v3027 = vld [vmem:[%s4] sm:$0xf]
      %v3028 = vld [vmem:[%s293] sm:$0xf]
      %v3029 = vld [vmem:[%s293 + $0x4] sm:$0xf]
      %v3030 = vld [vmem:[%s293 + $0x8] sm:$0xf]
      %v3031 = vld [vmem:[%s293 + $0xc] sm:$0xf]
      %v3032 = vld [vmem:[%s293 + $0x10] sm:$0xf]
      %v3033 = vld [vmem:[%s293 + $0x14] sm:$0xf]
      %v3034 = vld [vmem:[%s293 + $0x18] sm:$0xf]
      %v3035 = vld [vmem:[%s293 + $0x1c] sm:$0xf]
      %v3036 = vld [vmem:[%s293 + $0x20] sm:$0xf]
      %v3037 = vld [vmem:[%s293 + $0x24] sm:$0xf]
      %v3038 = vld [vmem:[%s293 + $0x28] sm:$0xf]
      %v3039 = vld [vmem:[%s293 + $0x2c] sm:$0xf]
      %v3040 = vld [vmem:[%s293 + $0x30] sm:$0xf]
      %v3041 = vld [vmem:[%s293 + $0x34] sm:$0xf]
      %v3042 = vld [vmem:[%s293 + $0x38] sm:$0xf]
      %v3043 = vld [vmem:[%s293 + $0x3c] sm:$0xf]
      %v3044 = vld [vmem:[%s293 + $0x40] sm:$0xf]
      %v3045 = vld [vmem:[%s293 + $0x44] sm:$0xf]
      %v3046 = vld [vmem:[%s293 + $0x48] sm:$0xf]
      %v3047 = vld [vmem:[%s293 + $0x4c] sm:$0xf]
      %v3048 = vld [vmem:[%s293 + $0x50] sm:$0xf]
      %v3049 = vld [vmem:[%s293 + $0x54] sm:$0xf]
      %v3050 = vld [vmem:[%s293 + $0x58] sm:$0xf]
      %v3051 = vld [vmem:[%s293 + $0x5c] sm:$0xf]
      %v3052 = vld [vmem:[%s293 + $0x60] sm:$0xf]
      %v3053 = vld [vmem:[%s293 + $0x64] sm:$0xf]
      %v3054 = vld [vmem:[%s293 + $0x68] sm:$0xf]
      %v3055 = vld [vmem:[%s293 + $0x6c] sm:$0xf]
      %v3056 = vld [vmem:[%s293 + $0x70] sm:$0xf]
      %v3057 = vld [vmem:[%s293 + $0x74] sm:$0xf]
      %v3058 = vld [vmem:[%s293 + $0x78] sm:$0xf]
      %v3059 = vld [vmem:[%s293 + $0x7c] sm:$0xf]
      %v3060 = vld [vmem:[%s5] sm:$0xf]
      %v3093 = vunpack.c.l.b16 %v3028
      %v3094 = vunpack.c.l.b16 %v3029
      %v3095 = vunpack.c.l.b16 %v3030
      %v3096 = vunpack.c.l.b16 %v3031
      %v3097 = vunpack.c.l.b16 %v3032
      %v3098 = vunpack.c.l.b16 %v3033
      %v3099 = vunpack.c.l.b16 %v3034
      %v3100 = vunpack.c.l.b16 %v3035
      %v3101 = vunpack.c.l.b16 %v3036
      %v3102 = vunpack.c.l.b16 %v3037
      %v3103 = vunpack.c.l.b16 %v3038
      %v3104 = vunpack.c.l.b16 %v3039
      %v3105 = vunpack.c.l.b16 %v3040
      %v3106 = vunpack.c.l.b16 %v3041
      %v3107 = vunpack.c.l.b16 %v3042
      %v3108 = vunpack.c.l.b16 %v3043
      %v3109 = vunpack.c.l.b16 %v3044
      %v3110 = vunpack.c.l.b16 %v3045
      %v3111 = vunpack.c.l.b16 %v3046
      %v3112 = vunpack.c.l.b16 %v3047
      %v3113 = vunpack.c.l.b16 %v3048
      %v3114 = vunpack.c.l.b16 %v3049
      %v3115 = vunpack.c.l.b16 %v3050
      %v3116 = vunpack.c.l.b16 %v3051
      %v3117 = vunpack.c.l.b16 %v3052
      %v3118 = vunpack.c.l.b16 %v3053
      %v3119 = vunpack.c.l.b16 %v3054
      %v3120 = vunpack.c.l.b16 %v3055
      %v3121 = vunpack.c.l.b16 %v3056
      %v3122 = vunpack.c.l.b16 %v3057
      %v3123 = vunpack.c.l.b16 %v3058
      %v3124 = vunpack.c.l.b16 %v3059
      %v3125 = vpack.c.b16 %v3094, %v3093
      %v3126 = vpack.c.b16 %v3096, %v3095
      %v3127 = vpack.c.b16 %v3098, %v3097
      %v3128 = vpack.c.b16 %v3100, %v3099
      %v3129 = vpack.c.b16 %v3102, %v3101
      %v3130 = vpack.c.b16 %v3104, %v3103
      %v3131 = vpack.c.b16 %v3106, %v3105
      %v3132 = vpack.c.b16 %v3108, %v3107
      %v3133 = vpack.c.b16 %v3110, %v3109
      %v3134 = vpack.c.b16 %v3112, %v3111
      %v3135 = vpack.c.b16 %v3114, %v3113
      %v3136 = vpack.c.b16 %v3116, %v3115
      %v3137 = vpack.c.b16 %v3118, %v3117
      %v3138 = vpack.c.b16 %v3120, %v3119
      %v3139 = vpack.c.b16 %v3122, %v3121
      %v3140 = vpack.c.b16 %v3124, %v3123
      %v3142 = vsel %vm798, %v3125, 0
      %v3145 = vsel %vm798, %v3126, 0
      %v3148 = vsel %vm798, %v3127, 0
      %v3151 = vsel %vm798, %v3128, 0
      %v3154 = vsel %vm798, %v3129, 0
      %v3157 = vsel %vm798, %v3130, 0
      %v3160 = vsel %vm798, %v3131, 0
      %v3163 = vsel %vm798, %v3132, 0
      %v3166 = vsel %vm798, %v3133, 0
      %v3169 = vsel %vm798, %v3134, 0
      %v3172 = vsel %vm798, %v3135, 0
      %v3175 = vsel %vm798, %v3136, 0
      %v3178 = vsel %vm798, %v3137, 0
      %v3181 = vsel %vm798, %v3138, 0
      %v3184 = vsel %vm798, %v3139, 0
      %v3187 = vsel %vm798, %v3140, 0
      %v3190 = vsel %vm847, %v3060, 0
      %3192 = vmatprep.subr.bf16.mxu0 0
      %3193 = vmatpush1.bf16.msra.mxu0 %v3190
      %3194 = vmatprep.subr.bf16.mxu0 0
      %3195 = vmatpush1.bf16.msra.mxu0 0
      %3196 = vmatprep.subr.bf16.mxu0 0
      %3197 = vmatpush1.bf16.msra.mxu0 0
      %3198 = vmatprep.subr.bf16.mxu0 0
      %3199 = vmatpush1.bf16.msra.mxu0 0
      %3200 = vmatprep.subr.bf16.mxu0 0
      %3201 = vmatpush1.bf16.msra.mxu0 0
      %3202 = vmatprep.subr.bf16.mxu0 0
      %3203 = vmatpush1.bf16.msra.mxu0 0
      %3204 = vmatprep.subr.bf16.mxu0 0
      %3205 = vmatpush1.bf16.msra.mxu0 0
      %3206 = vmatprep.subr.bf16.mxu0 0
      %3207 = vmatpush1.bf16.msra.mxu0 0
      %3208 = vmatprep.subr.bf16.mxu0 0
      %3209 = vmatpush1.bf16.msra.mxu0 0
      %3210 = vmatprep.subr.bf16.mxu0 0
      %3211 = vmatpush1.bf16.msra.mxu0 0
      %3212 = vmatprep.subr.bf16.mxu0 0
      %3213 = vmatpush1.bf16.msra.mxu0 0
      %3214 = vmatprep.subr.bf16.mxu0 0
      %3215 = vmatpush1.bf16.msra.mxu0 0
      %3216 = vmatprep.subr.bf16.mxu0 0
      %3217 = vmatpush1.bf16.msra.mxu0 0
      %3218 = vmatprep.subr.bf16.mxu0 0
      %3219 = vmatpush1.bf16.msra.mxu0 0
      %3220 = vmatprep.subr.bf16.mxu0 0
      %3221 = vmatpush1.bf16.msra.mxu0 0
      %3222 = vmatprep.subr.bf16.mxu0 0
      %3223 = vmatpush1.bf16.msra.mxu0 0
      %3224 = vmatprep.mubr.bf16.mxu0 0
      %3225 = vmatmul.mubr.bf16.gmra.mrb[0].mxu0 %v3142
      %v3226 = vpop.f32.mrb[0].mxu0
      %v3227 = vadd.f32 0.0, %v3226
      %v3228 = vpop.f32.mrb[0].mxu0
      %v3229 = vpop.f32.mrb[0].mxu0
      %v3230 = vadd.f32 0.0, %v3229
      %v3231 = vpop.f32.mrb[0].mxu0
      %3232 = vmatprep.mubr.bf16.mxu0 0
      %3233 = vmatmul.mubr.bf16.gmra.mrb[0].mxu0 %v3145
      %v3234 = vpop.f32.mrb[0].mxu0
      %v3235 = vadd.f32 0.0, %v3234
      %v3236 = vpop.f32.mrb[0].mxu0
      %v3237 = vpop.f32.mrb[0].mxu0
      %v3238 = vadd.f32 0.0, %v3237
      %v3239 = vpop.f32.mrb[0].mxu0
      %3240 = vmatprep.mubr.bf16.mxu0 0
      %3241 = vmatmul.mubr.bf16.gmra.mrb[0].mxu0 %v3148
      %v3242 = vpop.f32.mrb[0].mxu0
      %v3243 = vadd.f32 0.0, %v3242
      %v3244 = vpop.f32.mrb[0].mxu0
      %v3245 = vpop.f32.mrb[0].mxu0
      %v3246 = vadd.f32 0.0, %v3245
      %v3247 = vpop.f32.mrb[0].mxu0
      %3248 = vmatprep.mubr.bf16.mxu0 0
      %3249 = vmatmul.mubr.bf16.gmra.mrb[0].mxu0 %v3151
      %v3250 = vpop.f32.mrb[0].mxu0
      %v3251 = vadd.f32 0.0, %v3250
      %v3252 = vpop.f32.mrb[0].mxu0
      %v3253 = vpop.f32.mrb[0].mxu0
      %v3254 = vadd.f32 0.0, %v3253
      %v3255 = vpop.f32.mrb[0].mxu0
      %3256 = vmatprep.mubr.bf16.mxu0 0
      %3257 = vmatmul.mubr.bf16.gmra.mrb[0].mxu0 %v3154
      %v3258 = vpop.f32.mrb[0].mxu0
      %v3259 = vadd.f32 0.0, %v3258
      %v3260 = vpop.f32.mrb[0].mxu0
      %v3261 = vpop.f32.mrb[0].mxu0
      %v3262 = vadd.f32 0.0, %v3261
      %v3263 = vpop.f32.mrb[0].mxu0
      %3264 = vmatprep.mubr.bf16.mxu0 0
      %3265 = vmatmul.mubr.bf16.gmra.mrb[0].mxu0 %v3157
      %v3266 = vpop.f32.mrb[0].mxu0
      %v3267 = vadd.f32 0.0, %v3266
      %v3268 = vpop.f32.mrb[0].mxu0
      %v3269 = vpop.f32.mrb[0].mxu0
      %v3270 = vadd.f32 0.0, %v3269
      %v3271 = vpop.f32.mrb[0].mxu0
      %3272 = vmatprep.mubr.bf16.mxu0 0
      %3273 = vmatmul.mubr.bf16.gmra.mrb[0].mxu0 %v3160
      %v3274 = vpop.f32.mrb[0].mxu0
      %v3275 = vadd.f32 0.0, %v3274
      %v3276 = vpop.f32.mrb[0].mxu0
      %v3277 = vpop.f32.mrb[0].mxu0
      %v3278 = vadd.f32 0.0, %v3277
      %v3279 = vpop.f32.mrb[0].mxu0
      %3280 = vmatprep.mubr.bf16.mxu0 0
      %3281 = vmatmul.mubr.bf16.gmra.mrb[0].mxu0 %v3163
      %v3282 = vpop.f32.mrb[0].mxu0
      %v3283 = vadd.f32 0.0, %v3282
      %v3284 = vpop.f32.mrb[0].mxu0
      %v3285 = vpop.f32.mrb[0].mxu0
      %v3286 = vadd.f32 0.0, %v3285
      %v3287 = vpop.f32.mrb[0].mxu0
      %3288 = vmatprep.mubr.bf16.mxu0 0
      %3289 = vmatmul.mubr.bf16.gmra.mrb[0].mxu0 %v3166
      %v3290 = vpop.f32.mrb[0].mxu0
      %v3291 = vadd.f32 0.0, %v3290
      %v3292 = vpop.f32.mrb[0].mxu0
      %v3293 = vpop.f32.mrb[0].mxu0
      %v3294 = vadd.f32 0.0, %v3293
      %v3295 = vpop.f32.mrb[0].mxu0
      %3296 = vmatprep.mubr.bf16.mxu0 0
      %3297 = vmatmul.mubr.bf16.gmra.mrb[0].mxu0 %v3169
      %v3298 = vpop.f32.mrb[0].mxu0
      %v3299 = vadd.f32 0.0, %v3298
      %v3300 = vpop.f32.mrb[0].mxu0
      %v3301 = vpop.f32.mrb[0].mxu0
      %v3302 = vadd.f32 0.0, %v3301
      %v3303 = vpop.f32.mrb[0].mxu0
      %3304 = vmatprep.mubr.bf16.mxu0 0
      %3305 = vmatmul.mubr.bf16.gmra.mrb[0].mxu0 %v3172
      %v3306 = vpop.f32.mrb[0].mxu0
      %v3307 = vadd.f32 0.0, %v3306
      %v3308 = vpop.f32.mrb[0].mxu0
      %v3309 = vpop.f32.mrb[0].mxu0
      %v3310 = vadd.f32 0.0, %v3309
      %v3311 = vpop.f32.mrb[0].mxu0
      %3312 = vmatprep.mubr.bf16.mxu0 0
      %3313 = vmatmul.mubr.bf16.gmra.mrb[0].mxu0 %v3175
      %v3314 = vpop.f32.mrb[0].mxu0
      %v3315 = vadd.f32 0.0, %v3314
      %v3316 = vpop.f32.mrb[0].mxu0
      %v3317 = vpop.f32.mrb[0].mxu0
      %v3318 = vadd.f32 0.0, %v3317
      %v3319 = vpop.f32.mrb[0].mxu0
      %3320 = vmatprep.mubr.bf16.mxu0 0
      %3321 = vmatmul.mubr.bf16.gmra.mrb[0].mxu0 %v3178
      %v3322 = vpop.f32.mrb[0].mxu0
      %v3323 = vadd.f32 0.0, %v3322
      %v3324 = vpop.f32.mrb[0].mxu0
      %v3325 = vpop.f32.mrb[0].mxu0
      %v3326 = vadd.f32 0.0, %v3325
      %v3327 = vpop.f32.mrb[0].mxu0
      %3328 = vmatprep.mubr.bf16.mxu0 0
      %3329 = vmatmul.mubr.bf16.gmra.mrb[0].mxu0 %v3181
      %v3330 = vpop.f32.mrb[0].mxu0
      %v3331 = vadd.f32 0.0, %v3330
      %v3332 = vpop.f32.mrb[0].mxu0
      %v3333 = vpop.f32.mrb[0].mxu0
      %v3334 = vadd.f32 0.0, %v3333
      %v3335 = vpop.f32.mrb[0].mxu0
      %3336 = vmatprep.mubr.bf16.mxu0 0
      %3337 = vmatmul.mubr.bf16.gmra.mrb[0].mxu0 %v3184
      %v3338 = vpop.f32.mrb[0].mxu0
      %v3339 = vadd.f32 0.0, %v3338
      %v3340 = vpop.f32.mrb[0].mxu0
      %v3341 = vpop.f32.mrb[0].mxu0
      %v3342 = vadd.f32 0.0, %v3341
      %v3343 = vpop.f32.mrb[0].mxu0
      %3344 = vmatprep.mubr.bf16.mxu0 0
      %3345 = vmatmul.mubr.bf16.gmra.mrb[0].mxu0 %v3187
      %v3346 = vpop.f32.mrb[0].mxu0
      %v3347 = vadd.f32 0.0, %v3346
      %v3348 = vpop.f32.mrb[0].mxu0
      %v3349 = vpop.f32.mrb[0].mxu0
      %v3350 = vadd.f32 0.0, %v3349
      %v3351 = vpop.f32.mrb[0].mxu0
      %3352 = vdwg.mxu0
      %v3354 = vsel %vm798, %v3011, 0
      %v3357 = vsel %vm798, %v3012, 0
      %v3360 = vsel %vm798, %v3013, 0
      %v3363 = vsel %vm798, %v3014, 0
      %v3366 = vsel %vm798, %v3015, 0
      %v3369 = vsel %vm798, %v3016, 0
      %v3372 = vsel %vm798, %v3017, 0
      %v3375 = vsel %vm798, %v3018, 0
      %v3378 = vsel %vm798, %v3019, 0
      %v3381 = vsel %vm798, %v3020, 0
      %v3384 = vsel %vm798, %v3021, 0
      %v3387 = vsel %vm798, %v3022, 0
      %v3390 = vsel %vm798, %v3023, 0
      %v3393 = vsel %vm798, %v3024, 0
      %v3396 = vsel %vm798, %v3025, 0
      %v3399 = vsel %vm798, %v3026, 0
      %v3402 = vsel %vm847, %v3027, 0
      %3404 = vmatprep.subr.bf16.mxu0 0
      %3405 = vmatpush1.bf16.msra.mxu0 %v3402
      %3406 = vmatprep.subr.bf16.mxu0 0
      %3407 = vmatpush1.bf16.msra.mxu0 0
      %3408 = vmatprep.subr.bf16.mxu0 0
      %3409 = vmatpush1.bf16.msra.mxu0 0
      %3410 = vmatprep.subr.bf16.mxu0 0
      %3411 = vmatpush1.bf16.msra.mxu0 0
      %3412 = vmatprep.subr.bf16.mxu0 0
      %3413 = vmatpush1.bf16.msra.mxu0 0
      %3414 = vmatprep.subr.bf16.mxu0 0
      %3415 = vmatpush1.bf16.msra.mxu0 0
      %3416 = vmatprep.subr.bf16.mxu0 0
      %3417 = vmatpush1.bf16.msra.mxu0 0
      %3418 = vmatprep.subr.bf16.mxu0 0
      %3419 = vmatpush1.bf16.msra.mxu0 0
      %3420 = vmatprep.subr.bf16.mxu0 0
      %3421 = vmatpush1.bf16.msra.mxu0 0
      %3422 = vmatprep.subr.bf16.mxu0 0
      %3423 = vmatpush1.bf16.msra.mxu0 0
      %3424 = vmatprep.subr.bf16.mxu0 0
      %3425 = vmatpush1.bf16.msra.mxu0 0
      %3426 = vmatprep.subr.bf16.mxu0 0
      %3427 = vmatpush1.bf16.msra.mxu0 0
      %3428 = vmatprep.subr.bf16.mxu0 0
      %3429 = vmatpush1.bf16.msra.mxu0 0
      %3430 = vmatprep.subr.bf16.mxu0 0
      %3431 = vmatpush1.bf16.msra.mxu0 0
      %3432 = vmatprep.subr.bf16.mxu0 0
      %3433 = vmatpush1.bf16.msra.mxu0 0
      %3434 = vmatprep.subr.bf16.mxu0 0
      %3435 = vmatpush1.bf16.msra.mxu0 0
      %3436 = vmatprep.mubr.bf16.mxu0 0
      %3437 = vmatmul.mubr.bf16.gmra.mrb[0].mxu0 %v3354
      %v3438 = vpop.f32.mrb[0].mxu0
      %v3439 = vadd.f32 %v3227, %v3438
      %v3440 = vpop.f32.mrb[0].mxu0
      %v3441 = vpop.f32.mrb[0].mxu0
      %v3442 = vadd.f32 %v3230, %v3441
      %v3443 = vpop.f32.mrb[0].mxu0
      %3444 = vmatprep.mubr.bf16.mxu0 0
      %3445 = vmatmul.mubr.bf16.gmra.mrb[0].mxu0 %v3357
      %v3446 = vpop.f32.mrb[0].mxu0
      %v3447 = vadd.f32 %v3235, %v3446
      %v3448 = vpop.f32.mrb[0].mxu0
      %v3449 = vpop.f32.mrb[0].mxu0
      %v3450 = vadd.f32 %v3238, %v3449
      %v3451 = vpop.f32.mrb[0].mxu0
      %3452 = vmatprep.mubr.bf16.mxu0 0
      %3453 = vmatmul.mubr.bf16.gmra.mrb[0].mxu0 %v3360
      %v3454 = vpop.f32.mrb[0].mxu0
      %v3455 = vadd.f32 %v3243, %v3454
      %v3456 = vpop.f32.mrb[0].mxu0
      %v3457 = vpop.f32.mrb[0].mxu0
      %v3458 = vadd.f32 %v3246, %v3457
      %v3459 = vpop.f32.mrb[0].mxu0
      %3460 = vmatprep.mubr.bf16.mxu0 0
      %3461 = vmatmul.mubr.bf16.gmra.mrb[0].mxu0 %v3363
      %v3462 = vpop.f32.mrb[0].mxu0
      %v3463 = vadd.f32 %v3251, %v3462
      %v3464 = vpop.f32.mrb[0].mxu0
      %v3465 = vpop.f32.mrb[0].mxu0
      %v3466 = vadd.f32 %v3254, %v3465
      %v3467 = vpop.f32.mrb[0].mxu0
      %3468 = vmatprep.mubr.bf16.mxu0 0
      %3469 = vmatmul.mubr.bf16.gmra.mrb[0].mxu0 %v3366
      %v3470 = vpop.f32.mrb[0].mxu0
      %v3471 = vadd.f32 %v3259, %v3470
      %v3472 = vpop.f32.mrb[0].mxu0
      %v3473 = vpop.f32.mrb[0].mxu0
      %v3474 = vadd.f32 %v3262, %v3473
      %v3475 = vpop.f32.mrb[0].mxu0
      %3476 = vmatprep.mubr.bf16.mxu0 0
      %3477 = vmatmul.mubr.bf16.gmra.mrb[0].mxu0 %v3369
      %v3478 = vpop.f32.mrb[0].mxu0
      %v3479 = vadd.f32 %v3267, %v3478
      %v3480 = vpop.f32.mrb[0].mxu0
      %v3481 = vpop.f32.mrb[0].mxu0
      %v3482 = vadd.f32 %v3270, %v3481
      %v3483 = vpop.f32.mrb[0].mxu0
      %3484 = vmatprep.mubr.bf16.mxu0 0
      %3485 = vmatmul.mubr.bf16.gmra.mrb[0].mxu0 %v3372
      %v3486 = vpop.f32.mrb[0].mxu0
      %v3487 = vadd.f32 %v3275, %v3486
      %v3488 = vpop.f32.mrb[0].mxu0
      %v3489 = vpop.f32.mrb[0].mxu0
      %v3490 = vadd.f32 %v3278, %v3489
      %v3491 = vpop.f32.mrb[0].mxu0
      %3492 = vmatprep.mubr.bf16.mxu0 0
      %3493 = vmatmul.mubr.bf16.gmra.mrb[0].mxu0 %v3375
      %v3494 = vpop.f32.mrb[0].mxu0
      %v3495 = vadd.f32 %v3283, %v3494
      %v3496 = vpop.f32.mrb[0].mxu0
      %v3497 = vpop.f32.mrb[0].mxu0
      %v3498 = vadd.f32 %v3286, %v3497
      %v3499 = vpop.f32.mrb[0].mxu0
      %3500 = vmatprep.mubr.bf16.mxu0 0
      %3501 = vmatmul.mubr.bf16.gmra.mrb[0].mxu0 %v3378
      %v3502 = vpop.f32.mrb[0].mxu0
      %v3503 = vadd.f32 %v3291, %v3502
      %v3504 = vpop.f32.mrb[0].mxu0
      %v3505 = vpop.f32.mrb[0].mxu0
      %v3506 = vadd.f32 %v3294, %v3505
      %v3507 = vpop.f32.mrb[0].mxu0
      %3508 = vmatprep.mubr.bf16.mxu0 0
      %3509 = vmatmul.mubr.bf16.gmra.mrb[0].mxu0 %v3381
      %v3510 = vpop.f32.mrb[0].mxu0
      %v3511 = vadd.f32 %v3299, %v3510
      %v3512 = vpop.f32.mrb[0].mxu0
      %v3513 = vpop.f32.mrb[0].mxu0
      %v3514 = vadd.f32 %v3302, %v3513
      %v3515 = vpop.f32.mrb[0].mxu0
      %3516 = vmatprep.mubr.bf16.mxu0 0
      %3517 = vmatmul.mubr.bf16.gmra.mrb[0].mxu0 %v3384
      %v3518 = vpop.f32.mrb[0].mxu0
      %v3519 = vadd.f32 %v3307, %v3518
      %v3520 = vpop.f32.mrb[0].mxu0
      %v3521 = vpop.f32.mrb[0].mxu0
      %v3522 = vadd.f32 %v3310, %v3521
      %v3523 = vpop.f32.mrb[0].mxu0
      %3524 = vmatprep.mubr.bf16.mxu0 0
      %3525 = vmatmul.mubr.bf16.gmra.mrb[0].mxu0 %v3387
      %v3526 = vpop.f32.mrb[0].mxu0
      %v3527 = vadd.f32 %v3315, %v3526
      %v3528 = vpop.f32.mrb[0].mxu0
      %v3529 = vpop.f32.mrb[0].mxu0
      %v3530 = vadd.f32 %v3318, %v3529
      %v3531 = vpop.f32.mrb[0].mxu0
      %3532 = vmatprep.mubr.bf16.mxu0 0
      %3533 = vmatmul.mubr.bf16.gmra.mrb[0].mxu0 %v3390
      %v3534 = vpop.f32.mrb[0].mxu0
      %v3535 = vadd.f32 %v3323, %v3534
      %v3536 = vpop.f32.mrb[0].mxu0
      %v3537 = vpop.f32.mrb[0].mxu0
      %v3538 = vadd.f32 %v3326, %v3537
      %v3539 = vpop.f32.mrb[0].mxu0
      %3540 = vmatprep.mubr.bf16.mxu0 0
      %3541 = vmatmul.mubr.bf16.gmra.mrb[0].mxu0 %v3393
      %v3542 = vpop.f32.mrb[0].mxu0
      %v3543 = vadd.f32 %v3331, %v3542
      %v3544 = vpop.f32.mrb[0].mxu0
      %v3545 = vpop.f32.mrb[0].mxu0
      %v3546 = vadd.f32 %v3334, %v3545
      %v3547 = vpop.f32.mrb[0].mxu0
      %3548 = vmatprep.mubr.bf16.mxu0 0
      %3549 = vmatmul.mubr.bf16.gmra.mrb[0].mxu0 %v3396
      %v3550 = vpop.f32.mrb[0].mxu0
      %v3551 = vadd.f32 %v3339, %v3550
      %v3552 = vpop.f32.mrb[0].mxu0
      %v3553 = vpop.f32.mrb[0].mxu0
      %v3554 = vadd.f32 %v3342, %v3553
      %v3555 = vpop.f32.mrb[0].mxu0
      %3556 = vmatprep.mubr.bf16.mxu0 0
      %3557 = vmatmul.mubr.bf16.gmra.mrb[0].mxu0 %v3399
      %v3558 = vpop.f32.mrb[0].mxu0
      %v3559 = vadd.f32 %v3347, %v3558
      %v3560 = vpop.f32.mrb[0].mxu0
      %v3561 = vpop.f32.mrb[0].mxu0
      %v3562 = vadd.f32 %v3350, %v3561
      %v3563 = vpop.f32.mrb[0].mxu0
      %3564 = vdwg.mxu0
      %v3565 = vld [vmem:[%s6] sm:$0x1]
      %v3567 = vlaneseq
      %v3568 = vshrl.u32 %v3567, 7
      %v3569 = vsub.s32 0, %v3568
      %v3570 = vrot.slane %v3565, %v3569
      %v3572 = vadd.f32 %v3439, %v3570
      %v3573 = vadd.f32 %v3442, %v3570
      %v3574 = vadd.f32 %v3447, %v3570
      %v3575 = vadd.f32 %v3450, %v3570
      %v3576 = vadd.f32 %v3455, %v3570
      %v3577 = vadd.f32 %v3458, %v3570
      %v3578 = vadd.f32 %v3463, %v3570
      %v3579 = vadd.f32 %v3466, %v3570
      %v3580 = vadd.f32 %v3471, %v3570
      %v3581 = vadd.f32 %v3474, %v3570
      %v3582 = vadd.f32 %v3479, %v3570
      %v3583 = vadd.f32 %v3482, %v3570
      %v3584 = vadd.f32 %v3487, %v3570
      %v3585 = vadd.f32 %v3490, %v3570
      %v3586 = vadd.f32 %v3495, %v3570
      %v3587 = vadd.f32 %v3498, %v3570
      %v3588 = vadd.f32 %v3503, %v3570
      %v3589 = vadd.f32 %v3506, %v3570
      %v3590 = vadd.f32 %v3511, %v3570
      %v3591 = vadd.f32 %v3514, %v3570
      %v3592 = vadd.f32 %v3519, %v3570
      %v3593 = vadd.f32 %v3522, %v3570
      %v3594 = vadd.f32 %v3527, %v3570
      %v3595 = vadd.f32 %v3530, %v3570
      %v3596 = vadd.f32 %v3535, %v3570
      %v3597 = vadd.f32 %v3538, %v3570
      %v3598 = vadd.f32 %v3543, %v3570
      %v3599 = vadd.f32 %v3546, %v3570
      %v3600 = vadd.f32 %v3551, %v3570
      %v3601 = vadd.f32 %v3554, %v3570
      %v3602 = vadd.f32 %v3559, %v3570
      %v3603 = vadd.f32 %v3562, %v3570
      %v3604 = vxor.u32 %v3572, 2147483648
      %v3605 = vxor.u32 %v3573, 2147483648
      %v3606 = vxor.u32 %v3574, 2147483648
      %v3607 = vxor.u32 %v3575, 2147483648
      %v3608 = vxor.u32 %v3576, 2147483648
      %v3609 = vxor.u32 %v3577, 2147483648
      %v3610 = vxor.u32 %v3578, 2147483648
      %v3611 = vxor.u32 %v3579, 2147483648
      %v3612 = vxor.u32 %v3580, 2147483648
      %v3613 = vxor.u32 %v3581, 2147483648
      %v3614 = vxor.u32 %v3582, 2147483648
      %v3615 = vxor.u32 %v3583, 2147483648
      %v3616 = vxor.u32 %v3584, 2147483648
      %v3617 = vxor.u32 %v3585, 2147483648
      %v3618 = vxor.u32 %v3586, 2147483648
      %v3619 = vxor.u32 %v3587, 2147483648
      %v3620 = vxor.u32 %v3588, 2147483648
      %v3621 = vxor.u32 %v3589, 2147483648
      %v3622 = vxor.u32 %v3590, 2147483648
      %v3623 = vxor.u32 %v3591, 2147483648
      %v3624 = vxor.u32 %v3592, 2147483648
      %v3625 = vxor.u32 %v3593, 2147483648
      %v3626 = vxor.u32 %v3594, 2147483648
      %v3627 = vxor.u32 %v3595, 2147483648
      %v3628 = vxor.u32 %v3596, 2147483648
      %v3629 = vxor.u32 %v3597, 2147483648
      %v3630 = vxor.u32 %v3598, 2147483648
      %v3631 = vxor.u32 %v3599, 2147483648
      %v3632 = vxor.u32 %v3600, 2147483648
      %v3633 = vxor.u32 %v3601, 2147483648
      %v3634 = vxor.u32 %v3602, 2147483648
      %v3635 = vxor.u32 %v3603, 2147483648
      %v3636 = vmul.f32 %v3604, 1.442695
      %v3637 = vpow.pop %v3636
      %v3638 = vmul.f32 %v3605, 1.442695
      %v3639 = vpow.pop %v3638
      %v3640 = vmul.f32 %v3606, 1.442695
      %v3641 = vpow.pop %v3640
      %v3642 = vmul.f32 %v3607, 1.442695
      %v3643 = vpow.pop %v3642
      %v3644 = vmul.f32 %v3608, 1.442695
      %v3645 = vpow.pop %v3644
      %v3646 = vmul.f32 %v3609, 1.442695
      %v3647 = vpow.pop %v3646
      %v3648 = vmul.f32 %v3610, 1.442695
      %v3649 = vpow.pop %v3648
      %v3650 = vmul.f32 %v3611, 1.442695
      %v3651 = vpow.pop %v3650
      %v3652 = vmul.f32 %v3612, 1.442695
      %v3653 = vpow.pop %v3652
      %v3654 = vmul.f32 %v3613, 1.442695
      %v3655 = vpow.pop %v3654
      %v3656 = vmul.f32 %v3614, 1.442695
      %v3657 = vpow.pop %v3656
      %v3658 = vmul.f32 %v3615, 1.442695
      %v3659 = vpow.pop %v3658
      %v3660 = vmul.f32 %v3616, 1.442695
      %v3661 = vpow.pop %v3660
      %v3662 = vmul.f32 %v3617, 1.442695
      %v3663 = vpow.pop %v3662
      %v3664 = vmul.f32 %v3618, 1.442695
      %v3665 = vpow.pop %v3664
      %v3666 = vmul.f32 %v3619, 1.442695
      %v3667 = vpow.pop %v3666
      %v3668 = vmul.f32 %v3620, 1.442695
      %v3669 = vpow.pop %v3668
      %v3670 = vmul.f32 %v3621, 1.442695
      %v3671 = vpow.pop %v3670
      %v3672 = vmul.f32 %v3622, 1.442695
      %v3673 = vpow.pop %v3672
      %v3674 = vmul.f32 %v3623, 1.442695
      %v3675 = vpow.pop %v3674
      %v3676 = vmul.f32 %v3624, 1.442695
      %v3677 = vpow.pop %v3676
      %v3678 = vmul.f32 %v3625, 1.442695
      %v3679 = vpow.pop %v3678
      %v3680 = vmul.f32 %v3626, 1.442695
      %v3681 = vpow.pop %v3680
      %v3682 = vmul.f32 %v3627, 1.442695
      %v3683 = vpow.pop %v3682
      %v3684 = vmul.f32 %v3628, 1.442695
      %v3685 = vpow.pop %v3684
      %v3686 = vmul.f32 %v3629, 1.442695
      %v3687 = vpow.pop %v3686
      %v3688 = vmul.f32 %v3630, 1.442695
      %v3689 = vpow.pop %v3688
      %v3690 = vmul.f32 %v3631, 1.442695
      %v3691 = vpow.pop %v3690
      %v3692 = vmul.f32 %v3632, 1.442695
      %v3693 = vpow.pop %v3692
      %v3694 = vmul.f32 %v3633, 1.442695
      %v3695 = vpow.pop %v3694
      %v3696 = vmul.f32 %v3634, 1.442695
      %v3697 = vpow.pop %v3696
      %v3698 = vmul.f32 %v3635, 1.442695
      %v3699 = vpow.pop %v3698
      %v3700 = vadd.f32 %v3637, 1.0
      %v3701 = vadd.f32 %v3639, 1.0
      %v3702 = vadd.f32 %v3641, 1.0
      %v3703 = vadd.f32 %v3643, 1.0
      %v3704 = vadd.f32 %v3645, 1.0
      %v3705 = vadd.f32 %v3647, 1.0
      %v3706 = vadd.f32 %v3649, 1.0
      %v3707 = vadd.f32 %v3651, 1.0
      %v3708 = vadd.f32 %v3653, 1.0
      %v3709 = vadd.f32 %v3655, 1.0
      %v3710 = vadd.f32 %v3657, 1.0
      %v3711 = vadd.f32 %v3659, 1.0
      %v3712 = vadd.f32 %v3661, 1.0
      %v3713 = vadd.f32 %v3663, 1.0
      %v3714 = vadd.f32 %v3665, 1.0
      %v3715 = vadd.f32 %v3667, 1.0
      %v3716 = vadd.f32 %v3669, 1.0
      %v3717 = vadd.f32 %v3671, 1.0
      %v3718 = vadd.f32 %v3673, 1.0
      %v3719 = vadd.f32 %v3675, 1.0
      %v3720 = vadd.f32 %v3677, 1.0
      %v3721 = vadd.f32 %v3679, 1.0
      %v3722 = vadd.f32 %v3681, 1.0
      %v3723 = vadd.f32 %v3683, 1.0
      %v3724 = vadd.f32 %v3685, 1.0
      %v3725 = vadd.f32 %v3687, 1.0
      %v3726 = vadd.f32 %v3689, 1.0
      %v3727 = vadd.f32 %v3691, 1.0
      %v3728 = vadd.f32 %v3693, 1.0
      %v3729 = vadd.f32 %v3695, 1.0
      %v3730 = vadd.f32 %v3697, 1.0
      %v3731 = vadd.f32 %v3699, 1.0
      %v3732 = vrcp.pop %v3700
      %v3733 = vmul.f32 1.0, %v3732
      %v3734 = vrcp.pop %v3701
      %v3735 = vmul.f32 1.0, %v3734
      %v3736 = vrcp.pop %v3702
      %v3737 = vmul.f32 1.0, %v3736
      %v3738 = vrcp.pop %v3703
      %v3739 = vmul.f32 1.0, %v3738
      %v3740 = vrcp.pop %v3704
      %v3741 = vmul.f32 1.0, %v3740
      %v3742 = vrcp.pop %v3705
      %v3743 = vmul.f32 1.0, %v3742
      %v3744 = vrcp.pop %v3706
      %v3745 = vmul.f32 1.0, %v3744
      %v3746 = vrcp.pop %v3707
      %v3747 = vmul.f32 1.0, %v3746
      %v3748 = vrcp.pop %v3708
      %v3749 = vmul.f32 1.0, %v3748
      %v3750 = vrcp.pop %v3709
      %v3751 = vmul.f32 1.0, %v3750
      %v3752 = vrcp.pop %v3710
      %v3753 = vmul.f32 1.0, %v3752
      %v3754 = vrcp.pop %v3711
      %v3755 = vmul.f32 1.0, %v3754
      %v3756 = vrcp.pop %v3712
      %v3757 = vmul.f32 1.0, %v3756
      %v3758 = vrcp.pop %v3713
      %v3759 = vmul.f32 1.0, %v3758
      %v3760 = vrcp.pop %v3714
      %v3761 = vmul.f32 1.0, %v3760
      %v3762 = vrcp.pop %v3715
      %v3763 = vmul.f32 1.0, %v3762
      %v3764 = vrcp.pop %v3716
      %v3765 = vmul.f32 1.0, %v3764
      %v3766 = vrcp.pop %v3717
      %v3767 = vmul.f32 1.0, %v3766
      %v3768 = vrcp.pop %v3718
      %v3769 = vmul.f32 1.0, %v3768
      %v3770 = vrcp.pop %v3719
      %v3771 = vmul.f32 1.0, %v3770
      %v3772 = vrcp.pop %v3720
      %v3773 = vmul.f32 1.0, %v3772
      %v3774 = vrcp.pop %v3721
      %v3775 = vmul.f32 1.0, %v3774
      %v3776 = vrcp.pop %v3722
      %v3777 = vmul.f32 1.0, %v3776
      %v3778 = vrcp.pop %v3723
      %v3779 = vmul.f32 1.0, %v3778
      %v3780 = vrcp.pop %v3724
      %v3781 = vmul.f32 1.0, %v3780
      %v3782 = vrcp.pop %v3725
      %v3783 = vmul.f32 1.0, %v3782
      %v3784 = vrcp.pop %v3726
      %v3785 = vmul.f32 1.0, %v3784
      %v3786 = vrcp.pop %v3727
      %v3787 = vmul.f32 1.0, %v3786
      %v3788 = vrcp.pop %v3728
      %v3789 = vmul.f32 1.0, %v3788
      %v3790 = vrcp.pop %v3729
      %v3791 = vmul.f32 1.0, %v3790
      %v3792 = vrcp.pop %v3730
      %v3793 = vmul.f32 1.0, %v3792
      %v3794 = vrcp.pop %v3731
      %v3795 = vmul.f32 1.0, %v3794
      %v3796 = vmul.f32 %v3572, %v3733
      %v3797 = vmul.f32 %v3573, %v3735
      %v3798 = vmul.f32 %v3574, %v3737
      %v3799 = vmul.f32 %v3575, %v3739
      %v3800 = vmul.f32 %v3576, %v3741
      %v3801 = vmul.f32 %v3577, %v3743
      %v3802 = vmul.f32 %v3578, %v3745
      %v3803 = vmul.f32 %v3579, %v3747
      %v3804 = vmul.f32 %v3580, %v3749
      %v3805 = vmul.f32 %v3581, %v3751
      %v3806 = vmul.f32 %v3582, %v3753
      %v3807 = vmul.f32 %v3583, %v3755
      %v3808 = vmul.f32 %v3584, %v3757
      %v3809 = vmul.f32 %v3585, %v3759
      %v3810 = vmul.f32 %v3586, %v3761
      %v3811 = vmul.f32 %v3587, %v3763
      %v3812 = vmul.f32 %v3588, %v3765
      %v3813 = vmul.f32 %v3589, %v3767
      %v3814 = vmul.f32 %v3590, %v3769
      %v3815 = vmul.f32 %v3591, %v3771
      %v3816 = vmul.f32 %v3592, %v3773
      %v3817 = vmul.f32 %v3593, %v3775
      %v3818 = vmul.f32 %v3594, %v3777
      %v3819 = vmul.f32 %v3595, %v3779
      %v3820 = vmul.f32 %v3596, %v3781
      %v3821 = vmul.f32 %v3597, %v3783
      %v3822 = vmul.f32 %v3598, %v3785
      %v3823 = vmul.f32 %v3599, %v3787
      %v3824 = vmul.f32 %v3600, %v3789
      %v3825 = vmul.f32 %v3601, %v3791
      %v3826 = vmul.f32 %v3602, %v3793
      %v3827 = vmul.f32 %v3603, %v3795
      %3828 = vst.msk [vmem:[%s298] sm:$0xff] %vm798, %v3796
      %3829 = vst.msk [vmem:[%s298 + $0x8] sm:$0xff] %vm798, %v3797
      %3830 = vst.msk [vmem:[%s298 + $0x10] sm:$0xff] %vm798, %v3798
      %3831 = vst.msk [vmem:[%s298 + $0x18] sm:$0xff] %vm798, %v3799
      %3832 = vst.msk [vmem:[%s298 + $0x20] sm:$0xff] %vm798, %v3800
      %3833 = vst.msk [vmem:[%s298 + $0x28] sm:$0xff] %vm798, %v3801
      %3834 = vst.msk [vmem:[%s298 + $0x30] sm:$0xff] %vm798, %v3802
      %3835 = vst.msk [vmem:[%s298 + $0x38] sm:$0xff] %vm798, %v3803
      %3836 = vst.msk [vmem:[%s298 + $0x40] sm:$0xff] %vm798, %v3804
      %3837 = vst.msk [vmem:[%s298 + $0x48] sm:$0xff] %vm798, %v3805
      %3838 = vst.msk [vmem:[%s298 + $0x50] sm:$0xff] %vm798, %v3806
      %3839 = vst.msk [vmem:[%s298 + $0x58] sm:$0xff] %vm798, %v3807
      %3840 = vst.msk [vmem:[%s298 + $0x60] sm:$0xff] %vm798, %v3808
      %3841 = vst.msk [vmem:[%s298 + $0x68] sm:$0xff] %vm798, %v3809
      %3842 = vst.msk [vmem:[%s298 + $0x70] sm:$0xff] %vm798, %v3810
      %3843 = vst.msk [vmem:[%s298 + $0x78] sm:$0xff] %vm798, %v3811
      %3844 = vst.msk [vmem:[%s298 + $0x80] sm:$0xff] %vm798, %v3812
      %3845 = vst.msk [vmem:[%s298 + $0x88] sm:$0xff] %vm798, %v3813
      %3846 = vst.msk [vmem:[%s298 + $0x90] sm:$0xff] %vm798, %v3814
      %3847 = vst.msk [vmem:[%s298 + $0x98] sm:$0xff] %vm798, %v3815
      %3848 = vst.msk [vmem:[%s298 + $0xa0] sm:$0xff] %vm798, %v3816
      %3849 = vst.msk [vmem:[%s298 + $0xa8] sm:$0xff] %vm798, %v3817
      %3850 = vst.msk [vmem:[%s298 + $0xb0] sm:$0xff] %vm798, %v3818
      %3851 = vst.msk [vmem:[%s298 + $0xb8] sm:$0xff] %vm798, %v3819
      %3852 = vst.msk [vmem:[%s298 + $0xc0] sm:$0xff] %vm798, %v3820
      %3853 = vst.msk [vmem:[%s298 + $0xc8] sm:$0xff] %vm798, %v3821
      %3854 = vst.msk [vmem:[%s298 + $0xd0] sm:$0xff] %vm798, %v3822
      %3855 = vst.msk [vmem:[%s298 + $0xd8] sm:$0xff] %vm798, %v3823
      %3856 = vst.msk [vmem:[%s298 + $0xe0] sm:$0xff] %vm798, %v3824
      %3857 = vst.msk [vmem:[%s298 + $0xe8] sm:$0xff] %vm798, %v3825
      %3858 = vst.msk [vmem:[%s298 + $0xf0] sm:$0xff] %vm798, %v3826
      %3859 = vst.msk [vmem:[%s298 + $0xf8] sm:$0xff] %vm798, %v3827
      %p3860 = scmp.lt.s32.totalorder %s18, 1
      %s3861 = scalar_select %p3860, %s18, 1
      %s3862 = smul.addr %s3861, 32
      %s3863 = smul.addr %s3862, 8
      %s3864 = scalar_lea.vmem %s7, %s3863
      // Predicated region
      $region49: #{sppcspc_forward.7} parent=47 // pred_check
        %p3865 = pneg %p193
      $region50: #{sppcspc_forward.7} parent=47 // pred_check_branch
        %3867 = sbr.rel (%p3865) target = $region52
      $region51: #{sppcspc_forward.7} parent=47 // pred_region
        _
      $region52: #{sppcspc_forward.7} parent=47 // pred_fallthru
        _
    $region48: #{sppcspc_forward.7} parent=5 // pred_fallthru
      _
    %p3868 = scmp.le.s32.totalorder 2, %s13
    // Predicated region
    $region53: #{sppcspc_forward.7} parent=5 // pred_check
      %p3869 = pneg %p3868
    $region54: #{sppcspc_forward.7} parent=5 // pred_check_branch
      %3871 = sbr.rel (%p3869) target = $region56
    $region55: #{sppcspc_forward.7} parent=5 // pred_region
      %s3872 = ssub.s32 %s13, 2
      // Predicated region
      $region57: #{sppcspc_forward.7} parent=55 // pred_check
        %p3873 = pneg %p199
      $region58: #{sppcspc_forward.7} parent=55 // pred_check_branch
        %3875 = sbr.rel (%p3873) target = $region60
      $region59: #{sppcspc_forward.7} parent=55 // pred_region
        %p3876 = scmp.lt.s32.totalorder %s19, 1
        %s3877 = scalar_select %p3876, %s19, 1
        %s3878 = smul.addr %s3877, 32
        %s3879 = smul.addr %s3878, 8
        %s3880 = scalar_lea.vmem %s7, %s3879
      $region60: #{sppcspc_forward.7} parent=55 // pred_fallthru
        _
    $region56: #{sppcspc_forward.7} parent=5 // pred_fallthru
      _
  $region6: #{sppcspc_forward.7} parent=0 // loop_footer
    %s17 = sadd.s32 1, %s13
  $region7: #{sppcspc_forward.7} parent=0 // loop_footer_branch
    %12 = sbr.rel target = $region3
  $region8: #{sppcspc_forward.7} parent=0 // loop_exit
    _

</llo_original>
